<compile_context>
chip_gen: v7x
topology: tpu7x:2x2x1
jax: 0.10.0
libtpu: 0.0.40
codegen_flags: <defaults>
</compile_context>

<pallas_src>
import jax
import jax.numpy as jnp
from jax.experimental import pallas as pl
from jax.experimental.pallas import tpu as pltpu


def _round_up(x, m):
    return (x + m - 1) // m * m


def _pick_tm(mp):
    """Pick an M tile (multiple of 128) for a padded M extent `mp`."""
    if mp >= 1024 and mp % 512 == 0:
        return 512
    if mp >= 256 and (mp // 2) % 128 == 0:
        return mp // 2          # >= 2 blocks so 2-TC chips can split the grid
    return mp                   # single 128-lane block


_SMEM_SPEC = pl.BlockSpec(memory_space=pltpu.MemorySpace.SMEM)
_VMEM_SPEC = pl.BlockSpec(memory_space=pltpu.MemorySpace.VMEM)


# --------------------------------------------------------------------------
# Pallas kernels
# --------------------------------------------------------------------------

def _gemm_t_prelu_kernel(x_ref, w_ref, b_ref, a_ref, o_ref):
    """out^T = PReLU(W^T @ cols^T + b) for one M tile.

    x_ref: [K, TM] bf16 (transposed im2col), w_ref: [Cout, K] bf16,
    b_ref: [Cout, 1] f32, a_ref: [1] f32 in SMEM, o_ref: [Cout, TM] bf16.
    Single K block -> bias + PReLU fused directly into the store.
    """
    y = jnp.dot(w_ref[...], x_ref[...], preferred_element_type=jnp.float32)
    y = y + b_ref[...]
    alpha = a_ref[0]
    y = jnp.where(y > 0.0, y, alpha * y)
    o_ref[...] = y.astype(o_ref.dtype)


def _max4_kernel(a_ref, b_ref, c_ref, d_ref, o_ref):
    """Elementwise max of the four 2x2 pooling-window corners (MaxPool2d(2,2))."""
    o_ref[...] = jnp.maximum(jnp.maximum(a_ref[...], b_ref[...]),
                             jnp.maximum(c_ref[...], d_ref[...]))


def _dense_tail_kernel(x_ref, w1_ref, b1_ref, w2_ref, b2_ref, w3_ref, b3_ref,
                       w4_ref, b4_ref, a_ref, o_ref):
    """Fused Dense1..Dense4 (+ PReLU after the first three) in one kernel."""
    alpha = a_ref[0]

    def prelu(v):
        return jnp.where(v > 0.0, v, alpha * v)

    h = jnp.dot(x_ref[...], w1_ref[...],
                preferred_element_type=jnp.float32) + b1_ref[...]
    h = prelu(h).astype(jnp.bfloat16)
    h = jnp.dot(h, w2_ref[...],
                preferred_element_type=jnp.float32) + b2_ref[...]
    h = prelu(h).astype(jnp.bfloat16)
    h = jnp.dot(h, w3_ref[...],
                preferred_element_type=jnp.float32) + b3_ref[...]
    h = prelu(h).astype(jnp.bfloat16)
    out = jnp.dot(h, w4_ref[...],
                  preferred_element_type=jnp.float32) + b4_ref[...]
    o_ref[...] = out.astype(o_ref.dtype)


# --------------------------------------------------------------------------
# Pallas wrappers
# --------------------------------------------------------------------------

def gemm_t_prelu(cols_t, w_t, b, alpha):
    """PReLU(w_t @ cols_t + b) -> [N, M] bf16, lane-dense in M.

    cols_t: [K, M] bf16, w_t: [N, K] f32, b: [N] f32, alpha: [1] f32.
    """
    K, M = cols_t.shape
    N, Kw = w_t.shape
    assert K == Kw
    Mp = _round_up(M, 128)
    TM = _pick_tm(Mp)

    x_t = jnp.pad(cols_t, ((0, 0), (0, Mp - M)))
    w_b = w_t.astype(jnp.bfloat16)
    b2 = b.reshape(N, 1)

    out = pl.pallas_call(
        _gemm_t_prelu_kernel,
        out_shape=jax.ShapeDtypeStruct((N, Mp), jnp.bfloat16),
        grid=(Mp // TM,),
        in_specs=[
            pl.BlockSpec((K, TM), lambda i: (0, i)),    # activations (full K)
            pl.BlockSpec((N, K), lambda i: (0, 0)),     # weights (VMEM-resident)
            pl.BlockSpec((N, 1), lambda i: (0, 0)),     # bias
            _SMEM_SPEC,                                 # PReLU alpha scalar
        ],
        out_specs=pl.BlockSpec((N, TM), lambda i: (0, i)),
        compiler_params=pltpu.CompilerParams(
            dimension_semantics=("parallel",)),
    )(x_t, w_b, b2, alpha)
    return out[:, :M]


def conv2d_prelu(x, w, b, alpha, *, pad):
    """Conv2d(stride=1, padding=pad) + bias + PReLU on a CNHW activation.

    x: [Cin, B, H, W] bf16, w: [Cout, KH, KW, Cin], b: [Cout]
    -> [Cout, B, Ho, Wo] bf16.
    """
    Cin, B, H, W = x.shape
    Cout, KH, KW, _ = w.shape
    xp = jnp.pad(x, ((0, 0), (0, 0), (pad, pad), (pad, pad)))
    Ho = H + 2 * pad - KH + 1
    Wo = W + 2 * pad - KW + 1
    M = B * Ho * Wo
    # Transposed im2col (data-movement glue): rows ordered (dy, dx, cin),
    # columns ordered (b, ho, wo) -> matches w.reshape(Cout, KH*KW*Cin).
    patches = [xp[:, :, dy:dy + Ho, dx:dx + Wo].reshape(Cin, M)
               for dy in range(KH) for dx in range(KW)]
    cols_t = jnp.concatenate(patches, axis=0)            # [KH*KW*Cin, M] bf16
    w_t = w.reshape(Cout, KH * KW * Cin)
    y = gemm_t_prelu(cols_t, w_t, b, alpha)               # [Cout, M] bf16
    return y.reshape(Cout, B, Ho, Wo)


def maxpool2x2(x):
    """MaxPool2d(2,2) on CNHW. Corner slicing is glue; the max is Pallas."""
    C, B, H, W = x.shape
    a = x[:, :, 0::2, 0::2]
    b = x[:, :, 0::2, 1::2]
    c = x[:, :, 1::2, 0::2]
    d = x[:, :, 1::2, 1::2]
    out_shape = (C, B, H // 2, W // 2)
    n = C * B * (H // 2) * (W // 2)
    if n % 128 == 0:   # present a lane-dense 2-D view -> unmasked vector stores
        flat = (n // 128, 128)
        a, b, c, d = (t.reshape(flat) for t in (a, b, c, d))
    out = pl.pallas_call(
        _max4_kernel,
        out_shape=jax.ShapeDtypeStruct(a.shape, x.dtype),
    )(a, b, c, d)
    return out.reshape(out_shape)


def dense_tail(x, params, alpha):
    """Fused Dense1->PReLU->Dense2->PReLU->Dense3->PReLU->Dense4 (one kernel)."""
    B, _ = x.shape
    Bp = _round_up(B, 8)
    xb = jnp.pad(x, ((0, Bp - B), (0, 0))).astype(jnp.bfloat16)
    ws = [params[f'd{i}w'].astype(jnp.bfloat16) for i in range(1, 5)]
    bs = [params[f'd{i}b'].reshape(1, -1) for i in range(1, 5)]
    n_out = ws[-1].shape[1]
    out = pl.pallas_call(
        _dense_tail_kernel,
        out_shape=jax.ShapeDtypeStruct((Bp, n_out), jnp.float32),
        in_specs=[_VMEM_SPEC] * 9 + [_SMEM_SPEC],
        out_specs=_VMEM_SPEC,
    )(xb, ws[0], bs[0], ws[1], bs[1], ws[2], bs[2], ws[3], bs[3], alpha)
    return out[:B]


# --------------------------------------------------------------------------
# Parameters (deterministic synthetic init, shapes from the nn.Module)
# --------------------------------------------------------------------------

def init_params(key):
    def conv_w(k, cout, kh, kw, cin):
        std = (2.0 / (kh * kw * cin)) ** 0.5
        return jax.random.normal(k, (cout, kh, kw, cin), jnp.float32) * std

    def lin_w(k, fin, fout):
        std = (2.0 / fin) ** 0.5
        return jax.random.normal(k, (fin, fout), jnp.float32) * std

    keys = jax.random.split(key, 12)
    p = {}
    conv_cfg = [(16, 5, 5, 1), (16, 5, 5, 16), (32, 3, 3, 16), (32, 3, 3, 32),
                (64, 5, 5, 32), (64, 5, 5, 64), (128, 3, 3, 64), (128, 3, 3, 128)]
    for i, (co, kh, kw, ci) in enumerate(conv_cfg, 1):
        p[f'w{i}'] = conv_w(keys[i - 1], co, kh, kw, ci)
        p[f'b{i}'] = jnp.zeros((co,), jnp.float32)
    dense_cfg = [(512, 128), (128, 64), (64, 16), (16, 10)]
    for i, (fi, fo) in enumerate(dense_cfg, 1):
        p[f'd{i}w'] = lin_w(keys[7 + i], fi, fo)
        p[f'd{i}b'] = jnp.zeros((fo,), jnp.float32)
    p['prelu'] = jnp.full((1,), 0.25, jnp.float32)   # nn.PReLU() default alpha
    return p


# --------------------------------------------------------------------------
# Forward pass (mirrors CNN.forward)
# --------------------------------------------------------------------------

def _cnn_forward(x_nchw, params):
    a = params['prelu']
    # NCHW -> CNHW, bf16 activations (MXU-native; GEMMs accumulate in f32).
    x = jnp.transpose(x_nchw, (1, 0, 2, 3)).astype(jnp.bfloat16)

    x = conv2d_prelu(x, params['w1'], params['b1'], a, pad=2)  # conv1 + PReLU
    x = conv2d_prelu(x, params['w2'], params['b2'], a, pad=2)  # conv2 + PReLU
    x = maxpool2x2(x)                                          # pool

    x = conv2d_prelu(x, params['w3'], params['b3'], a, pad=1)  # conv3 + PReLU
    x = conv2d_prelu(x, params['w4'], params['b4'], a, pad=1)  # conv4 + PReLU
    # dropout -> identity (inference)
    x = maxpool2x2(x)                                          # pool

    x = conv2d_prelu(x, params['w5'], params['b5'], a, pad=2)  # conv5 + PReLU
    x = conv2d_prelu(x, params['w6'], params['b6'], a, pad=2)  # conv6 + PReLU
    x = maxpool2x2(x)                                          # pool

    x = conv2d_prelu(x, params['w7'], params['b7'], a, pad=1)  # conv7 + PReLU
    x = conv2d_prelu(x, params['w8'], params['b8'], a, pad=1)  # conv8 + PReLU
    # dropout -> identity (inference)
    x = maxpool2x2(x)                                          # -> [128, B, 2, 2]

    B = x.shape[1]
    # PyTorch Flatten on NCHW orders features as (C, H, W):
    xf = jnp.transpose(x, (1, 0, 2, 3)).reshape(B, -1)         # [B, 512]
    return dense_tail(xf, params, a)                           # fused dense tail


cnn_forward = jax.jit(_cnn_forward)


if __name__ == "__main__":
    key = jax.random.PRNGKey(0)
    pkey, xkey = jax.random.split(key)
    params = init_params(pkey)
    # Input consistent with the module: 1 channel, 32x32 (so flatten gives 512).
    x = jax.random.normal(xkey, (2, 1, 32, 32), jnp.float32)   # NCHW like PyTorch
    out = cnn_forward(x, params)
    out = jax.block_until_ready(out)
    assert out.shape == (2, 10), out.shape
    print("KERNEL_OK")
</pallas_src>

<mosaic_0001>
module attributes {stable_mosaic.version = 11 : i64} {
  func.func @_gemm_t_prelu_kernel(%arg0: i32, %arg1: memref<25x512xbf16, #tpu.memory_space<vmem>>, %arg2: memref<16x25xbf16, #tpu.memory_space<vmem>>, %arg3: memref<16x1xf32, #tpu.memory_space<vmem>>, %arg4: memref<1xf32, #tpu.memory_space<smem>>, %arg5: memref<16x512xbf16, #tpu.memory_space<vmem>>) attributes {dimension_semantics = [#tpu.dimension_semantics<parallel>], iteration_bounds = array<i64: 4>, scalar_prefetch = 0 : i64, scratch_operands = 0 : i64, tpu.core_type = #tpu.core_type<tc>, window_params = [{transform_indices = @transform_0, window_bounds = array<i64: 25, 512>}, {pipeline_mode = #tpu.pipeline_mode<synchronous>, transform_indices = @transform_1, window_bounds = array<i64: 16, 25>}, {pipeline_mode = #tpu.pipeline_mode<synchronous>, transform_indices = @transform_2, window_bounds = array<i64: 16, 1>}, {transform_indices = @transform_3, window_bounds = array<i64: 1>}, {transform_indices = @transform_4, window_bounds = array<i64: 16, 512>}]} {
    %c0 = arith.constant 0 : index
    %c0_0 = arith.constant 0 : index
    %0 = vector.load %arg2[%c0, %c0_0] : memref<16x25xbf16, #tpu.memory_space<vmem>>, vector<16x25xbf16>
    %c0_1 = arith.constant 0 : index
    %c0_2 = arith.constant 0 : index
    %1 = vector.load %arg1[%c0_1, %c0_2] : memref<25x512xbf16, #tpu.memory_space<vmem>>, vector<25x512xbf16>
    %cst = arith.constant dense<0.000000e+00> : vector<16x512xf32>
    %2 = tpu.matmul %0, %1, %cst {dimension_numbers = #tpu.dot_dimension_numbers<[1], [0], [0], [1], [0, 0, 1, 1], [], []>} : vector<16x25xbf16>, vector<25x512xbf16>, vector<16x512xf32> -> vector<16x512xf32>
    %c0_3 = arith.constant 0 : index
    %c0_4 = arith.constant 0 : index
    %3 = vector.load %arg3[%c0_3, %c0_4] : memref<16x1xf32, #tpu.memory_space<vmem>>, vector<16x1xf32>
    %4 = vector.broadcast %3 : vector<16x1xf32> to vector<16x512xf32>
    %5 = arith.addf %2, %4 : vector<16x512xf32>
    %c0_5 = arith.constant 0 : index
    %6 = memref.load %arg4[%c0_5] : memref<1xf32, #tpu.memory_space<smem>>
    %cst_6 = arith.constant 0.000000e+00 : f32
    %7 = vector.broadcast %cst_6 : f32 to vector<16x512xf32>
    %8 = arith.cmpf ogt, %5, %7 : vector<16x512xf32>
    %9 = vector.broadcast %6 : f32 to vector<16x512xf32>
    %10 = arith.mulf %9, %5 : vector<16x512xf32>
    %11 = arith.select %8, %5, %10 : vector<16x512xi1>, vector<16x512xf32>
    %12 = arith.truncf %11 : vector<16x512xf32> to vector<16x512xbf16>
    %c0_7 = arith.constant 0 : index
    %c0_8 = arith.constant 0 : index
    %13 = vector.load %arg5[%c0_7, %c0_8] : memref<16x512xbf16, #tpu.memory_space<vmem>>, vector<16x512xbf16>
    tpu.vector_store %arg5[%c0_7, %c0_8], %12 {strides = array<i32>} : memref<16x512xbf16, #tpu.memory_space<vmem>>, vector<16x512xbf16>,
    return
  }
  func.func @transform_0(%arg0: i32) -> (i32, i32) {
    %c0_i32 = arith.constant 0 : i32
    %c0_i32_0 = arith.constant 0 : i32
    return %c0_i32, %arg0 : i32, i32
  }
  func.func @transform_1(%arg0: i32) -> (i32, i32) {
    %c0_i32 = arith.constant 0 : i32
    %c0_i32_0 = arith.constant 0 : i32
    %c0_i32_1 = arith.constant 0 : i32
    return %c0_i32, %c0_i32_0 : i32, i32
  }
  func.func @transform_2(%arg0: i32) -> (i32, i32) {
    %c0_i32 = arith.constant 0 : i32
    %c0_i32_0 = arith.constant 0 : i32
    %c0_i32_1 = arith.constant 0 : i32
    return %c0_i32, %c0_i32_0 : i32, i32
  }
  func.func @transform_3(%arg0: i32) -> i32 {
    %c0_i32 = arith.constant 0 : i32
    %c0_i32_0 = arith.constant 0 : i32
    return %c0_i32 : i32
  }
  func.func @transform_4(%arg0: i32) -> (i32, i32) {
    %c0_i32 = arith.constant 0 : i32
    %c0_i32_0 = arith.constant 0 : i32
    return %c0_i32, %arg0 : i32, i32
  }
}

module attributes {stable_mosaic.version = 11 : i64} {
  func.func @_gemm_t_prelu_kernel(%arg0: i32, %arg1: memref<400x512xbf16, #tpu.memory_space<vmem>>, %arg2: memref<16x400xbf16, #tpu.memory_space<vmem>>, %arg3: memref<16x1xf32, #tpu.memory_space<vmem>>, %arg4: memref<1xf32, #tpu.memory_space<smem>>, %arg5: memref<16x512xbf16, #tpu.memory_space<vmem>>) attributes {dimension_semantics = [#tpu.dimension_semantics<parallel>], iteration_bounds = array<i64: 4>, scalar_prefetch = 0 : i64, scratch_operands = 0 : i64, tpu.core_type = #tpu.core_type<tc>, window_params = [{transform_indices = @transform_0, window_bounds = array<i64: 400, 512>}, {pipeline_mode = #tpu.pipeline_mode<synchronous>, transform_indices = @transform_1, window_bounds = array<i64: 16, 400>}, {pipeline_mode = #tpu.pipeline_mode<synchronous>, transform_indices = @transform_2, window_bounds = array<i64: 16, 1>}, {transform_indices = @transform_3, window_bounds = array<i64: 1>}, {transform_indices = @transform_4, window_bounds = array<i64: 16, 512>}]} {
    %c0 = arith.constant 0 : index
    %c0_0 = arith.constant 0 : index
    %0 = vector.load %arg2[%c0, %c0_0] : memref<16x400xbf16, #tpu.memory_space<vmem>>, vector<16x400xbf16>
    %c0_1 = arith.constant 0 : index
    %c0_2 = arith.constant 0 : index
    %1 = vector.load %arg1[%c0_1, %c0_2] : memref<400x512xbf16, #tpu.memory_space<vmem>>, vector<400x512xbf16>
    %cst = arith.constant dense<0.000000e+00> : vector<16x512xf32>
    %2 = tpu.matmul %0, %1, %cst {dimension_numbers = #tpu.dot_dimension_numbers<[1], [0], [0], [1], [0, 0, 1, 1], [], []>} : vector<16x400xbf16>, vector<400x512xbf16>, vector<16x512xf32> -> vector<16x512xf32>
    %c0_3 = arith.constant 0 : index
    %c0_4 = arith.constant 0 : index
    %3 = vector.load %arg3[%c0_3, %c0_4] : memref<16x1xf32, #tpu.memory_space<vmem>>, vector<16x1xf32>
    %4 = vector.broadcast %3 : vector<16x1xf32> to vector<16x512xf32>
    %5 = arith.addf %2, %4 : vector<16x512xf32>
    %c0_5 = arith.constant 0 : index
    %6 = memref.load %arg4[%c0_5] : memref<1xf32, #tpu.memory_space<smem>>
    %cst_6 = arith.constant 0.000000e+00 : f32
    %7 = vector.broadcast %cst_6 : f32 to vector<16x512xf32>
    %8 = arith.cmpf ogt, %5, %7 : vector<16x512xf32>
    %9 = vector.broadcast %6 : f32 to vector<16x512xf32>
    %10 = arith.mulf %9, %5 : vector<16x512xf32>
    %11 = arith.select %8, %5, %10 : vector<16x512xi1>, vector<16x512xf32>
    %12 = arith.truncf %11 : vector<16x512xf32> to vector<16x512xbf16>
    %c0_7 = arith.constant 0 : index
    %c0_8 = arith.constant 0 : index
    %13 = vector.load %arg5[%c0_7, %c0_8] : memref<16x512xbf16, #tpu.memory_space<vmem>>, vector<16x512xbf16>
    tpu.vector_store %arg5[%c0_7, %c0_8], %12 {strides = array<i32>} : memref<16x512xbf16, #tpu.memory_space<vmem>>, vector<16x512xbf16>,
    return
  }
  func.func @transform_0(%arg0: i32) -> (i32, i32) {
    %c0_i32 = arith.constant 0 : i32
    %c0_i32_0 = arith.constant 0 : i32
    return %c0_i32, %arg0 : i32, i32
  }
  func.func @transform_1(%arg0: i32) -> (i32, i32) {
    %c0_i32 = arith.constant 0 : i32
    %c0_i32_0 = arith.constant 0 : i32
    %c0_i32_1 = arith.constant 0 : i32
    return %c0_i32, %c0_i32_0 : i32, i32
  }
  func.func @transform_2(%arg0: i32) -> (i32, i32) {
    %c0_i32 = arith.constant 0 : i32
    %c0_i32_0 = arith.constant 0 : i32
    %c0_i32_1 = arith.constant 0 : i32
    return %c0_i32, %c0_i32_0 : i32, i32
  }
  func.func @transform_3(%arg0: i32) -> i32 {
    %c0_i32 = arith.constant 0 : i32
    %c0_i32_0 = arith.constant 0 : i32
    return %c0_i32 : i32
  }
  func.func @transform_4(%arg0: i32) -> (i32, i32) {
    %c0_i32 = arith.constant 0 : i32
    %c0_i32_0 = arith.constant 0 : i32
    return %c0_i32, %arg0 : i32, i32
  }
}

module attributes {stable_mosaic.version = 11 : i64} {
  func.func @_max4_kernel(%arg0: memref<64x128xbf16, #tpu.memory_space<vmem>>, %arg1: memref<64x128xbf16, #tpu.memory_space<vmem>>, %arg2: memref<64x128xbf16, #tpu.memory_space<vmem>>, %arg3: memref<64x128xbf16, #tpu.memory_space<vmem>>, %arg4: memref<64x128xbf16, #tpu.memory_space<vmem>>) attributes {dimension_semantics = [], scalar_prefetch = 0 : i64, scratch_operands = 0 : i64, tpu.core_type = #tpu.core_type<tc>} {
    %c0 = arith.constant 0 : index
    %c0_0 = arith.constant 0 : index
    %0 = vector.load %arg0[%c0, %c0_0] : memref<64x128xbf16, #tpu.memory_space<vmem>>, vector<64x128xbf16>
    %c0_1 = arith.constant 0 : index
    %c0_2 = arith.constant 0 : index
    %1 = vector.load %arg1[%c0_1, %c0_2] : memref<64x128xbf16, #tpu.memory_space<vmem>>, vector<64x128xbf16>
    %2 = arith.maximumf %0, %1 : vector<64x128xbf16>
    %c0_3 = arith.constant 0 : index
    %c0_4 = arith.constant 0 : index
    %3 = vector.load %arg2[%c0_3, %c0_4] : memref<64x128xbf16, #tpu.memory_space<vmem>>, vector<64x128xbf16>
    %c0_5 = arith.constant 0 : index
    %c0_6 = arith.constant 0 : index
    %4 = vector.load %arg3[%c0_5, %c0_6] : memref<64x128xbf16, #tpu.memory_space<vmem>>, vector<64x128xbf16>
    %5 = arith.maximumf %3, %4 : vector<64x128xbf16>
    %6 = arith.maximumf %2, %5 : vector<64x128xbf16>
    %c0_7 = arith.constant 0 : index
    %c0_8 = arith.constant 0 : index
    %7 = vector.load %arg4[%c0_7, %c0_8] : memref<64x128xbf16, #tpu.memory_space<vmem>>, vector<64x128xbf16>
    tpu.vector_store %arg4[%c0_7, %c0_8], %6 {strides = array<i32>} : memref<64x128xbf16, #tpu.memory_space<vmem>>, vector<64x128xbf16>,
    return
  }
}

module attributes {stable_mosaic.version = 11 : i64} {
  func.func @_gemm_t_prelu_kernel(%arg0: i32, %arg1: memref<144x256xbf16, #tpu.memory_space<vmem>>, %arg2: memref<32x144xbf16, #tpu.memory_space<vmem>>, %arg3: memref<32x1xf32, #tpu.memory_space<vmem>>, %arg4: memref<1xf32, #tpu.memory_space<smem>>, %arg5: memref<32x256xbf16, #tpu.memory_space<vmem>>) attributes {dimension_semantics = [#tpu.dimension_semantics<parallel>], iteration_bounds = array<i64: 2>, scalar_prefetch = 0 : i64, scratch_operands = 0 : i64, tpu.core_type = #tpu.core_type<tc>, window_params = [{transform_indices = @transform_0, window_bounds = array<i64: 144, 256>}, {pipeline_mode = #tpu.pipeline_mode<synchronous>, transform_indices = @transform_1, window_bounds = array<i64: 32, 144>}, {pipeline_mode = #tpu.pipeline_mode<synchronous>, transform_indices = @transform_2, window_bounds = array<i64: 32, 1>}, {transform_indices = @transform_3, window_bounds = array<i64: 1>}, {transform_indices = @transform_4, window_bounds = array<i64: 32, 256>}]} {
    %c0 = arith.constant 0 : index
    %c0_0 = arith.constant 0 : index
    %0 = vector.load %arg2[%c0, %c0_0] : memref<32x144xbf16, #tpu.memory_space<vmem>>, vector<32x144xbf16>
    %c0_1 = arith.constant 0 : index
    %c0_2 = arith.constant 0 : index
    %1 = vector.load %arg1[%c0_1, %c0_2] : memref<144x256xbf16, #tpu.memory_space<vmem>>, vector<144x256xbf16>
    %cst = arith.constant dense<0.000000e+00> : vector<32x256xf32>
    %2 = tpu.matmul %0, %1, %cst {dimension_numbers = #tpu.dot_dimension_numbers<[1], [0], [0], [1], [0, 0, 1, 1], [], []>} : vector<32x144xbf16>, vector<144x256xbf16>, vector<32x256xf32> -> vector<32x256xf32>
    %c0_3 = arith.constant 0 : index
    %c0_4 = arith.constant 0 : index
    %3 = vector.load %arg3[%c0_3, %c0_4] : memref<32x1xf32, #tpu.memory_space<vmem>>, vector<32x1xf32>
    %4 = vector.broadcast %3 : vector<32x1xf32> to vector<32x256xf32>
    %5 = arith.addf %2, %4 : vector<32x256xf32>
    %c0_5 = arith.constant 0 : index
    %6 = memref.load %arg4[%c0_5] : memref<1xf32, #tpu.memory_space<smem>>
    %cst_6 = arith.constant 0.000000e+00 : f32
    %7 = vector.broadcast %cst_6 : f32 to vector<32x256xf32>
    %8 = arith.cmpf ogt, %5, %7 : vector<32x256xf32>
    %9 = vector.broadcast %6 : f32 to vector<32x256xf32>
    %10 = arith.mulf %9, %5 : vector<32x256xf32>
    %11 = arith.select %8, %5, %10 : vector<32x256xi1>, vector<32x256xf32>
    %12 = arith.truncf %11 : vector<32x256xf32> to vector<32x256xbf16>
    %c0_7 = arith.constant 0 : index
    %c0_8 = arith.constant 0 : index
    %13 = vector.load %arg5[%c0_7, %c0_8] : memref<32x256xbf16, #tpu.memory_space<vmem>>, vector<32x256xbf16>
    tpu.vector_store %arg5[%c0_7, %c0_8], %12 {strides = array<i32>} : memref<32x256xbf16, #tpu.memory_space<vmem>>, vector<32x256xbf16>,
    return
  }
  func.func @transform_0(%arg0: i32) -> (i32, i32) {
    %c0_i32 = arith.constant 0 : i32
    %c0_i32_0 = arith.constant 0 : i32
    return %c0_i32, %arg0 : i32, i32
  }
  func.func @transform_1(%arg0: i32) -> (i32, i32) {
    %c0_i32 = arith.constant 0 : i32
    %c0_i32_0 = arith.constant 0 : i32
    %c0_i32_1 = arith.constant 0 : i32
    return %c0_i32, %c0_i32_0 : i32, i32
  }
  func.func @transform_2(%arg0: i32) -> (i32, i32) {
    %c0_i32 = arith.constant 0 : i32
    %c0_i32_0 = arith.constant 0 : i32
    %c0_i32_1 = arith.constant 0 : i32
    return %c0_i32, %c0_i32_0 : i32, i32
  }
  func.func @transform_3(%arg0: i32) -> i32 {
    %c0_i32 = arith.constant 0 : i32
    %c0_i32_0 = arith.constant 0 : i32
    return %c0_i32 : i32
  }
  func.func @transform_4(%arg0: i32) -> (i32, i32) {
    %c0_i32 = arith.constant 0 : i32
    %c0_i32_0 = arith.constant 0 : i32
    return %c0_i32, %arg0 : i32, i32
  }
}

module attributes {stable_mosaic.version = 11 : i64} {
  func.func @_gemm_t_prelu_kernel(%arg0: i32, %arg1: memref<288x256xbf16, #tpu.memory_space<vmem>>, %arg2: memref<32x288xbf16, #tpu.memory_space<vmem>>, %arg3: memref<32x1xf32, #tpu.memory_space<vmem>>, %arg4: memref<1xf32, #tpu.memory_space<smem>>, %arg5: memref<32x256xbf16, #tpu.memory_space<vmem>>) attributes {dimension_semantics = [#tpu.dimension_semantics<parallel>], iteration_bounds = array<i64: 2>, scalar_prefetch = 0 : i64, scratch_operands = 0 : i64, tpu.core_type = #tpu.core_type<tc>, window_params = [{transform_indices = @transform_0, window_bounds = array<i64: 288, 256>}, {pipeline_mode = #tpu.pipeline_mode<synchronous>, transform_indices = @transform_1, window_bounds = array<i64: 32, 288>}, {pipeline_mode = #tpu.pipeline_mode<synchronous>, transform_indices = @transform_2, window_bounds = array<i64: 32, 1>}, {transform_indices = @transform_3, window_bounds = array<i64: 1>}, {transform_indices = @transform_4, window_bounds = array<i64: 32, 256>}]} {
    %c0 = arith.constant 0 : index
    %c0_0 = arith.constant 0 : index
    %0 = vector.load %arg2[%c0, %c0_0] : memref<32x288xbf16, #tpu.memory_space<vmem>>, vector<32x288xbf16>
    %c0_1 = arith.constant 0 : index
    %c0_2 = arith.constant 0 : index
    %1 = vector.load %arg1[%c0_1, %c0_2] : memref<288x256xbf16, #tpu.memory_space<vmem>>, vector<288x256xbf16>
    %cst = arith.constant dense<0.000000e+00> : vector<32x256xf32>
    %2 = tpu.matmul %0, %1, %cst {dimension_numbers = #tpu.dot_dimension_numbers<[1], [0], [0], [1], [0, 0, 1, 1], [], []>} : vector<32x288xbf16>, vector<288x256xbf16>, vector<32x256xf32> -> vector<32x256xf32>
    %c0_3 = arith.constant 0 : index
    %c0_4 = arith.constant 0 : index
    %3 = vector.load %arg3[%c0_3, %c0_4] : memref<32x1xf32, #tpu.memory_space<vmem>>, vector<32x1xf32>
    %4 = vector.broadcast %3 : vector<32x1xf32> to vector<32x256xf32>
    %5 = arith.addf %2, %4 : vector<32x256xf32>
    %c0_5 = arith.constant 0 : index
    %6 = memref.load %arg4[%c0_5] : memref<1xf32, #tpu.memory_space<smem>>
    %cst_6 = arith.constant 0.000000e+00 : f32
    %7 = vector.broadcast %cst_6 : f32 to vector<32x256xf32>
    %8 = arith.cmpf ogt, %5, %7 : vector<32x256xf32>
    %9 = vector.broadcast %6 : f32 to vector<32x256xf32>
    %10 = arith.mulf %9, %5 : vector<32x256xf32>
    %11 = arith.select %8, %5, %10 : vector<32x256xi1>, vector<32x256xf32>
    %12 = arith.truncf %11 : vector<32x256xf32> to vector<32x256xbf16>
    %c0_7 = arith.constant 0 : index
    %c0_8 = arith.constant 0 : index
    %13 = vector.load %arg5[%c0_7, %c0_8] : memref<32x256xbf16, #tpu.memory_space<vmem>>, vector<32x256xbf16>
    tpu.vector_store %arg5[%c0_7, %c0_8], %12 {strides = array<i32>} : memref<32x256xbf16, #tpu.memory_space<vmem>>, vector<32x256xbf16>,
    return
  }
  func.func @transform_0(%arg0: i32) -> (i32, i32) {
    %c0_i32 = arith.constant 0 : i32
    %c0_i32_0 = arith.constant 0 : i32
    return %c0_i32, %arg0 : i32, i32
  }
  func.func @transform_1(%arg0: i32) -> (i32, i32) {
    %c0_i32 = arith.constant 0 : i32
    %c0_i32_0 = arith.constant 0 : i32
    %c0_i32_1 = arith.constant 0 : i32
    return %c0_i32, %c0_i32_0 : i32, i32
  }
  func.func @transform_2(%arg0: i32) -> (i32, i32) {
    %c0_i32 = arith.constant 0 : i32
    %c0_i32_0 = arith.constant 0 : i32
    %c0_i32_1 = arith.constant 0 : i32
    return %c0_i32, %c0_i32_0 : i32, i32
  }
  func.func @transform_3(%arg0: i32) -> i32 {
    %c0_i32 = arith.constant 0 : i32
    %c0_i32_0 = arith.constant 0 : i32
    return %c0_i32 : i32
  }
  func.func @transform_4(%arg0: i32) -> (i32, i32) {
    %c0_i32 = arith.constant 0 : i32
    %c0_i32_0 = arith.constant 0 : i32
    return %c0_i32, %arg0 : i32, i32
  }
}

module attributes {stable_mosaic.version = 11 : i64} {
  func.func @_max4_kernel(%arg0: memref<32x128xbf16, #tpu.memory_space<vmem>>, %arg1: memref<32x128xbf16, #tpu.memory_space<vmem>>, %arg2: memref<32x128xbf16, #tpu.memory_space<vmem>>, %arg3: memref<32x128xbf16, #tpu.memory_space<vmem>>, %arg4: memref<32x128xbf16, #tpu.memory_space<vmem>>) attributes {dimension_semantics = [], scalar_prefetch = 0 : i64, scratch_operands = 0 : i64, tpu.core_type = #tpu.core_type<tc>} {
    %c0 = arith.constant 0 : index
    %c0_0 = arith.constant 0 : index
    %0 = vector.load %arg0[%c0, %c0_0] : memref<32x128xbf16, #tpu.memory_space<vmem>>, vector<32x128xbf16>
    %c0_1 = arith.constant 0 : index
    %c0_2 = arith.constant 0 : index
    %1 = vector.load %arg1[%c0_1, %c0_2] : memref<32x128xbf16, #tpu.memory_space<vmem>>, vector<32x128xbf16>
    %2 = arith.maximumf %0, %1 : vector<32x128xbf16>
    %c0_3 = arith.constant 0 : index
    %c0_4 = arith.constant 0 : index
    %3 = vector.load %arg2[%c0_3, %c0_4] : memref<32x128xbf16, #tpu.memory_space<vmem>>, vector<32x128xbf16>
    %c0_5 = arith.constant 0 : index
    %c0_6 = arith.constant 0 : index
    %4 = vector.load %arg3[%c0_5, %c0_6] : memref<32x128xbf16, #tpu.memory_space<vmem>>, vector<32x128xbf16>
    %5 = arith.maximumf %3, %4 : vector<32x128xbf16>
    %6 = arith.maximumf %2, %5 : vector<32x128xbf16>
    %c0_7 = arith.constant 0 : index
    %c0_8 = arith.constant 0 : index
    %7 = vector.load %arg4[%c0_7, %c0_8] : memref<32x128xbf16, #tpu.memory_space<vmem>>, vector<32x128xbf16>
    tpu.vector_store %arg4[%c0_7, %c0_8], %6 {strides = array<i32>} : memref<32x128xbf16, #tpu.memory_space<vmem>>, vector<32x128xbf16>,
    return
  }
}

module attributes {stable_mosaic.version = 11 : i64} {
  func.func @_gemm_t_prelu_kernel(%arg0: i32, %arg1: memref<800x128xbf16, #tpu.memory_space<vmem>>, %arg2: memref<64x800xbf16, #tpu.memory_space<vmem>>, %arg3: memref<64x1xf32, #tpu.memory_space<vmem>>, %arg4: memref<1xf32, #tpu.memory_space<smem>>, %arg5: memref<64x128xbf16, #tpu.memory_space<vmem>>) attributes {dimension_semantics = [#tpu.dimension_semantics<parallel>], iteration_bounds = array<i64: 1>, scalar_prefetch = 0 : i64, scratch_operands = 0 : i64, tpu.core_type = #tpu.core_type<tc>, window_params = [{transform_indices = @transform_0, window_bounds = array<i64: 800, 128>}, {pipeline_mode = #tpu.pipeline_mode<synchronous>, transform_indices = @transform_1, window_bounds = array<i64: 64, 800>}, {pipeline_mode = #tpu.pipeline_mode<synchronous>, transform_indices = @transform_2, window_bounds = array<i64: 64, 1>}, {transform_indices = @transform_3, window_bounds = array<i64: 1>}, {transform_indices = @transform_4, window_bounds = array<i64: 64, 128>}]} {
    %c0 = arith.constant 0 : index
    %c0_0 = arith.constant 0 : index
    %0 = vector.load %arg2[%c0, %c0_0] : memref<64x800xbf16, #tpu.memory_space<vmem>>, vector<64x800xbf16>
    %c0_1 = arith.constant 0 : index
    %c0_2 = arith.constant 0 : index
    %1 = vector.load %arg1[%c0_1, %c0_2] : memref<800x128xbf16, #tpu.memory_space<vmem>>, vector<800x128xbf16>
    %cst = arith.constant dense<0.000000e+00> : vector<64x128xf32>
    %2 = tpu.matmul %0, %1, %cst {dimension_numbers = #tpu.dot_dimension_numbers<[1], [0], [0], [1], [0, 0, 1, 1], [], []>} : vector<64x800xbf16>, vector<800x128xbf16>, vector<64x128xf32> -> vector<64x128xf32>
    %c0_3 = arith.constant 0 : index
    %c0_4 = arith.constant 0 : index
    %3 = vector.load %arg3[%c0_3, %c0_4] : memref<64x1xf32, #tpu.memory_space<vmem>>, vector<64x1xf32>
    %4 = vector.broadcast %3 : vector<64x1xf32> to vector<64x128xf32>
    %5 = arith.addf %2, %4 : vector<64x128xf32>
    %c0_5 = arith.constant 0 : index
    %6 = memref.load %arg4[%c0_5] : memref<1xf32, #tpu.memory_space<smem>>
    %cst_6 = arith.constant 0.000000e+00 : f32
    %7 = vector.broadcast %cst_6 : f32 to vector<64x128xf32>
    %8 = arith.cmpf ogt, %5, %7 : vector<64x128xf32>
    %9 = vector.broadcast %6 : f32 to vector<64x128xf32>
    %10 = arith.mulf %9, %5 : vector<64x128xf32>
    %11 = arith.select %8, %5, %10 : vector<64x128xi1>, vector<64x128xf32>
    %12 = arith.truncf %11 : vector<64x128xf32> to vector<64x128xbf16>
    %c0_7 = arith.constant 0 : index
    %c0_8 = arith.constant 0 : index
    %13 = vector.load %arg5[%c0_7, %c0_8] : memref<64x128xbf16, #tpu.memory_space<vmem>>, vector<64x128xbf16>
    tpu.vector_store %arg5[%c0_7, %c0_8], %12 {strides = array<i32>} : memref<64x128xbf16, #tpu.memory_space<vmem>>, vector<64x128xbf16>,
    return
  }
  func.func @transform_0(%arg0: i32) -> (i32, i32) {
    %c0_i32 = arith.constant 0 : i32
    %c0_i32_0 = arith.constant 0 : i32
    return %c0_i32, %arg0 : i32, i32
  }
  func.func @transform_1(%arg0: i32) -> (i32, i32) {
    %c0_i32 = arith.constant 0 : i32
    %c0_i32_0 = arith.constant 0 : i32
    %c0_i32_1 = arith.constant 0 : i32
    return %c0_i32, %c0_i32_0 : i32, i32
  }
  func.func @transform_2(%arg0: i32) -> (i32, i32) {
    %c0_i32 = arith.constant 0 : i32
    %c0_i32_0 = arith.constant 0 : i32
    %c0_i32_1 = arith.constant 0 : i32
    return %c0_i32, %c0_i32_0 : i32, i32
  }
  func.func @transform_3(%arg0: i32) -> i32 {
    %c0_i32 = arith.constant 0 : i32
    %c0_i32_0 = arith.constant 0 : i32
    return %c0_i32 : i32
  }
  func.func @transform_4(%arg0: i32) -> (i32, i32) {
    %c0_i32 = arith.constant 0 : i32
    %c0_i32_0 = arith.constant 0 : i32
    return %c0_i32, %arg0 : i32, i32
  }
}

module attributes {stable_mosaic.version = 11 : i64} {
  func.func @_gemm_t_prelu_kernel(%arg0: i32, %arg1: memref<1600x128xbf16, #tpu.memory_space<vmem>>, %arg2: memref<64x1600xbf16, #tpu.memory_space<vmem>>, %arg3: memref<64x1xf32, #tpu.memory_space<vmem>>, %arg4: memref<1xf32, #tpu.memory_space<smem>>, %arg5: memref<64x128xbf16, #tpu.memory_space<vmem>>) attributes {dimension_semantics = [#tpu.dimension_semantics<parallel>], iteration_bounds = array<i64: 1>, scalar_prefetch = 0 : i64, scratch_operands = 0 : i64, tpu.core_type = #tpu.core_type<tc>, window_params = [{transform_indices = @transform_0, window_bounds = array<i64: 1600, 128>}, {pipeline_mode = #tpu.pipeline_mode<synchronous>, transform_indices = @transform_1, window_bounds = array<i64: 64, 1600>}, {pipeline_mode = #tpu.pipeline_mode<synchronous>, transform_indices = @transform_2, window_bounds = array<i64: 64, 1>}, {transform_indices = @transform_3, window_bounds = array<i64: 1>}, {transform_indices = @transform_4, window_bounds = array<i64: 64, 128>}]} {
    %c0 = arith.constant 0 : index
    %c0_0 = arith.constant 0 : index
    %0 = vector.load %arg2[%c0, %c0_0] : memref<64x1600xbf16, #tpu.memory_space<vmem>>, vector<64x1600xbf16>
    %c0_1 = arith.constant 0 : index
    %c0_2 = arith.constant 0 : index
    %1 = vector.load %arg1[%c0_1, %c0_2] : memref<1600x128xbf16, #tpu.memory_space<vmem>>, vector<1600x128xbf16>
    %cst = arith.constant dense<0.000000e+00> : vector<64x128xf32>
    %2 = tpu.matmul %0, %1, %cst {dimension_numbers = #tpu.dot_dimension_numbers<[1], [0], [0], [1], [0, 0, 1, 1], [], []>} : vector<64x1600xbf16>, vector<1600x128xbf16>, vector<64x128xf32> -> vector<64x128xf32>
    %c0_3 = arith.constant 0 : index
    %c0_4 = arith.constant 0 : index
    %3 = vector.load %arg3[%c0_3, %c0_4] : memref<64x1xf32, #tpu.memory_space<vmem>>, vector<64x1xf32>
    %4 = vector.broadcast %3 : vector<64x1xf32> to vector<64x128xf32>
    %5 = arith.addf %2, %4 : vector<64x128xf32>
    %c0_5 = arith.constant 0 : index
    %6 = memref.load %arg4[%c0_5] : memref<1xf32, #tpu.memory_space<smem>>
    %cst_6 = arith.constant 0.000000e+00 : f32
    %7 = vector.broadcast %cst_6 : f32 to vector<64x128xf32>
    %8 = arith.cmpf ogt, %5, %7 : vector<64x128xf32>
    %9 = vector.broadcast %6 : f32 to vector<64x128xf32>
    %10 = arith.mulf %9, %5 : vector<64x128xf32>
    %11 = arith.select %8, %5, %10 : vector<64x128xi1>, vector<64x128xf32>
    %12 = arith.truncf %11 : vector<64x128xf32> to vector<64x128xbf16>
    %c0_7 = arith.constant 0 : index
    %c0_8 = arith.constant 0 : index
    %13 = vector.load %arg5[%c0_7, %c0_8] : memref<64x128xbf16, #tpu.memory_space<vmem>>, vector<64x128xbf16>
    tpu.vector_store %arg5[%c0_7, %c0_8], %12 {strides = array<i32>} : memref<64x128xbf16, #tpu.memory_space<vmem>>, vector<64x128xbf16>,
    return
  }
  func.func @transform_0(%arg0: i32) -> (i32, i32) {
    %c0_i32 = arith.constant 0 : i32
    %c0_i32_0 = arith.constant 0 : i32
    return %c0_i32, %arg0 : i32, i32
  }
  func.func @transform_1(%arg0: i32) -> (i32, i32) {
    %c0_i32 = arith.constant 0 : i32
    %c0_i32_0 = arith.constant 0 : i32
    %c0_i32_1 = arith.constant 0 : i32
    return %c0_i32, %c0_i32_0 : i32, i32
  }
  func.func @transform_2(%arg0: i32) -> (i32, i32) {
    %c0_i32 = arith.constant 0 : i32
    %c0_i32_0 = arith.constant 0 : i32
    %c0_i32_1 = arith.constant 0 : i32
    return %c0_i32, %c0_i32_0 : i32, i32
  }
  func.func @transform_3(%arg0: i32) -> i32 {
    %c0_i32 = arith.constant 0 : i32
    %c0_i32_0 = arith.constant 0 : i32
    return %c0_i32 : i32
  }
  func.func @transform_4(%arg0: i32) -> (i32, i32) {
    %c0_i32 = arith.constant 0 : i32
    %c0_i32_0 = arith.constant 0 : i32
    return %c0_i32, %arg0 : i32, i32
  }
}

module attributes {stable_mosaic.version = 11 : i64} {
  func.func @_max4_kernel(%arg0: memref<16x128xbf16, #tpu.memory_space<vmem>>, %arg1: memref<16x128xbf16, #tpu.memory_space<vmem>>, %arg2: memref<16x128xbf16, #tpu.memory_space<vmem>>, %arg3: memref<16x128xbf16, #tpu.memory_space<vmem>>, %arg4: memref<16x128xbf16, #tpu.memory_space<vmem>>) attributes {dimension_semantics = [], scalar_prefetch = 0 : i64, scratch_operands = 0 : i64, tpu.core_type = #tpu.core_type<tc>} {
    %c0 = arith.constant 0 : index
    %c0_0 = arith.constant 0 : index
    %0 = vector.load %arg0[%c0, %c0_0] : memref<16x128xbf16, #tpu.memory_space<vmem>>, vector<16x128xbf16>
    %c0_1 = arith.constant 0 : index
    %c0_2 = arith.constant 0 : index
    %1 = vector.load %arg1[%c0_1, %c0_2] : memref<16x128xbf16, #tpu.memory_space<vmem>>, vector<16x128xbf16>
    %2 = arith.maximumf %0, %1 : vector<16x128xbf16>
    %c0_3 = arith.constant 0 : index
    %c0_4 = arith.constant 0 : index
    %3 = vector.load %arg2[%c0_3, %c0_4] : memref<16x128xbf16, #tpu.memory_space<vmem>>, vector<16x128xbf16>
    %c0_5 = arith.constant 0 : index
    %c0_6 = arith.constant 0 : index
    %4 = vector.load %arg3[%c0_5, %c0_6] : memref<16x128xbf16, #tpu.memory_space<vmem>>, vector<16x128xbf16>
    %5 = arith.maximumf %3, %4 : vector<16x128xbf16>
    %6 = arith.maximumf %2, %5 : vector<16x128xbf16>
    %c0_7 = arith.constant 0 : index
    %c0_8 = arith.constant 0 : index
    %7 = vector.load %arg4[%c0_7, %c0_8] : memref<16x128xbf16, #tpu.memory_space<vmem>>, vector<16x128xbf16>
    tpu.vector_store %arg4[%c0_7, %c0_8], %6 {strides = array<i32>} : memref<16x128xbf16, #tpu.memory_space<vmem>>, vector<16x128xbf16>,
    return
  }
}

module attributes {stable_mosaic.version = 11 : i64} {
  func.func @_gemm_t_prelu_kernel(%arg0: i32, %arg1: memref<576x128xbf16, #tpu.memory_space<vmem>>, %arg2: memref<128x576xbf16, #tpu.memory_space<vmem>>, %arg3: memref<128x1xf32, #tpu.memory_space<vmem>>, %arg4: memref<1xf32, #tpu.memory_space<smem>>, %arg5: memref<128x128xbf16, #tpu.memory_space<vmem>>) attributes {dimension_semantics = [#tpu.dimension_semantics<parallel>], iteration_bounds = array<i64: 1>, scalar_prefetch = 0 : i64, scratch_operands = 0 : i64, tpu.core_type = #tpu.core_type<tc>, window_params = [{transform_indices = @transform_0, window_bounds = array<i64: 576, 128>}, {pipeline_mode = #tpu.pipeline_mode<synchronous>, transform_indices = @transform_1, window_bounds = array<i64: 128, 576>}, {pipeline_mode = #tpu.pipeline_mode<synchronous>, transform_indices = @transform_2, window_bounds = array<i64: 128, 1>}, {transform_indices = @transform_3, window_bounds = array<i64: 1>}, {transform_indices = @transform_4, window_bounds = array<i64: 128, 128>}]} {
    %c0 = arith.constant 0 : index
    %c0_0 = arith.constant 0 : index
    %0 = vector.load %arg2[%c0, %c0_0] : memref<128x576xbf16, #tpu.memory_space<vmem>>, vector<128x576xbf16>
    %c0_1 = arith.constant 0 : index
    %c0_2 = arith.constant 0 : index
    %1 = vector.load %arg1[%c0_1, %c0_2] : memref<576x128xbf16, #tpu.memory_space<vmem>>, vector<576x128xbf16>
    %cst = arith.constant dense<0.000000e+00> : vector<128x128xf32>
    %2 = tpu.matmul %0, %1, %cst {dimension_numbers = #tpu.dot_dimension_numbers<[1], [0], [0], [1], [0, 0, 1, 1], [], []>} : vector<128x576xbf16>, vector<576x128xbf16>, vector<128x128xf32> -> vector<128x128xf32>
    %c0_3 = arith.constant 0 : index
    %c0_4 = arith.constant 0 : index
    %3 = vector.load %arg3[%c0_3, %c0_4] : memref<128x1xf32, #tpu.memory_space<vmem>>, vector<128x1xf32>
    %4 = vector.broadcast %3 : vector<128x1xf32> to vector<128x128xf32>
    %5 = arith.addf %2, %4 : vector<128x128xf32>
    %c0_5 = arith.constant 0 : index
    %6 = memref.load %arg4[%c0_5] : memref<1xf32, #tpu.memory_space<smem>>
    %cst_6 = arith.constant 0.000000e+00 : f32
    %7 = vector.broadcast %cst_6 : f32 to vector<128x128xf32>
    %8 = arith.cmpf ogt, %5, %7 : vector<128x128xf32>
    %9 = vector.broadcast %6 : f32 to vector<128x128xf32>
    %10 = arith.mulf %9, %5 : vector<128x128xf32>
    %11 = arith.select %8, %5, %10 : vector<128x128xi1>, vector<128x128xf32>
    %12 = arith.truncf %11 : vector<128x128xf32> to vector<128x128xbf16>
    %c0_7 = arith.constant 0 : index
    %c0_8 = arith.constant 0 : index
    %13 = vector.load %arg5[%c0_7, %c0_8] : memref<128x128xbf16, #tpu.memory_space<vmem>>, vector<128x128xbf16>
    tpu.vector_store %arg5[%c0_7, %c0_8], %12 {strides = array<i32>} : memref<128x128xbf16, #tpu.memory_space<vmem>>, vector<128x128xbf16>,
    return
  }
  func.func @transform_0(%arg0: i32) -> (i32, i32) {
    %c0_i32 = arith.constant 0 : i32
    %c0_i32_0 = arith.constant 0 : i32
    return %c0_i32, %arg0 : i32, i32
  }
  func.func @transform_1(%arg0: i32) -> (i32, i32) {
    %c0_i32 = arith.constant 0 : i32
    %c0_i32_0 = arith.constant 0 : i32
    %c0_i32_1 = arith.constant 0 : i32
    return %c0_i32, %c0_i32_0 : i32, i32
  }
  func.func @transform_2(%arg0: i32) -> (i32, i32) {
    %c0_i32 = arith.constant 0 : i32
    %c0_i32_0 = arith.constant 0 : i32
    %c0_i32_1 = arith.constant 0 : i32
    return %c0_i32, %c0_i32_0 : i32, i32
  }
  func.func @transform_3(%arg0: i32) -> i32 {
    %c0_i32 = arith.constant 0 : i32
    %c0_i32_0 = arith.constant 0 : i32
    return %c0_i32 : i32
  }
  func.func @transform_4(%arg0: i32) -> (i32, i32) {
    %c0_i32 = arith.constant 0 : i32
    %c0_i32_0 = arith.constant 0 : i32
    return %c0_i32, %arg0 : i32, i32
  }
}

module attributes {stable_mosaic.version = 11 : i64} {
  func.func @_gemm_t_prelu_kernel(%arg0: i32, %arg1: memref<1152x128xbf16, #tpu.memory_space<vmem>>, %arg2: memref<128x1152xbf16, #tpu.memory_space<vmem>>, %arg3: memref<128x1xf32, #tpu.memory_space<vmem>>, %arg4: memref<1xf32, #tpu.memory_space<smem>>, %arg5: memref<128x128xbf16, #tpu.memory_space<vmem>>) attributes {dimension_semantics = [#tpu.dimension_semantics<parallel>], iteration_bounds = array<i64: 1>, scalar_prefetch = 0 : i64, scratch_operands = 0 : i64, tpu.core_type = #tpu.core_type<tc>, window_params = [{transform_indices = @transform_0, window_bounds = array<i64: 1152, 128>}, {pipeline_mode = #tpu.pipeline_mode<synchronous>, transform_indices = @transform_1, window_bounds = array<i64: 128, 1152>}, {pipeline_mode = #tpu.pipeline_mode<synchronous>, transform_indices = @transform_2, window_bounds = array<i64: 128, 1>}, {transform_indices = @transform_3, window_bounds = array<i64: 1>}, {transform_indices = @transform_4, window_bounds = array<i64: 128, 128>}]} {
    %c0 = arith.constant 0 : index
    %c0_0 = arith.constant 0 : index
    %0 = vector.load %arg2[%c0, %c0_0] : memref<128x1152xbf16, #tpu.memory_space<vmem>>, vector<128x1152xbf16>
    %c0_1 = arith.constant 0 : index
    %c0_2 = arith.constant 0 : index
    %1 = vector.load %arg1[%c0_1, %c0_2] : memref<1152x128xbf16, #tpu.memory_space<vmem>>, vector<1152x128xbf16>
    %cst = arith.constant dense<0.000000e+00> : vector<128x128xf32>
    %2 = tpu.matmul %0, %1, %cst {dimension_numbers = #tpu.dot_dimension_numbers<[1], [0], [0], [1], [0, 0, 1, 1], [], []>} : vector<128x1152xbf16>, vector<1152x128xbf16>, vector<128x128xf32> -> vector<128x128xf32>
    %c0_3 = arith.constant 0 : index
    %c0_4 = arith.constant 0 : index
    %3 = vector.load %arg3[%c0_3, %c0_4] : memref<128x1xf32, #tpu.memory_space<vmem>>, vector<128x1xf32>
    %4 = vector.broadcast %3 : vector<128x1xf32> to vector<128x128xf32>
    %5 = arith.addf %2, %4 : vector<128x128xf32>
    %c0_5 = arith.constant 0 : index
    %6 = memref.load %arg4[%c0_5] : memref<1xf32, #tpu.memory_space<smem>>
    %cst_6 = arith.constant 0.000000e+00 : f32
    %7 = vector.broadcast %cst_6 : f32 to vector<128x128xf32>
    %8 = arith.cmpf ogt, %5, %7 : vector<128x128xf32>
    %9 = vector.broadcast %6 : f32 to vector<128x128xf32>
    %10 = arith.mulf %9, %5 : vector<128x128xf32>
    %11 = arith.select %8, %5, %10 : vector<128x128xi1>, vector<128x128xf32>
    %12 = arith.truncf %11 : vector<128x128xf32> to vector<128x128xbf16>
    %c0_7 = arith.constant 0 : index
    %c0_8 = arith.constant 0 : index
    %13 = vector.load %arg5[%c0_7, %c0_8] : memref<128x128xbf16, #tpu.memory_space<vmem>>, vector<128x128xbf16>
    tpu.vector_store %arg5[%c0_7, %c0_8], %12 {strides = array<i32>} : memref<128x128xbf16, #tpu.memory_space<vmem>>, vector<128x128xbf16>,
    return
  }
  func.func @transform_0(%arg0: i32) -> (i32, i32) {
    %c0_i32 = arith.constant 0 : i32
    %c0_i32_0 = arith.constant 0 : i32
    return %c0_i32, %arg0 : i32, i32
  }
  func.func @transform_1(%arg0: i32) -> (i32, i32) {
    %c0_i32 = arith.constant 0 : i32
    %c0_i32_0 = arith.constant 0 : i32
    %c0_i32_1 = arith.constant 0 : i32
    return %c0_i32, %c0_i32_0 : i32, i32
  }
  func.func @transform_2(%arg0: i32) -> (i32, i32) {
    %c0_i32 = arith.constant 0 : i32
    %c0_i32_0 = arith.constant 0 : i32
    %c0_i32_1 = arith.constant 0 : i32
    return %c0_i32, %c0_i32_0 : i32, i32
  }
  func.func @transform_3(%arg0: i32) -> i32 {
    %c0_i32 = arith.constant 0 : i32
    %c0_i32_0 = arith.constant 0 : i32
    return %c0_i32 : i32
  }
  func.func @transform_4(%arg0: i32) -> (i32, i32) {
    %c0_i32 = arith.constant 0 : i32
    %c0_i32_0 = arith.constant 0 : i32
    return %c0_i32, %arg0 : i32, i32
  }
}

module attributes {stable_mosaic.version = 11 : i64} {
  func.func @_max4_kernel(%arg0: memref<8x128xbf16, #tpu.memory_space<vmem>>, %arg1: memref<8x128xbf16, #tpu.memory_space<vmem>>, %arg2: memref<8x128xbf16, #tpu.memory_space<vmem>>, %arg3: memref<8x128xbf16, #tpu.memory_space<vmem>>, %arg4: memref<8x128xbf16, #tpu.memory_space<vmem>>) attributes {dimension_semantics = [], scalar_prefetch = 0 : i64, scratch_operands = 0 : i64, tpu.core_type = #tpu.core_type<tc>} {
    %c0 = arith.constant 0 : index
    %c0_0 = arith.constant 0 : index
    %0 = vector.load %arg0[%c0, %c0_0] : memref<8x128xbf16, #tpu.memory_space<vmem>>, vector<8x128xbf16>
    %c0_1 = arith.constant 0 : index
    %c0_2 = arith.constant 0 : index
    %1 = vector.load %arg1[%c0_1, %c0_2] : memref<8x128xbf16, #tpu.memory_space<vmem>>, vector<8x128xbf16>
    %2 = arith.maximumf %0, %1 : vector<8x128xbf16>
    %c0_3 = arith.constant 0 : index
    %c0_4 = arith.constant 0 : index
    %3 = vector.load %arg2[%c0_3, %c0_4] : memref<8x128xbf16, #tpu.memory_space<vmem>>, vector<8x128xbf16>
    %c0_5 = arith.constant 0 : index
    %c0_6 = arith.constant 0 : index
    %4 = vector.load %arg3[%c0_5, %c0_6] : memref<8x128xbf16, #tpu.memory_space<vmem>>, vector<8x128xbf16>
    %5 = arith.maximumf %3, %4 : vector<8x128xbf16>
    %6 = arith.maximumf %2, %5 : vector<8x128xbf16>
    %c0_7 = arith.constant 0 : index
    %c0_8 = arith.constant 0 : index
    %7 = vector.load %arg4[%c0_7, %c0_8] : memref<8x128xbf16, #tpu.memory_space<vmem>>, vector<8x128xbf16>
    tpu.vector_store %arg4[%c0_7, %c0_8], %6 {strides = array<i32>} : memref<8x128xbf16, #tpu.memory_space<vmem>>, vector<8x128xbf16>,
    return
  }
}

module attributes {stable_mosaic.version = 11 : i64} {
  func.func @_dense_tail_kernel(%arg0: memref<8x512xbf16, #tpu.memory_space<vmem>>, %arg1: memref<512x128xbf16, #tpu.memory_space<vmem>>, %arg2: memref<1x128xf32, #tpu.memory_space<vmem>>, %arg3: memref<128x64xbf16, #tpu.memory_space<vmem>>, %arg4: memref<1x64xf32, #tpu.memory_space<vmem>>, %arg5: memref<64x16xbf16, #tpu.memory_space<vmem>>, %arg6: memref<1x16xf32, #tpu.memory_space<vmem>>, %arg7: memref<16x10xbf16, #tpu.memory_space<vmem>>, %arg8: memref<1x10xf32, #tpu.memory_space<vmem>>, %arg9: memref<1xf32, #tpu.memory_space<smem>>, %arg10: memref<8x10xf32, #tpu.memory_space<vmem>>) attributes {dimension_semantics = [], scalar_prefetch = 0 : i64, scratch_operands = 0 : i64, tpu.core_type = #tpu.core_type<tc>} {
    %c0 = arith.constant 0 : index
    %0 = memref.load %arg9[%c0] : memref<1xf32, #tpu.memory_space<smem>>
    %c0_0 = arith.constant 0 : index
    %c0_1 = arith.constant 0 : index
    %1 = vector.load %arg0[%c0_0, %c0_1] : memref<8x512xbf16, #tpu.memory_space<vmem>>, vector<8x512xbf16>
    %c0_2 = arith.constant 0 : index
    %c0_3 = arith.constant 0 : index
    %2 = vector.load %arg1[%c0_2, %c0_3] : memref<512x128xbf16, #tpu.memory_space<vmem>>, vector<512x128xbf16>
    %cst = arith.constant dense<0.000000e+00> : vector<8x128xf32>
    %3 = tpu.matmul %1, %2, %cst {dimension_numbers = #tpu.dot_dimension_numbers<[1], [0], [0], [1], [0, 0, 1, 1], [], []>} : vector<8x512xbf16>, vector<512x128xbf16>, vector<8x128xf32> -> vector<8x128xf32>
    %c0_4 = arith.constant 0 : index
    %c0_5 = arith.constant 0 : index
    %4 = vector.load %arg2[%c0_4, %c0_5] : memref<1x128xf32, #tpu.memory_space<vmem>>, vector<1x128xf32>
    %5 = vector.broadcast %4 : vector<1x128xf32> to vector<8x128xf32>
    %6 = arith.addf %3, %5 : vector<8x128xf32>
    %cst_6 = arith.constant 0.000000e+00 : f32
    %7 = vector.broadcast %cst_6 : f32 to vector<8x128xf32>
    %8 = arith.cmpf ogt, %6, %7 : vector<8x128xf32>
    %9 = vector.broadcast %0 : f32 to vector<8x128xf32>
    %10 = arith.mulf %9, %6 : vector<8x128xf32>
    %11 = arith.select %8, %6, %10 : vector<8x128xi1>, vector<8x128xf32>
    %12 = arith.truncf %11 : vector<8x128xf32> to vector<8x128xbf16>
    %c0_7 = arith.constant 0 : index
    %c0_8 = arith.constant 0 : index
    %13 = vector.load %arg3[%c0_7, %c0_8] : memref<128x64xbf16, #tpu.memory_space<vmem>>, vector<128x64xbf16>
    %cst_9 = arith.constant dense<0.000000e+00> : vector<8x64xf32>
    %14 = tpu.matmul %12, %13, %cst_9 {dimension_numbers = #tpu.dot_dimension_numbers<[1], [0], [0], [1], [0, 0, 1, 1], [], []>} : vector<8x128xbf16>, vector<128x64xbf16>, vector<8x64xf32> -> vector<8x64xf32>
    %c0_10 = arith.constant 0 : index
    %c0_11 = arith.constant 0 : index
    %15 = vector.load %arg4[%c0_10, %c0_11] : memref<1x64xf32, #tpu.memory_space<vmem>>, vector<1x64xf32>
    %16 = vector.broadcast %15 : vector<1x64xf32> to vector<8x64xf32>
    %17 = arith.addf %14, %16 : vector<8x64xf32>
    %cst_12 = arith.constant 0.000000e+00 : f32
    %18 = vector.broadcast %cst_12 : f32 to vector<8x64xf32>
    %19 = arith.cmpf ogt, %17, %18 : vector<8x64xf32>
    %20 = vector.broadcast %0 : f32 to vector<8x64xf32>
    %21 = arith.mulf %20, %17 : vector<8x64xf32>
    %22 = arith.select %19, %17, %21 : vector<8x64xi1>, vector<8x64xf32>
    %23 = arith.truncf %22 : vector<8x64xf32> to vector<8x64xbf16>
    %c0_13 = arith.constant 0 : index
    %c0_14 = arith.constant 0 : index
    %24 = vector.load %arg5[%c0_13, %c0_14] : memref<64x16xbf16, #tpu.memory_space<vmem>>, vector<64x16xbf16>
    %cst_15 = arith.constant dense<0.000000e+00> : vector<8x16xf32>
    %25 = tpu.matmul %23, %24, %cst_15 {dimension_numbers = #tpu.dot_dimension_numbers<[1], [0], [0], [1], [0, 0, 1, 1], [], []>} : vector<8x64xbf16>, vector<64x16xbf16>, vector<8x16xf32> -> vector<8x16xf32>
    %c0_16 = arith.constant 0 : index
    %c0_17 = arith.constant 0 : index
    %26 = vector.load %arg6[%c0_16, %c0_17] : memref<1x16xf32, #tpu.memory_space<vmem>>, vector<1x16xf32>
    %27 = vector.broadcast %26 : vector<1x16xf32> to vector<8x16xf32>
    %28 = arith.addf %25, %27 : vector<8x16xf32>
    %cst_18 = arith.constant 0.000000e+00 : f32
    %29 = vector.broadcast %cst_18 : f32 to vector<8x16xf32>
    %30 = arith.cmpf ogt, %28, %29 : vector<8x16xf32>
    %31 = vector.broadcast %0 : f32 to vector<8x16xf32>
    %32 = arith.mulf %31, %28 : vector<8x16xf32>
    %33 = arith.select %30, %28, %32 : vector<8x16xi1>, vector<8x16xf32>
    %34 = arith.truncf %33 : vector<8x16xf32> to vector<8x16xbf16>
    %c0_19 = arith.constant 0 : index
    %c0_20 = arith.constant 0 : index
    %35 = vector.load %arg7[%c0_19, %c0_20] : memref<16x10xbf16, #tpu.memory_space<vmem>>, vector<16x10xbf16>
    %cst_21 = arith.constant dense<0.000000e+00> : vector<8x10xf32>
    %36 = tpu.matmul %34, %35, %cst_21 {dimension_numbers = #tpu.dot_dimension_numbers<[1], [0], [0], [1], [0, 0, 1, 1], [], []>} : vector<8x16xbf16>, vector<16x10xbf16>, vector<8x10xf32> -> vector<8x10xf32>
    %c0_22 = arith.constant 0 : index
    %c0_23 = arith.constant 0 : index
    %37 = vector.load %arg8[%c0_22, %c0_23] : memref<1x10xf32, #tpu.memory_space<vmem>>, vector<1x10xf32>
    %38 = vector.broadcast %37 : vector<1x10xf32> to vector<8x10xf32>
    %39 = arith.addf %36, %38 : vector<8x10xf32>
    %c0_24 = arith.constant 0 : index
    %c0_25 = arith.constant 0 : index
    %40 = vector.load %arg10[%c0_24, %c0_25] : memref<8x10xf32, #tpu.memory_space<vmem>>, vector<8x10xf32>
    tpu.vector_store %arg10[%c0_24, %c0_25], %39 {strides = array<i32>} : memref<8x10xf32, #tpu.memory_space<vmem>>, vector<8x10xf32>,
    return
  }
}

</mosaic_0001>

<llo_original>
// kernel: _cnn_forward.13
$region0: #{_cnn_forward.13}
  #allocation0 [shape = 'u32[]', space=smem, size = 0x4, offset = 0x4, fixed_abs, tag = 'smem constant byte address 0x4 - core index']
  #allocation1 [shape = 'u32[144,128]{1,0:T(1,128)}', space=vmem, size = 0x12000, scoped, tag = 'internal scratch']
  #allocation2 [shape = 'f32[1]{0:T(128)S(6)}', space=smem, size = 0x200, scoped, tag = 'scoped memory for _cnn_forward.13']
  %s0 = inlined_call_operand.vmem [shape: bf16[25,2048], index: 0, kind: input, shape index: {}]
  %s1 = inlined_call_operand.vmem [shape: bf16[16,25], index: 1, kind: input, shape index: {}]
  %s2 = inlined_call_operand.vmem [shape: f32[16,1], index: 2, kind: input, shape index: {}]
  %s3 = inlined_call_operand.<no memory space> [shape: f32[1], index: 3, kind: input, shape index: {}]
  %s4 = inlined_call_operand.vmem [shape: bf16[16,2048], index: 4, kind: output, shape index: {}]
  %s5 = sld [smem:[#allocation0]]
  $region91: #{_cnn_forward.13} parent=0
    _
  %s7 = ssub.s32 1, %s5
  %s8 = scalar_select 0, %s7, %s5
  %9 = sst [smem:[#allocation2]] %s3
  $region1: #{_cnn_forward.13} parent=0
    #allocation3 [shape = 'u8[65536]{0}', space=vmem, size = 0x10000, scoped, tag = 'input window, operand 0']
    #allocation4 [shape = 'u8[32768]{0}', space=vmem, size = 0x8000, scoped, tag = 'output window, operand 0']
    loop: start=0, step=1, limit=6
    $region2: #{_cnn_forward.13} parent=1 // loop_pre_header
      _
    $region3: #{_cnn_forward.13} parent=1 // loop_header
      %s11 = sphi 0, %s15
      %p12 = scmp.ge.s32.totalorder %s11, 6
      %s21 = sphi 0, %s23
      %s24 = sphi 0, %s21
      %s25 = sphi 0, %s24
      %s41 = sphi 0, %s25
      %s45 = sphi 0, %s45
      %s47 = sphi 0, %s45
      %s48 = sphi 0, %s47
      %s62 = sphi 0, %s48
      %s66 = sphi 0, %s66
      %s68 = sphi 0, %s66
      %s69 = sphi 0, %s68
      %s83 = sphi 0, %s69
      %s87 = sphi 0, %s87
      %s89 = sphi 0, %s87
      %s90 = sphi 0, %s89
      %s104 = sphi 0, %s90
      %s110 = sphi 0, %s112
      %s113 = sphi 0, %s110
      %s114 = sphi 0, %s113
      %s130 = sphi 0, %s114
    $region4: #{_cnn_forward.13} parent=1 // loop_header_branch
      %14 = sbr.rel (%p12) target = $region8
    $region5: #{_cnn_forward.13} parent=1 // loop_body
      %s16 = ssub.s32 %s11, 1
      %s17 = ssub.s32 %s11, 2
      %s18 = sadd.s32 %s11, 1
      %s19 = ssub.s32 %s11, %s18
      %p20 = scmp.eq.s32.totalorder %s19, 0
      %s22 = sadd.s32 %s21, 1
      %s23 = scalar_select %p20, %s21, %s22
      %p26 = pneg %p20
      %p27 = scmp.eq.s32.totalorder %s11, 3
      %p28 = por %p26, %p27
      %p29 = scmp.ne.s32.totalorder %s21, %s24
      %p30 = scmp.eq.s32.totalorder %s11, 0
      %p31 = por %p29, %p30
      %p32 = scmp.ne.s32.totalorder %s21, %s24
      %p33 = scmp.eq.s32.totalorder %s16, 3
      %p34 = por %p32, %p33
      %p35 = scmp.ne.s32.totalorder %s24, %s25
      %p36 = scmp.eq.s32.totalorder %s16, 0
      %p37 = por %p35, %p36
      %p38 = scmp.ne.s32.totalorder %s24, %s25
      %p39 = scmp.eq.s32.totalorder %s17, 3
      %p40 = por %p38, %p39
      %p42 = scmp.ne.s32.totalorder %s25, %s41
      %p43 = scmp.eq.s32.totalorder %s17, 0
      %p44 = por %p42, %p43
      %s46 = sadd.s32 %s45, 1
      %p49 = scmp.eq.s32.totalorder %s11, 3
      %p50 = scmp.ne.s32.totalorder %s45, %s47
      %p51 = scmp.eq.s32.totalorder %s11, 0
      %p52 = por %p50, %p51
      %p53 = scmp.ne.s32.totalorder %s45, %s47
      %p54 = scmp.eq.s32.totalorder %s16, 3
      %p55 = por %p53, %p54
      %p56 = scmp.ne.s32.totalorder %s47, %s48
      %p57 = scmp.eq.s32.totalorder %s16, 0
      %p58 = por %p56, %p57
      %p59 = scmp.ne.s32.totalorder %s47, %s48
      %p60 = scmp.eq.s32.totalorder %s17, 3
      %p61 = por %p59, %p60
      %p63 = scmp.ne.s32.totalorder %s48, %s62
      %p64 = scmp.eq.s32.totalorder %s17, 0
      %p65 = por %p63, %p64
      %s67 = sadd.s32 %s66, 1
      %p70 = scmp.eq.s32.totalorder %s11, 3
      %p71 = scmp.ne.s32.totalorder %s66, %s68
      %p72 = scmp.eq.s32.totalorder %s11, 0
      %p73 = por %p71, %p72
      %p74 = scmp.ne.s32.totalorder %s66, %s68
      %p75 = scmp.eq.s32.totalorder %s16, 3
      %p76 = por %p74, %p75
      %p77 = scmp.ne.s32.totalorder %s68, %s69
      %p78 = scmp.eq.s32.totalorder %s16, 0
      %p79 = por %p77, %p78
      %p80 = scmp.ne.s32.totalorder %s68, %s69
      %p81 = scmp.eq.s32.totalorder %s17, 3
      %p82 = por %p80, %p81
      %p84 = scmp.ne.s32.totalorder %s69, %s83
      %p85 = scmp.eq.s32.totalorder %s17, 0
      %p86 = por %p84, %p85
      %s88 = sadd.s32 %s87, 1
      %p91 = scmp.eq.s32.totalorder %s11, 3
      %p92 = scmp.ne.s32.totalorder %s87, %s89
      %p93 = scmp.eq.s32.totalorder %s11, 0
      %p94 = por %p92, %p93
      %p95 = scmp.ne.s32.totalorder %s87, %s89
      %p96 = scmp.eq.s32.totalorder %s16, 3
      %p97 = por %p95, %p96
      %p98 = scmp.ne.s32.totalorder %s89, %s90
      %p99 = scmp.eq.s32.totalorder %s16, 0
      %p100 = por %p98, %p99
      %p101 = scmp.ne.s32.totalorder %s89, %s90
      %p102 = scmp.eq.s32.totalorder %s17, 3
      %p103 = por %p101, %p102
      %p105 = scmp.ne.s32.totalorder %s90, %s104
      %p106 = scmp.eq.s32.totalorder %s17, 0
      %p107 = por %p105, %p106
      %s108 = ssub.s32 %s11, %s18
      %p109 = scmp.eq.s32.totalorder %s108, 0
      %s111 = sadd.s32 %s110, 1
      %s112 = scalar_select %p109, %s110, %s111
      %p115 = pneg %p109
      %p116 = scmp.eq.s32.totalorder %s11, 3
      %p117 = por %p115, %p116
      %p118 = scmp.ne.s32.totalorder %s110, %s113
      %p119 = scmp.eq.s32.totalorder %s11, 0
      %p120 = por %p118, %p119
      %p121 = scmp.ne.s32.totalorder %s110, %s113
      %p122 = scmp.eq.s32.totalorder %s16, 3
      %p123 = por %p121, %p122
      %p124 = scmp.ne.s32.totalorder %s113, %s114
      %p125 = scmp.eq.s32.totalorder %s16, 0
      %p126 = por %p124, %p125
      %p127 = scmp.ne.s32.totalorder %s113, %s114
      %p128 = scmp.eq.s32.totalorder %s17, 3
      %p129 = por %p127, %p128
      %p131 = scmp.ne.s32.totalorder %s114, %s130
      %p132 = scmp.eq.s32.totalorder %s17, 0
      %p133 = por %p131, %p132
      %p134 = scmp.le.s32.totalorder 1, %s11
      %p135 = scmp.lt.s32.totalorder %s11, 5
      %p136 = pnand %p134, %p135
      %p137 = pneg %p136
      // Predicated region
      $region9: #{_cnn_forward.13} parent=5 // pred_check
        _
      $region10: #{_cnn_forward.13} parent=5 // pred_check_branch
        %139 = sbr.rel (%p136) target = $region12
      $region11: #{_cnn_forward.13} parent=5 // pred_region
        %s140 = ssub.s32 %s11, 1
        // Predicated region
        $region13: #{_cnn_forward.13} parent=11 // pred_check
          %p141 = pneg %p58
        $region14: #{_cnn_forward.13} parent=11 // pred_check_branch
          %143 = sbr.rel (%p141) target = $region16
        $region15: #{_cnn_forward.13} parent=11 // pred_region
          _
        $region16: #{_cnn_forward.13} parent=11 // pred_fallthru
          _
        // Predicated region
        $region17: #{_cnn_forward.13} parent=11 // pred_check
          %p144 = pneg %p79
        $region18: #{_cnn_forward.13} parent=11 // pred_check_branch
          %146 = sbr.rel (%p144) target = $region20
        $region19: #{_cnn_forward.13} parent=11 // pred_region
          _
        $region20: #{_cnn_forward.13} parent=11 // pred_fallthru
          _
        // Predicated region
        $region21: #{_cnn_forward.13} parent=11 // pred_check
          %p147 = pneg %p100
        $region22: #{_cnn_forward.13} parent=11 // pred_check_branch
          %149 = sbr.rel (%p147) target = $region24
        $region23: #{_cnn_forward.13} parent=11 // pred_region
          _
        $region24: #{_cnn_forward.13} parent=11 // pred_fallthru
          _
      $region12: #{_cnn_forward.13} parent=5 // pred_fallthru
        _
      %p150 = scmp.lt.s32.totalorder %s11, 4
      // Predicated region
      $region25: #{_cnn_forward.13} parent=5 // pred_check
        %p151 = pneg %p150
      $region26: #{_cnn_forward.13} parent=5 // pred_check_branch
        %153 = sbr.rel (%p151) target = $region28
      $region27: #{_cnn_forward.13} parent=5 // pred_region
        // Predicated region
        $region29: #{_cnn_forward.13} parent=27 // pred_check
          %p154 = pneg %p31
        $region30: #{_cnn_forward.13} parent=27 // pred_check_branch
          %156 = sbr.rel (%p154) target = $region32
        $region31: #{_cnn_forward.13} parent=27 // pred_region
          %s157 = sand.u32 %s21, 1
          %s158 = sand.u32 %s21, 1
          %s159 = smul.addr %s158, 64
          %s160 = scalar_lea.vmem [#allocation3], %s159
          %s161 = smul.u32 4, %s11
          %s162 = smul.addr %s161, 4
          %s163 = scalar_lea.vmem %s0, %s162
          // Predicated region
          $region33: #{_cnn_forward.13} parent=31 // pred_check
            _
          $region34: #{_cnn_forward.13} parent=31 // pred_check_branch
            %165 = sbr.rel (0) target = $region36
          $region35: #{_cnn_forward.13} parent=31 // pred_region
            // Predicated region
            $region37: #{_cnn_forward.13} parent=35 // pred_check
              _
            $region38: #{_cnn_forward.13} parent=35 // pred_check_branch
              %167 = sbr.rel (0) target = $region40
            $region39: #{_cnn_forward.13} parent=35 // pred_region
              loop: start=0, step=1, limit=1
              $region41: #{_cnn_forward.13} parent=39 // loop_pre_header
                _
              $region42: #{_cnn_forward.13} parent=39 // loop_header
                %s169 = sphi 0, %s173
                %p170 = scmp.ge.s32.totalorder %s169, 1
                %s174 = sphi %s163, %s163
                %s175 = sphi %s160, %s160
              $region43: #{_cnn_forward.13} parent=39 // loop_header_branch
                %172 = sbr.rel (%p170) target = $region47
              $region44: #{_cnn_forward.13} parent=39 // loop_body
                %v176 = vld [vmem:[%s174] sm:$0xff]
                %177 = vst [vmem:[%s175] sm:$0xff] %v176
                %v178 = vld [vmem:[%s174 + $0x8] sm:$0xff]
                %179 = vst [vmem:[%s175 + $0x8] sm:$0xff] %v178
                %v180 = vld [vmem:[%s174 + $0x40] sm:$0xff]
                %181 = vst [vmem:[%s175 + $0x10] sm:$0xff] %v180
                %v182 = vld [vmem:[%s174 + $0x48] sm:$0xff]
                %183 = vst [vmem:[%s175 + $0x18] sm:$0xff] %v182
                %v184 = vld [vmem:[%s174 + $0x80] sm:$0xff]
                %185 = vst [vmem:[%s175 + $0x20] sm:$0xff] %v184
                %v186 = vld [vmem:[%s174 + $0x88] sm:$0xff]
                %187 = vst [vmem:[%s175 + $0x28] sm:$0xff] %v186
                %v188 = vld [vmem:[%s174 + $0xc0] sm:$0xff]
                %189 = vst [vmem:[%s175 + $0x30] sm:$0xff] %v188
                %v190 = vld [vmem:[%s174 + $0xc8] sm:$0xff]
                %191 = vst [vmem:[%s175 + $0x38] sm:$0xff] %v190
              $region45: #{_cnn_forward.13} parent=39 // loop_footer
                %s173 = sadd.s32 1, %s169
              $region46: #{_cnn_forward.13} parent=39 // loop_footer_branch
                %168 = sbr.rel target = $region42
              $region47: #{_cnn_forward.13} parent=39 // loop_exit
                _
            $region40: #{_cnn_forward.13} parent=35 // pred_fallthru
              _
            // Predicated region
            $region48: #{_cnn_forward.13} parent=35 // pred_check
              _
            $region49: #{_cnn_forward.13} parent=35 // pred_check_branch
              %193 = sbr.rel target = $region51
            $region50: #{_cnn_forward.13} parent=35 // pred_region
              _
            $region51: #{_cnn_forward.13} parent=35 // pred_fallthru
              _
          $region36: #{_cnn_forward.13} parent=31 // pred_fallthru
            _
          %194 = vnop
        $region32: #{_cnn_forward.13} parent=27 // pred_fallthru
          _
      $region28: #{_cnn_forward.13} parent=5 // pred_fallthru
        _
      %p195 = scmp.le.s32.totalorder 1, %s11
      %p196 = scmp.lt.s32.totalorder %s11, 5
      %p197 = pnand %p195, %p196
      %p198 = pneg %p197
      // Predicated region
      $region52: #{_cnn_forward.13} parent=5 // pred_check
        _
      $region53: #{_cnn_forward.13} parent=5 // pred_check_branch
        %200 = sbr.rel (%p197) target = $region55
      $region54: #{_cnn_forward.13} parent=5 // pred_region
        %s201 = ssub.s32 %s11, 1
        %s202 = sand.u32 %s24, 1
        %s203 = sand.u32 %s24, 1
        %s204 = smul.addr %s203, 64
        %s205 = scalar_lea.vmem [#allocation3], %s204
        // Predicated region
        $region56: #{_cnn_forward.13} parent=54 // pred_check
          %p206 = pneg %p37
        $region57: #{_cnn_forward.13} parent=54 // pred_check_branch
          %208 = sbr.rel (%p206) target = $region59
        $region58: #{_cnn_forward.13} parent=54 // pred_region
          _
        $region59: #{_cnn_forward.13} parent=54 // pred_fallthru
          _
        %s209 = sand.u32 %s24, 1
        %s210 = sand.u32 %s24, 1
        %s211 = smul.addr %s210, 64
        %s212 = scalar_lea.vmem [#allocation3], %s211
        %p213 = pneg %p37
        %p214 = pneg %p34
        %p215 = pneg %p58
        %p216 = pneg %p55
        %p217 = pneg %p79
        %p218 = pneg %p76
        %p219 = pneg %p100
        %p220 = pneg %p97
        %p221 = pneg %p126
        %p222 = pneg %p123
        %s223 = sand.u32 %s113, 1
        %s224 = sand.u32 %s113, 1
        %s225 = smul.addr %s224, 32
        %s226 = scalar_lea.vmem [#allocation4], %s225
        %s227 = smul.u32 4, %s16
        %s228 = smul.u32 4, %s16
        %v230 = vld [vmem:[%s1] sm:$0xf]
        %v231 = vld [vmem:[%s1 + $0x4] sm:$0xf]
        %v232 = vld [vmem:[%s205] sm:$0xff]
        %v233 = vld [vmem:[%s205 + $0x8] sm:$0xff]
        %v234 = vld [vmem:[%s205 + $0x10] sm:$0xff]
        %v235 = vld [vmem:[%s205 + $0x18] sm:$0xff]
        %v236 = vld [vmem:[%s205 + $0x20] sm:$0xff]
        %v237 = vld [vmem:[%s205 + $0x28] sm:$0xff]
        %v238 = vld [vmem:[%s205 + $0x30] sm:$0x11]
        %v239 = vld [vmem:[%s205 + $0x38] sm:$0x11]
        %v240 = vld [vmem:[%s2] sm:$0xff]
        %v241 = vld [vmem:[%s2 + $0x8] sm:$0xff]
        %243 = vset.pattern.permute.xlu0 0
        %244 = vperm.xlu0 %243, %v240
        %v245 = vpop.permute.xlu0 %244
        %248 = vset.pattern.permute.xlu0 0
        %249 = vperm.xlu0 %248, %v241
        %v250 = vpop.permute.xlu0 %249
        %v254 = vunpack.c.l.b16 %v230
        %v255 = vunpack.c.l.b16 %v231
        %v256 = vpack.c.b16 %v255, %v254
        %v265 = vunpack.c.l.b16 %v232
        %v266 = vunpack.c.h.b16 %v232
        %v267 = vunpack.c.l.b16 %v233
        %v268 = vunpack.c.h.b16 %v233
        %v269 = vunpack.c.l.b16 %v234
        %v270 = vunpack.c.h.b16 %v234
        %v271 = vunpack.c.l.b16 %v235
        %v272 = vunpack.c.h.b16 %v235
        %v273 = vunpack.c.l.b16 %v236
        %v274 = vunpack.c.h.b16 %v236
        %v275 = vunpack.c.l.b16 %v237
        %v276 = vunpack.c.h.b16 %v237
        %v277 = vunpack.c.l.b16 %v238
        %v278 = vunpack.c.h.b16 %v238
        %v279 = vunpack.c.l.b16 %v239
        %v280 = vunpack.c.h.b16 %v239
        %v281 = vpack.c.b16 %v269, %v265
        %v282 = vpack.c.b16 %v270, %v266
        %v283 = vpack.c.b16 %v271, %v267
        %v284 = vpack.c.b16 %v272, %v268
        %v285 = vpack.c.b16 %v277, %v273
        %v286 = vpack.c.b16 %v278, %v274
        %v287 = vpack.c.b16 %v279, %v275
        %v288 = vpack.c.b16 %v280, %v276
        %vm293 = vcmask 203776
        %v295 = vsel %vm293, %v256, 0
        %vm297 = vcmask 1043456
        %vm298 = vcmask 1044480
        %v299 = vsel %vm297, 4294967295, 65535
        %v300 = vsel %vm298, %v299, 0
        %v302 = vand.u32 %v285, %v300
        %v305 = vand.u32 %v286, %v300
        %v308 = vand.u32 %v287, %v300
        %v311 = vand.u32 %v288, %v300
        %313 = vmatprep.subr.bf16.mxu0 %v282
        %314 = vmatpush1.bf16.msra.mxu0 %v281
        %315 = vmatprep.subr.bf16.mxu0 %v305
        %316 = vmatpush1.bf16.msra.mxu0 %v302
        %317 = vmatprep.subr.bf16.mxu0 0
        %318 = vmatpush1.bf16.msra.mxu0 0
        %319 = vmatprep.subr.bf16.mxu0 0
        %320 = vmatpush1.bf16.msra.mxu0 0
        %321 = vmatprep.subr.bf16.mxu0 0
        %322 = vmatpush1.bf16.msra.mxu0 0
        %323 = vmatprep.subr.bf16.mxu0 0
        %324 = vmatpush1.bf16.msra.mxu0 0
        %325 = vmatprep.subr.bf16.mxu0 0
        %326 = vmatpush1.bf16.msra.mxu0 0
        %327 = vmatprep.subr.bf16.mxu0 0
        %328 = vmatpush1.bf16.msra.mxu0 0
        %329 = vmatprep.subr.bf16.mxu0 0
        %330 = vmatpush1.bf16.msra.mxu0 0
        %331 = vmatprep.subr.bf16.mxu0 0
        %332 = vmatpush1.bf16.msra.mxu0 0
        %333 = vmatprep.subr.bf16.mxu0 0
        %334 = vmatpush1.bf16.msra.mxu0 0
        %335 = vmatprep.subr.bf16.mxu0 0
        %336 = vmatpush1.bf16.msra.mxu0 0
        %337 = vmatprep.subr.bf16.mxu0 0
        %338 = vmatpush1.bf16.msra.mxu0 0
        %339 = vmatprep.subr.bf16.mxu0 0
        %340 = vmatpush1.bf16.msra.mxu0 0
        %341 = vmatprep.subr.bf16.mxu0 0
        %342 = vmatpush1.bf16.msra.mxu0 0
        %343 = vmatprep.subr.bf16.mxu0 0
        %344 = vmatpush1.bf16.msra.mxu0 0
        %345 = vmatprep.mubr.bf16.mxu0 0
        %346 = vmatmul.mubr.bf16.gmra.mrb[0].mxu0 %v295
        %v347 = vpop.f32.mrb[0].mxu0
        %v348 = vadd.f32 %v245, %v347
        %v349 = vpop.f32.mrb[0].mxu0
        %v350 = vadd.f32 %v245, %v349
        %v351 = vpop.f32.mrb[0].mxu0
        %v352 = vadd.f32 %v250, %v351
        %v353 = vpop.f32.mrb[0].mxu0
        %v354 = vadd.f32 %v250, %v353
        %355 = vdwg.mxu0
        %356 = vmatprep.subr.bf16.mxu0 %v284
        %357 = vmatpush1.bf16.msra.mxu0 %v283
        %358 = vmatprep.subr.bf16.mxu0 %v311
        %359 = vmatpush1.bf16.msra.mxu0 %v308
        %360 = vmatprep.subr.bf16.mxu0 0
        %361 = vmatpush1.bf16.msra.mxu0 0
        %362 = vmatprep.subr.bf16.mxu0 0
        %363 = vmatpush1.bf16.msra.mxu0 0
        %364 = vmatprep.subr.bf16.mxu0 0
        %365 = vmatpush1.bf16.msra.mxu0 0
        %366 = vmatprep.subr.bf16.mxu0 0
        %367 = vmatpush1.bf16.msra.mxu0 0
        %368 = vmatprep.subr.bf16.mxu0 0
        %369 = vmatpush1.bf16.msra.mxu0 0
        %370 = vmatprep.subr.bf16.mxu0 0
        %371 = vmatpush1.bf16.msra.mxu0 0
        %372 = vmatprep.subr.bf16.mxu0 0
        %373 = vmatpush1.bf16.msra.mxu0 0
        %374 = vmatprep.subr.bf16.mxu0 0
        %375 = vmatpush1.bf16.msra.mxu0 0
        %376 = vmatprep.subr.bf16.mxu0 0
        %377 = vmatpush1.bf16.msra.mxu0 0
        %378 = vmatprep.subr.bf16.mxu0 0
        %379 = vmatpush1.bf16.msra.mxu0 0
        %380 = vmatprep.subr.bf16.mxu0 0
        %381 = vmatpush1.bf16.msra.mxu0 0
        %382 = vmatprep.subr.bf16.mxu0 0
        %383 = vmatpush1.bf16.msra.mxu0 0
        %384 = vmatprep.subr.bf16.mxu0 0
        %385 = vmatpush1.bf16.msra.mxu0 0
        %386 = vmatprep.subr.bf16.mxu0 0
        %387 = vmatpush1.bf16.msra.mxu0 0
        %388 = vmatprep.mubr.bf16.mxu0 0
        %389 = vmatmul.mubr.bf16.gmra.mrb[0].mxu0 %v295
        %v390 = vpop.f32.mrb[0].mxu0
        %v391 = vadd.f32 %v245, %v390
        %v392 = vpop.f32.mrb[0].mxu0
        %v393 = vadd.f32 %v245, %v392
        %v394 = vpop.f32.mrb[0].mxu0
        %v395 = vadd.f32 %v250, %v394
        %v396 = vpop.f32.mrb[0].mxu0
        %v397 = vadd.f32 %v250, %v396
        %398 = vdwg.mxu0
        %s399 = sld [smem:[#allocation2]]
        %vm400 = vcmp.gt.f32.partialorder %v348, 0.0
        %vm401 = vcmp.gt.f32.partialorder %v350, 0.0
        %vm402 = vcmp.gt.f32.partialorder %v391, 0.0
        %vm403 = vcmp.gt.f32.partialorder %v393, 0.0
        %vm404 = vcmp.gt.f32.partialorder %v352, 0.0
        %vm405 = vcmp.gt.f32.partialorder %v354, 0.0
        %vm406 = vcmp.gt.f32.partialorder %v395, 0.0
        %vm407 = vcmp.gt.f32.partialorder %v397, 0.0
        %v408 = vstv %s399
        %v409 = vmul.f32 %v408, %v348
        %v410 = vmul.f32 %v408, %v350
        %v411 = vmul.f32 %v408, %v391
        %v412 = vmul.f32 %v408, %v393
        %v413 = vmul.f32 %v408, %v352
        %v414 = vmul.f32 %v408, %v354
        %v415 = vmul.f32 %v408, %v395
        %v416 = vmul.f32 %v408, %v397
        %v417 = vsel %vm400, %v348, %v409
        %v418 = vsel %vm401, %v350, %v410
        %v419 = vsel %vm402, %v391, %v411
        %v420 = vsel %vm403, %v393, %v412
        %v421 = vsel %vm404, %v352, %v413
        %v422 = vsel %vm405, %v354, %v414
        %v423 = vsel %vm406, %v395, %v415
        %v424 = vsel %vm407, %v397, %v416
        %v425 = vpack.c.bf16 %v421, %v417
        %v426 = vpack.c.bf16 %v422, %v418
        %v427 = vpack.c.bf16 %v423, %v419
        %v428 = vpack.c.bf16 %v424, %v420
        %v433 = vunpack.c.l.b16 %v425
        %v434 = vunpack.c.l.b16 %v426
        %v435 = vunpack.c.l.b16 %v427
        %v436 = vunpack.c.l.b16 %v428
        %v437 = vunpack.c.h.b16 %v425
        %v438 = vunpack.c.h.b16 %v426
        %v439 = vunpack.c.h.b16 %v427
        %v440 = vunpack.c.h.b16 %v428
        %v441 = vpack.c.b16 %v434, %v433
        %v442 = vpack.c.b16 %v436, %v435
        %v443 = vpack.c.b16 %v438, %v437
        %v444 = vpack.c.b16 %v440, %v439
        %449 = vst [vmem:[%s226] sm:$0xff] %v441
        %450 = vst [vmem:[%s226 + $0x8] sm:$0xff] %v442
        %451 = vst [vmem:[%s226 + $0x10] sm:$0xff] %v443
        %452 = vst [vmem:[%s226 + $0x18] sm:$0xff] %v444
        %s453 = sand.u32 %s113, 1
        %s454 = sand.u32 %s113, 1
        %s455 = smul.addr %s454, 32
        %s456 = scalar_lea.vmem [#allocation4], %s455
        // Predicated region
        $region60: #{_cnn_forward.13} parent=54 // pred_check
          %p457 = pneg %p123
        $region61: #{_cnn_forward.13} parent=54 // pred_check_branch
          %459 = sbr.rel (%p457) target = $region63
        $region62: #{_cnn_forward.13} parent=54 // pred_region
          %s460 = smul.u32 4, %s16
          %s461 = smul.addr %s460, 4
          %s462 = scalar_lea.vmem %s4, %s461
          // Predicated region
          $region64: #{_cnn_forward.13} parent=62 // pred_check
            _
          $region65: #{_cnn_forward.13} parent=62 // pred_check_branch
            %464 = sbr.rel (0) target = $region67
          $region66: #{_cnn_forward.13} parent=62 // pred_region
            // Predicated region
            $region68: #{_cnn_forward.13} parent=66 // pred_check
              _
            $region69: #{_cnn_forward.13} parent=66 // pred_check_branch
              %466 = sbr.rel (0) target = $region71
            $region70: #{_cnn_forward.13} parent=66 // pred_region
              loop: start=0, step=1, limit=1
              $region72: #{_cnn_forward.13} parent=70 // loop_pre_header
                _
              $region73: #{_cnn_forward.13} parent=70 // loop_header
                %s468 = sphi 0, %s472
                %p469 = scmp.ge.s32.totalorder %s468, 1
                %s473 = sphi %s456, %s456
                %s474 = sphi %s462, %s462
              $region74: #{_cnn_forward.13} parent=70 // loop_header_branch
                %471 = sbr.rel (%p469) target = $region78
              $region75: #{_cnn_forward.13} parent=70 // loop_body
                %v475 = vld [vmem:[%s473] sm:$0xff]
                %476 = vst [vmem:[%s474] sm:$0xff] %v475
                %v477 = vld [vmem:[%s473 + $0x8] sm:$0xff]
                %478 = vst [vmem:[%s474 + $0x8] sm:$0xff] %v477
                %v479 = vld [vmem:[%s473 + $0x10] sm:$0xff]
                %480 = vst [vmem:[%s474 + $0x40] sm:$0xff] %v479
                %v481 = vld [vmem:[%s473 + $0x18] sm:$0xff]
                %482 = vst [vmem:[%s474 + $0x48] sm:$0xff] %v481
              $region76: #{_cnn_forward.13} parent=70 // loop_footer
                %s472 = sadd.s32 1, %s468
              $region77: #{_cnn_forward.13} parent=70 // loop_footer_branch
                %467 = sbr.rel target = $region73
              $region78: #{_cnn_forward.13} parent=70 // loop_exit
                _
            $region71: #{_cnn_forward.13} parent=66 // pred_fallthru
              _
            // Predicated region
            $region79: #{_cnn_forward.13} parent=66 // pred_check
              _
            $region80: #{_cnn_forward.13} parent=66 // pred_check_branch
              %484 = sbr.rel target = $region82
            $region81: #{_cnn_forward.13} parent=66 // pred_region
              _
            $region82: #{_cnn_forward.13} parent=66 // pred_fallthru
              _
          $region67: #{_cnn_forward.13} parent=62 // pred_fallthru
            _
          %485 = vnop
        $region63: #{_cnn_forward.13} parent=54 // pred_fallthru
          _
      $region55: #{_cnn_forward.13} parent=5 // pred_fallthru
        _
      %p486 = scmp.le.s32.totalorder 2, %s11
      // Predicated region
      $region83: #{_cnn_forward.13} parent=5 // pred_check
        %p487 = pneg %p486
      $region84: #{_cnn_forward.13} parent=5 // pred_check_branch
        %489 = sbr.rel (%p487) target = $region86
      $region85: #{_cnn_forward.13} parent=5 // pred_region
        %s490 = ssub.s32 %s11, 2
        // Predicated region
        $region87: #{_cnn_forward.13} parent=85 // pred_check
          %p491 = pneg %p129
        $region88: #{_cnn_forward.13} parent=85 // pred_check_branch
          %493 = sbr.rel (%p491) target = $region90
        $region89: #{_cnn_forward.13} parent=85 // pred_region
          %s494 = sand.u32 %s114, 1
          %s495 = sand.u32 %s114, 1
          %s496 = smul.addr %s495, 32
          %s497 = scalar_lea.vmem [#allocation4], %s496
        $region90: #{_cnn_forward.13} parent=85 // pred_fallthru
          _
      $region86: #{_cnn_forward.13} parent=5 // pred_fallthru
        _
    $region6: #{_cnn_forward.13} parent=1 // loop_footer
      %s15 = sadd.s32 1, %s11
    $region7: #{_cnn_forward.13} parent=1 // loop_footer_branch
      %10 = sbr.rel target = $region3
    $region8: #{_cnn_forward.13} parent=1 // loop_exit
      _

// kernel: _cnn_forward.14
$region0: #{_cnn_forward.14}
  #allocation0 [shape = 'u32[]', space=smem, size = 0x4, offset = 0x4, fixed_abs, tag = 'smem constant byte address 0x4 - core index']
  #allocation1 [shape = 'u32[144,128]{1,0:T(1,128)}', space=vmem, size = 0x12000, scoped, tag = 'internal scratch']
  #allocation2 [shape = 'f32[1]{0:T(128)S(6)}', space=smem, size = 0x200, scoped, tag = 'scoped memory for _cnn_forward.14']
  %s0 = inlined_call_operand.vmem [shape: bf16[400,2048], index: 0, kind: input, shape index: {}]
  %s1 = inlined_call_operand.vmem [shape: bf16[16,400], index: 1, kind: input, shape index: {}]
  %s2 = inlined_call_operand.vmem [shape: f32[16,1], index: 2, kind: input, shape index: {}]
  %s3 = inlined_call_operand.<no memory space> [shape: f32[1], index: 3, kind: input, shape index: {}]
  %s4 = inlined_call_operand.vmem [shape: bf16[16,2048], index: 4, kind: output, shape index: {}]
  %s5 = sld [smem:[#allocation0]]
  $region91: #{_cnn_forward.14} parent=0
    _
  %s7 = ssub.s32 1, %s5
  %s8 = scalar_select 0, %s7, %s5
  %9 = sst [smem:[#allocation2]] %s3
  $region1: #{_cnn_forward.14} parent=0
    #allocation3 [shape = 'u8[819200]{0}', space=vmem, size = 0xc8000, scoped, tag = 'input window, operand 0']
    #allocation4 [shape = 'u8[32768]{0}', space=vmem, size = 0x8000, scoped, tag = 'output window, operand 0']
    loop: start=0, step=1, limit=6
    $region2: #{_cnn_forward.14} parent=1 // loop_pre_header
      _
    $region3: #{_cnn_forward.14} parent=1 // loop_header
      %s11 = sphi 0, %s15
      %p12 = scmp.ge.s32.totalorder %s11, 6
      %s21 = sphi 0, %s23
      %s24 = sphi 0, %s21
      %s25 = sphi 0, %s24
      %s41 = sphi 0, %s25
      %s45 = sphi 0, %s45
      %s47 = sphi 0, %s45
      %s48 = sphi 0, %s47
      %s62 = sphi 0, %s48
      %s66 = sphi 0, %s66
      %s68 = sphi 0, %s66
      %s69 = sphi 0, %s68
      %s83 = sphi 0, %s69
      %s87 = sphi 0, %s87
      %s89 = sphi 0, %s87
      %s90 = sphi 0, %s89
      %s104 = sphi 0, %s90
      %s110 = sphi 0, %s112
      %s113 = sphi 0, %s110
      %s114 = sphi 0, %s113
      %s130 = sphi 0, %s114
    $region4: #{_cnn_forward.14} parent=1 // loop_header_branch
      %14 = sbr.rel (%p12) target = $region8
    $region5: #{_cnn_forward.14} parent=1 // loop_body
      %s16 = ssub.s32 %s11, 1
      %s17 = ssub.s32 %s11, 2
      %s18 = sadd.s32 %s11, 1
      %s19 = ssub.s32 %s11, %s18
      %p20 = scmp.eq.s32.totalorder %s19, 0
      %s22 = sadd.s32 %s21, 1
      %s23 = scalar_select %p20, %s21, %s22
      %p26 = pneg %p20
      %p27 = scmp.eq.s32.totalorder %s11, 3
      %p28 = por %p26, %p27
      %p29 = scmp.ne.s32.totalorder %s21, %s24
      %p30 = scmp.eq.s32.totalorder %s11, 0
      %p31 = por %p29, %p30
      %p32 = scmp.ne.s32.totalorder %s21, %s24
      %p33 = scmp.eq.s32.totalorder %s16, 3
      %p34 = por %p32, %p33
      %p35 = scmp.ne.s32.totalorder %s24, %s25
      %p36 = scmp.eq.s32.totalorder %s16, 0
      %p37 = por %p35, %p36
      %p38 = scmp.ne.s32.totalorder %s24, %s25
      %p39 = scmp.eq.s32.totalorder %s17, 3
      %p40 = por %p38, %p39
      %p42 = scmp.ne.s32.totalorder %s25, %s41
      %p43 = scmp.eq.s32.totalorder %s17, 0
      %p44 = por %p42, %p43
      %s46 = sadd.s32 %s45, 1
      %p49 = scmp.eq.s32.totalorder %s11, 3
      %p50 = scmp.ne.s32.totalorder %s45, %s47
      %p51 = scmp.eq.s32.totalorder %s11, 0
      %p52 = por %p50, %p51
      %p53 = scmp.ne.s32.totalorder %s45, %s47
      %p54 = scmp.eq.s32.totalorder %s16, 3
      %p55 = por %p53, %p54
      %p56 = scmp.ne.s32.totalorder %s47, %s48
      %p57 = scmp.eq.s32.totalorder %s16, 0
      %p58 = por %p56, %p57
      %p59 = scmp.ne.s32.totalorder %s47, %s48
      %p60 = scmp.eq.s32.totalorder %s17, 3
      %p61 = por %p59, %p60
      %p63 = scmp.ne.s32.totalorder %s48, %s62
      %p64 = scmp.eq.s32.totalorder %s17, 0
      %p65 = por %p63, %p64
      %s67 = sadd.s32 %s66, 1
      %p70 = scmp.eq.s32.totalorder %s11, 3
      %p71 = scmp.ne.s32.totalorder %s66, %s68
      %p72 = scmp.eq.s32.totalorder %s11, 0
      %p73 = por %p71, %p72
      %p74 = scmp.ne.s32.totalorder %s66, %s68
      %p75 = scmp.eq.s32.totalorder %s16, 3
      %p76 = por %p74, %p75
      %p77 = scmp.ne.s32.totalorder %s68, %s69
      %p78 = scmp.eq.s32.totalorder %s16, 0
      %p79 = por %p77, %p78
      %p80 = scmp.ne.s32.totalorder %s68, %s69
      %p81 = scmp.eq.s32.totalorder %s17, 3
      %p82 = por %p80, %p81
      %p84 = scmp.ne.s32.totalorder %s69, %s83
      %p85 = scmp.eq.s32.totalorder %s17, 0
      %p86 = por %p84, %p85
      %s88 = sadd.s32 %s87, 1
      %p91 = scmp.eq.s32.totalorder %s11, 3
      %p92 = scmp.ne.s32.totalorder %s87, %s89
      %p93 = scmp.eq.s32.totalorder %s11, 0
      %p94 = por %p92, %p93
      %p95 = scmp.ne.s32.totalorder %s87, %s89
      %p96 = scmp.eq.s32.totalorder %s16, 3
      %p97 = por %p95, %p96
      %p98 = scmp.ne.s32.totalorder %s89, %s90
      %p99 = scmp.eq.s32.totalorder %s16, 0
      %p100 = por %p98, %p99
      %p101 = scmp.ne.s32.totalorder %s89, %s90
      %p102 = scmp.eq.s32.totalorder %s17, 3
      %p103 = por %p101, %p102
      %p105 = scmp.ne.s32.totalorder %s90, %s104
      %p106 = scmp.eq.s32.totalorder %s17, 0
      %p107 = por %p105, %p106
      %s108 = ssub.s32 %s11, %s18
      %p109 = scmp.eq.s32.totalorder %s108, 0
      %s111 = sadd.s32 %s110, 1
      %s112 = scalar_select %p109, %s110, %s111
      %p115 = pneg %p109
      %p116 = scmp.eq.s32.totalorder %s11, 3
      %p117 = por %p115, %p116
      %p118 = scmp.ne.s32.totalorder %s110, %s113
      %p119 = scmp.eq.s32.totalorder %s11, 0
      %p120 = por %p118, %p119
      %p121 = scmp.ne.s32.totalorder %s110, %s113
      %p122 = scmp.eq.s32.totalorder %s16, 3
      %p123 = por %p121, %p122
      %p124 = scmp.ne.s32.totalorder %s113, %s114
      %p125 = scmp.eq.s32.totalorder %s16, 0
      %p126 = por %p124, %p125
      %p127 = scmp.ne.s32.totalorder %s113, %s114
      %p128 = scmp.eq.s32.totalorder %s17, 3
      %p129 = por %p127, %p128
      %p131 = scmp.ne.s32.totalorder %s114, %s130
      %p132 = scmp.eq.s32.totalorder %s17, 0
      %p133 = por %p131, %p132
      %p134 = scmp.le.s32.totalorder 1, %s11
      %p135 = scmp.lt.s32.totalorder %s11, 5
      %p136 = pnand %p134, %p135
      %p137 = pneg %p136
      // Predicated region
      $region9: #{_cnn_forward.14} parent=5 // pred_check
        _
      $region10: #{_cnn_forward.14} parent=5 // pred_check_branch
        %139 = sbr.rel (%p136) target = $region12
      $region11: #{_cnn_forward.14} parent=5 // pred_region
        %s140 = ssub.s32 %s11, 1
        // Predicated region
        $region13: #{_cnn_forward.14} parent=11 // pred_check
          %p141 = pneg %p58
        $region14: #{_cnn_forward.14} parent=11 // pred_check_branch
          %143 = sbr.rel (%p141) target = $region16
        $region15: #{_cnn_forward.14} parent=11 // pred_region
          _
        $region16: #{_cnn_forward.14} parent=11 // pred_fallthru
          _
        // Predicated region
        $region17: #{_cnn_forward.14} parent=11 // pred_check
          %p144 = pneg %p79
        $region18: #{_cnn_forward.14} parent=11 // pred_check_branch
          %146 = sbr.rel (%p144) target = $region20
        $region19: #{_cnn_forward.14} parent=11 // pred_region
          _
        $region20: #{_cnn_forward.14} parent=11 // pred_fallthru
          _
        // Predicated region
        $region21: #{_cnn_forward.14} parent=11 // pred_check
          %p147 = pneg %p100
        $region22: #{_cnn_forward.14} parent=11 // pred_check_branch
          %149 = sbr.rel (%p147) target = $region24
        $region23: #{_cnn_forward.14} parent=11 // pred_region
          _
        $region24: #{_cnn_forward.14} parent=11 // pred_fallthru
          _
      $region12: #{_cnn_forward.14} parent=5 // pred_fallthru
        _
      %p150 = scmp.lt.s32.totalorder %s11, 4
      // Predicated region
      $region25: #{_cnn_forward.14} parent=5 // pred_check
        %p151 = pneg %p150
      $region26: #{_cnn_forward.14} parent=5 // pred_check_branch
        %153 = sbr.rel (%p151) target = $region28
      $region27: #{_cnn_forward.14} parent=5 // pred_region
        // Predicated region
        $region29: #{_cnn_forward.14} parent=27 // pred_check
          %p154 = pneg %p31
        $region30: #{_cnn_forward.14} parent=27 // pred_check_branch
          %156 = sbr.rel (%p154) target = $region32
        $region31: #{_cnn_forward.14} parent=27 // pred_region
          %s157 = sand.u32 %s21, 1
          %s158 = sand.u32 %s21, 1
          %s159 = smul.addr %s158, 800
          %s160 = scalar_lea.vmem [#allocation3], %s159
          %s161 = smul.u32 4, %s11
          %s162 = smul.addr %s161, 4
          %s163 = scalar_lea.vmem %s0, %s162
          // Predicated region
          $region33: #{_cnn_forward.14} parent=31 // pred_check
            _
          $region34: #{_cnn_forward.14} parent=31 // pred_check_branch
            %165 = sbr.rel (0) target = $region36
          $region35: #{_cnn_forward.14} parent=31 // pred_region
            // Predicated region
            $region37: #{_cnn_forward.14} parent=35 // pred_check
              _
            $region38: #{_cnn_forward.14} parent=35 // pred_check_branch
              %167 = sbr.rel (0) target = $region40
            $region39: #{_cnn_forward.14} parent=35 // pred_region
              loop: start=0, step=1, limit=1
              $region41: #{_cnn_forward.14} parent=39 // loop_pre_header
                _
              $region42: #{_cnn_forward.14} parent=39 // loop_header
                %s169 = sphi 0, %s173
                %p170 = scmp.ge.s32.totalorder %s169, 1
                %s174 = sphi %s163, %s163
                %s175 = sphi %s160, %s160
              $region43: #{_cnn_forward.14} parent=39 // loop_header_branch
                %172 = sbr.rel (%p170) target = $region47
              $region44: #{_cnn_forward.14} parent=39 // loop_body
                %v176 = vld [vmem:[%s174] sm:$0xff]
                %177 = vst [vmem:[%s175] sm:$0xff] %v176
                %v178 = vld [vmem:[%s174 + $0x8] sm:$0xff]
                %179 = vst [vmem:[%s175 + $0x8] sm:$0xff] %v178
                %v180 = vld [vmem:[%s174 + $0x40] sm:$0xff]
                %181 = vst [vmem:[%s175 + $0x10] sm:$0xff] %v180
                %v182 = vld [vmem:[%s174 + $0x48] sm:$0xff]
                %183 = vst [vmem:[%s175 + $0x18] sm:$0xff] %v182
                %v184 = vld [vmem:[%s174 + $0x80] sm:$0xff]
                %185 = vst [vmem:[%s175 + $0x20] sm:$0xff] %v184
                %v186 = vld [vmem:[%s174 + $0x88] sm:$0xff]
                %187 = vst [vmem:[%s175 + $0x28] sm:$0xff] %v186
                %v188 = vld [vmem:[%s174 + $0xc0] sm:$0xff]
                %189 = vst [vmem:[%s175 + $0x30] sm:$0xff] %v188
                %v190 = vld [vmem:[%s174 + $0xc8] sm:$0xff]
                %191 = vst [vmem:[%s175 + $0x38] sm:$0xff] %v190
                %v192 = vld [vmem:[%s174 + $0x100] sm:$0xff]
                %193 = vst [vmem:[%s175 + $0x40] sm:$0xff] %v192
                %v194 = vld [vmem:[%s174 + $0x108] sm:$0xff]
                %195 = vst [vmem:[%s175 + $0x48] sm:$0xff] %v194
                %v196 = vld [vmem:[%s174 + $0x140] sm:$0xff]
                %197 = vst [vmem:[%s175 + $0x50] sm:$0xff] %v196
                %v198 = vld [vmem:[%s174 + $0x148] sm:$0xff]
                %199 = vst [vmem:[%s175 + $0x58] sm:$0xff] %v198
                %v200 = vld [vmem:[%s174 + $0x180] sm:$0xff]
                %201 = vst [vmem:[%s175 + $0x60] sm:$0xff] %v200
                %v202 = vld [vmem:[%s174 + $0x188] sm:$0xff]
                %203 = vst [vmem:[%s175 + $0x68] sm:$0xff] %v202
                %v204 = vld [vmem:[%s174 + $0x1c0] sm:$0xff]
                %205 = vst [vmem:[%s175 + $0x70] sm:$0xff] %v204
                %v206 = vld [vmem:[%s174 + $0x1c8] sm:$0xff]
                %207 = vst [vmem:[%s175 + $0x78] sm:$0xff] %v206
                %v208 = vld [vmem:[%s174 + $0x200] sm:$0xff]
                %209 = vst [vmem:[%s175 + $0x80] sm:$0xff] %v208
                %v210 = vld [vmem:[%s174 + $0x208] sm:$0xff]
                %211 = vst [vmem:[%s175 + $0x88] sm:$0xff] %v210
                %v212 = vld [vmem:[%s174 + $0x240] sm:$0xff]
                %213 = vst [vmem:[%s175 + $0x90] sm:$0xff] %v212
                %v214 = vld [vmem:[%s174 + $0x248] sm:$0xff]
                %215 = vst [vmem:[%s175 + $0x98] sm:$0xff] %v214
                %v216 = vld [vmem:[%s174 + $0x280] sm:$0xff]
                %217 = vst [vmem:[%s175 + $0xa0] sm:$0xff] %v216
                %v218 = vld [vmem:[%s174 + $0x288] sm:$0xff]
                %219 = vst [vmem:[%s175 + $0xa8] sm:$0xff] %v218
                %v220 = vld [vmem:[%s174 + $0x2c0] sm:$0xff]
                %221 = vst [vmem:[%s175 + $0xb0] sm:$0xff] %v220
                %v222 = vld [vmem:[%s174 + $0x2c8] sm:$0xff]
                %223 = vst [vmem:[%s175 + $0xb8] sm:$0xff] %v222
                %v224 = vld [vmem:[%s174 + $0x300] sm:$0xff]
                %225 = vst [vmem:[%s175 + $0xc0] sm:$0xff] %v224
                %v226 = vld [vmem:[%s174 + $0x308] sm:$0xff]
                %227 = vst [vmem:[%s175 + $0xc8] sm:$0xff] %v226
                %v228 = vld [vmem:[%s174 + $0x340] sm:$0xff]
                %229 = vst [vmem:[%s175 + $0xd0] sm:$0xff] %v228
                %v230 = vld [vmem:[%s174 + $0x348] sm:$0xff]
                %231 = vst [vmem:[%s175 + $0xd8] sm:$0xff] %v230
                %v232 = vld [vmem:[%s174 + $0x380] sm:$0xff]
                %233 = vst [vmem:[%s175 + $0xe0] sm:$0xff] %v232
                %v234 = vld [vmem:[%s174 + $0x388] sm:$0xff]
                %235 = vst [vmem:[%s175 + $0xe8] sm:$0xff] %v234
                %v236 = vld [vmem:[%s174 + $0x3c0] sm:$0xff]
                %237 = vst [vmem:[%s175 + $0xf0] sm:$0xff] %v236
                %v238 = vld [vmem:[%s174 + $0x3c8] sm:$0xff]
                %239 = vst [vmem:[%s175 + $0xf8] sm:$0xff] %v238
                %v240 = vld [vmem:[%s174 + $0x400] sm:$0xff]
                %241 = vst [vmem:[%s175 + $0x100] sm:$0xff] %v240
                %v242 = vld [vmem:[%s174 + $0x408] sm:$0xff]
                %243 = vst [vmem:[%s175 + $0x108] sm:$0xff] %v242
                %v244 = vld [vmem:[%s174 + $0x440] sm:$0xff]
                %245 = vst [vmem:[%s175 + $0x110] sm:$0xff] %v244
                %v246 = vld [vmem:[%s174 + $0x448] sm:$0xff]
                %247 = vst [vmem:[%s175 + $0x118] sm:$0xff] %v246
                %v248 = vld [vmem:[%s174 + $0x480] sm:$0xff]
                %249 = vst [vmem:[%s175 + $0x120] sm:$0xff] %v248
                %v250 = vld [vmem:[%s174 + $0x488] sm:$0xff]
                %251 = vst [vmem:[%s175 + $0x128] sm:$0xff] %v250
                %v252 = vld [vmem:[%s174 + $0x4c0] sm:$0xff]
                %253 = vst [vmem:[%s175 + $0x130] sm:$0xff] %v252
                %v254 = vld [vmem:[%s174 + $0x4c8] sm:$0xff]
                %255 = vst [vmem:[%s175 + $0x138] sm:$0xff] %v254
                %v256 = vld [vmem:[%s174 + $0x500] sm:$0xff]
                %257 = vst [vmem:[%s175 + $0x140] sm:$0xff] %v256
                %v258 = vld [vmem:[%s174 + $0x508] sm:$0xff]
                %259 = vst [vmem:[%s175 + $0x148] sm:$0xff] %v258
                %v260 = vld [vmem:[%s174 + $0x540] sm:$0xff]
                %261 = vst [vmem:[%s175 + $0x150] sm:$0xff] %v260
                %v262 = vld [vmem:[%s174 + $0x548] sm:$0xff]
                %263 = vst [vmem:[%s175 + $0x158] sm:$0xff] %v262
                %v264 = vld [vmem:[%s174 + $0x580] sm:$0xff]
                %265 = vst [vmem:[%s175 + $0x160] sm:$0xff] %v264
                %v266 = vld [vmem:[%s174 + $0x588] sm:$0xff]
                %267 = vst [vmem:[%s175 + $0x168] sm:$0xff] %v266
                %v268 = vld [vmem:[%s174 + $0x5c0] sm:$0xff]
                %269 = vst [vmem:[%s175 + $0x170] sm:$0xff] %v268
                %v270 = vld [vmem:[%s174 + $0x5c8] sm:$0xff]
                %271 = vst [vmem:[%s175 + $0x178] sm:$0xff] %v270
                %v272 = vld [vmem:[%s174 + $0x600] sm:$0xff]
                %273 = vst [vmem:[%s175 + $0x180] sm:$0xff] %v272
                %v274 = vld [vmem:[%s174 + $0x608] sm:$0xff]
                %275 = vst [vmem:[%s175 + $0x188] sm:$0xff] %v274
                %v276 = vld [vmem:[%s174 + $0x640] sm:$0xff]
                %277 = vst [vmem:[%s175 + $0x190] sm:$0xff] %v276
                %v278 = vld [vmem:[%s174 + $0x648] sm:$0xff]
                %279 = vst [vmem:[%s175 + $0x198] sm:$0xff] %v278
                %v280 = vld [vmem:[%s174 + $0x680] sm:$0xff]
                %281 = vst [vmem:[%s175 + $0x1a0] sm:$0xff] %v280
                %v282 = vld [vmem:[%s174 + $0x688] sm:$0xff]
                %283 = vst [vmem:[%s175 + $0x1a8] sm:$0xff] %v282
                %v284 = vld [vmem:[%s174 + $0x6c0] sm:$0xff]
                %285 = vst [vmem:[%s175 + $0x1b0] sm:$0xff] %v284
                %v286 = vld [vmem:[%s174 + $0x6c8] sm:$0xff]
                %287 = vst [vmem:[%s175 + $0x1b8] sm:$0xff] %v286
                %v288 = vld [vmem:[%s174 + $0x700] sm:$0xff]
                %289 = vst [vmem:[%s175 + $0x1c0] sm:$0xff] %v288
                %v290 = vld [vmem:[%s174 + $0x708] sm:$0xff]
                %291 = vst [vmem:[%s175 + $0x1c8] sm:$0xff] %v290
                %v292 = vld [vmem:[%s174 + $0x740] sm:$0xff]
                %293 = vst [vmem:[%s175 + $0x1d0] sm:$0xff] %v292
                %v294 = vld [vmem:[%s174 + $0x748] sm:$0xff]
                %295 = vst [vmem:[%s175 + $0x1d8] sm:$0xff] %v294
                %v296 = vld [vmem:[%s174 + $0x780] sm:$0xff]
                %297 = vst [vmem:[%s175 + $0x1e0] sm:$0xff] %v296
                %v298 = vld [vmem:[%s174 + $0x788] sm:$0xff]
                %299 = vst [vmem:[%s175 + $0x1e8] sm:$0xff] %v298
                %v300 = vld [vmem:[%s174 + $0x7c0] sm:$0xff]
                %301 = vst [vmem:[%s175 + $0x1f0] sm:$0xff] %v300
                %v302 = vld [vmem:[%s174 + $0x7c8] sm:$0xff]
                %303 = vst [vmem:[%s175 + $0x1f8] sm:$0xff] %v302
                %v304 = vld [vmem:[%s174 + $0x800] sm:$0xff]
                %305 = vst [vmem:[%s175 + $0x200] sm:$0xff] %v304
                %v306 = vld [vmem:[%s174 + $0x808] sm:$0xff]
                %307 = vst [vmem:[%s175 + $0x208] sm:$0xff] %v306
                %v308 = vld [vmem:[%s174 + $0x840] sm:$0xff]
                %309 = vst [vmem:[%s175 + $0x210] sm:$0xff] %v308
                %v310 = vld [vmem:[%s174 + $0x848] sm:$0xff]
                %311 = vst [vmem:[%s175 + $0x218] sm:$0xff] %v310
                %v312 = vld [vmem:[%s174 + $0x880] sm:$0xff]
                %313 = vst [vmem:[%s175 + $0x220] sm:$0xff] %v312
                %v314 = vld [vmem:[%s174 + $0x888] sm:$0xff]
                %315 = vst [vmem:[%s175 + $0x228] sm:$0xff] %v314
                %v316 = vld [vmem:[%s174 + $0x8c0] sm:$0xff]
                %317 = vst [vmem:[%s175 + $0x230] sm:$0xff] %v316
                %v318 = vld [vmem:[%s174 + $0x8c8] sm:$0xff]
                %319 = vst [vmem:[%s175 + $0x238] sm:$0xff] %v318
                %v320 = vld [vmem:[%s174 + $0x900] sm:$0xff]
                %321 = vst [vmem:[%s175 + $0x240] sm:$0xff] %v320
                %v322 = vld [vmem:[%s174 + $0x908] sm:$0xff]
                %323 = vst [vmem:[%s175 + $0x248] sm:$0xff] %v322
                %v324 = vld [vmem:[%s174 + $0x940] sm:$0xff]
                %325 = vst [vmem:[%s175 + $0x250] sm:$0xff] %v324
                %v326 = vld [vmem:[%s174 + $0x948] sm:$0xff]
                %327 = vst [vmem:[%s175 + $0x258] sm:$0xff] %v326
                %v328 = vld [vmem:[%s174 + $0x980] sm:$0xff]
                %329 = vst [vmem:[%s175 + $0x260] sm:$0xff] %v328
                %v330 = vld [vmem:[%s174 + $0x988] sm:$0xff]
                %331 = vst [vmem:[%s175 + $0x268] sm:$0xff] %v330
                %v332 = vld [vmem:[%s174 + $0x9c0] sm:$0xff]
                %333 = vst [vmem:[%s175 + $0x270] sm:$0xff] %v332
                %v334 = vld [vmem:[%s174 + $0x9c8] sm:$0xff]
                %335 = vst [vmem:[%s175 + $0x278] sm:$0xff] %v334
                %v336 = vld [vmem:[%s174 + $0xa00] sm:$0xff]
                %337 = vst [vmem:[%s175 + $0x280] sm:$0xff] %v336
                %v338 = vld [vmem:[%s174 + $0xa08] sm:$0xff]
                %339 = vst [vmem:[%s175 + $0x288] sm:$0xff] %v338
                %v340 = vld [vmem:[%s174 + $0xa40] sm:$0xff]
                %341 = vst [vmem:[%s175 + $0x290] sm:$0xff] %v340
                %v342 = vld [vmem:[%s174 + $0xa48] sm:$0xff]
                %343 = vst [vmem:[%s175 + $0x298] sm:$0xff] %v342
                %v344 = vld [vmem:[%s174 + $0xa80] sm:$0xff]
                %345 = vst [vmem:[%s175 + $0x2a0] sm:$0xff] %v344
                %v346 = vld [vmem:[%s174 + $0xa88] sm:$0xff]
                %347 = vst [vmem:[%s175 + $0x2a8] sm:$0xff] %v346
                %v348 = vld [vmem:[%s174 + $0xac0] sm:$0xff]
                %349 = vst [vmem:[%s175 + $0x2b0] sm:$0xff] %v348
                %v350 = vld [vmem:[%s174 + $0xac8] sm:$0xff]
                %351 = vst [vmem:[%s175 + $0x2b8] sm:$0xff] %v350
                %v352 = vld [vmem:[%s174 + $0xb00] sm:$0xff]
                %353 = vst [vmem:[%s175 + $0x2c0] sm:$0xff] %v352
                %v354 = vld [vmem:[%s174 + $0xb08] sm:$0xff]
                %355 = vst [vmem:[%s175 + $0x2c8] sm:$0xff] %v354
                %v356 = vld [vmem:[%s174 + $0xb40] sm:$0xff]
                %357 = vst [vmem:[%s175 + $0x2d0] sm:$0xff] %v356
                %v358 = vld [vmem:[%s174 + $0xb48] sm:$0xff]
                %359 = vst [vmem:[%s175 + $0x2d8] sm:$0xff] %v358
                %v360 = vld [vmem:[%s174 + $0xb80] sm:$0xff]
                %361 = vst [vmem:[%s175 + $0x2e0] sm:$0xff] %v360
                %v362 = vld [vmem:[%s174 + $0xb88] sm:$0xff]
                %363 = vst [vmem:[%s175 + $0x2e8] sm:$0xff] %v362
                %v364 = vld [vmem:[%s174 + $0xbc0] sm:$0xff]
                %365 = vst [vmem:[%s175 + $0x2f0] sm:$0xff] %v364
                %v366 = vld [vmem:[%s174 + $0xbc8] sm:$0xff]
                %367 = vst [vmem:[%s175 + $0x2f8] sm:$0xff] %v366
                %v368 = vld [vmem:[%s174 + $0xc00] sm:$0xff]
                %369 = vst [vmem:[%s175 + $0x300] sm:$0xff] %v368
                %v370 = vld [vmem:[%s174 + $0xc08] sm:$0xff]
                %371 = vst [vmem:[%s175 + $0x308] sm:$0xff] %v370
                %v372 = vld [vmem:[%s174 + $0xc40] sm:$0xff]
                %373 = vst [vmem:[%s175 + $0x310] sm:$0xff] %v372
                %v374 = vld [vmem:[%s174 + $0xc48] sm:$0xff]
                %375 = vst [vmem:[%s175 + $0x318] sm:$0xff] %v374
              $region45: #{_cnn_forward.14} parent=39 // loop_footer
                %s173 = sadd.s32 1, %s169
              $region46: #{_cnn_forward.14} parent=39 // loop_footer_branch
                %168 = sbr.rel target = $region42
              $region47: #{_cnn_forward.14} parent=39 // loop_exit
                _
            $region40: #{_cnn_forward.14} parent=35 // pred_fallthru
              _
            // Predicated region
            $region48: #{_cnn_forward.14} parent=35 // pred_check
              _
            $region49: #{_cnn_forward.14} parent=35 // pred_check_branch
              %377 = sbr.rel target = $region51
            $region50: #{_cnn_forward.14} parent=35 // pred_region
              _
            $region51: #{_cnn_forward.14} parent=35 // pred_fallthru
              _
          $region36: #{_cnn_forward.14} parent=31 // pred_fallthru
            _
          %378 = vnop
        $region32: #{_cnn_forward.14} parent=27 // pred_fallthru
          _
      $region28: #{_cnn_forward.14} parent=5 // pred_fallthru
        _
      %p379 = scmp.le.s32.totalorder 1, %s11
      %p380 = scmp.lt.s32.totalorder %s11, 5
      %p381 = pnand %p379, %p380
      %p382 = pneg %p381
      // Predicated region
      $region52: #{_cnn_forward.14} parent=5 // pred_check
        _
      $region53: #{_cnn_forward.14} parent=5 // pred_check_branch
        %384 = sbr.rel (%p381) target = $region55
      $region54: #{_cnn_forward.14} parent=5 // pred_region
        %s385 = ssub.s32 %s11, 1
        %s386 = sand.u32 %s24, 1
        %s387 = sand.u32 %s24, 1
        %s388 = smul.addr %s387, 800
        %s389 = scalar_lea.vmem [#allocation3], %s388
        // Predicated region
        $region56: #{_cnn_forward.14} parent=54 // pred_check
          %p390 = pneg %p37
        $region57: #{_cnn_forward.14} parent=54 // pred_check_branch
          %392 = sbr.rel (%p390) target = $region59
        $region58: #{_cnn_forward.14} parent=54 // pred_region
          _
        $region59: #{_cnn_forward.14} parent=54 // pred_fallthru
          _
        %s393 = sand.u32 %s24, 1
        %s394 = sand.u32 %s24, 1
        %s395 = smul.addr %s394, 800
        %s396 = scalar_lea.vmem [#allocation3], %s395
        %p397 = pneg %p37
        %p398 = pneg %p34
        %p399 = pneg %p58
        %p400 = pneg %p55
        %p401 = pneg %p79
        %p402 = pneg %p76
        %p403 = pneg %p100
        %p404 = pneg %p97
        %p405 = pneg %p126
        %p406 = pneg %p123
        %s407 = sand.u32 %s113, 1
        %s408 = sand.u32 %s113, 1
        %s409 = smul.addr %s408, 32
        %s410 = scalar_lea.vmem [#allocation4], %s409
        %s411 = smul.u32 4, %s16
        %s412 = smul.u32 4, %s16
        %v414 = vld [vmem:[%s1] sm:$0xff]
        %v415 = vld [vmem:[%s1 + $0x8] sm:$0xff]
        %v416 = vld [vmem:[%s1 + $0x10] sm:$0xff]
        %v417 = vld [vmem:[%s1 + $0x18] sm:$0xff]
        %v418 = vld [vmem:[%s389] sm:$0xff]
        %v419 = vld [vmem:[%s389 + $0x8] sm:$0xff]
        %v420 = vld [vmem:[%s389 + $0x10] sm:$0xff]
        %v421 = vld [vmem:[%s389 + $0x18] sm:$0xff]
        %v422 = vld [vmem:[%s389 + $0x20] sm:$0xff]
        %v423 = vld [vmem:[%s389 + $0x28] sm:$0xff]
        %v424 = vld [vmem:[%s389 + $0x30] sm:$0xff]
        %v425 = vld [vmem:[%s389 + $0x38] sm:$0xff]
        %v426 = vld [vmem:[%s389 + $0x40] sm:$0xff]
        %v427 = vld [vmem:[%s389 + $0x48] sm:$0xff]
        %v428 = vld [vmem:[%s389 + $0x50] sm:$0xff]
        %v429 = vld [vmem:[%s389 + $0x58] sm:$0xff]
        %v430 = vld [vmem:[%s389 + $0x60] sm:$0xff]
        %v431 = vld [vmem:[%s389 + $0x68] sm:$0xff]
        %v432 = vld [vmem:[%s389 + $0x70] sm:$0xff]
        %v433 = vld [vmem:[%s389 + $0x78] sm:$0xff]
        %v434 = vld [vmem:[%s389 + $0x80] sm:$0xff]
        %v435 = vld [vmem:[%s389 + $0x88] sm:$0xff]
        %v436 = vld [vmem:[%s389 + $0x90] sm:$0xff]
        %v437 = vld [vmem:[%s389 + $0x98] sm:$0xff]
        %v438 = vld [vmem:[%s389 + $0xa0] sm:$0xff]
        %v439 = vld [vmem:[%s389 + $0xa8] sm:$0xff]
        %v440 = vld [vmem:[%s389 + $0xb0] sm:$0xff]
        %v441 = vld [vmem:[%s389 + $0xb8] sm:$0xff]
        %v442 = vld [vmem:[%s389 + $0xc0] sm:$0xff]
        %v443 = vld [vmem:[%s389 + $0xc8] sm:$0xff]
        %v444 = vld [vmem:[%s389 + $0xd0] sm:$0xff]
        %v445 = vld [vmem:[%s389 + $0xd8] sm:$0xff]
        %v446 = vld [vmem:[%s389 + $0xe0] sm:$0xff]
        %v447 = vld [vmem:[%s389 + $0xe8] sm:$0xff]
        %v448 = vld [vmem:[%s389 + $0xf0] sm:$0xff]
        %v449 = vld [vmem:[%s389 + $0xf8] sm:$0xff]
        %v450 = vld [vmem:[%s389 + $0x100] sm:$0xff]
        %v451 = vld [vmem:[%s389 + $0x108] sm:$0xff]
        %v452 = vld [vmem:[%s389 + $0x110] sm:$0xff]
        %v453 = vld [vmem:[%s389 + $0x118] sm:$0xff]
        %v454 = vld [vmem:[%s389 + $0x120] sm:$0xff]
        %v455 = vld [vmem:[%s389 + $0x128] sm:$0xff]
        %v456 = vld [vmem:[%s389 + $0x130] sm:$0xff]
        %v457 = vld [vmem:[%s389 + $0x138] sm:$0xff]
        %v458 = vld [vmem:[%s389 + $0x140] sm:$0xff]
        %v459 = vld [vmem:[%s389 + $0x148] sm:$0xff]
        %v460 = vld [vmem:[%s389 + $0x150] sm:$0xff]
        %v461 = vld [vmem:[%s389 + $0x158] sm:$0xff]
        %v462 = vld [vmem:[%s389 + $0x160] sm:$0xff]
        %v463 = vld [vmem:[%s389 + $0x168] sm:$0xff]
        %v464 = vld [vmem:[%s389 + $0x170] sm:$0xff]
        %v465 = vld [vmem:[%s389 + $0x178] sm:$0xff]
        %v466 = vld [vmem:[%s389 + $0x180] sm:$0xff]
        %v467 = vld [vmem:[%s389 + $0x188] sm:$0xff]
        %v468 = vld [vmem:[%s389 + $0x190] sm:$0xff]
        %v469 = vld [vmem:[%s389 + $0x198] sm:$0xff]
        %v470 = vld [vmem:[%s389 + $0x1a0] sm:$0xff]
        %v471 = vld [vmem:[%s389 + $0x1a8] sm:$0xff]
        %v472 = vld [vmem:[%s389 + $0x1b0] sm:$0xff]
        %v473 = vld [vmem:[%s389 + $0x1b8] sm:$0xff]
        %v474 = vld [vmem:[%s389 + $0x1c0] sm:$0xff]
        %v475 = vld [vmem:[%s389 + $0x1c8] sm:$0xff]
        %v476 = vld [vmem:[%s389 + $0x1d0] sm:$0xff]
        %v477 = vld [vmem:[%s389 + $0x1d8] sm:$0xff]
        %v478 = vld [vmem:[%s389 + $0x1e0] sm:$0xff]
        %v479 = vld [vmem:[%s389 + $0x1e8] sm:$0xff]
        %v480 = vld [vmem:[%s389 + $0x1f0] sm:$0xff]
        %v481 = vld [vmem:[%s389 + $0x1f8] sm:$0xff]
        %v482 = vld [vmem:[%s389 + $0x200] sm:$0xff]
        %v483 = vld [vmem:[%s389 + $0x208] sm:$0xff]
        %v484 = vld [vmem:[%s389 + $0x210] sm:$0xff]
        %v485 = vld [vmem:[%s389 + $0x218] sm:$0xff]
        %v486 = vld [vmem:[%s389 + $0x220] sm:$0xff]
        %v487 = vld [vmem:[%s389 + $0x228] sm:$0xff]
        %v488 = vld [vmem:[%s389 + $0x230] sm:$0xff]
        %v489 = vld [vmem:[%s389 + $0x238] sm:$0xff]
        %v490 = vld [vmem:[%s389 + $0x240] sm:$0xff]
        %v491 = vld [vmem:[%s389 + $0x248] sm:$0xff]
        %v492 = vld [vmem:[%s389 + $0x250] sm:$0xff]
        %v493 = vld [vmem:[%s389 + $0x258] sm:$0xff]
        %v494 = vld [vmem:[%s389 + $0x260] sm:$0xff]
        %v495 = vld [vmem:[%s389 + $0x268] sm:$0xff]
        %v496 = vld [vmem:[%s389 + $0x270] sm:$0xff]
        %v497 = vld [vmem:[%s389 + $0x278] sm:$0xff]
        %v498 = vld [vmem:[%s389 + $0x280] sm:$0xff]
        %v499 = vld [vmem:[%s389 + $0x288] sm:$0xff]
        %v500 = vld [vmem:[%s389 + $0x290] sm:$0xff]
        %v501 = vld [vmem:[%s389 + $0x298] sm:$0xff]
        %v502 = vld [vmem:[%s389 + $0x2a0] sm:$0xff]
        %v503 = vld [vmem:[%s389 + $0x2a8] sm:$0xff]
        %v504 = vld [vmem:[%s389 + $0x2b0] sm:$0xff]
        %v505 = vld [vmem:[%s389 + $0x2b8] sm:$0xff]
        %v506 = vld [vmem:[%s389 + $0x2c0] sm:$0xff]
        %v507 = vld [vmem:[%s389 + $0x2c8] sm:$0xff]
        %v508 = vld [vmem:[%s389 + $0x2d0] sm:$0xff]
        %v509 = vld [vmem:[%s389 + $0x2d8] sm:$0xff]
        %v510 = vld [vmem:[%s389 + $0x2e0] sm:$0xff]
        %v511 = vld [vmem:[%s389 + $0x2e8] sm:$0xff]
        %v512 = vld [vmem:[%s389 + $0x2f0] sm:$0xff]
        %v513 = vld [vmem:[%s389 + $0x2f8] sm:$0xff]
        %v514 = vld [vmem:[%s389 + $0x300] sm:$0xff]
        %v515 = vld [vmem:[%s389 + $0x308] sm:$0xff]
        %v516 = vld [vmem:[%s389 + $0x310] sm:$0xff]
        %v517 = vld [vmem:[%s389 + $0x318] sm:$0xff]
        %v518 = vld [vmem:[%s2] sm:$0xff]
        %v519 = vld [vmem:[%s2 + $0x8] sm:$0xff]
        %521 = vset.pattern.permute.xlu0 0
        %522 = vperm.xlu0 %521, %v518
        %v523 = vpop.permute.xlu0 %522
        %526 = vset.pattern.permute.xlu0 0
        %527 = vperm.xlu0 %526, %v519
        %v528 = vpop.permute.xlu0 %527
        %v534 = vunpack.c.l.b16 %v414
        %v535 = vunpack.c.h.b16 %v414
        %v536 = vunpack.c.l.b16 %v415
        %v537 = vunpack.c.h.b16 %v415
        %v538 = vunpack.c.l.b16 %v416
        %v539 = vunpack.c.h.b16 %v416
        %v540 = vunpack.c.l.b16 %v417
        %v541 = vunpack.c.h.b16 %v417
        %v542 = vpack.c.b16 %v538, %v534
        %v543 = vpack.c.b16 %v539, %v535
        %v544 = vpack.c.b16 %v540, %v536
        %v545 = vpack.c.b16 %v541, %v537
        %v649 = vunpack.c.l.b16 %v418
        %v650 = vunpack.c.h.b16 %v418
        %v651 = vunpack.c.l.b16 %v419
        %v652 = vunpack.c.h.b16 %v419
        %v653 = vunpack.c.l.b16 %v420
        %v654 = vunpack.c.h.b16 %v420
        %v655 = vunpack.c.l.b16 %v421
        %v656 = vunpack.c.h.b16 %v421
        %v657 = vunpack.c.l.b16 %v422
        %v658 = vunpack.c.h.b16 %v422
        %v659 = vunpack.c.l.b16 %v423
        %v660 = vunpack.c.h.b16 %v423
        %v661 = vunpack.c.l.b16 %v424
        %v662 = vunpack.c.h.b16 %v424
        %v663 = vunpack.c.l.b16 %v425
        %v664 = vunpack.c.h.b16 %v425
        %v665 = vunpack.c.l.b16 %v426
        %v666 = vunpack.c.h.b16 %v426
        %v667 = vunpack.c.l.b16 %v427
        %v668 = vunpack.c.h.b16 %v427
        %v669 = vunpack.c.l.b16 %v428
        %v670 = vunpack.c.h.b16 %v428
        %v671 = vunpack.c.l.b16 %v429
        %v672 = vunpack.c.h.b16 %v429
        %v673 = vunpack.c.l.b16 %v430
        %v674 = vunpack.c.h.b16 %v430
        %v675 = vunpack.c.l.b16 %v431
        %v676 = vunpack.c.h.b16 %v431
        %v677 = vunpack.c.l.b16 %v432
        %v678 = vunpack.c.h.b16 %v432
        %v679 = vunpack.c.l.b16 %v433
        %v680 = vunpack.c.h.b16 %v433
        %v681 = vunpack.c.l.b16 %v434
        %v682 = vunpack.c.h.b16 %v434
        %v683 = vunpack.c.l.b16 %v435
        %v684 = vunpack.c.h.b16 %v435
        %v685 = vunpack.c.l.b16 %v436
        %v686 = vunpack.c.h.b16 %v436
        %v687 = vunpack.c.l.b16 %v437
        %v688 = vunpack.c.h.b16 %v437
        %v689 = vunpack.c.l.b16 %v438
        %v690 = vunpack.c.h.b16 %v438
        %v691 = vunpack.c.l.b16 %v439
        %v692 = vunpack.c.h.b16 %v439
        %v693 = vunpack.c.l.b16 %v440
        %v694 = vunpack.c.h.b16 %v440
        %v695 = vunpack.c.l.b16 %v441
        %v696 = vunpack.c.h.b16 %v441
        %v697 = vunpack.c.l.b16 %v442
        %v698 = vunpack.c.h.b16 %v442
        %v699 = vunpack.c.l.b16 %v443
        %v700 = vunpack.c.h.b16 %v443
        %v701 = vunpack.c.l.b16 %v444
        %v702 = vunpack.c.h.b16 %v444
        %v703 = vunpack.c.l.b16 %v445
        %v704 = vunpack.c.h.b16 %v445
        %v705 = vunpack.c.l.b16 %v446
        %v706 = vunpack.c.h.b16 %v446
        %v707 = vunpack.c.l.b16 %v447
        %v708 = vunpack.c.h.b16 %v447
        %v709 = vunpack.c.l.b16 %v448
        %v710 = vunpack.c.h.b16 %v448
        %v711 = vunpack.c.l.b16 %v449
        %v712 = vunpack.c.h.b16 %v449
        %v713 = vunpack.c.l.b16 %v450
        %v714 = vunpack.c.h.b16 %v450
        %v715 = vunpack.c.l.b16 %v451
        %v716 = vunpack.c.h.b16 %v451
        %v717 = vunpack.c.l.b16 %v452
        %v718 = vunpack.c.h.b16 %v452
        %v719 = vunpack.c.l.b16 %v453
        %v720 = vunpack.c.h.b16 %v453
        %v721 = vunpack.c.l.b16 %v454
        %v722 = vunpack.c.h.b16 %v454
        %v723 = vunpack.c.l.b16 %v455
        %v724 = vunpack.c.h.b16 %v455
        %v725 = vunpack.c.l.b16 %v456
        %v726 = vunpack.c.h.b16 %v456
        %v727 = vunpack.c.l.b16 %v457
        %v728 = vunpack.c.h.b16 %v457
        %v729 = vunpack.c.l.b16 %v458
        %v730 = vunpack.c.h.b16 %v458
        %v731 = vunpack.c.l.b16 %v459
        %v732 = vunpack.c.h.b16 %v459
        %v733 = vunpack.c.l.b16 %v460
        %v734 = vunpack.c.h.b16 %v460
        %v735 = vunpack.c.l.b16 %v461
        %v736 = vunpack.c.h.b16 %v461
        %v737 = vunpack.c.l.b16 %v462
        %v738 = vunpack.c.h.b16 %v462
        %v739 = vunpack.c.l.b16 %v463
        %v740 = vunpack.c.h.b16 %v463
        %v741 = vunpack.c.l.b16 %v464
        %v742 = vunpack.c.h.b16 %v464
        %v743 = vunpack.c.l.b16 %v465
        %v744 = vunpack.c.h.b16 %v465
        %v745 = vunpack.c.l.b16 %v466
        %v746 = vunpack.c.h.b16 %v466
        %v747 = vunpack.c.l.b16 %v467
        %v748 = vunpack.c.h.b16 %v467
        %v749 = vunpack.c.l.b16 %v468
        %v750 = vunpack.c.h.b16 %v468
        %v751 = vunpack.c.l.b16 %v469
        %v752 = vunpack.c.h.b16 %v469
        %v753 = vunpack.c.l.b16 %v470
        %v754 = vunpack.c.h.b16 %v470
        %v755 = vunpack.c.l.b16 %v471
        %v756 = vunpack.c.h.b16 %v471
        %v757 = vunpack.c.l.b16 %v472
        %v758 = vunpack.c.h.b16 %v472
        %v759 = vunpack.c.l.b16 %v473
        %v760 = vunpack.c.h.b16 %v473
        %v761 = vunpack.c.l.b16 %v474
        %v762 = vunpack.c.h.b16 %v474
        %v763 = vunpack.c.l.b16 %v475
        %v764 = vunpack.c.h.b16 %v475
        %v765 = vunpack.c.l.b16 %v476
        %v766 = vunpack.c.h.b16 %v476
        %v767 = vunpack.c.l.b16 %v477
        %v768 = vunpack.c.h.b16 %v477
        %v769 = vunpack.c.l.b16 %v478
        %v770 = vunpack.c.h.b16 %v478
        %v771 = vunpack.c.l.b16 %v479
        %v772 = vunpack.c.h.b16 %v479
        %v773 = vunpack.c.l.b16 %v480
        %v774 = vunpack.c.h.b16 %v480
        %v775 = vunpack.c.l.b16 %v481
        %v776 = vunpack.c.h.b16 %v481
        %v777 = vunpack.c.l.b16 %v482
        %v778 = vunpack.c.h.b16 %v482
        %v779 = vunpack.c.l.b16 %v483
        %v780 = vunpack.c.h.b16 %v483
        %v781 = vunpack.c.l.b16 %v484
        %v782 = vunpack.c.h.b16 %v484
        %v783 = vunpack.c.l.b16 %v485
        %v784 = vunpack.c.h.b16 %v485
        %v785 = vunpack.c.l.b16 %v486
        %v786 = vunpack.c.h.b16 %v486
        %v787 = vunpack.c.l.b16 %v487
        %v788 = vunpack.c.h.b16 %v487
        %v789 = vunpack.c.l.b16 %v488
        %v790 = vunpack.c.h.b16 %v488
        %v791 = vunpack.c.l.b16 %v489
        %v792 = vunpack.c.h.b16 %v489
        %v793 = vunpack.c.l.b16 %v490
        %v794 = vunpack.c.h.b16 %v490
        %v795 = vunpack.c.l.b16 %v491
        %v796 = vunpack.c.h.b16 %v491
        %v797 = vunpack.c.l.b16 %v492
        %v798 = vunpack.c.h.b16 %v492
        %v799 = vunpack.c.l.b16 %v493
        %v800 = vunpack.c.h.b16 %v493
        %v801 = vunpack.c.l.b16 %v494
        %v802 = vunpack.c.h.b16 %v494
        %v803 = vunpack.c.l.b16 %v495
        %v804 = vunpack.c.h.b16 %v495
        %v805 = vunpack.c.l.b16 %v496
        %v806 = vunpack.c.h.b16 %v496
        %v807 = vunpack.c.l.b16 %v497
        %v808 = vunpack.c.h.b16 %v497
        %v809 = vunpack.c.l.b16 %v498
        %v810 = vunpack.c.h.b16 %v498
        %v811 = vunpack.c.l.b16 %v499
        %v812 = vunpack.c.h.b16 %v499
        %v813 = vunpack.c.l.b16 %v500
        %v814 = vunpack.c.h.b16 %v500
        %v815 = vunpack.c.l.b16 %v501
        %v816 = vunpack.c.h.b16 %v501
        %v817 = vunpack.c.l.b16 %v502
        %v818 = vunpack.c.h.b16 %v502
        %v819 = vunpack.c.l.b16 %v503
        %v820 = vunpack.c.h.b16 %v503
        %v821 = vunpack.c.l.b16 %v504
        %v822 = vunpack.c.h.b16 %v504
        %v823 = vunpack.c.l.b16 %v505
        %v824 = vunpack.c.h.b16 %v505
        %v825 = vunpack.c.l.b16 %v506
        %v826 = vunpack.c.h.b16 %v506
        %v827 = vunpack.c.l.b16 %v507
        %v828 = vunpack.c.h.b16 %v507
        %v829 = vunpack.c.l.b16 %v508
        %v830 = vunpack.c.h.b16 %v508
        %v831 = vunpack.c.l.b16 %v509
        %v832 = vunpack.c.h.b16 %v509
        %v833 = vunpack.c.l.b16 %v510
        %v834 = vunpack.c.h.b16 %v510
        %v835 = vunpack.c.l.b16 %v511
        %v836 = vunpack.c.h.b16 %v511
        %v837 = vunpack.c.l.b16 %v512
        %v838 = vunpack.c.h.b16 %v512
        %v839 = vunpack.c.l.b16 %v513
        %v840 = vunpack.c.h.b16 %v513
        %v841 = vunpack.c.l.b16 %v514
        %v842 = vunpack.c.h.b16 %v514
        %v843 = vunpack.c.l.b16 %v515
        %v844 = vunpack.c.h.b16 %v515
        %v845 = vunpack.c.l.b16 %v516
        %v846 = vunpack.c.h.b16 %v516
        %v847 = vunpack.c.l.b16 %v517
        %v848 = vunpack.c.h.b16 %v517
        %v849 = vpack.c.b16 %v653, %v649
        %v850 = vpack.c.b16 %v654, %v650
        %v851 = vpack.c.b16 %v655, %v651
        %v852 = vpack.c.b16 %v656, %v652
        %v853 = vpack.c.b16 %v661, %v657
        %v854 = vpack.c.b16 %v662, %v658
        %v855 = vpack.c.b16 %v663, %v659
        %v856 = vpack.c.b16 %v664, %v660
        %v857 = vpack.c.b16 %v669, %v665
        %v858 = vpack.c.b16 %v670, %v666
        %v859 = vpack.c.b16 %v671, %v667
        %v860 = vpack.c.b16 %v672, %v668
        %v861 = vpack.c.b16 %v677, %v673
        %v862 = vpack.c.b16 %v678, %v674
        %v863 = vpack.c.b16 %v679, %v675
        %v864 = vpack.c.b16 %v680, %v676
        %v865 = vpack.c.b16 %v685, %v681
        %v866 = vpack.c.b16 %v686, %v682
        %v867 = vpack.c.b16 %v687, %v683
        %v868 = vpack.c.b16 %v688, %v684
        %v869 = vpack.c.b16 %v693, %v689
        %v870 = vpack.c.b16 %v694, %v690
        %v871 = vpack.c.b16 %v695, %v691
        %v872 = vpack.c.b16 %v696, %v692
        %v873 = vpack.c.b16 %v701, %v697
        %v874 = vpack.c.b16 %v702, %v698
        %v875 = vpack.c.b16 %v703, %v699
        %v876 = vpack.c.b16 %v704, %v700
        %v877 = vpack.c.b16 %v709, %v705
        %v878 = vpack.c.b16 %v710, %v706
        %v879 = vpack.c.b16 %v711, %v707
        %v880 = vpack.c.b16 %v712, %v708
        %v881 = vpack.c.b16 %v717, %v713
        %v882 = vpack.c.b16 %v718, %v714
        %v883 = vpack.c.b16 %v719, %v715
        %v884 = vpack.c.b16 %v720, %v716
        %v885 = vpack.c.b16 %v725, %v721
        %v886 = vpack.c.b16 %v726, %v722
        %v887 = vpack.c.b16 %v727, %v723
        %v888 = vpack.c.b16 %v728, %v724
        %v889 = vpack.c.b16 %v733, %v729
        %v890 = vpack.c.b16 %v734, %v730
        %v891 = vpack.c.b16 %v735, %v731
        %v892 = vpack.c.b16 %v736, %v732
        %v893 = vpack.c.b16 %v741, %v737
        %v894 = vpack.c.b16 %v742, %v738
        %v895 = vpack.c.b16 %v743, %v739
        %v896 = vpack.c.b16 %v744, %v740
        %v897 = vpack.c.b16 %v749, %v745
        %v898 = vpack.c.b16 %v750, %v746
        %v899 = vpack.c.b16 %v751, %v747
        %v900 = vpack.c.b16 %v752, %v748
        %v901 = vpack.c.b16 %v757, %v753
        %v902 = vpack.c.b16 %v758, %v754
        %v903 = vpack.c.b16 %v759, %v755
        %v904 = vpack.c.b16 %v760, %v756
        %v905 = vpack.c.b16 %v765, %v761
        %v906 = vpack.c.b16 %v766, %v762
        %v907 = vpack.c.b16 %v767, %v763
        %v908 = vpack.c.b16 %v768, %v764
        %v909 = vpack.c.b16 %v773, %v769
        %v910 = vpack.c.b16 %v774, %v770
        %v911 = vpack.c.b16 %v775, %v771
        %v912 = vpack.c.b16 %v776, %v772
        %v913 = vpack.c.b16 %v781, %v777
        %v914 = vpack.c.b16 %v782, %v778
        %v915 = vpack.c.b16 %v783, %v779
        %v916 = vpack.c.b16 %v784, %v780
        %v917 = vpack.c.b16 %v789, %v785
        %v918 = vpack.c.b16 %v790, %v786
        %v919 = vpack.c.b16 %v791, %v787
        %v920 = vpack.c.b16 %v792, %v788
        %v921 = vpack.c.b16 %v797, %v793
        %v922 = vpack.c.b16 %v798, %v794
        %v923 = vpack.c.b16 %v799, %v795
        %v924 = vpack.c.b16 %v800, %v796
        %v925 = vpack.c.b16 %v805, %v801
        %v926 = vpack.c.b16 %v806, %v802
        %v927 = vpack.c.b16 %v807, %v803
        %v928 = vpack.c.b16 %v808, %v804
        %v929 = vpack.c.b16 %v813, %v809
        %v930 = vpack.c.b16 %v814, %v810
        %v931 = vpack.c.b16 %v815, %v811
        %v932 = vpack.c.b16 %v816, %v812
        %v933 = vpack.c.b16 %v821, %v817
        %v934 = vpack.c.b16 %v822, %v818
        %v935 = vpack.c.b16 %v823, %v819
        %v936 = vpack.c.b16 %v824, %v820
        %v937 = vpack.c.b16 %v829, %v825
        %v938 = vpack.c.b16 %v830, %v826
        %v939 = vpack.c.b16 %v831, %v827
        %v940 = vpack.c.b16 %v832, %v828
        %v941 = vpack.c.b16 %v837, %v833
        %v942 = vpack.c.b16 %v838, %v834
        %v943 = vpack.c.b16 %v839, %v835
        %v944 = vpack.c.b16 %v840, %v836
        %v945 = vpack.c.b16 %v845, %v841
        %v946 = vpack.c.b16 %v846, %v842
        %v947 = vpack.c.b16 %v847, %v843
        %v948 = vpack.c.b16 %v848, %v844
        %vm1049 = vcmask 130048
        %v1051 = vsel %vm1049, %v545, 0
        %1053 = vmatprep.subr.bf16.mxu0 %v850
        %1054 = vmatpush1.bf16.msra.mxu0 %v849
        %1055 = vmatprep.subr.bf16.mxu0 %v854
        %1056 = vmatpush1.bf16.msra.mxu0 %v853
        %1057 = vmatprep.subr.bf16.mxu0 %v858
        %1058 = vmatpush1.bf16.msra.mxu0 %v857
        %1059 = vmatprep.subr.bf16.mxu0 %v862
        %1060 = vmatpush1.bf16.msra.mxu0 %v861
        %1061 = vmatprep.subr.bf16.mxu0 %v866
        %1062 = vmatpush1.bf16.msra.mxu0 %v865
        %1063 = vmatprep.subr.bf16.mxu0 %v870
        %1064 = vmatpush1.bf16.msra.mxu0 %v869
        %1065 = vmatprep.subr.bf16.mxu0 %v874
        %1066 = vmatpush1.bf16.msra.mxu0 %v873
        %1067 = vmatprep.subr.bf16.mxu0 %v878
        %1068 = vmatpush1.bf16.msra.mxu0 %v877
        %1069 = vmatprep.subr.bf16.mxu0 %v882
        %1070 = vmatpush1.bf16.msra.mxu0 %v881
        %1071 = vmatprep.subr.bf16.mxu0 %v886
        %1072 = vmatpush1.bf16.msra.mxu0 %v885
        %1073 = vmatprep.subr.bf16.mxu0 %v890
        %1074 = vmatpush1.bf16.msra.mxu0 %v889
        %1075 = vmatprep.subr.bf16.mxu0 %v894
        %1076 = vmatpush1.bf16.msra.mxu0 %v893
        %1077 = vmatprep.subr.bf16.mxu0 %v898
        %1078 = vmatpush1.bf16.msra.mxu0 %v897
        %1079 = vmatprep.subr.bf16.mxu0 %v902
        %1080 = vmatpush1.bf16.msra.mxu0 %v901
        %1081 = vmatprep.subr.bf16.mxu0 %v906
        %1082 = vmatpush1.bf16.msra.mxu0 %v905
        %1083 = vmatprep.subr.bf16.mxu0 %v910
        %1084 = vmatpush1.bf16.msra.mxu0 %v909
        %1085 = vmatprep.mubr.bf16.mxu0 %v543
        %1086 = vmatmul.mubr.bf16.gmra.mrb[0].mxu0 %v542
        %v1087 = vpop.f32.mrb[0].mxu0
        %v1088 = vadd.f32 %v523, %v1087
        %v1089 = vpop.f32.mrb[0].mxu0
        %v1090 = vadd.f32 %v523, %v1089
        %v1091 = vpop.f32.mrb[0].mxu0
        %v1092 = vadd.f32 %v528, %v1091
        %v1093 = vpop.f32.mrb[0].mxu0
        %v1094 = vadd.f32 %v528, %v1093
        %1095 = vdwg.mxu0
        %1096 = vmatprep.subr.bf16.mxu0 %v914
        %1097 = vmatpush1.bf16.msra.mxu0 %v913
        %1098 = vmatprep.subr.bf16.mxu0 %v918
        %1099 = vmatpush1.bf16.msra.mxu0 %v917
        %1100 = vmatprep.subr.bf16.mxu0 %v922
        %1101 = vmatpush1.bf16.msra.mxu0 %v921
        %1102 = vmatprep.subr.bf16.mxu0 %v926
        %1103 = vmatpush1.bf16.msra.mxu0 %v925
        %1104 = vmatprep.subr.bf16.mxu0 %v930
        %1105 = vmatpush1.bf16.msra.mxu0 %v929
        %1106 = vmatprep.subr.bf16.mxu0 %v934
        %1107 = vmatpush1.bf16.msra.mxu0 %v933
        %1108 = vmatprep.subr.bf16.mxu0 %v938
        %1109 = vmatpush1.bf16.msra.mxu0 %v937
        %1110 = vmatprep.subr.bf16.mxu0 %v942
        %1111 = vmatpush1.bf16.msra.mxu0 %v941
        %1112 = vmatprep.subr.bf16.mxu0 %v946
        %1113 = vmatpush1.bf16.msra.mxu0 %v945
        %1114 = vmatprep.subr.bf16.mxu0 0
        %1115 = vmatpush1.bf16.msra.mxu0 0
        %1116 = vmatprep.subr.bf16.mxu0 0
        %1117 = vmatpush1.bf16.msra.mxu0 0
        %1118 = vmatprep.subr.bf16.mxu0 0
        %1119 = vmatpush1.bf16.msra.mxu0 0
        %1120 = vmatprep.subr.bf16.mxu0 0
        %1121 = vmatpush1.bf16.msra.mxu0 0
        %1122 = vmatprep.subr.bf16.mxu0 0
        %1123 = vmatpush1.bf16.msra.mxu0 0
        %1124 = vmatprep.subr.bf16.mxu0 0
        %1125 = vmatpush1.bf16.msra.mxu0 0
        %1126 = vmatprep.subr.bf16.mxu0 0
        %1127 = vmatpush1.bf16.msra.mxu0 0
        %1128 = vmatprep.mubr.bf16.mxu0 %v1051
        %1129 = vmatmul.mubr.bf16.gmra.mrb[0].mxu0 %v544
        %v1130 = vpop.f32.mrb[0].mxu0
        %v1131 = vadd.f32 %v1088, %v1130
        %v1132 = vpop.f32.mrb[0].mxu0
        %v1133 = vadd.f32 %v1090, %v1132
        %v1134 = vpop.f32.mrb[0].mxu0
        %v1135 = vadd.f32 %v1092, %v1134
        %v1136 = vpop.f32.mrb[0].mxu0
        %v1137 = vadd.f32 %v1094, %v1136
        %1138 = vdwg.mxu0
        %1139 = vmatprep.subr.bf16.mxu0 %v852
        %1140 = vmatpush1.bf16.msra.mxu0 %v851
        %1141 = vmatprep.subr.bf16.mxu0 %v856
        %1142 = vmatpush1.bf16.msra.mxu0 %v855
        %1143 = vmatprep.subr.bf16.mxu0 %v860
        %1144 = vmatpush1.bf16.msra.mxu0 %v859
        %1145 = vmatprep.subr.bf16.mxu0 %v864
        %1146 = vmatpush1.bf16.msra.mxu0 %v863
        %1147 = vmatprep.subr.bf16.mxu0 %v868
        %1148 = vmatpush1.bf16.msra.mxu0 %v867
        %1149 = vmatprep.subr.bf16.mxu0 %v872
        %1150 = vmatpush1.bf16.msra.mxu0 %v871
        %1151 = vmatprep.subr.bf16.mxu0 %v876
        %1152 = vmatpush1.bf16.msra.mxu0 %v875
        %1153 = vmatprep.subr.bf16.mxu0 %v880
        %1154 = vmatpush1.bf16.msra.mxu0 %v879
        %1155 = vmatprep.subr.bf16.mxu0 %v884
        %1156 = vmatpush1.bf16.msra.mxu0 %v883
        %1157 = vmatprep.subr.bf16.mxu0 %v888
        %1158 = vmatpush1.bf16.msra.mxu0 %v887
        %1159 = vmatprep.subr.bf16.mxu0 %v892
        %1160 = vmatpush1.bf16.msra.mxu0 %v891
        %1161 = vmatprep.subr.bf16.mxu0 %v896
        %1162 = vmatpush1.bf16.msra.mxu0 %v895
        %1163 = vmatprep.subr.bf16.mxu0 %v900
        %1164 = vmatpush1.bf16.msra.mxu0 %v899
        %1165 = vmatprep.subr.bf16.mxu0 %v904
        %1166 = vmatpush1.bf16.msra.mxu0 %v903
        %1167 = vmatprep.subr.bf16.mxu0 %v908
        %1168 = vmatpush1.bf16.msra.mxu0 %v907
        %1169 = vmatprep.subr.bf16.mxu0 %v912
        %1170 = vmatpush1.bf16.msra.mxu0 %v911
        %1171 = vmatprep.mubr.bf16.mxu0 %v543
        %1172 = vmatmul.mubr.bf16.gmra.mrb[0].mxu0 %v542
        %v1173 = vpop.f32.mrb[0].mxu0
        %v1174 = vadd.f32 %v523, %v1173
        %v1175 = vpop.f32.mrb[0].mxu0
        %v1176 = vadd.f32 %v523, %v1175
        %v1177 = vpop.f32.mrb[0].mxu0
        %v1178 = vadd.f32 %v528, %v1177
        %v1179 = vpop.f32.mrb[0].mxu0
        %v1180 = vadd.f32 %v528, %v1179
        %1181 = vdwg.mxu0
        %1182 = vmatprep.subr.bf16.mxu0 %v916
        %1183 = vmatpush1.bf16.msra.mxu0 %v915
        %1184 = vmatprep.subr.bf16.mxu0 %v920
        %1185 = vmatpush1.bf16.msra.mxu0 %v919
        %1186 = vmatprep.subr.bf16.mxu0 %v924
        %1187 = vmatpush1.bf16.msra.mxu0 %v923
        %1188 = vmatprep.subr.bf16.mxu0 %v928
        %1189 = vmatpush1.bf16.msra.mxu0 %v927
        %1190 = vmatprep.subr.bf16.mxu0 %v932
        %1191 = vmatpush1.bf16.msra.mxu0 %v931
        %1192 = vmatprep.subr.bf16.mxu0 %v936
        %1193 = vmatpush1.bf16.msra.mxu0 %v935
        %1194 = vmatprep.subr.bf16.mxu0 %v940
        %1195 = vmatpush1.bf16.msra.mxu0 %v939
        %1196 = vmatprep.subr.bf16.mxu0 %v944
        %1197 = vmatpush1.bf16.msra.mxu0 %v943
        %1198 = vmatprep.subr.bf16.mxu0 %v948
        %1199 = vmatpush1.bf16.msra.mxu0 %v947
        %1200 = vmatprep.subr.bf16.mxu0 0
        %1201 = vmatpush1.bf16.msra.mxu0 0
        %1202 = vmatprep.subr.bf16.mxu0 0
        %1203 = vmatpush1.bf16.msra.mxu0 0
        %1204 = vmatprep.subr.bf16.mxu0 0
        %1205 = vmatpush1.bf16.msra.mxu0 0
        %1206 = vmatprep.subr.bf16.mxu0 0
        %1207 = vmatpush1.bf16.msra.mxu0 0
        %1208 = vmatprep.subr.bf16.mxu0 0
        %1209 = vmatpush1.bf16.msra.mxu0 0
        %1210 = vmatprep.subr.bf16.mxu0 0
        %1211 = vmatpush1.bf16.msra.mxu0 0
        %1212 = vmatprep.subr.bf16.mxu0 0
        %1213 = vmatpush1.bf16.msra.mxu0 0
        %1214 = vmatprep.mubr.bf16.mxu0 %v1051
        %1215 = vmatmul.mubr.bf16.gmra.mrb[0].mxu0 %v544
        %v1216 = vpop.f32.mrb[0].mxu0
        %v1217 = vadd.f32 %v1174, %v1216
        %v1218 = vpop.f32.mrb[0].mxu0
        %v1219 = vadd.f32 %v1176, %v1218
        %v1220 = vpop.f32.mrb[0].mxu0
        %v1221 = vadd.f32 %v1178, %v1220
        %v1222 = vpop.f32.mrb[0].mxu0
        %v1223 = vadd.f32 %v1180, %v1222
        %1224 = vdwg.mxu0
        %s1225 = sld [smem:[#allocation2]]
        %vm1226 = vcmp.gt.f32.partialorder %v1131, 0.0
        %vm1227 = vcmp.gt.f32.partialorder %v1133, 0.0
        %vm1228 = vcmp.gt.f32.partialorder %v1217, 0.0
        %vm1229 = vcmp.gt.f32.partialorder %v1219, 0.0
        %vm1230 = vcmp.gt.f32.partialorder %v1135, 0.0
        %vm1231 = vcmp.gt.f32.partialorder %v1137, 0.0
        %vm1232 = vcmp.gt.f32.partialorder %v1221, 0.0
        %vm1233 = vcmp.gt.f32.partialorder %v1223, 0.0
        %v1234 = vstv %s1225
        %v1235 = vmul.f32 %v1234, %v1131
        %v1236 = vmul.f32 %v1234, %v1133
        %v1237 = vmul.f32 %v1234, %v1217
        %v1238 = vmul.f32 %v1234, %v1219
        %v1239 = vmul.f32 %v1234, %v1135
        %v1240 = vmul.f32 %v1234, %v1137
        %v1241 = vmul.f32 %v1234, %v1221
        %v1242 = vmul.f32 %v1234, %v1223
        %v1243 = vsel %vm1226, %v1131, %v1235
        %v1244 = vsel %vm1227, %v1133, %v1236
        %v1245 = vsel %vm1228, %v1217, %v1237
        %v1246 = vsel %vm1229, %v1219, %v1238
        %v1247 = vsel %vm1230, %v1135, %v1239
        %v1248 = vsel %vm1231, %v1137, %v1240
        %v1249 = vsel %vm1232, %v1221, %v1241
        %v1250 = vsel %vm1233, %v1223, %v1242
        %v1251 = vpack.c.bf16 %v1247, %v1243
        %v1252 = vpack.c.bf16 %v1248, %v1244
        %v1253 = vpack.c.bf16 %v1249, %v1245
        %v1254 = vpack.c.bf16 %v1250, %v1246
        %v1259 = vunpack.c.l.b16 %v1251
        %v1260 = vunpack.c.l.b16 %v1252
        %v1261 = vunpack.c.l.b16 %v1253
        %v1262 = vunpack.c.l.b16 %v1254
        %v1263 = vunpack.c.h.b16 %v1251
        %v1264 = vunpack.c.h.b16 %v1252
        %v1265 = vunpack.c.h.b16 %v1253
        %v1266 = vunpack.c.h.b16 %v1254
        %v1267 = vpack.c.b16 %v1260, %v1259
        %v1268 = vpack.c.b16 %v1262, %v1261
        %v1269 = vpack.c.b16 %v1264, %v1263
        %v1270 = vpack.c.b16 %v1266, %v1265
        %1275 = vst [vmem:[%s410] sm:$0xff] %v1267
        %1276 = vst [vmem:[%s410 + $0x8] sm:$0xff] %v1268
        %1277 = vst [vmem:[%s410 + $0x10] sm:$0xff] %v1269
        %1278 = vst [vmem:[%s410 + $0x18] sm:$0xff] %v1270
        %s1279 = sand.u32 %s113, 1
        %s1280 = sand.u32 %s113, 1
        %s1281 = smul.addr %s1280, 32
        %s1282 = scalar_lea.vmem [#allocation4], %s1281
        // Predicated region
        $region60: #{_cnn_forward.14} parent=54 // pred_check
          %p1283 = pneg %p123
        $region61: #{_cnn_forward.14} parent=54 // pred_check_branch
          %1285 = sbr.rel (%p1283) target = $region63
        $region62: #{_cnn_forward.14} parent=54 // pred_region
          %s1286 = smul.u32 4, %s16
          %s1287 = smul.addr %s1286, 4
          %s1288 = scalar_lea.vmem %s4, %s1287
          // Predicated region
          $region64: #{_cnn_forward.14} parent=62 // pred_check
            _
          $region65: #{_cnn_forward.14} parent=62 // pred_check_branch
            %1290 = sbr.rel (0) target = $region67
          $region66: #{_cnn_forward.14} parent=62 // pred_region
            // Predicated region
            $region68: #{_cnn_forward.14} parent=66 // pred_check
              _
            $region69: #{_cnn_forward.14} parent=66 // pred_check_branch
              %1292 = sbr.rel (0) target = $region71
            $region70: #{_cnn_forward.14} parent=66 // pred_region
              loop: start=0, step=1, limit=1
              $region72: #{_cnn_forward.14} parent=70 // loop_pre_header
                _
              $region73: #{_cnn_forward.14} parent=70 // loop_header
                %s1294 = sphi 0, %s1298
                %p1295 = scmp.ge.s32.totalorder %s1294, 1
                %s1299 = sphi %s1282, %s1282
                %s1300 = sphi %s1288, %s1288
              $region74: #{_cnn_forward.14} parent=70 // loop_header_branch
                %1297 = sbr.rel (%p1295) target = $region78
              $region75: #{_cnn_forward.14} parent=70 // loop_body
                %v1301 = vld [vmem:[%s1299] sm:$0xff]
                %1302 = vst [vmem:[%s1300] sm:$0xff] %v1301
                %v1303 = vld [vmem:[%s1299 + $0x8] sm:$0xff]
                %1304 = vst [vmem:[%s1300 + $0x8] sm:$0xff] %v1303
                %v1305 = vld [vmem:[%s1299 + $0x10] sm:$0xff]
                %1306 = vst [vmem:[%s1300 + $0x40] sm:$0xff] %v1305
                %v1307 = vld [vmem:[%s1299 + $0x18] sm:$0xff]
                %1308 = vst [vmem:[%s1300 + $0x48] sm:$0xff] %v1307
              $region76: #{_cnn_forward.14} parent=70 // loop_footer
                %s1298 = sadd.s32 1, %s1294
              $region77: #{_cnn_forward.14} parent=70 // loop_footer_branch
                %1293 = sbr.rel target = $region73
              $region78: #{_cnn_forward.14} parent=70 // loop_exit
                _
            $region71: #{_cnn_forward.14} parent=66 // pred_fallthru
              _
            // Predicated region
            $region79: #{_cnn_forward.14} parent=66 // pred_check
              _
            $region80: #{_cnn_forward.14} parent=66 // pred_check_branch
              %1310 = sbr.rel target = $region82
            $region81: #{_cnn_forward.14} parent=66 // pred_region
              _
            $region82: #{_cnn_forward.14} parent=66 // pred_fallthru
              _
          $region67: #{_cnn_forward.14} parent=62 // pred_fallthru
            _
          %1311 = vnop
        $region63: #{_cnn_forward.14} parent=54 // pred_fallthru
          _
      $region55: #{_cnn_forward.14} parent=5 // pred_fallthru
        _
      %p1312 = scmp.le.s32.totalorder 2, %s11
      // Predicated region
      $region83: #{_cnn_forward.14} parent=5 // pred_check
        %p1313 = pneg %p1312
      $region84: #{_cnn_forward.14} parent=5 // pred_check_branch
        %1315 = sbr.rel (%p1313) target = $region86
      $region85: #{_cnn_forward.14} parent=5 // pred_region
        %s1316 = ssub.s32 %s11, 2
        // Predicated region
        $region87: #{_cnn_forward.14} parent=85 // pred_check
          %p1317 = pneg %p129
        $region88: #{_cnn_forward.14} parent=85 // pred_check_branch
          %1319 = sbr.rel (%p1317) target = $region90
        $region89: #{_cnn_forward.14} parent=85 // pred_region
          %s1320 = sand.u32 %s114, 1
          %s1321 = sand.u32 %s114, 1
          %s1322 = smul.addr %s1321, 32
          %s1323 = scalar_lea.vmem [#allocation4], %s1322
        $region90: #{_cnn_forward.14} parent=85 // pred_fallthru
          _
      $region86: #{_cnn_forward.14} parent=5 // pred_fallthru
        _
    $region6: #{_cnn_forward.14} parent=1 // loop_footer
      %s15 = sadd.s32 1, %s11
    $region7: #{_cnn_forward.14} parent=1 // loop_footer_branch
      %10 = sbr.rel target = $region3
    $region8: #{_cnn_forward.14} parent=1 // loop_exit
      _

// kernel: _cnn_forward.15
$region0: #{_cnn_forward.15}
  #allocation0 [shape = 'u32[]', space=smem, size = 0x4, offset = 0x4, fixed_abs, tag = 'smem constant byte address 0x4 - core index']
  #allocation1 [shape = 'u32[144,128]{1,0:T(1,128)}', space=vmem, size = 0x12000, scoped, tag = 'internal scratch']
  %s0 = inlined_call_operand.vmem [shape: bf16[64,128], index: 0, kind: input, shape index: {}]
  %s1 = inlined_call_operand.vmem [shape: bf16[64,128], index: 1, kind: input, shape index: {}]
  %s2 = inlined_call_operand.vmem [shape: bf16[64,128], index: 2, kind: input, shape index: {}]
  %s3 = inlined_call_operand.vmem [shape: bf16[64,128], index: 3, kind: input, shape index: {}]
  %s4 = inlined_call_operand.vmem [shape: bf16[64,128], index: 4, kind: output, shape index: {}]
  %s5 = sld [smem:[#allocation0]]
  $region26: #{_cnn_forward.15} parent=0
    _
  %s7 = ssub.s32 1, %s5
  %s8 = scalar_select 0, %s7, %s5
  // Predicated region
  $region2: #{_cnn_forward.15} parent=0 // pred_check
    _
  $region3: #{_cnn_forward.15} parent=0 // pred_check_branch
    %10 = sbr.rel (0) target = $region5
  $region4: #{_cnn_forward.15} parent=0 // pred_region
    _
  $region5: #{_cnn_forward.15} parent=0 // pred_fallthru
    _
  // Predicated region
  $region6: #{_cnn_forward.15} parent=0 // pred_check
    _
  $region7: #{_cnn_forward.15} parent=0 // pred_check_branch
    %12 = sbr.rel (0) target = $region9
  $region8: #{_cnn_forward.15} parent=0 // pred_region
    _
  $region9: #{_cnn_forward.15} parent=0 // pred_fallthru
    _
  // Predicated region
  $region10: #{_cnn_forward.15} parent=0 // pred_check
    _
  $region11: #{_cnn_forward.15} parent=0 // pred_check_branch
    %14 = sbr.rel (0) target = $region13
  $region12: #{_cnn_forward.15} parent=0 // pred_region
    _
  $region13: #{_cnn_forward.15} parent=0 // pred_fallthru
    _
  // Predicated region
  $region14: #{_cnn_forward.15} parent=0 // pred_check
    _
  $region15: #{_cnn_forward.15} parent=0 // pred_check_branch
    %16 = sbr.rel (0) target = $region17
  $region16: #{_cnn_forward.15} parent=0 // pred_region
    _
  $region17: #{_cnn_forward.15} parent=0 // pred_fallthru
    _
  %v17 = vld [vmem:[%s0] sm:$0xf]
  %v18 = vld [vmem:[%s0 + $0x4] sm:$0xf]
  %v19 = vld [vmem:[%s0 + $0x8] sm:$0xf]
  %v20 = vld [vmem:[%s0 + $0xc] sm:$0xf]
  %v21 = vld [vmem:[%s0 + $0x10] sm:$0xf]
  %v22 = vld [vmem:[%s0 + $0x14] sm:$0xf]
  %v23 = vld [vmem:[%s0 + $0x18] sm:$0xf]
  %v24 = vld [vmem:[%s0 + $0x1c] sm:$0xf]
  %v25 = vld [vmem:[%s1] sm:$0xf]
  %v26 = vld [vmem:[%s1 + $0x4] sm:$0xf]
  %v27 = vld [vmem:[%s1 + $0x8] sm:$0xf]
  %v28 = vld [vmem:[%s1 + $0xc] sm:$0xf]
  %v29 = vld [vmem:[%s1 + $0x10] sm:$0xf]
  %v30 = vld [vmem:[%s1 + $0x14] sm:$0xf]
  %v31 = vld [vmem:[%s1 + $0x18] sm:$0xf]
  %v32 = vld [vmem:[%s1 + $0x1c] sm:$0xf]
  %v33 = vmax.bf16 %v17, %v25
  %v34 = vmax.bf16 %v18, %v26
  %v35 = vmax.bf16 %v19, %v27
  %v36 = vmax.bf16 %v20, %v28
  %v37 = vmax.bf16 %v21, %v29
  %v38 = vmax.bf16 %v22, %v30
  %v39 = vmax.bf16 %v23, %v31
  %v40 = vmax.bf16 %v24, %v32
  %v41 = vld [vmem:[%s2] sm:$0xf]
  %v42 = vld [vmem:[%s2 + $0x4] sm:$0xf]
  %v43 = vld [vmem:[%s2 + $0x8] sm:$0xf]
  %v44 = vld [vmem:[%s2 + $0xc] sm:$0xf]
  %v45 = vld [vmem:[%s2 + $0x10] sm:$0xf]
  %v46 = vld [vmem:[%s2 + $0x14] sm:$0xf]
  %v47 = vld [vmem:[%s2 + $0x18] sm:$0xf]
  %v48 = vld [vmem:[%s2 + $0x1c] sm:$0xf]
  %v49 = vld [vmem:[%s3] sm:$0xf]
  %v50 = vld [vmem:[%s3 + $0x4] sm:$0xf]
  %v51 = vld [vmem:[%s3 + $0x8] sm:$0xf]
  %v52 = vld [vmem:[%s3 + $0xc] sm:$0xf]
  %v53 = vld [vmem:[%s3 + $0x10] sm:$0xf]
  %v54 = vld [vmem:[%s3 + $0x14] sm:$0xf]
  %v55 = vld [vmem:[%s3 + $0x18] sm:$0xf]
  %v56 = vld [vmem:[%s3 + $0x1c] sm:$0xf]
  %v57 = vmax.bf16 %v41, %v49
  %v58 = vmax.bf16 %v42, %v50
  %v59 = vmax.bf16 %v43, %v51
  %v60 = vmax.bf16 %v44, %v52
  %v61 = vmax.bf16 %v45, %v53
  %v62 = vmax.bf16 %v46, %v54
  %v63 = vmax.bf16 %v47, %v55
  %v64 = vmax.bf16 %v48, %v56
  %v65 = vmax.bf16 %v33, %v57
  %v66 = vmax.bf16 %v34, %v58
  %v67 = vmax.bf16 %v35, %v59
  %v68 = vmax.bf16 %v36, %v60
  %v69 = vmax.bf16 %v37, %v61
  %v70 = vmax.bf16 %v38, %v62
  %v71 = vmax.bf16 %v39, %v63
  %v72 = vmax.bf16 %v40, %v64
  %73 = vst [vmem:[%s4] sm:$0xf] %v65
  %74 = vst [vmem:[%s4 + $0x4] sm:$0xf] %v66
  %75 = vst [vmem:[%s4 + $0x8] sm:$0xf] %v67
  %76 = vst [vmem:[%s4 + $0xc] sm:$0xf] %v68
  %77 = vst [vmem:[%s4 + $0x10] sm:$0xf] %v69
  %78 = vst [vmem:[%s4 + $0x14] sm:$0xf] %v70
  %79 = vst [vmem:[%s4 + $0x18] sm:$0xf] %v71
  %80 = vst [vmem:[%s4 + $0x1c] sm:$0xf] %v72
  // Predicated region
  $region18: #{_cnn_forward.15} parent=0 // pred_check
    _
  $region19: #{_cnn_forward.15} parent=0 // pred_check_branch
    %82 = sbr.rel (0) target = $region21
  $region20: #{_cnn_forward.15} parent=0 // pred_region
    _
  $region21: #{_cnn_forward.15} parent=0 // pred_fallthru
    _
  // Predicated region
  $region22: #{_cnn_forward.15} parent=0 // pred_check
    _
  $region23: #{_cnn_forward.15} parent=0 // pred_check_branch
    %84 = sbr.rel (0) target = $region25
  $region24: #{_cnn_forward.15} parent=0 // pred_region
    _
  $region25: #{_cnn_forward.15} parent=0 // pred_fallthru
    _

// kernel: _cnn_forward.16
$region0: #{_cnn_forward.16}
  #allocation0 [shape = 'u32[]', space=smem, size = 0x4, offset = 0x4, fixed_abs, tag = 'smem constant byte address 0x4 - core index']
  #allocation1 [shape = 'u32[144,128]{1,0:T(1,128)}', space=vmem, size = 0x12000, scoped, tag = 'internal scratch']
  #allocation2 [shape = 'f32[1]{0:T(128)S(6)}', space=smem, size = 0x200, scoped, tag = 'scoped memory for _cnn_forward.16']
  %s0 = inlined_call_operand.vmem [shape: bf16[144,512], index: 0, kind: input, shape index: {}]
  %s1 = inlined_call_operand.vmem [shape: bf16[32,144], index: 1, kind: input, shape index: {}]
  %s2 = inlined_call_operand.vmem [shape: f32[32,1], index: 2, kind: input, shape index: {}]
  %s3 = inlined_call_operand.<no memory space> [shape: f32[1], index: 3, kind: input, shape index: {}]
  %s4 = inlined_call_operand.vmem [shape: bf16[32,512], index: 4, kind: output, shape index: {}]
  %s5 = sld [smem:[#allocation0]]
  $region121: #{_cnn_forward.16} parent=0
    _
  %s7 = ssub.s32 1, %s5
  %s8 = scalar_select 0, %s7, %s5
  %9 = sst [smem:[#allocation2]] %s3
  $region1: #{_cnn_forward.16} parent=0
    #allocation3 [shape = 'u8[147456]{0}', space=vmem, size = 0x24000, scoped, tag = 'input window, operand 0']
    #allocation4 [shape = 'u8[32768]{0}', space=vmem, size = 0x8000, scoped, tag = 'output window, operand 0']
    loop: start=0, step=1, limit=4
    $region2: #{_cnn_forward.16} parent=1 // loop_pre_header
      _
    $region3: #{_cnn_forward.16} parent=1 // loop_header
      %s11 = sphi 0, %s15
      %p12 = scmp.ge.s32.totalorder %s11, 4
      %s21 = sphi 0, %s23
      %s24 = sphi 0, %s21
      %s25 = sphi 0, %s24
      %s41 = sphi 0, %s25
      %s45 = sphi 0, %s45
      %s47 = sphi 0, %s45
      %s48 = sphi 0, %s47
      %s62 = sphi 0, %s48
      %s66 = sphi 0, %s66
      %s68 = sphi 0, %s66
      %s69 = sphi 0, %s68
      %s83 = sphi 0, %s69
      %s87 = sphi 0, %s87
      %s89 = sphi 0, %s87
      %s90 = sphi 0, %s89
      %s104 = sphi 0, %s90
      %s110 = sphi 0, %s112
      %s113 = sphi 0, %s110
      %s114 = sphi 0, %s113
      %s130 = sphi 0, %s114
    $region4: #{_cnn_forward.16} parent=1 // loop_header_branch
      %14 = sbr.rel (%p12) target = $region8
    $region5: #{_cnn_forward.16} parent=1 // loop_body
      %s16 = ssub.s32 %s11, 1
      %s17 = ssub.s32 %s11, 2
      %s18 = sadd.s32 %s11, 1
      %s19 = ssub.s32 %s11, %s18
      %p20 = scmp.eq.s32.totalorder %s19, 0
      %s22 = sadd.s32 %s21, 1
      %s23 = scalar_select %p20, %s21, %s22
      %p26 = pneg %p20
      %p27 = scmp.eq.s32.totalorder %s11, 1
      %p28 = por %p26, %p27
      %p29 = scmp.ne.s32.totalorder %s21, %s24
      %p30 = scmp.eq.s32.totalorder %s11, 0
      %p31 = por %p29, %p30
      %p32 = scmp.ne.s32.totalorder %s21, %s24
      %p33 = scmp.eq.s32.totalorder %s16, 1
      %p34 = por %p32, %p33
      %p35 = scmp.ne.s32.totalorder %s24, %s25
      %p36 = scmp.eq.s32.totalorder %s16, 0
      %p37 = por %p35, %p36
      %p38 = scmp.ne.s32.totalorder %s24, %s25
      %p39 = scmp.eq.s32.totalorder %s17, 1
      %p40 = por %p38, %p39
      %p42 = scmp.ne.s32.totalorder %s25, %s41
      %p43 = scmp.eq.s32.totalorder %s17, 0
      %p44 = por %p42, %p43
      %s46 = sadd.s32 %s45, 1
      %p49 = scmp.eq.s32.totalorder %s11, 1
      %p50 = scmp.ne.s32.totalorder %s45, %s47
      %p51 = scmp.eq.s32.totalorder %s11, 0
      %p52 = por %p50, %p51
      %p53 = scmp.ne.s32.totalorder %s45, %s47
      %p54 = scmp.eq.s32.totalorder %s16, 1
      %p55 = por %p53, %p54
      %p56 = scmp.ne.s32.totalorder %s47, %s48
      %p57 = scmp.eq.s32.totalorder %s16, 0
      %p58 = por %p56, %p57
      %p59 = scmp.ne.s32.totalorder %s47, %s48
      %p60 = scmp.eq.s32.totalorder %s17, 1
      %p61 = por %p59, %p60
      %p63 = scmp.ne.s32.totalorder %s48, %s62
      %p64 = scmp.eq.s32.totalorder %s17, 0
      %p65 = por %p63, %p64
      %s67 = sadd.s32 %s66, 1
      %p70 = scmp.eq.s32.totalorder %s11, 1
      %p71 = scmp.ne.s32.totalorder %s66, %s68
      %p72 = scmp.eq.s32.totalorder %s11, 0
      %p73 = por %p71, %p72
      %p74 = scmp.ne.s32.totalorder %s66, %s68
      %p75 = scmp.eq.s32.totalorder %s16, 1
      %p76 = por %p74, %p75
      %p77 = scmp.ne.s32.totalorder %s68, %s69
      %p78 = scmp.eq.s32.totalorder %s16, 0
      %p79 = por %p77, %p78
      %p80 = scmp.ne.s32.totalorder %s68, %s69
      %p81 = scmp.eq.s32.totalorder %s17, 1
      %p82 = por %p80, %p81
      %p84 = scmp.ne.s32.totalorder %s69, %s83
      %p85 = scmp.eq.s32.totalorder %s17, 0
      %p86 = por %p84, %p85
      %s88 = sadd.s32 %s87, 1
      %p91 = scmp.eq.s32.totalorder %s11, 1
      %p92 = scmp.ne.s32.totalorder %s87, %s89
      %p93 = scmp.eq.s32.totalorder %s11, 0
      %p94 = por %p92, %p93
      %p95 = scmp.ne.s32.totalorder %s87, %s89
      %p96 = scmp.eq.s32.totalorder %s16, 1
      %p97 = por %p95, %p96
      %p98 = scmp.ne.s32.totalorder %s89, %s90
      %p99 = scmp.eq.s32.totalorder %s16, 0
      %p100 = por %p98, %p99
      %p101 = scmp.ne.s32.totalorder %s89, %s90
      %p102 = scmp.eq.s32.totalorder %s17, 1
      %p103 = por %p101, %p102
      %p105 = scmp.ne.s32.totalorder %s90, %s104
      %p106 = scmp.eq.s32.totalorder %s17, 0
      %p107 = por %p105, %p106
      %s108 = ssub.s32 %s11, %s18
      %p109 = scmp.eq.s32.totalorder %s108, 0
      %s111 = sadd.s32 %s110, 1
      %s112 = scalar_select %p109, %s110, %s111
      %p115 = pneg %p109
      %p116 = scmp.eq.s32.totalorder %s11, 1
      %p117 = por %p115, %p116
      %p118 = scmp.ne.s32.totalorder %s110, %s113
      %p119 = scmp.eq.s32.totalorder %s11, 0
      %p120 = por %p118, %p119
      %p121 = scmp.ne.s32.totalorder %s110, %s113
      %p122 = scmp.eq.s32.totalorder %s16, 1
      %p123 = por %p121, %p122
      %p124 = scmp.ne.s32.totalorder %s113, %s114
      %p125 = scmp.eq.s32.totalorder %s16, 0
      %p126 = por %p124, %p125
      %p127 = scmp.ne.s32.totalorder %s113, %s114
      %p128 = scmp.eq.s32.totalorder %s17, 1
      %p129 = por %p127, %p128
      %p131 = scmp.ne.s32.totalorder %s114, %s130
      %p132 = scmp.eq.s32.totalorder %s17, 0
      %p133 = por %p131, %p132
      %p134 = scmp.le.s32.totalorder 1, %s11
      %p135 = scmp.lt.s32.totalorder %s11, 3
      %p136 = pnand %p134, %p135
      %p137 = pneg %p136
      // Predicated region
      $region9: #{_cnn_forward.16} parent=5 // pred_check
        _
      $region10: #{_cnn_forward.16} parent=5 // pred_check_branch
        %139 = sbr.rel (%p136) target = $region12
      $region11: #{_cnn_forward.16} parent=5 // pred_region
        %s140 = ssub.s32 %s11, 1
        // Predicated region
        $region13: #{_cnn_forward.16} parent=11 // pred_check
          %p141 = pneg %p58
        $region14: #{_cnn_forward.16} parent=11 // pred_check_branch
          %143 = sbr.rel (%p141) target = $region16
        $region15: #{_cnn_forward.16} parent=11 // pred_region
          _
        $region16: #{_cnn_forward.16} parent=11 // pred_fallthru
          _
        // Predicated region
        $region17: #{_cnn_forward.16} parent=11 // pred_check
          %p144 = pneg %p79
        $region18: #{_cnn_forward.16} parent=11 // pred_check_branch
          %146 = sbr.rel (%p144) target = $region20
        $region19: #{_cnn_forward.16} parent=11 // pred_region
          _
        $region20: #{_cnn_forward.16} parent=11 // pred_fallthru
          _
        // Predicated region
        $region21: #{_cnn_forward.16} parent=11 // pred_check
          %p147 = pneg %p100
        $region22: #{_cnn_forward.16} parent=11 // pred_check_branch
          %149 = sbr.rel (%p147) target = $region24
        $region23: #{_cnn_forward.16} parent=11 // pred_region
          _
        $region24: #{_cnn_forward.16} parent=11 // pred_fallthru
          _
      $region12: #{_cnn_forward.16} parent=5 // pred_fallthru
        _
      %p150 = scmp.lt.s32.totalorder %s11, 2
      // Predicated region
      $region25: #{_cnn_forward.16} parent=5 // pred_check
        %p151 = pneg %p150
      $region26: #{_cnn_forward.16} parent=5 // pred_check_branch
        %153 = sbr.rel (%p151) target = $region28
      $region27: #{_cnn_forward.16} parent=5 // pred_region
        // Predicated region
        $region29: #{_cnn_forward.16} parent=27 // pred_check
          %p154 = pneg %p31
        $region30: #{_cnn_forward.16} parent=27 // pred_check_branch
          %156 = sbr.rel (%p154) target = $region32
        $region31: #{_cnn_forward.16} parent=27 // pred_region
          %s157 = sand.u32 %s21, 1
          %s158 = sand.u32 %s21, 1
          %s159 = smul.addr %s158, 144
          %s160 = scalar_lea.vmem [#allocation3], %s159
          %s161 = smul.u32 2, %s11
          %s162 = smul.addr %s161, 4
          %s163 = scalar_lea.vmem %s0, %s162
          // Predicated region
          $region33: #{_cnn_forward.16} parent=31 // pred_check
            _
          $region34: #{_cnn_forward.16} parent=31 // pred_check_branch
            %165 = sbr.rel (0) target = $region36
          $region35: #{_cnn_forward.16} parent=31 // pred_region
            // Predicated region
            $region37: #{_cnn_forward.16} parent=35 // pred_check
              _
            $region38: #{_cnn_forward.16} parent=35 // pred_check_branch
              %167 = sbr.rel (0) target = $region40
            $region39: #{_cnn_forward.16} parent=35 // pred_region
              // Predicated region
              $region52: #{_cnn_forward.16} parent=39 // pred_check
                _
              $region53: #{_cnn_forward.16} parent=39 // pred_check_branch
                %216 = sbr.rel (0) target = $region55
              $region54: #{_cnn_forward.16} parent=39 // pred_region
                loop: start=0, step=1, limit=1
                $region56: #{_cnn_forward.16} parent=54 // loop_pre_header
                  _
                $region57: #{_cnn_forward.16} parent=54 // loop_header
                  %s218 = sphi 0, %s222
                  %p219 = scmp.ge.s32.totalorder %s218, 1
                  %s223 = sphi %s163, %s163
                  %s224 = sphi %s160, %s160
                $region58: #{_cnn_forward.16} parent=54 // loop_header_branch
                  %221 = sbr.rel (%p219) target = $region62
                $region59: #{_cnn_forward.16} parent=54 // loop_body
                  %v225 = vld [vmem:[%s223] sm:$0xff]
                  %226 = vst [vmem:[%s224] sm:$0xff] %v225
                  %v227 = vld [vmem:[%s223 + $0x10] sm:$0xff]
                  %228 = vst [vmem:[%s224 + $0x8] sm:$0xff] %v227
                  %v229 = vld [vmem:[%s223 + $0x20] sm:$0xff]
                  %230 = vst [vmem:[%s224 + $0x10] sm:$0xff] %v229
                  %v231 = vld [vmem:[%s223 + $0x30] sm:$0xff]
                  %232 = vst [vmem:[%s224 + $0x18] sm:$0xff] %v231
                  %v233 = vld [vmem:[%s223 + $0x40] sm:$0xff]
                  %234 = vst [vmem:[%s224 + $0x20] sm:$0xff] %v233
                  %v235 = vld [vmem:[%s223 + $0x50] sm:$0xff]
                  %236 = vst [vmem:[%s224 + $0x28] sm:$0xff] %v235
                  %v237 = vld [vmem:[%s223 + $0x60] sm:$0xff]
                  %238 = vst [vmem:[%s224 + $0x30] sm:$0xff] %v237
                  %v239 = vld [vmem:[%s223 + $0x70] sm:$0xff]
                  %240 = vst [vmem:[%s224 + $0x38] sm:$0xff] %v239
                  %v241 = vld [vmem:[%s223 + $0x80] sm:$0xff]
                  %242 = vst [vmem:[%s224 + $0x40] sm:$0xff] %v241
                  %v243 = vld [vmem:[%s223 + $0x90] sm:$0xff]
                  %244 = vst [vmem:[%s224 + $0x48] sm:$0xff] %v243
                  %v245 = vld [vmem:[%s223 + $0xa0] sm:$0xff]
                  %246 = vst [vmem:[%s224 + $0x50] sm:$0xff] %v245
                  %v247 = vld [vmem:[%s223 + $0xb0] sm:$0xff]
                  %248 = vst [vmem:[%s224 + $0x58] sm:$0xff] %v247
                  %v249 = vld [vmem:[%s223 + $0xc0] sm:$0xff]
                  %250 = vst [vmem:[%s224 + $0x60] sm:$0xff] %v249
                  %v251 = vld [vmem:[%s223 + $0xd0] sm:$0xff]
                  %252 = vst [vmem:[%s224 + $0x68] sm:$0xff] %v251
                  %v253 = vld [vmem:[%s223 + $0xe0] sm:$0xff]
                  %254 = vst [vmem:[%s224 + $0x70] sm:$0xff] %v253
                  %v255 = vld [vmem:[%s223 + $0xf0] sm:$0xff]
                  %256 = vst [vmem:[%s224 + $0x78] sm:$0xff] %v255
                  %v257 = vld [vmem:[%s223 + $0x100] sm:$0xff]
                  %258 = vst [vmem:[%s224 + $0x80] sm:$0xff] %v257
                  %v259 = vld [vmem:[%s223 + $0x110] sm:$0xff]
                  %260 = vst [vmem:[%s224 + $0x88] sm:$0xff] %v259
                $region60: #{_cnn_forward.16} parent=54 // loop_footer
                  %s222 = sadd.s32 1, %s218
                $region61: #{_cnn_forward.16} parent=54 // loop_footer_branch
                  %217 = sbr.rel target = $region57
                $region62: #{_cnn_forward.16} parent=54 // loop_exit
                  _
              $region55: #{_cnn_forward.16} parent=39 // pred_fallthru
                _
              // Predicated region
              $region63: #{_cnn_forward.16} parent=39 // pred_check
                _
              $region64: #{_cnn_forward.16} parent=39 // pred_check_branch
                %262 = sbr.rel target = $region66
              $region65: #{_cnn_forward.16} parent=39 // pred_region
                _
              $region66: #{_cnn_forward.16} parent=39 // pred_fallthru
                _
            $region40: #{_cnn_forward.16} parent=35 // pred_fallthru
              _
            // Predicated region
            $region41: #{_cnn_forward.16} parent=35 // pred_check
              _
            $region42: #{_cnn_forward.16} parent=35 // pred_check_branch
              %169 = sbr.rel target = $region44
            $region43: #{_cnn_forward.16} parent=35 // pred_region
              loop: start=0, step=1, limit=1
              $region45: #{_cnn_forward.16} parent=43 // loop_pre_header
                _
              $region46: #{_cnn_forward.16} parent=43 // loop_header
                %s172 = sphi 0, %s176
                %p173 = scmp.ge.s32.totalorder %s172, 1
                %s177 = sphi %s163, %s163
                %s178 = sphi %s160, %s160
              $region47: #{_cnn_forward.16} parent=43 // loop_header_branch
                %175 = sbr.rel (%p173) target = $region51
              $region48: #{_cnn_forward.16} parent=43 // loop_body
                %v179 = vld [vmem:[%s177] sm:$0xff]
                %180 = vst [vmem:[%s178] sm:$0xff] %v179
                %v181 = vld [vmem:[%s177 + $0x10] sm:$0xff]
                %182 = vst [vmem:[%s178 + $0x8] sm:$0xff] %v181
                %v183 = vld [vmem:[%s177 + $0x20] sm:$0xff]
                %184 = vst [vmem:[%s178 + $0x10] sm:$0xff] %v183
                %v185 = vld [vmem:[%s177 + $0x30] sm:$0xff]
                %186 = vst [vmem:[%s178 + $0x18] sm:$0xff] %v185
                %v187 = vld [vmem:[%s177 + $0x40] sm:$0xff]
                %188 = vst [vmem:[%s178 + $0x20] sm:$0xff] %v187
                %v189 = vld [vmem:[%s177 + $0x50] sm:$0xff]
                %190 = vst [vmem:[%s178 + $0x28] sm:$0xff] %v189
                %v191 = vld [vmem:[%s177 + $0x60] sm:$0xff]
                %192 = vst [vmem:[%s178 + $0x30] sm:$0xff] %v191
                %v193 = vld [vmem:[%s177 + $0x70] sm:$0xff]
                %194 = vst [vmem:[%s178 + $0x38] sm:$0xff] %v193
                %v195 = vld [vmem:[%s177 + $0x80] sm:$0xff]
                %196 = vst [vmem:[%s178 + $0x40] sm:$0xff] %v195
                %v197 = vld [vmem:[%s177 + $0x90] sm:$0xff]
                %198 = vst [vmem:[%s178 + $0x48] sm:$0xff] %v197
                %v199 = vld [vmem:[%s177 + $0xa0] sm:$0xff]
                %200 = vst [vmem:[%s178 + $0x50] sm:$0xff] %v199
                %v201 = vld [vmem:[%s177 + $0xb0] sm:$0xff]
                %202 = vst [vmem:[%s178 + $0x58] sm:$0xff] %v201
                %v203 = vld [vmem:[%s177 + $0xc0] sm:$0xff]
                %204 = vst [vmem:[%s178 + $0x60] sm:$0xff] %v203
                %v205 = vld [vmem:[%s177 + $0xd0] sm:$0xff]
                %206 = vst [vmem:[%s178 + $0x68] sm:$0xff] %v205
                %v207 = vld [vmem:[%s177 + $0xe0] sm:$0xff]
                %208 = vst [vmem:[%s178 + $0x70] sm:$0xff] %v207
                %v209 = vld [vmem:[%s177 + $0xf0] sm:$0xff]
                %210 = vst [vmem:[%s178 + $0x78] sm:$0xff] %v209
                %v211 = vld [vmem:[%s177 + $0x100] sm:$0xff]
                %212 = vst [vmem:[%s178 + $0x80] sm:$0xff] %v211
                %v213 = vld [vmem:[%s177 + $0x110] sm:$0xff]
                %214 = vst [vmem:[%s178 + $0x88] sm:$0xff] %v213
              $region49: #{_cnn_forward.16} parent=43 // loop_footer
                %s176 = sadd.s32 1, %s172
              $region50: #{_cnn_forward.16} parent=43 // loop_footer_branch
                %171 = sbr.rel target = $region46
              $region51: #{_cnn_forward.16} parent=43 // loop_exit
                _
            $region44: #{_cnn_forward.16} parent=35 // pred_fallthru
              _
          $region36: #{_cnn_forward.16} parent=31 // pred_fallthru
            _
          %263 = vnop
        $region32: #{_cnn_forward.16} parent=27 // pred_fallthru
          _
      $region28: #{_cnn_forward.16} parent=5 // pred_fallthru
        _
      %p264 = scmp.le.s32.totalorder 1, %s11
      %p265 = scmp.lt.s32.totalorder %s11, 3
      %p266 = pnand %p264, %p265
      %p267 = pneg %p266
      // Predicated region
      $region67: #{_cnn_forward.16} parent=5 // pred_check
        _
      $region68: #{_cnn_forward.16} parent=5 // pred_check_branch
        %269 = sbr.rel (%p266) target = $region70
      $region69: #{_cnn_forward.16} parent=5 // pred_region
        %s270 = ssub.s32 %s11, 1
        %s271 = sand.u32 %s24, 1
        %s272 = sand.u32 %s24, 1
        %s273 = smul.addr %s272, 144
        %s274 = scalar_lea.vmem [#allocation3], %s273
        // Predicated region
        $region71: #{_cnn_forward.16} parent=69 // pred_check
          %p275 = pneg %p37
        $region72: #{_cnn_forward.16} parent=69 // pred_check_branch
          %277 = sbr.rel (%p275) target = $region74
        $region73: #{_cnn_forward.16} parent=69 // pred_region
          _
        $region74: #{_cnn_forward.16} parent=69 // pred_fallthru
          _
        %s278 = sand.u32 %s24, 1
        %s279 = sand.u32 %s24, 1
        %s280 = smul.addr %s279, 144
        %s281 = scalar_lea.vmem [#allocation3], %s280
        %p282 = pneg %p37
        %p283 = pneg %p34
        %p284 = pneg %p58
        %p285 = pneg %p55
        %p286 = pneg %p79
        %p287 = pneg %p76
        %p288 = pneg %p100
        %p289 = pneg %p97
        %p290 = pneg %p126
        %p291 = pneg %p123
        %s292 = sand.u32 %s113, 1
        %s293 = sand.u32 %s113, 1
        %s294 = smul.addr %s293, 32
        %s295 = scalar_lea.vmem [#allocation4], %s294
        %s296 = smul.u32 2, %s16
        %s297 = smul.u32 2, %s16
        %v299 = vld [vmem:[%s1] sm:$0xff]
        %v300 = vld [vmem:[%s1 + $0x8] sm:$0xff]
        %v301 = vld [vmem:[%s1 + $0x10] sm:$0xff]
        %v302 = vld [vmem:[%s1 + $0x18] sm:$0xff]
        %v303 = vld [vmem:[%s274] sm:$0xff]
        %v304 = vld [vmem:[%s274 + $0x8] sm:$0xff]
        %v305 = vld [vmem:[%s274 + $0x10] sm:$0xff]
        %v306 = vld [vmem:[%s274 + $0x18] sm:$0xff]
        %v307 = vld [vmem:[%s274 + $0x20] sm:$0xff]
        %v308 = vld [vmem:[%s274 + $0x28] sm:$0xff]
        %v309 = vld [vmem:[%s274 + $0x30] sm:$0xff]
        %v310 = vld [vmem:[%s274 + $0x38] sm:$0xff]
        %v311 = vld [vmem:[%s274 + $0x40] sm:$0xff]
        %v312 = vld [vmem:[%s274 + $0x48] sm:$0xff]
        %v313 = vld [vmem:[%s274 + $0x50] sm:$0xff]
        %v314 = vld [vmem:[%s274 + $0x58] sm:$0xff]
        %v315 = vld [vmem:[%s274 + $0x60] sm:$0xff]
        %v316 = vld [vmem:[%s274 + $0x68] sm:$0xff]
        %v317 = vld [vmem:[%s274 + $0x70] sm:$0xff]
        %v318 = vld [vmem:[%s274 + $0x78] sm:$0xff]
        %v319 = vld [vmem:[%s274 + $0x80] sm:$0xff]
        %v320 = vld [vmem:[%s274 + $0x88] sm:$0xff]
        %v321 = vld [vmem:[%s2] sm:$0xff]
        %v322 = vld [vmem:[%s2 + $0x8] sm:$0xff]
        %v323 = vld [vmem:[%s2 + $0x10] sm:$0xff]
        %v324 = vld [vmem:[%s2 + $0x18] sm:$0xff]
        %326 = vset.pattern.permute.xlu0 0
        %327 = vperm.xlu0 %326, %v321
        %v328 = vpop.permute.xlu0 %327
        %331 = vset.pattern.permute.xlu0 0
        %332 = vperm.xlu0 %331, %v322
        %v333 = vpop.permute.xlu0 %332
        %336 = vset.pattern.permute.xlu0 0
        %337 = vperm.xlu0 %336, %v323
        %v338 = vpop.permute.xlu0 %337
        %341 = vset.pattern.permute.xlu0 0
        %342 = vperm.xlu0 %341, %v324
        %v343 = vpop.permute.xlu0 %342
        %v349 = vunpack.c.l.b16 %v299
        %v350 = vunpack.c.h.b16 %v299
        %v351 = vunpack.c.l.b16 %v300
        %v352 = vunpack.c.h.b16 %v300
        %v353 = vunpack.c.l.b16 %v301
        %v354 = vunpack.c.h.b16 %v301
        %v355 = vunpack.c.l.b16 %v302
        %v356 = vunpack.c.h.b16 %v302
        %v357 = vpack.c.b16 %v351, %v349
        %v358 = vpack.c.b16 %v352, %v350
        %v359 = vpack.c.b16 %v355, %v353
        %v360 = vpack.c.b16 %v356, %v354
        %v381 = vunpack.c.l.b16 %v303
        %v382 = vunpack.c.h.b16 %v303
        %v383 = vunpack.c.l.b16 %v304
        %v384 = vunpack.c.h.b16 %v304
        %v385 = vunpack.c.l.b16 %v305
        %v386 = vunpack.c.h.b16 %v305
        %v387 = vunpack.c.l.b16 %v306
        %v388 = vunpack.c.h.b16 %v306
        %v389 = vunpack.c.l.b16 %v307
        %v390 = vunpack.c.h.b16 %v307
        %v391 = vunpack.c.l.b16 %v308
        %v392 = vunpack.c.h.b16 %v308
        %v393 = vunpack.c.l.b16 %v309
        %v394 = vunpack.c.h.b16 %v309
        %v395 = vunpack.c.l.b16 %v310
        %v396 = vunpack.c.h.b16 %v310
        %v397 = vunpack.c.l.b16 %v311
        %v398 = vunpack.c.h.b16 %v311
        %v399 = vunpack.c.l.b16 %v312
        %v400 = vunpack.c.h.b16 %v312
        %v401 = vunpack.c.l.b16 %v313
        %v402 = vunpack.c.h.b16 %v313
        %v403 = vunpack.c.l.b16 %v314
        %v404 = vunpack.c.h.b16 %v314
        %v405 = vunpack.c.l.b16 %v315
        %v406 = vunpack.c.h.b16 %v315
        %v407 = vunpack.c.l.b16 %v316
        %v408 = vunpack.c.h.b16 %v316
        %v409 = vunpack.c.l.b16 %v317
        %v410 = vunpack.c.h.b16 %v317
        %v411 = vunpack.c.l.b16 %v318
        %v412 = vunpack.c.h.b16 %v318
        %v413 = vunpack.c.l.b16 %v319
        %v414 = vunpack.c.h.b16 %v319
        %v415 = vunpack.c.l.b16 %v320
        %v416 = vunpack.c.h.b16 %v320
        %v417 = vpack.c.b16 %v383, %v381
        %v418 = vpack.c.b16 %v384, %v382
        %v419 = vpack.c.b16 %v387, %v385
        %v420 = vpack.c.b16 %v388, %v386
        %v421 = vpack.c.b16 %v391, %v389
        %v422 = vpack.c.b16 %v392, %v390
        %v423 = vpack.c.b16 %v395, %v393
        %v424 = vpack.c.b16 %v396, %v394
        %v425 = vpack.c.b16 %v399, %v397
        %v426 = vpack.c.b16 %v400, %v398
        %v427 = vpack.c.b16 %v403, %v401
        %v428 = vpack.c.b16 %v404, %v402
        %v429 = vpack.c.b16 %v407, %v405
        %v430 = vpack.c.b16 %v408, %v406
        %v431 = vpack.c.b16 %v411, %v409
        %v432 = vpack.c.b16 %v412, %v410
        %v433 = vpack.c.b16 %v415, %v413
        %v434 = vpack.c.b16 %v416, %v414
        %vm453 = vcmask 130048
        %v455 = vsel %vm453, %v358, 0
        %v458 = vsel %vm453, %v360, 0
        %460 = vmatprep.subr.bf16.mxu0 %v418
        %461 = vmatpush1.bf16.msra.mxu0 %v417
        %462 = vmatprep.subr.bf16.mxu0 %v420
        %463 = vmatpush1.bf16.msra.mxu0 %v419
        %464 = vmatprep.subr.bf16.mxu0 %v422
        %465 = vmatpush1.bf16.msra.mxu0 %v421
        %466 = vmatprep.subr.bf16.mxu0 %v424
        %467 = vmatpush1.bf16.msra.mxu0 %v423
        %468 = vmatprep.subr.bf16.mxu0 %v426
        %469 = vmatpush1.bf16.msra.mxu0 %v425
        %470 = vmatprep.subr.bf16.mxu0 %v428
        %471 = vmatpush1.bf16.msra.mxu0 %v427
        %472 = vmatprep.subr.bf16.mxu0 %v430
        %473 = vmatpush1.bf16.msra.mxu0 %v429
        %474 = vmatprep.subr.bf16.mxu0 %v432
        %475 = vmatpush1.bf16.msra.mxu0 %v431
        %476 = vmatprep.subr.bf16.mxu0 %v434
        %477 = vmatpush1.bf16.msra.mxu0 %v433
        %478 = vmatprep.subr.bf16.mxu0 0
        %479 = vmatpush1.bf16.msra.mxu0 0
        %480 = vmatprep.subr.bf16.mxu0 0
        %481 = vmatpush1.bf16.msra.mxu0 0
        %482 = vmatprep.subr.bf16.mxu0 0
        %483 = vmatpush1.bf16.msra.mxu0 0
        %484 = vmatprep.subr.bf16.mxu0 0
        %485 = vmatpush1.bf16.msra.mxu0 0
        %486 = vmatprep.subr.bf16.mxu0 0
        %487 = vmatpush1.bf16.msra.mxu0 0
        %488 = vmatprep.subr.bf16.mxu0 0
        %489 = vmatpush1.bf16.msra.mxu0 0
        %490 = vmatprep.subr.bf16.mxu0 0
        %491 = vmatpush1.bf16.msra.mxu0 0
        %492 = vmatprep.mubr.bf16.mxu0 %v455
        %493 = vmatmul.mubr.bf16.gmra.mrb[0].mxu0 %v357
        %v494 = vpop.f32.mrb[0].mxu0
        %v495 = vadd.f32 %v328, %v494
        %v496 = vpop.f32.mrb[0].mxu0
        %v497 = vadd.f32 %v328, %v496
        %v498 = vpop.f32.mrb[0].mxu0
        %v499 = vadd.f32 %v333, %v498
        %v500 = vpop.f32.mrb[0].mxu0
        %v501 = vadd.f32 %v333, %v500
        %502 = vmatprep.mubr.bf16.mxu0 %v458
        %503 = vmatmul.mubr.bf16.gmra.mrb[0].mxu0 %v359
        %v504 = vpop.f32.mrb[0].mxu0
        %v505 = vadd.f32 %v338, %v504
        %v506 = vpop.f32.mrb[0].mxu0
        %v507 = vadd.f32 %v338, %v506
        %v508 = vpop.f32.mrb[0].mxu0
        %v509 = vadd.f32 %v343, %v508
        %v510 = vpop.f32.mrb[0].mxu0
        %v511 = vadd.f32 %v343, %v510
        %512 = vdwg.mxu0
        %s513 = sld [smem:[#allocation2]]
        %vm514 = vcmp.gt.f32.partialorder %v495, 0.0
        %vm515 = vcmp.gt.f32.partialorder %v497, 0.0
        %vm516 = vcmp.gt.f32.partialorder %v499, 0.0
        %vm517 = vcmp.gt.f32.partialorder %v501, 0.0
        %vm518 = vcmp.gt.f32.partialorder %v505, 0.0
        %vm519 = vcmp.gt.f32.partialorder %v507, 0.0
        %vm520 = vcmp.gt.f32.partialorder %v509, 0.0
        %vm521 = vcmp.gt.f32.partialorder %v511, 0.0
        %v522 = vstv %s513
        %v523 = vmul.f32 %v522, %v495
        %v524 = vmul.f32 %v522, %v497
        %v525 = vmul.f32 %v522, %v499
        %v526 = vmul.f32 %v522, %v501
        %v527 = vmul.f32 %v522, %v505
        %v528 = vmul.f32 %v522, %v507
        %v529 = vmul.f32 %v522, %v509
        %v530 = vmul.f32 %v522, %v511
        %v531 = vsel %vm514, %v495, %v523
        %v532 = vsel %vm515, %v497, %v524
        %v533 = vsel %vm516, %v499, %v525
        %v534 = vsel %vm517, %v501, %v526
        %v535 = vsel %vm518, %v505, %v527
        %v536 = vsel %vm519, %v507, %v528
        %v537 = vsel %vm520, %v509, %v529
        %v538 = vsel %vm521, %v511, %v530
        %v539 = vpack.c.bf16 %v533, %v531
        %v540 = vpack.c.bf16 %v534, %v532
        %v541 = vpack.c.bf16 %v537, %v535
        %v542 = vpack.c.bf16 %v538, %v536
        %v547 = vunpack.c.l.b16 %v539
        %v548 = vunpack.c.l.b16 %v540
        %v549 = vunpack.c.h.b16 %v539
        %v550 = vunpack.c.h.b16 %v540
        %v551 = vunpack.c.l.b16 %v541
        %v552 = vunpack.c.l.b16 %v542
        %v553 = vunpack.c.h.b16 %v541
        %v554 = vunpack.c.h.b16 %v542
        %v555 = vpack.c.b16 %v548, %v547
        %v556 = vpack.c.b16 %v550, %v549
        %v557 = vpack.c.b16 %v552, %v551
        %v558 = vpack.c.b16 %v554, %v553
        %563 = vst [vmem:[%s295] sm:$0xff] %v555
        %564 = vst [vmem:[%s295 + $0x8] sm:$0xff] %v556
        %565 = vst [vmem:[%s295 + $0x10] sm:$0xff] %v557
        %566 = vst [vmem:[%s295 + $0x18] sm:$0xff] %v558
        %s567 = sand.u32 %s113, 1
        %s568 = sand.u32 %s113, 1
        %s569 = smul.addr %s568, 32
        %s570 = scalar_lea.vmem [#allocation4], %s569
        // Predicated region
        $region75: #{_cnn_forward.16} parent=69 // pred_check
          %p571 = pneg %p123
        $region76: #{_cnn_forward.16} parent=69 // pred_check_branch
          %573 = sbr.rel (%p571) target = $region78
        $region77: #{_cnn_forward.16} parent=69 // pred_region
          %s574 = smul.u32 2, %s16
          %s575 = smul.addr %s574, 4
          %s576 = scalar_lea.vmem %s4, %s575
          // Predicated region
          $region79: #{_cnn_forward.16} parent=77 // pred_check
            _
          $region80: #{_cnn_forward.16} parent=77 // pred_check_branch
            %578 = sbr.rel (0) target = $region82
          $region81: #{_cnn_forward.16} parent=77 // pred_region
            // Predicated region
            $region83: #{_cnn_forward.16} parent=81 // pred_check
              _
            $region84: #{_cnn_forward.16} parent=81 // pred_check_branch
              %580 = sbr.rel (0) target = $region86
            $region85: #{_cnn_forward.16} parent=81 // pred_region
              // Predicated region
              $region98: #{_cnn_forward.16} parent=85 // pred_check
                _
              $region99: #{_cnn_forward.16} parent=85 // pred_check_branch
                %601 = sbr.rel (0) target = $region101
              $region100: #{_cnn_forward.16} parent=85 // pred_region
                loop: start=0, step=1, limit=1
                $region102: #{_cnn_forward.16} parent=100 // loop_pre_header
                  _
                $region103: #{_cnn_forward.16} parent=100 // loop_header
                  %s603 = sphi 0, %s607
                  %p604 = scmp.ge.s32.totalorder %s603, 1
                  %s608 = sphi %s570, %s570
                  %s609 = sphi %s576, %s576
                $region104: #{_cnn_forward.16} parent=100 // loop_header_branch
                  %606 = sbr.rel (%p604) target = $region108
                $region105: #{_cnn_forward.16} parent=100 // loop_body
                  %v610 = vld [vmem:[%s608] sm:$0xff]
                  %611 = vst [vmem:[%s609] sm:$0xff] %v610
                  %v612 = vld [vmem:[%s608 + $0x8] sm:$0xff]
                  %613 = vst [vmem:[%s609 + $0x10] sm:$0xff] %v612
                  %v614 = vld [vmem:[%s608 + $0x10] sm:$0xff]
                  %615 = vst [vmem:[%s609 + $0x20] sm:$0xff] %v614
                  %v616 = vld [vmem:[%s608 + $0x18] sm:$0xff]
                  %617 = vst [vmem:[%s609 + $0x30] sm:$0xff] %v616
                $region106: #{_cnn_forward.16} parent=100 // loop_footer
                  %s607 = sadd.s32 1, %s603
                $region107: #{_cnn_forward.16} parent=100 // loop_footer_branch
                  %602 = sbr.rel target = $region103
                $region108: #{_cnn_forward.16} parent=100 // loop_exit
                  _
              $region101: #{_cnn_forward.16} parent=85 // pred_fallthru
                _
              // Predicated region
              $region109: #{_cnn_forward.16} parent=85 // pred_check
                _
              $region110: #{_cnn_forward.16} parent=85 // pred_check_branch
                %619 = sbr.rel target = $region112
              $region111: #{_cnn_forward.16} parent=85 // pred_region
                _
              $region112: #{_cnn_forward.16} parent=85 // pred_fallthru
                _
            $region86: #{_cnn_forward.16} parent=81 // pred_fallthru
              _
            // Predicated region
            $region87: #{_cnn_forward.16} parent=81 // pred_check
              _
            $region88: #{_cnn_forward.16} parent=81 // pred_check_branch
              %582 = sbr.rel target = $region90
            $region89: #{_cnn_forward.16} parent=81 // pred_region
              loop: start=0, step=1, limit=1
              $region91: #{_cnn_forward.16} parent=89 // loop_pre_header
                _
              $region92: #{_cnn_forward.16} parent=89 // loop_header
                %s585 = sphi 0, %s589
                %p586 = scmp.ge.s32.totalorder %s585, 1
                %s590 = sphi %s570, %s570
                %s591 = sphi %s576, %s576
              $region93: #{_cnn_forward.16} parent=89 // loop_header_branch
                %588 = sbr.rel (%p586) target = $region97
              $region94: #{_cnn_forward.16} parent=89 // loop_body
                %v592 = vld [vmem:[%s590] sm:$0xff]
                %593 = vst [vmem:[%s591] sm:$0xff] %v592
                %v594 = vld [vmem:[%s590 + $0x8] sm:$0xff]
                %595 = vst [vmem:[%s591 + $0x10] sm:$0xff] %v594
                %v596 = vld [vmem:[%s590 + $0x10] sm:$0xff]
                %597 = vst [vmem:[%s591 + $0x20] sm:$0xff] %v596
                %v598 = vld [vmem:[%s590 + $0x18] sm:$0xff]
                %599 = vst [vmem:[%s591 + $0x30] sm:$0xff] %v598
              $region95: #{_cnn_forward.16} parent=89 // loop_footer
                %s589 = sadd.s32 1, %s585
              $region96: #{_cnn_forward.16} parent=89 // loop_footer_branch
                %584 = sbr.rel target = $region92
              $region97: #{_cnn_forward.16} parent=89 // loop_exit
                _
            $region90: #{_cnn_forward.16} parent=81 // pred_fallthru
              _
          $region82: #{_cnn_forward.16} parent=77 // pred_fallthru
            _
          %620 = vnop
        $region78: #{_cnn_forward.16} parent=69 // pred_fallthru
          _
      $region70: #{_cnn_forward.16} parent=5 // pred_fallthru
        _
      %p621 = scmp.le.s32.totalorder 2, %s11
      // Predicated region
      $region113: #{_cnn_forward.16} parent=5 // pred_check
        %p622 = pneg %p621
      $region114: #{_cnn_forward.16} parent=5 // pred_check_branch
        %624 = sbr.rel (%p622) target = $region116
      $region115: #{_cnn_forward.16} parent=5 // pred_region
        %s625 = ssub.s32 %s11, 2
        // Predicated region
        $region117: #{_cnn_forward.16} parent=115 // pred_check
          %p626 = pneg %p129
        $region118: #{_cnn_forward.16} parent=115 // pred_check_branch
          %628 = sbr.rel (%p626) target = $region120
        $region119: #{_cnn_forward.16} parent=115 // pred_region
          %s629 = sand.u32 %s114, 1
          %s630 = sand.u32 %s114, 1
          %s631 = smul.addr %s630, 32
          %s632 = scalar_lea.vmem [#allocation4], %s631
        $region120: #{_cnn_forward.16} parent=115 // pred_fallthru
          _
      $region116: #{_cnn_forward.16} parent=5 // pred_fallthru
        _
    $region6: #{_cnn_forward.16} parent=1 // loop_footer
      %s15 = sadd.s32 1, %s11
    $region7: #{_cnn_forward.16} parent=1 // loop_footer_branch
      %10 = sbr.rel target = $region3
    $region8: #{_cnn_forward.16} parent=1 // loop_exit
      _

// kernel: _cnn_forward.18
$region0: #{_cnn_forward.18}
  #allocation0 [shape = 'u32[]', space=smem, size = 0x4, offset = 0x4, fixed_abs, tag = 'smem constant byte address 0x4 - core index']
  #allocation1 [shape = 'u32[144,128]{1,0:T(1,128)}', space=vmem, size = 0x12000, scoped, tag = 'internal scratch']
  %s0 = inlined_call_operand.vmem [shape: bf16[32,128], index: 0, kind: input, shape index: {}]
  %s1 = inlined_call_operand.vmem [shape: bf16[32,128], index: 1, kind: input, shape index: {}]
  %s2 = inlined_call_operand.vmem [shape: bf16[32,128], index: 2, kind: input, shape index: {}]
  %s3 = inlined_call_operand.vmem [shape: bf16[32,128], index: 3, kind: input, shape index: {}]
  %s4 = inlined_call_operand.vmem [shape: bf16[32,128], index: 4, kind: output, shape index: {}]
  %s5 = sld [smem:[#allocation0]]
  $region26: #{_cnn_forward.18} parent=0
    _
  %s7 = ssub.s32 1, %s5
  %s8 = scalar_select 0, %s7, %s5
  // Predicated region
  $region2: #{_cnn_forward.18} parent=0 // pred_check
    _
  $region3: #{_cnn_forward.18} parent=0 // pred_check_branch
    %10 = sbr.rel (0) target = $region5
  $region4: #{_cnn_forward.18} parent=0 // pred_region
    _
  $region5: #{_cnn_forward.18} parent=0 // pred_fallthru
    _
  // Predicated region
  $region6: #{_cnn_forward.18} parent=0 // pred_check
    _
  $region7: #{_cnn_forward.18} parent=0 // pred_check_branch
    %12 = sbr.rel (0) target = $region9
  $region8: #{_cnn_forward.18} parent=0 // pred_region
    _
  $region9: #{_cnn_forward.18} parent=0 // pred_fallthru
    _
  // Predicated region
  $region10: #{_cnn_forward.18} parent=0 // pred_check
    _
  $region11: #{_cnn_forward.18} parent=0 // pred_check_branch
    %14 = sbr.rel (0) target = $region13
  $region12: #{_cnn_forward.18} parent=0 // pred_region
    _
  $region13: #{_cnn_forward.18} parent=0 // pred_fallthru
    _
  // Predicated region
  $region14: #{_cnn_forward.18} parent=0 // pred_check
    _
  $region15: #{_cnn_forward.18} parent=0 // pred_check_branch
    %16 = sbr.rel (0) target = $region17
  $region16: #{_cnn_forward.18} parent=0 // pred_region
    _
  $region17: #{_cnn_forward.18} parent=0 // pred_fallthru
    _
  %v17 = vld [vmem:[%s0] sm:$0xf]
  %v18 = vld [vmem:[%s0 + $0x4] sm:$0xf]
  %v19 = vld [vmem:[%s0 + $0x8] sm:$0xf]
  %v20 = vld [vmem:[%s0 + $0xc] sm:$0xf]
  %v21 = vld [vmem:[%s1] sm:$0xf]
  %v22 = vld [vmem:[%s1 + $0x4] sm:$0xf]
  %v23 = vld [vmem:[%s1 + $0x8] sm:$0xf]
  %v24 = vld [vmem:[%s1 + $0xc] sm:$0xf]
  %v25 = vmax.bf16 %v17, %v21
  %v26 = vmax.bf16 %v18, %v22
  %v27 = vmax.bf16 %v19, %v23
  %v28 = vmax.bf16 %v20, %v24
  %v29 = vld [vmem:[%s2] sm:$0xf]
  %v30 = vld [vmem:[%s2 + $0x4] sm:$0xf]
  %v31 = vld [vmem:[%s2 + $0x8] sm:$0xf]
  %v32 = vld [vmem:[%s2 + $0xc] sm:$0xf]
  %v33 = vld [vmem:[%s3] sm:$0xf]
  %v34 = vld [vmem:[%s3 + $0x4] sm:$0xf]
  %v35 = vld [vmem:[%s3 + $0x8] sm:$0xf]
  %v36 = vld [vmem:[%s3 + $0xc] sm:$0xf]
  %v37 = vmax.bf16 %v29, %v33
  %v38 = vmax.bf16 %v30, %v34
  %v39 = vmax.bf16 %v31, %v35
  %v40 = vmax.bf16 %v32, %v36
  %v41 = vmax.bf16 %v25, %v37
  %v42 = vmax.bf16 %v26, %v38
  %v43 = vmax.bf16 %v27, %v39
  %v44 = vmax.bf16 %v28, %v40
  %45 = vst [vmem:[%s4] sm:$0xf] %v41
  %46 = vst [vmem:[%s4 + $0x4] sm:$0xf] %v42
  %47 = vst [vmem:[%s4 + $0x8] sm:$0xf] %v43
  %48 = vst [vmem:[%s4 + $0xc] sm:$0xf] %v44
  // Predicated region
  $region18: #{_cnn_forward.18} parent=0 // pred_check
    _
  $region19: #{_cnn_forward.18} parent=0 // pred_check_branch
    %50 = sbr.rel (0) target = $region21
  $region20: #{_cnn_forward.18} parent=0 // pred_region
    _
  $region21: #{_cnn_forward.18} parent=0 // pred_fallthru
    _
  // Predicated region
  $region22: #{_cnn_forward.18} parent=0 // pred_check
    _
  $region23: #{_cnn_forward.18} parent=0 // pred_check_branch
    %52 = sbr.rel (0) target = $region25
  $region24: #{_cnn_forward.18} parent=0 // pred_region
    _
  $region25: #{_cnn_forward.18} parent=0 // pred_fallthru
    _

// kernel: _cnn_forward.17
$region0: #{_cnn_forward.17}
  #allocation0 [shape = 'u32[]', space=smem, size = 0x4, offset = 0x4, fixed_abs, tag = 'smem constant byte address 0x4 - core index']
  #allocation1 [shape = 'u32[144,128]{1,0:T(1,128)}', space=vmem, size = 0x12000, scoped, tag = 'internal scratch']
  #allocation2 [shape = 'f32[1]{0:T(128)S(6)}', space=smem, size = 0x200, scoped, tag = 'scoped memory for _cnn_forward.17']
  %s0 = inlined_call_operand.vmem [shape: bf16[288,512], index: 0, kind: input, shape index: {}]
  %s1 = inlined_call_operand.vmem [shape: bf16[32,288], index: 1, kind: input, shape index: {}]
  %s2 = inlined_call_operand.vmem [shape: f32[32,1], index: 2, kind: input, shape index: {}]
  %s3 = inlined_call_operand.<no memory space> [shape: f32[1], index: 3, kind: input, shape index: {}]
  %s4 = inlined_call_operand.vmem [shape: bf16[32,512], index: 4, kind: output, shape index: {}]
  %s5 = sld [smem:[#allocation0]]
  $region121: #{_cnn_forward.17} parent=0
    _
  %s7 = ssub.s32 1, %s5
  %s8 = scalar_select 0, %s7, %s5
  %9 = sst [smem:[#allocation2]] %s3
  $region1: #{_cnn_forward.17} parent=0
    #allocation3 [shape = 'u8[294912]{0}', space=vmem, size = 0x48000, scoped, tag = 'input window, operand 0']
    #allocation4 [shape = 'u8[32768]{0}', space=vmem, size = 0x8000, scoped, tag = 'output window, operand 0']
    loop: start=0, step=1, limit=4
    $region2: #{_cnn_forward.17} parent=1 // loop_pre_header
      _
    $region3: #{_cnn_forward.17} parent=1 // loop_header
      %s11 = sphi 0, %s15
      %p12 = scmp.ge.s32.totalorder %s11, 4
      %s21 = sphi 0, %s23
      %s24 = sphi 0, %s21
      %s25 = sphi 0, %s24
      %s41 = sphi 0, %s25
      %s45 = sphi 0, %s45
      %s47 = sphi 0, %s45
      %s48 = sphi 0, %s47
      %s62 = sphi 0, %s48
      %s66 = sphi 0, %s66
      %s68 = sphi 0, %s66
      %s69 = sphi 0, %s68
      %s83 = sphi 0, %s69
      %s87 = sphi 0, %s87
      %s89 = sphi 0, %s87
      %s90 = sphi 0, %s89
      %s104 = sphi 0, %s90
      %s110 = sphi 0, %s112
      %s113 = sphi 0, %s110
      %s114 = sphi 0, %s113
      %s130 = sphi 0, %s114
    $region4: #{_cnn_forward.17} parent=1 // loop_header_branch
      %14 = sbr.rel (%p12) target = $region8
    $region5: #{_cnn_forward.17} parent=1 // loop_body
      %s16 = ssub.s32 %s11, 1
      %s17 = ssub.s32 %s11, 2
      %s18 = sadd.s32 %s11, 1
      %s19 = ssub.s32 %s11, %s18
      %p20 = scmp.eq.s32.totalorder %s19, 0
      %s22 = sadd.s32 %s21, 1
      %s23 = scalar_select %p20, %s21, %s22
      %p26 = pneg %p20
      %p27 = scmp.eq.s32.totalorder %s11, 1
      %p28 = por %p26, %p27
      %p29 = scmp.ne.s32.totalorder %s21, %s24
      %p30 = scmp.eq.s32.totalorder %s11, 0
      %p31 = por %p29, %p30
      %p32 = scmp.ne.s32.totalorder %s21, %s24
      %p33 = scmp.eq.s32.totalorder %s16, 1
      %p34 = por %p32, %p33
      %p35 = scmp.ne.s32.totalorder %s24, %s25
      %p36 = scmp.eq.s32.totalorder %s16, 0
      %p37 = por %p35, %p36
      %p38 = scmp.ne.s32.totalorder %s24, %s25
      %p39 = scmp.eq.s32.totalorder %s17, 1
      %p40 = por %p38, %p39
      %p42 = scmp.ne.s32.totalorder %s25, %s41
      %p43 = scmp.eq.s32.totalorder %s17, 0
      %p44 = por %p42, %p43
      %s46 = sadd.s32 %s45, 1
      %p49 = scmp.eq.s32.totalorder %s11, 1
      %p50 = scmp.ne.s32.totalorder %s45, %s47
      %p51 = scmp.eq.s32.totalorder %s11, 0
      %p52 = por %p50, %p51
      %p53 = scmp.ne.s32.totalorder %s45, %s47
      %p54 = scmp.eq.s32.totalorder %s16, 1
      %p55 = por %p53, %p54
      %p56 = scmp.ne.s32.totalorder %s47, %s48
      %p57 = scmp.eq.s32.totalorder %s16, 0
      %p58 = por %p56, %p57
      %p59 = scmp.ne.s32.totalorder %s47, %s48
      %p60 = scmp.eq.s32.totalorder %s17, 1
      %p61 = por %p59, %p60
      %p63 = scmp.ne.s32.totalorder %s48, %s62
      %p64 = scmp.eq.s32.totalorder %s17, 0
      %p65 = por %p63, %p64
      %s67 = sadd.s32 %s66, 1
      %p70 = scmp.eq.s32.totalorder %s11, 1
      %p71 = scmp.ne.s32.totalorder %s66, %s68
      %p72 = scmp.eq.s32.totalorder %s11, 0
      %p73 = por %p71, %p72
      %p74 = scmp.ne.s32.totalorder %s66, %s68
      %p75 = scmp.eq.s32.totalorder %s16, 1
      %p76 = por %p74, %p75
      %p77 = scmp.ne.s32.totalorder %s68, %s69
      %p78 = scmp.eq.s32.totalorder %s16, 0
      %p79 = por %p77, %p78
      %p80 = scmp.ne.s32.totalorder %s68, %s69
      %p81 = scmp.eq.s32.totalorder %s17, 1
      %p82 = por %p80, %p81
      %p84 = scmp.ne.s32.totalorder %s69, %s83
      %p85 = scmp.eq.s32.totalorder %s17, 0
      %p86 = por %p84, %p85
      %s88 = sadd.s32 %s87, 1
      %p91 = scmp.eq.s32.totalorder %s11, 1
      %p92 = scmp.ne.s32.totalorder %s87, %s89
      %p93 = scmp.eq.s32.totalorder %s11, 0
      %p94 = por %p92, %p93
      %p95 = scmp.ne.s32.totalorder %s87, %s89
      %p96 = scmp.eq.s32.totalorder %s16, 1
      %p97 = por %p95, %p96
      %p98 = scmp.ne.s32.totalorder %s89, %s90
      %p99 = scmp.eq.s32.totalorder %s16, 0
      %p100 = por %p98, %p99
      %p101 = scmp.ne.s32.totalorder %s89, %s90
      %p102 = scmp.eq.s32.totalorder %s17, 1
      %p103 = por %p101, %p102
      %p105 = scmp.ne.s32.totalorder %s90, %s104
      %p106 = scmp.eq.s32.totalorder %s17, 0
      %p107 = por %p105, %p106
      %s108 = ssub.s32 %s11, %s18
      %p109 = scmp.eq.s32.totalorder %s108, 0
      %s111 = sadd.s32 %s110, 1
      %s112 = scalar_select %p109, %s110, %s111
      %p115 = pneg %p109
      %p116 = scmp.eq.s32.totalorder %s11, 1
      %p117 = por %p115, %p116
      %p118 = scmp.ne.s32.totalorder %s110, %s113
      %p119 = scmp.eq.s32.totalorder %s11, 0
      %p120 = por %p118, %p119
      %p121 = scmp.ne.s32.totalorder %s110, %s113
      %p122 = scmp.eq.s32.totalorder %s16, 1
      %p123 = por %p121, %p122
      %p124 = scmp.ne.s32.totalorder %s113, %s114
      %p125 = scmp.eq.s32.totalorder %s16, 0
      %p126 = por %p124, %p125
      %p127 = scmp.ne.s32.totalorder %s113, %s114
      %p128 = scmp.eq.s32.totalorder %s17, 1
      %p129 = por %p127, %p128
      %p131 = scmp.ne.s32.totalorder %s114, %s130
      %p132 = scmp.eq.s32.totalorder %s17, 0
      %p133 = por %p131, %p132
      %p134 = scmp.le.s32.totalorder 1, %s11
      %p135 = scmp.lt.s32.totalorder %s11, 3
      %p136 = pnand %p134, %p135
      %p137 = pneg %p136
      // Predicated region
      $region9: #{_cnn_forward.17} parent=5 // pred_check
        _
      $region10: #{_cnn_forward.17} parent=5 // pred_check_branch
        %139 = sbr.rel (%p136) target = $region12
      $region11: #{_cnn_forward.17} parent=5 // pred_region
        %s140 = ssub.s32 %s11, 1
        // Predicated region
        $region13: #{_cnn_forward.17} parent=11 // pred_check
          %p141 = pneg %p58
        $region14: #{_cnn_forward.17} parent=11 // pred_check_branch
          %143 = sbr.rel (%p141) target = $region16
        $region15: #{_cnn_forward.17} parent=11 // pred_region
          _
        $region16: #{_cnn_forward.17} parent=11 // pred_fallthru
          _
        // Predicated region
        $region17: #{_cnn_forward.17} parent=11 // pred_check
          %p144 = pneg %p79
        $region18: #{_cnn_forward.17} parent=11 // pred_check_branch
          %146 = sbr.rel (%p144) target = $region20
        $region19: #{_cnn_forward.17} parent=11 // pred_region
          _
        $region20: #{_cnn_forward.17} parent=11 // pred_fallthru
          _
        // Predicated region
        $region21: #{_cnn_forward.17} parent=11 // pred_check
          %p147 = pneg %p100
        $region22: #{_cnn_forward.17} parent=11 // pred_check_branch
          %149 = sbr.rel (%p147) target = $region24
        $region23: #{_cnn_forward.17} parent=11 // pred_region
          _
        $region24: #{_cnn_forward.17} parent=11 // pred_fallthru
          _
      $region12: #{_cnn_forward.17} parent=5 // pred_fallthru
        _
      %p150 = scmp.lt.s32.totalorder %s11, 2
      // Predicated region
      $region25: #{_cnn_forward.17} parent=5 // pred_check
        %p151 = pneg %p150
      $region26: #{_cnn_forward.17} parent=5 // pred_check_branch
        %153 = sbr.rel (%p151) target = $region28
      $region27: #{_cnn_forward.17} parent=5 // pred_region
        // Predicated region
        $region29: #{_cnn_forward.17} parent=27 // pred_check
          %p154 = pneg %p31
        $region30: #{_cnn_forward.17} parent=27 // pred_check_branch
          %156 = sbr.rel (%p154) target = $region32
        $region31: #{_cnn_forward.17} parent=27 // pred_region
          %s157 = sand.u32 %s21, 1
          %s158 = sand.u32 %s21, 1
          %s159 = smul.addr %s158, 288
          %s160 = scalar_lea.vmem [#allocation3], %s159
          %s161 = smul.u32 2, %s11
          %s162 = smul.addr %s161, 4
          %s163 = scalar_lea.vmem %s0, %s162
          // Predicated region
          $region33: #{_cnn_forward.17} parent=31 // pred_check
            _
          $region34: #{_cnn_forward.17} parent=31 // pred_check_branch
            %165 = sbr.rel (0) target = $region36
          $region35: #{_cnn_forward.17} parent=31 // pred_region
            // Predicated region
            $region37: #{_cnn_forward.17} parent=35 // pred_check
              _
            $region38: #{_cnn_forward.17} parent=35 // pred_check_branch
              %167 = sbr.rel (0) target = $region40
            $region39: #{_cnn_forward.17} parent=35 // pred_region
              // Predicated region
              $region52: #{_cnn_forward.17} parent=39 // pred_check
                _
              $region53: #{_cnn_forward.17} parent=39 // pred_check_branch
                %252 = sbr.rel (0) target = $region55
              $region54: #{_cnn_forward.17} parent=39 // pred_region
                loop: start=0, step=1, limit=1
                $region56: #{_cnn_forward.17} parent=54 // loop_pre_header
                  _
                $region57: #{_cnn_forward.17} parent=54 // loop_header
                  %s254 = sphi 0, %s258
                  %p255 = scmp.ge.s32.totalorder %s254, 1
                  %s259 = sphi %s163, %s163
                  %s260 = sphi %s160, %s160
                $region58: #{_cnn_forward.17} parent=54 // loop_header_branch
                  %257 = sbr.rel (%p255) target = $region62
                $region59: #{_cnn_forward.17} parent=54 // loop_body
                  %v261 = vld [vmem:[%s259] sm:$0xff]
                  %262 = vst [vmem:[%s260] sm:$0xff] %v261
                  %v263 = vld [vmem:[%s259 + $0x10] sm:$0xff]
                  %264 = vst [vmem:[%s260 + $0x8] sm:$0xff] %v263
                  %v265 = vld [vmem:[%s259 + $0x20] sm:$0xff]
                  %266 = vst [vmem:[%s260 + $0x10] sm:$0xff] %v265
                  %v267 = vld [vmem:[%s259 + $0x30] sm:$0xff]
                  %268 = vst [vmem:[%s260 + $0x18] sm:$0xff] %v267
                  %v269 = vld [vmem:[%s259 + $0x40] sm:$0xff]
                  %270 = vst [vmem:[%s260 + $0x20] sm:$0xff] %v269
                  %v271 = vld [vmem:[%s259 + $0x50] sm:$0xff]
                  %272 = vst [vmem:[%s260 + $0x28] sm:$0xff] %v271
                  %v273 = vld [vmem:[%s259 + $0x60] sm:$0xff]
                  %274 = vst [vmem:[%s260 + $0x30] sm:$0xff] %v273
                  %v275 = vld [vmem:[%s259 + $0x70] sm:$0xff]
                  %276 = vst [vmem:[%s260 + $0x38] sm:$0xff] %v275
                  %v277 = vld [vmem:[%s259 + $0x80] sm:$0xff]
                  %278 = vst [vmem:[%s260 + $0x40] sm:$0xff] %v277
                  %v279 = vld [vmem:[%s259 + $0x90] sm:$0xff]
                  %280 = vst [vmem:[%s260 + $0x48] sm:$0xff] %v279
                  %v281 = vld [vmem:[%s259 + $0xa0] sm:$0xff]
                  %282 = vst [vmem:[%s260 + $0x50] sm:$0xff] %v281
                  %v283 = vld [vmem:[%s259 + $0xb0] sm:$0xff]
                  %284 = vst [vmem:[%s260 + $0x58] sm:$0xff] %v283
                  %v285 = vld [vmem:[%s259 + $0xc0] sm:$0xff]
                  %286 = vst [vmem:[%s260 + $0x60] sm:$0xff] %v285
                  %v287 = vld [vmem:[%s259 + $0xd0] sm:$0xff]
                  %288 = vst [vmem:[%s260 + $0x68] sm:$0xff] %v287
                  %v289 = vld [vmem:[%s259 + $0xe0] sm:$0xff]
                  %290 = vst [vmem:[%s260 + $0x70] sm:$0xff] %v289
                  %v291 = vld [vmem:[%s259 + $0xf0] sm:$0xff]
                  %292 = vst [vmem:[%s260 + $0x78] sm:$0xff] %v291
                  %v293 = vld [vmem:[%s259 + $0x100] sm:$0xff]
                  %294 = vst [vmem:[%s260 + $0x80] sm:$0xff] %v293
                  %v295 = vld [vmem:[%s259 + $0x110] sm:$0xff]
                  %296 = vst [vmem:[%s260 + $0x88] sm:$0xff] %v295
                  %v297 = vld [vmem:[%s259 + $0x120] sm:$0xff]
                  %298 = vst [vmem:[%s260 + $0x90] sm:$0xff] %v297
                  %v299 = vld [vmem:[%s259 + $0x130] sm:$0xff]
                  %300 = vst [vmem:[%s260 + $0x98] sm:$0xff] %v299
                  %v301 = vld [vmem:[%s259 + $0x140] sm:$0xff]
                  %302 = vst [vmem:[%s260 + $0xa0] sm:$0xff] %v301
                  %v303 = vld [vmem:[%s259 + $0x150] sm:$0xff]
                  %304 = vst [vmem:[%s260 + $0xa8] sm:$0xff] %v303
                  %v305 = vld [vmem:[%s259 + $0x160] sm:$0xff]
                  %306 = vst [vmem:[%s260 + $0xb0] sm:$0xff] %v305
                  %v307 = vld [vmem:[%s259 + $0x170] sm:$0xff]
                  %308 = vst [vmem:[%s260 + $0xb8] sm:$0xff] %v307
                  %v309 = vld [vmem:[%s259 + $0x180] sm:$0xff]
                  %310 = vst [vmem:[%s260 + $0xc0] sm:$0xff] %v309
                  %v311 = vld [vmem:[%s259 + $0x190] sm:$0xff]
                  %312 = vst [vmem:[%s260 + $0xc8] sm:$0xff] %v311
                  %v313 = vld [vmem:[%s259 + $0x1a0] sm:$0xff]
                  %314 = vst [vmem:[%s260 + $0xd0] sm:$0xff] %v313
                  %v315 = vld [vmem:[%s259 + $0x1b0] sm:$0xff]
                  %316 = vst [vmem:[%s260 + $0xd8] sm:$0xff] %v315
                  %v317 = vld [vmem:[%s259 + $0x1c0] sm:$0xff]
                  %318 = vst [vmem:[%s260 + $0xe0] sm:$0xff] %v317
                  %v319 = vld [vmem:[%s259 + $0x1d0] sm:$0xff]
                  %320 = vst [vmem:[%s260 + $0xe8] sm:$0xff] %v319
                  %v321 = vld [vmem:[%s259 + $0x1e0] sm:$0xff]
                  %322 = vst [vmem:[%s260 + $0xf0] sm:$0xff] %v321
                  %v323 = vld [vmem:[%s259 + $0x1f0] sm:$0xff]
                  %324 = vst [vmem:[%s260 + $0xf8] sm:$0xff] %v323
                  %v325 = vld [vmem:[%s259 + $0x200] sm:$0xff]
                  %326 = vst [vmem:[%s260 + $0x100] sm:$0xff] %v325
                  %v327 = vld [vmem:[%s259 + $0x210] sm:$0xff]
                  %328 = vst [vmem:[%s260 + $0x108] sm:$0xff] %v327
                  %v329 = vld [vmem:[%s259 + $0x220] sm:$0xff]
                  %330 = vst [vmem:[%s260 + $0x110] sm:$0xff] %v329
                  %v331 = vld [vmem:[%s259 + $0x230] sm:$0xff]
                  %332 = vst [vmem:[%s260 + $0x118] sm:$0xff] %v331
                $region60: #{_cnn_forward.17} parent=54 // loop_footer
                  %s258 = sadd.s32 1, %s254
                $region61: #{_cnn_forward.17} parent=54 // loop_footer_branch
                  %253 = sbr.rel target = $region57
                $region62: #{_cnn_forward.17} parent=54 // loop_exit
                  _
              $region55: #{_cnn_forward.17} parent=39 // pred_fallthru
                _
              // Predicated region
              $region63: #{_cnn_forward.17} parent=39 // pred_check
                _
              $region64: #{_cnn_forward.17} parent=39 // pred_check_branch
                %334 = sbr.rel target = $region66
              $region65: #{_cnn_forward.17} parent=39 // pred_region
                _
              $region66: #{_cnn_forward.17} parent=39 // pred_fallthru
                _
            $region40: #{_cnn_forward.17} parent=35 // pred_fallthru
              _
            // Predicated region
            $region41: #{_cnn_forward.17} parent=35 // pred_check
              _
            $region42: #{_cnn_forward.17} parent=35 // pred_check_branch
              %169 = sbr.rel target = $region44
            $region43: #{_cnn_forward.17} parent=35 // pred_region
              loop: start=0, step=1, limit=1
              $region45: #{_cnn_forward.17} parent=43 // loop_pre_header
                _
              $region46: #{_cnn_forward.17} parent=43 // loop_header
                %s172 = sphi 0, %s176
                %p173 = scmp.ge.s32.totalorder %s172, 1
                %s177 = sphi %s163, %s163
                %s178 = sphi %s160, %s160
              $region47: #{_cnn_forward.17} parent=43 // loop_header_branch
                %175 = sbr.rel (%p173) target = $region51
              $region48: #{_cnn_forward.17} parent=43 // loop_body
                %v179 = vld [vmem:[%s177] sm:$0xff]
                %180 = vst [vmem:[%s178] sm:$0xff] %v179
                %v181 = vld [vmem:[%s177 + $0x10] sm:$0xff]
                %182 = vst [vmem:[%s178 + $0x8] sm:$0xff] %v181
                %v183 = vld [vmem:[%s177 + $0x20] sm:$0xff]
                %184 = vst [vmem:[%s178 + $0x10] sm:$0xff] %v183
                %v185 = vld [vmem:[%s177 + $0x30] sm:$0xff]
                %186 = vst [vmem:[%s178 + $0x18] sm:$0xff] %v185
                %v187 = vld [vmem:[%s177 + $0x40] sm:$0xff]
                %188 = vst [vmem:[%s178 + $0x20] sm:$0xff] %v187
                %v189 = vld [vmem:[%s177 + $0x50] sm:$0xff]
                %190 = vst [vmem:[%s178 + $0x28] sm:$0xff] %v189
                %v191 = vld [vmem:[%s177 + $0x60] sm:$0xff]
                %192 = vst [vmem:[%s178 + $0x30] sm:$0xff] %v191
                %v193 = vld [vmem:[%s177 + $0x70] sm:$0xff]
                %194 = vst [vmem:[%s178 + $0x38] sm:$0xff] %v193
                %v195 = vld [vmem:[%s177 + $0x80] sm:$0xff]
                %196 = vst [vmem:[%s178 + $0x40] sm:$0xff] %v195
                %v197 = vld [vmem:[%s177 + $0x90] sm:$0xff]
                %198 = vst [vmem:[%s178 + $0x48] sm:$0xff] %v197
                %v199 = vld [vmem:[%s177 + $0xa0] sm:$0xff]
                %200 = vst [vmem:[%s178 + $0x50] sm:$0xff] %v199
                %v201 = vld [vmem:[%s177 + $0xb0] sm:$0xff]
                %202 = vst [vmem:[%s178 + $0x58] sm:$0xff] %v201
                %v203 = vld [vmem:[%s177 + $0xc0] sm:$0xff]
                %204 = vst [vmem:[%s178 + $0x60] sm:$0xff] %v203
                %v205 = vld [vmem:[%s177 + $0xd0] sm:$0xff]
                %206 = vst [vmem:[%s178 + $0x68] sm:$0xff] %v205
                %v207 = vld [vmem:[%s177 + $0xe0] sm:$0xff]
                %208 = vst [vmem:[%s178 + $0x70] sm:$0xff] %v207
                %v209 = vld [vmem:[%s177 + $0xf0] sm:$0xff]
                %210 = vst [vmem:[%s178 + $0x78] sm:$0xff] %v209
                %v211 = vld [vmem:[%s177 + $0x100] sm:$0xff]
                %212 = vst [vmem:[%s178 + $0x80] sm:$0xff] %v211
                %v213 = vld [vmem:[%s177 + $0x110] sm:$0xff]
                %214 = vst [vmem:[%s178 + $0x88] sm:$0xff] %v213
                %v215 = vld [vmem:[%s177 + $0x120] sm:$0xff]
                %216 = vst [vmem:[%s178 + $0x90] sm:$0xff] %v215
                %v217 = vld [vmem:[%s177 + $0x130] sm:$0xff]
                %218 = vst [vmem:[%s178 + $0x98] sm:$0xff] %v217
                %v219 = vld [vmem:[%s177 + $0x140] sm:$0xff]
                %220 = vst [vmem:[%s178 + $0xa0] sm:$0xff] %v219
                %v221 = vld [vmem:[%s177 + $0x150] sm:$0xff]
                %222 = vst [vmem:[%s178 + $0xa8] sm:$0xff] %v221
                %v223 = vld [vmem:[%s177 + $0x160] sm:$0xff]
                %224 = vst [vmem:[%s178 + $0xb0] sm:$0xff] %v223
                %v225 = vld [vmem:[%s177 + $0x170] sm:$0xff]
                %226 = vst [vmem:[%s178 + $0xb8] sm:$0xff] %v225
                %v227 = vld [vmem:[%s177 + $0x180] sm:$0xff]
                %228 = vst [vmem:[%s178 + $0xc0] sm:$0xff] %v227
                %v229 = vld [vmem:[%s177 + $0x190] sm:$0xff]
                %230 = vst [vmem:[%s178 + $0xc8] sm:$0xff] %v229
                %v231 = vld [vmem:[%s177 + $0x1a0] sm:$0xff]
                %232 = vst [vmem:[%s178 + $0xd0] sm:$0xff] %v231
                %v233 = vld [vmem:[%s177 + $0x1b0] sm:$0xff]
                %234 = vst [vmem:[%s178 + $0xd8] sm:$0xff] %v233
                %v235 = vld [vmem:[%s177 + $0x1c0] sm:$0xff]
                %236 = vst [vmem:[%s178 + $0xe0] sm:$0xff] %v235
                %v237 = vld [vmem:[%s177 + $0x1d0] sm:$0xff]
                %238 = vst [vmem:[%s178 + $0xe8] sm:$0xff] %v237
                %v239 = vld [vmem:[%s177 + $0x1e0] sm:$0xff]
                %240 = vst [vmem:[%s178 + $0xf0] sm:$0xff] %v239
                %v241 = vld [vmem:[%s177 + $0x1f0] sm:$0xff]
                %242 = vst [vmem:[%s178 + $0xf8] sm:$0xff] %v241
                %v243 = vld [vmem:[%s177 + $0x200] sm:$0xff]
                %244 = vst [vmem:[%s178 + $0x100] sm:$0xff] %v243
                %v245 = vld [vmem:[%s177 + $0x210] sm:$0xff]
                %246 = vst [vmem:[%s178 + $0x108] sm:$0xff] %v245
                %v247 = vld [vmem:[%s177 + $0x220] sm:$0xff]
                %248 = vst [vmem:[%s178 + $0x110] sm:$0xff] %v247
                %v249 = vld [vmem:[%s177 + $0x230] sm:$0xff]
                %250 = vst [vmem:[%s178 + $0x118] sm:$0xff] %v249
              $region49: #{_cnn_forward.17} parent=43 // loop_footer
                %s176 = sadd.s32 1, %s172
              $region50: #{_cnn_forward.17} parent=43 // loop_footer_branch
                %171 = sbr.rel target = $region46
              $region51: #{_cnn_forward.17} parent=43 // loop_exit
                _
            $region44: #{_cnn_forward.17} parent=35 // pred_fallthru
              _
          $region36: #{_cnn_forward.17} parent=31 // pred_fallthru
            _
          %335 = vnop
        $region32: #{_cnn_forward.17} parent=27 // pred_fallthru
          _
      $region28: #{_cnn_forward.17} parent=5 // pred_fallthru
        _
      %p336 = scmp.le.s32.totalorder 1, %s11
      %p337 = scmp.lt.s32.totalorder %s11, 3
      %p338 = pnand %p336, %p337
      %p339 = pneg %p338
      // Predicated region
      $region67: #{_cnn_forward.17} parent=5 // pred_check
        _
      $region68: #{_cnn_forward.17} parent=5 // pred_check_branch
        %341 = sbr.rel (%p338) target = $region70
      $region69: #{_cnn_forward.17} parent=5 // pred_region
        %s342 = ssub.s32 %s11, 1
        %s343 = sand.u32 %s24, 1
        %s344 = sand.u32 %s24, 1
        %s345 = smul.addr %s344, 288
        %s346 = scalar_lea.vmem [#allocation3], %s345
        // Predicated region
        $region71: #{_cnn_forward.17} parent=69 // pred_check
          %p347 = pneg %p37
        $region72: #{_cnn_forward.17} parent=69 // pred_check_branch
          %349 = sbr.rel (%p347) target = $region74
        $region73: #{_cnn_forward.17} parent=69 // pred_region
          _
        $region74: #{_cnn_forward.17} parent=69 // pred_fallthru
          _
        %s350 = sand.u32 %s24, 1
        %s351 = sand.u32 %s24, 1
        %s352 = smul.addr %s351, 288
        %s353 = scalar_lea.vmem [#allocation3], %s352
        %p354 = pneg %p37
        %p355 = pneg %p34
        %p356 = pneg %p58
        %p357 = pneg %p55
        %p358 = pneg %p79
        %p359 = pneg %p76
        %p360 = pneg %p100
        %p361 = pneg %p97
        %p362 = pneg %p126
        %p363 = pneg %p123
        %s364 = sand.u32 %s113, 1
        %s365 = sand.u32 %s113, 1
        %s366 = smul.addr %s365, 32
        %s367 = scalar_lea.vmem [#allocation4], %s366
        %s368 = smul.u32 2, %s16
        %s369 = smul.u32 2, %s16
        %v371 = vld [vmem:[%s1] sm:$0xff]
        %v372 = vld [vmem:[%s1 + $0x8] sm:$0xf]
        %v373 = vld [vmem:[%s1 + $0xc] sm:$0xff]
        %v374 = vld [vmem:[%s1 + $0x14] sm:$0xf]
        %v375 = vld [vmem:[%s1 + $0x18] sm:$0xff]
        %v376 = vld [vmem:[%s1 + $0x20] sm:$0xf]
        %v377 = vld [vmem:[%s1 + $0x24] sm:$0xff]
        %v378 = vld [vmem:[%s1 + $0x2c] sm:$0xf]
        %v379 = vld [vmem:[%s346] sm:$0xff]
        %v380 = vld [vmem:[%s346 + $0x8] sm:$0xff]
        %v381 = vld [vmem:[%s346 + $0x10] sm:$0xff]
        %v382 = vld [vmem:[%s346 + $0x18] sm:$0xff]
        %v383 = vld [vmem:[%s346 + $0x20] sm:$0xff]
        %v384 = vld [vmem:[%s346 + $0x28] sm:$0xff]
        %v385 = vld [vmem:[%s346 + $0x30] sm:$0xff]
        %v386 = vld [vmem:[%s346 + $0x38] sm:$0xff]
        %v387 = vld [vmem:[%s346 + $0x40] sm:$0xff]
        %v388 = vld [vmem:[%s346 + $0x48] sm:$0xff]
        %v389 = vld [vmem:[%s346 + $0x50] sm:$0xff]
        %v390 = vld [vmem:[%s346 + $0x58] sm:$0xff]
        %v391 = vld [vmem:[%s346 + $0x60] sm:$0xff]
        %v392 = vld [vmem:[%s346 + $0x68] sm:$0xff]
        %v393 = vld [vmem:[%s346 + $0x70] sm:$0xff]
        %v394 = vld [vmem:[%s346 + $0x78] sm:$0xff]
        %v395 = vld [vmem:[%s346 + $0x80] sm:$0xff]
        %v396 = vld [vmem:[%s346 + $0x88] sm:$0xff]
        %v397 = vld [vmem:[%s346 + $0x90] sm:$0xff]
        %v398 = vld [vmem:[%s346 + $0x98] sm:$0xff]
        %v399 = vld [vmem:[%s346 + $0xa0] sm:$0xff]
        %v400 = vld [vmem:[%s346 + $0xa8] sm:$0xff]
        %v401 = vld [vmem:[%s346 + $0xb0] sm:$0xff]
        %v402 = vld [vmem:[%s346 + $0xb8] sm:$0xff]
        %v403 = vld [vmem:[%s346 + $0xc0] sm:$0xff]
        %v404 = vld [vmem:[%s346 + $0xc8] sm:$0xff]
        %v405 = vld [vmem:[%s346 + $0xd0] sm:$0xff]
        %v406 = vld [vmem:[%s346 + $0xd8] sm:$0xff]
        %v407 = vld [vmem:[%s346 + $0xe0] sm:$0xff]
        %v408 = vld [vmem:[%s346 + $0xe8] sm:$0xff]
        %v409 = vld [vmem:[%s346 + $0xf0] sm:$0xff]
        %v410 = vld [vmem:[%s346 + $0xf8] sm:$0xff]
        %v411 = vld [vmem:[%s346 + $0x100] sm:$0xff]
        %v412 = vld [vmem:[%s346 + $0x108] sm:$0xff]
        %v413 = vld [vmem:[%s346 + $0x110] sm:$0xff]
        %v414 = vld [vmem:[%s346 + $0x118] sm:$0xff]
        %v415 = vld [vmem:[%s2] sm:$0xff]
        %v416 = vld [vmem:[%s2 + $0x8] sm:$0xff]
        %v417 = vld [vmem:[%s2 + $0x10] sm:$0xff]
        %v418 = vld [vmem:[%s2 + $0x18] sm:$0xff]
        %420 = vset.pattern.permute.xlu0 0
        %421 = vperm.xlu0 %420, %v415
        %v422 = vpop.permute.xlu0 %421
        %425 = vset.pattern.permute.xlu0 0
        %426 = vperm.xlu0 %425, %v416
        %v427 = vpop.permute.xlu0 %426
        %430 = vset.pattern.permute.xlu0 0
        %431 = vperm.xlu0 %430, %v417
        %v432 = vpop.permute.xlu0 %431
        %435 = vset.pattern.permute.xlu0 0
        %436 = vperm.xlu0 %435, %v418
        %v437 = vpop.permute.xlu0 %436
        %v447 = vunpack.c.l.b16 %v371
        %v448 = vunpack.c.h.b16 %v371
        %v449 = vunpack.c.l.b16 %v372
        %v450 = vunpack.c.l.b16 %v373
        %v451 = vunpack.c.h.b16 %v373
        %v452 = vunpack.c.l.b16 %v374
        %v453 = vunpack.c.l.b16 %v375
        %v454 = vunpack.c.h.b16 %v375
        %v455 = vunpack.c.l.b16 %v376
        %v456 = vunpack.c.l.b16 %v377
        %v457 = vunpack.c.h.b16 %v377
        %v458 = vunpack.c.l.b16 %v378
        %v459 = vpack.c.b16 %v450, %v447
        %v460 = vpack.c.b16 %v451, %v448
        %v461 = vpack.c.b16 %v452, %v449
        %v462 = vpack.c.b16 %v456, %v453
        %v463 = vpack.c.b16 %v457, %v454
        %v464 = vpack.c.b16 %v458, %v455
        %v505 = vunpack.c.l.b16 %v379
        %v506 = vunpack.c.h.b16 %v379
        %v507 = vunpack.c.l.b16 %v380
        %v508 = vunpack.c.h.b16 %v380
        %v509 = vunpack.c.l.b16 %v381
        %v510 = vunpack.c.h.b16 %v381
        %v511 = vunpack.c.l.b16 %v382
        %v512 = vunpack.c.h.b16 %v382
        %v513 = vunpack.c.l.b16 %v383
        %v514 = vunpack.c.h.b16 %v383
        %v515 = vunpack.c.l.b16 %v384
        %v516 = vunpack.c.h.b16 %v384
        %v517 = vunpack.c.l.b16 %v385
        %v518 = vunpack.c.h.b16 %v385
        %v519 = vunpack.c.l.b16 %v386
        %v520 = vunpack.c.h.b16 %v386
        %v521 = vunpack.c.l.b16 %v387
        %v522 = vunpack.c.h.b16 %v387
        %v523 = vunpack.c.l.b16 %v388
        %v524 = vunpack.c.h.b16 %v388
        %v525 = vunpack.c.l.b16 %v389
        %v526 = vunpack.c.h.b16 %v389
        %v527 = vunpack.c.l.b16 %v390
        %v528 = vunpack.c.h.b16 %v390
        %v529 = vunpack.c.l.b16 %v391
        %v530 = vunpack.c.h.b16 %v391
        %v531 = vunpack.c.l.b16 %v392
        %v532 = vunpack.c.h.b16 %v392
        %v533 = vunpack.c.l.b16 %v393
        %v534 = vunpack.c.h.b16 %v393
        %v535 = vunpack.c.l.b16 %v394
        %v536 = vunpack.c.h.b16 %v394
        %v537 = vunpack.c.l.b16 %v395
        %v538 = vunpack.c.h.b16 %v395
        %v539 = vunpack.c.l.b16 %v396
        %v540 = vunpack.c.h.b16 %v396
        %v541 = vunpack.c.l.b16 %v397
        %v542 = vunpack.c.h.b16 %v397
        %v543 = vunpack.c.l.b16 %v398
        %v544 = vunpack.c.h.b16 %v398
        %v545 = vunpack.c.l.b16 %v399
        %v546 = vunpack.c.h.b16 %v399
        %v547 = vunpack.c.l.b16 %v400
        %v548 = vunpack.c.h.b16 %v400
        %v549 = vunpack.c.l.b16 %v401
        %v550 = vunpack.c.h.b16 %v401
        %v551 = vunpack.c.l.b16 %v402
        %v552 = vunpack.c.h.b16 %v402
        %v553 = vunpack.c.l.b16 %v403
        %v554 = vunpack.c.h.b16 %v403
        %v555 = vunpack.c.l.b16 %v404
        %v556 = vunpack.c.h.b16 %v404
        %v557 = vunpack.c.l.b16 %v405
        %v558 = vunpack.c.h.b16 %v405
        %v559 = vunpack.c.l.b16 %v406
        %v560 = vunpack.c.h.b16 %v406
        %v561 = vunpack.c.l.b16 %v407
        %v562 = vunpack.c.h.b16 %v407
        %v563 = vunpack.c.l.b16 %v408
        %v564 = vunpack.c.h.b16 %v408
        %v565 = vunpack.c.l.b16 %v409
        %v566 = vunpack.c.h.b16 %v409
        %v567 = vunpack.c.l.b16 %v410
        %v568 = vunpack.c.h.b16 %v410
        %v569 = vunpack.c.l.b16 %v411
        %v570 = vunpack.c.h.b16 %v411
        %v571 = vunpack.c.l.b16 %v412
        %v572 = vunpack.c.h.b16 %v412
        %v573 = vunpack.c.l.b16 %v413
        %v574 = vunpack.c.h.b16 %v413
        %v575 = vunpack.c.l.b16 %v414
        %v576 = vunpack.c.h.b16 %v414
        %v577 = vpack.c.b16 %v507, %v505
        %v578 = vpack.c.b16 %v508, %v506
        %v579 = vpack.c.b16 %v511, %v509
        %v580 = vpack.c.b16 %v512, %v510
        %v581 = vpack.c.b16 %v515, %v513
        %v582 = vpack.c.b16 %v516, %v514
        %v583 = vpack.c.b16 %v519, %v517
        %v584 = vpack.c.b16 %v520, %v518
        %v585 = vpack.c.b16 %v523, %v521
        %v586 = vpack.c.b16 %v524, %v522
        %v587 = vpack.c.b16 %v527, %v525
        %v588 = vpack.c.b16 %v528, %v526
        %v589 = vpack.c.b16 %v531, %v529
        %v590 = vpack.c.b16 %v532, %v530
        %v591 = vpack.c.b16 %v535, %v533
        %v592 = vpack.c.b16 %v536, %v534
        %v593 = vpack.c.b16 %v539, %v537
        %v594 = vpack.c.b16 %v540, %v538
        %v595 = vpack.c.b16 %v543, %v541
        %v596 = vpack.c.b16 %v544, %v542
        %v597 = vpack.c.b16 %v547, %v545
        %v598 = vpack.c.b16 %v548, %v546
        %v599 = vpack.c.b16 %v551, %v549
        %v600 = vpack.c.b16 %v552, %v550
        %v601 = vpack.c.b16 %v555, %v553
        %v602 = vpack.c.b16 %v556, %v554
        %v603 = vpack.c.b16 %v559, %v557
        %v604 = vpack.c.b16 %v560, %v558
        %v605 = vpack.c.b16 %v563, %v561
        %v606 = vpack.c.b16 %v564, %v562
        %v607 = vpack.c.b16 %v567, %v565
        %v608 = vpack.c.b16 %v568, %v566
        %v609 = vpack.c.b16 %v571, %v569
        %v610 = vpack.c.b16 %v572, %v570
        %v611 = vpack.c.b16 %v575, %v573
        %v612 = vpack.c.b16 %v576, %v574
        %vm649 = vcmask 261120
        %v651 = vsel %vm649, %v461, 0
        %v654 = vsel %vm649, %v464, 0
        %656 = vmatprep.subr.bf16.mxu0 %v578
        %657 = vmatpush1.bf16.msra.mxu0 %v577
        %658 = vmatprep.subr.bf16.mxu0 %v580
        %659 = vmatpush1.bf16.msra.mxu0 %v579
        %660 = vmatprep.subr.bf16.mxu0 %v582
        %661 = vmatpush1.bf16.msra.mxu0 %v581
        %662 = vmatprep.subr.bf16.mxu0 %v584
        %663 = vmatpush1.bf16.msra.mxu0 %v583
        %664 = vmatprep.subr.bf16.mxu0 %v586
        %665 = vmatpush1.bf16.msra.mxu0 %v585
        %666 = vmatprep.subr.bf16.mxu0 %v588
        %667 = vmatpush1.bf16.msra.mxu0 %v587
        %668 = vmatprep.subr.bf16.mxu0 %v590
        %669 = vmatpush1.bf16.msra.mxu0 %v589
        %670 = vmatprep.subr.bf16.mxu0 %v592
        %671 = vmatpush1.bf16.msra.mxu0 %v591
        %672 = vmatprep.subr.bf16.mxu0 %v594
        %673 = vmatpush1.bf16.msra.mxu0 %v593
        %674 = vmatprep.subr.bf16.mxu0 %v596
        %675 = vmatpush1.bf16.msra.mxu0 %v595
        %676 = vmatprep.subr.bf16.mxu0 %v598
        %677 = vmatpush1.bf16.msra.mxu0 %v597
        %678 = vmatprep.subr.bf16.mxu0 %v600
        %679 = vmatpush1.bf16.msra.mxu0 %v599
        %680 = vmatprep.subr.bf16.mxu0 %v602
        %681 = vmatpush1.bf16.msra.mxu0 %v601
        %682 = vmatprep.subr.bf16.mxu0 %v604
        %683 = vmatpush1.bf16.msra.mxu0 %v603
        %684 = vmatprep.subr.bf16.mxu0 %v606
        %685 = vmatpush1.bf16.msra.mxu0 %v605
        %686 = vmatprep.subr.bf16.mxu0 %v608
        %687 = vmatpush1.bf16.msra.mxu0 %v607
        %688 = vmatprep.mubr.bf16.mxu0 %v460
        %689 = vmatmul.mubr.bf16.gmra.mrb[0].mxu0 %v459
        %v690 = vpop.f32.mrb[0].mxu0
        %v691 = vadd.f32 %v422, %v690
        %v692 = vpop.f32.mrb[0].mxu0
        %v693 = vadd.f32 %v422, %v692
        %v694 = vpop.f32.mrb[0].mxu0
        %v695 = vadd.f32 %v427, %v694
        %v696 = vpop.f32.mrb[0].mxu0
        %v697 = vadd.f32 %v427, %v696
        %698 = vmatprep.mubr.bf16.mxu0 %v463
        %699 = vmatmul.mubr.bf16.gmra.mrb[0].mxu0 %v462
        %v700 = vpop.f32.mrb[0].mxu0
        %v701 = vadd.f32 %v432, %v700
        %v702 = vpop.f32.mrb[0].mxu0
        %v703 = vadd.f32 %v432, %v702
        %v704 = vpop.f32.mrb[0].mxu0
        %v705 = vadd.f32 %v437, %v704
        %v706 = vpop.f32.mrb[0].mxu0
        %v707 = vadd.f32 %v437, %v706
        %708 = vdwg.mxu0
        %709 = vmatprep.subr.bf16.mxu0 %v610
        %710 = vmatpush1.bf16.msra.mxu0 %v609
        %711 = vmatprep.subr.bf16.mxu0 %v612
        %712 = vmatpush1.bf16.msra.mxu0 %v611
        %713 = vmatprep.subr.bf16.mxu0 0
        %714 = vmatpush1.bf16.msra.mxu0 0
        %715 = vmatprep.subr.bf16.mxu0 0
        %716 = vmatpush1.bf16.msra.mxu0 0
        %717 = vmatprep.subr.bf16.mxu0 0
        %718 = vmatpush1.bf16.msra.mxu0 0
        %719 = vmatprep.subr.bf16.mxu0 0
        %720 = vmatpush1.bf16.msra.mxu0 0
        %721 = vmatprep.subr.bf16.mxu0 0
        %722 = vmatpush1.bf16.msra.mxu0 0
        %723 = vmatprep.subr.bf16.mxu0 0
        %724 = vmatpush1.bf16.msra.mxu0 0
        %725 = vmatprep.subr.bf16.mxu0 0
        %726 = vmatpush1.bf16.msra.mxu0 0
        %727 = vmatprep.subr.bf16.mxu0 0
        %728 = vmatpush1.bf16.msra.mxu0 0
        %729 = vmatprep.subr.bf16.mxu0 0
        %730 = vmatpush1.bf16.msra.mxu0 0
        %731 = vmatprep.subr.bf16.mxu0 0
        %732 = vmatpush1.bf16.msra.mxu0 0
        %733 = vmatprep.subr.bf16.mxu0 0
        %734 = vmatpush1.bf16.msra.mxu0 0
        %735 = vmatprep.subr.bf16.mxu0 0
        %736 = vmatpush1.bf16.msra.mxu0 0
        %737 = vmatprep.subr.bf16.mxu0 0
        %738 = vmatpush1.bf16.msra.mxu0 0
        %739 = vmatprep.subr.bf16.mxu0 0
        %740 = vmatpush1.bf16.msra.mxu0 0
        %741 = vmatprep.mubr.bf16.mxu0 0
        %742 = vmatmul.mubr.bf16.gmra.mrb[0].mxu0 %v651
        %v743 = vpop.f32.mrb[0].mxu0
        %v744 = vadd.f32 %v691, %v743
        %v745 = vpop.f32.mrb[0].mxu0
        %v746 = vadd.f32 %v693, %v745
        %v747 = vpop.f32.mrb[0].mxu0
        %v748 = vadd.f32 %v695, %v747
        %v749 = vpop.f32.mrb[0].mxu0
        %v750 = vadd.f32 %v697, %v749
        %751 = vmatprep.mubr.bf16.mxu0 0
        %752 = vmatmul.mubr.bf16.gmra.mrb[0].mxu0 %v654
        %v753 = vpop.f32.mrb[0].mxu0
        %v754 = vadd.f32 %v701, %v753
        %v755 = vpop.f32.mrb[0].mxu0
        %v756 = vadd.f32 %v703, %v755
        %v757 = vpop.f32.mrb[0].mxu0
        %v758 = vadd.f32 %v705, %v757
        %v759 = vpop.f32.mrb[0].mxu0
        %v760 = vadd.f32 %v707, %v759
        %761 = vdwg.mxu0
        %s762 = sld [smem:[#allocation2]]
        %vm763 = vcmp.gt.f32.partialorder %v744, 0.0
        %vm764 = vcmp.gt.f32.partialorder %v746, 0.0
        %vm765 = vcmp.gt.f32.partialorder %v748, 0.0
        %vm766 = vcmp.gt.f32.partialorder %v750, 0.0
        %vm767 = vcmp.gt.f32.partialorder %v754, 0.0
        %vm768 = vcmp.gt.f32.partialorder %v756, 0.0
        %vm769 = vcmp.gt.f32.partialorder %v758, 0.0
        %vm770 = vcmp.gt.f32.partialorder %v760, 0.0
        %v771 = vstv %s762
        %v772 = vmul.f32 %v771, %v744
        %v773 = vmul.f32 %v771, %v746
        %v774 = vmul.f32 %v771, %v748
        %v775 = vmul.f32 %v771, %v750
        %v776 = vmul.f32 %v771, %v754
        %v777 = vmul.f32 %v771, %v756
        %v778 = vmul.f32 %v771, %v758
        %v779 = vmul.f32 %v771, %v760
        %v780 = vsel %vm763, %v744, %v772
        %v781 = vsel %vm764, %v746, %v773
        %v782 = vsel %vm765, %v748, %v774
        %v783 = vsel %vm766, %v750, %v775
        %v784 = vsel %vm767, %v754, %v776
        %v785 = vsel %vm768, %v756, %v777
        %v786 = vsel %vm769, %v758, %v778
        %v787 = vsel %vm770, %v760, %v779
        %v788 = vpack.c.bf16 %v782, %v780
        %v789 = vpack.c.bf16 %v783, %v781
        %v790 = vpack.c.bf16 %v786, %v784
        %v791 = vpack.c.bf16 %v787, %v785
        %v796 = vunpack.c.l.b16 %v788
        %v797 = vunpack.c.l.b16 %v789
        %v798 = vunpack.c.h.b16 %v788
        %v799 = vunpack.c.h.b16 %v789
        %v800 = vunpack.c.l.b16 %v790
        %v801 = vunpack.c.l.b16 %v791
        %v802 = vunpack.c.h.b16 %v790
        %v803 = vunpack.c.h.b16 %v791
        %v804 = vpack.c.b16 %v797, %v796
        %v805 = vpack.c.b16 %v799, %v798
        %v806 = vpack.c.b16 %v801, %v800
        %v807 = vpack.c.b16 %v803, %v802
        %812 = vst [vmem:[%s367] sm:$0xff] %v804
        %813 = vst [vmem:[%s367 + $0x8] sm:$0xff] %v805
        %814 = vst [vmem:[%s367 + $0x10] sm:$0xff] %v806
        %815 = vst [vmem:[%s367 + $0x18] sm:$0xff] %v807
        %s816 = sand.u32 %s113, 1
        %s817 = sand.u32 %s113, 1
        %s818 = smul.addr %s817, 32
        %s819 = scalar_lea.vmem [#allocation4], %s818
        // Predicated region
        $region75: #{_cnn_forward.17} parent=69 // pred_check
          %p820 = pneg %p123
        $region76: #{_cnn_forward.17} parent=69 // pred_check_branch
          %822 = sbr.rel (%p820) target = $region78
        $region77: #{_cnn_forward.17} parent=69 // pred_region
          %s823 = smul.u32 2, %s16
          %s824 = smul.addr %s823, 4
          %s825 = scalar_lea.vmem %s4, %s824
          // Predicated region
          $region79: #{_cnn_forward.17} parent=77 // pred_check
            _
          $region80: #{_cnn_forward.17} parent=77 // pred_check_branch
            %827 = sbr.rel (0) target = $region82
          $region81: #{_cnn_forward.17} parent=77 // pred_region
            // Predicated region
            $region83: #{_cnn_forward.17} parent=81 // pred_check
              _
            $region84: #{_cnn_forward.17} parent=81 // pred_check_branch
              %829 = sbr.rel (0) target = $region86
            $region85: #{_cnn_forward.17} parent=81 // pred_region
              // Predicated region
              $region98: #{_cnn_forward.17} parent=85 // pred_check
                _
              $region99: #{_cnn_forward.17} parent=85 // pred_check_branch
                %850 = sbr.rel (0) target = $region101
              $region100: #{_cnn_forward.17} parent=85 // pred_region
                loop: start=0, step=1, limit=1
                $region102: #{_cnn_forward.17} parent=100 // loop_pre_header
                  _
                $region103: #{_cnn_forward.17} parent=100 // loop_header
                  %s852 = sphi 0, %s856
                  %p853 = scmp.ge.s32.totalorder %s852, 1
                  %s857 = sphi %s819, %s819
                  %s858 = sphi %s825, %s825
                $region104: #{_cnn_forward.17} parent=100 // loop_header_branch
                  %855 = sbr.rel (%p853) target = $region108
                $region105: #{_cnn_forward.17} parent=100 // loop_body
                  %v859 = vld [vmem:[%s857] sm:$0xff]
                  %860 = vst [vmem:[%s858] sm:$0xff] %v859
                  %v861 = vld [vmem:[%s857 + $0x8] sm:$0xff]
                  %862 = vst [vmem:[%s858 + $0x10] sm:$0xff] %v861
                  %v863 = vld [vmem:[%s857 + $0x10] sm:$0xff]
                  %864 = vst [vmem:[%s858 + $0x20] sm:$0xff] %v863
                  %v865 = vld [vmem:[%s857 + $0x18] sm:$0xff]
                  %866 = vst [vmem:[%s858 + $0x30] sm:$0xff] %v865
                $region106: #{_cnn_forward.17} parent=100 // loop_footer
                  %s856 = sadd.s32 1, %s852
                $region107: #{_cnn_forward.17} parent=100 // loop_footer_branch
                  %851 = sbr.rel target = $region103
                $region108: #{_cnn_forward.17} parent=100 // loop_exit
                  _
              $region101: #{_cnn_forward.17} parent=85 // pred_fallthru
                _
              // Predicated region
              $region109: #{_cnn_forward.17} parent=85 // pred_check
                _
              $region110: #{_cnn_forward.17} parent=85 // pred_check_branch
                %868 = sbr.rel target = $region112
              $region111: #{_cnn_forward.17} parent=85 // pred_region
                _
              $region112: #{_cnn_forward.17} parent=85 // pred_fallthru
                _
            $region86: #{_cnn_forward.17} parent=81 // pred_fallthru
              _
            // Predicated region
            $region87: #{_cnn_forward.17} parent=81 // pred_check
              _
            $region88: #{_cnn_forward.17} parent=81 // pred_check_branch
              %831 = sbr.rel target = $region90
            $region89: #{_cnn_forward.17} parent=81 // pred_region
              loop: start=0, step=1, limit=1
              $region91: #{_cnn_forward.17} parent=89 // loop_pre_header
                _
              $region92: #{_cnn_forward.17} parent=89 // loop_header
                %s834 = sphi 0, %s838
                %p835 = scmp.ge.s32.totalorder %s834, 1
                %s839 = sphi %s819, %s819
                %s840 = sphi %s825, %s825
              $region93: #{_cnn_forward.17} parent=89 // loop_header_branch
                %837 = sbr.rel (%p835) target = $region97
              $region94: #{_cnn_forward.17} parent=89 // loop_body
                %v841 = vld [vmem:[%s839] sm:$0xff]
                %842 = vst [vmem:[%s840] sm:$0xff] %v841
                %v843 = vld [vmem:[%s839 + $0x8] sm:$0xff]
                %844 = vst [vmem:[%s840 + $0x10] sm:$0xff] %v843
                %v845 = vld [vmem:[%s839 + $0x10] sm:$0xff]
                %846 = vst [vmem:[%s840 + $0x20] sm:$0xff] %v845
                %v847 = vld [vmem:[%s839 + $0x18] sm:$0xff]
                %848 = vst [vmem:[%s840 + $0x30] sm:$0xff] %v847
              $region95: #{_cnn_forward.17} parent=89 // loop_footer
                %s838 = sadd.s32 1, %s834
              $region96: #{_cnn_forward.17} parent=89 // loop_footer_branch
                %833 = sbr.rel target = $region92
              $region97: #{_cnn_forward.17} parent=89 // loop_exit
                _
            $region90: #{_cnn_forward.17} parent=81 // pred_fallthru
              _
          $region82: #{_cnn_forward.17} parent=77 // pred_fallthru
            _
          %869 = vnop
        $region78: #{_cnn_forward.17} parent=69 // pred_fallthru
          _
      $region70: #{_cnn_forward.17} parent=5 // pred_fallthru
        _
      %p870 = scmp.le.s32.totalorder 2, %s11
      // Predicated region
      $region113: #{_cnn_forward.17} parent=5 // pred_check
        %p871 = pneg %p870
      $region114: #{_cnn_forward.17} parent=5 // pred_check_branch
        %873 = sbr.rel (%p871) target = $region116
      $region115: #{_cnn_forward.17} parent=5 // pred_region
        %s874 = ssub.s32 %s11, 2
        // Predicated region
        $region117: #{_cnn_forward.17} parent=115 // pred_check
          %p875 = pneg %p129
        $region118: #{_cnn_forward.17} parent=115 // pred_check_branch
          %877 = sbr.rel (%p875) target = $region120
        $region119: #{_cnn_forward.17} parent=115 // pred_region
          %s878 = sand.u32 %s114, 1
          %s879 = sand.u32 %s114, 1
          %s880 = smul.addr %s879, 32
          %s881 = scalar_lea.vmem [#allocation4], %s880
        $region120: #{_cnn_forward.17} parent=115 // pred_fallthru
          _
      $region116: #{_cnn_forward.17} parent=5 // pred_fallthru
        _
    $region6: #{_cnn_forward.17} parent=1 // loop_footer
      %s15 = sadd.s32 1, %s11
    $region7: #{_cnn_forward.17} parent=1 // loop_footer_branch
      %10 = sbr.rel target = $region3
    $region8: #{_cnn_forward.17} parent=1 // loop_exit
      _

// kernel: _cnn_forward.19
$region0: #{_cnn_forward.19}
  #allocation0 [shape = 'u32[]', space=smem, size = 0x4, offset = 0x4, fixed_abs, tag = 'smem constant byte address 0x4 - core index']
  #allocation1 [shape = 'u32[144,128]{1,0:T(1,128)}', space=vmem, size = 0x12000, scoped, tag = 'internal scratch']
  #allocation2 [shape = 'f32[1]{0:T(128)S(6)}', space=smem, size = 0x200, scoped, tag = 'scoped memory for _cnn_forward.19']
  %s0 = inlined_call_operand.vmem [shape: bf16[800,128], index: 0, kind: input, shape index: {}]
  %s1 = inlined_call_operand.vmem [shape: bf16[64,800], index: 1, kind: input, shape index: {}]
  %s2 = inlined_call_operand.vmem [shape: f32[64,1], index: 2, kind: input, shape index: {}]
  %s3 = inlined_call_operand.<no memory space> [shape: f32[1], index: 3, kind: input, shape index: {}]
  %s4 = inlined_call_operand.vmem [shape: bf16[64,128], index: 4, kind: output, shape index: {}]
  %s5 = sld [smem:[#allocation0]]
  $region26: #{_cnn_forward.19} parent=0
    _
  %s7 = ssub.s32 1, %s5
  %s8 = scalar_select 0, %s7, %s5
  %9 = sst [smem:[#allocation2]] %s3
  // Predicated region
  $region2: #{_cnn_forward.19} parent=0 // pred_check
    _
  $region3: #{_cnn_forward.19} parent=0 // pred_check_branch
    %11 = sbr.rel (0) target = $region5
  $region4: #{_cnn_forward.19} parent=0 // pred_region
    _
  $region5: #{_cnn_forward.19} parent=0 // pred_fallthru
    _
  // Predicated region
  $region6: #{_cnn_forward.19} parent=0 // pred_check
    _
  $region7: #{_cnn_forward.19} parent=0 // pred_check_branch
    %13 = sbr.rel (0) target = $region9
  $region8: #{_cnn_forward.19} parent=0 // pred_region
    _
  $region9: #{_cnn_forward.19} parent=0 // pred_fallthru
    _
  // Predicated region
  $region10: #{_cnn_forward.19} parent=0 // pred_check
    _
  $region11: #{_cnn_forward.19} parent=0 // pred_check_branch
    %15 = sbr.rel (0) target = $region13
  $region12: #{_cnn_forward.19} parent=0 // pred_region
    _
  $region13: #{_cnn_forward.19} parent=0 // pred_fallthru
    _
  // Predicated region
  $region14: #{_cnn_forward.19} parent=0 // pred_check
    _
  $region15: #{_cnn_forward.19} parent=0 // pred_check_branch
    %17 = sbr.rel (0) target = $region17
  $region16: #{_cnn_forward.19} parent=0 // pred_region
    _
  $region17: #{_cnn_forward.19} parent=0 // pred_fallthru
    _
  %v19 = vld [vmem:[%s1] sm:$0xff]
  %v20 = vld [vmem:[%s1 + $0x8] sm:$0xff]
  %v21 = vld [vmem:[%s1 + $0x10] sm:$0xff]
  %v22 = vld [vmem:[%s1 + $0x18] sm:$0xf]
  %v23 = vld [vmem:[%s1 + $0x1c] sm:$0xff]
  %v24 = vld [vmem:[%s1 + $0x24] sm:$0xff]
  %v25 = vld [vmem:[%s1 + $0x2c] sm:$0xff]
  %v26 = vld [vmem:[%s1 + $0x34] sm:$0xf]
  %v27 = vld [vmem:[%s1 + $0x38] sm:$0xff]
  %v28 = vld [vmem:[%s1 + $0x40] sm:$0xff]
  %v29 = vld [vmem:[%s1 + $0x48] sm:$0xff]
  %v30 = vld [vmem:[%s1 + $0x50] sm:$0xf]
  %v31 = vld [vmem:[%s1 + $0x54] sm:$0xff]
  %v32 = vld [vmem:[%s1 + $0x5c] sm:$0xff]
  %v33 = vld [vmem:[%s1 + $0x64] sm:$0xff]
  %v34 = vld [vmem:[%s1 + $0x6c] sm:$0xf]
  %v35 = vld [vmem:[%s1 + $0x70] sm:$0xff]
  %v36 = vld [vmem:[%s1 + $0x78] sm:$0xff]
  %v37 = vld [vmem:[%s1 + $0x80] sm:$0xff]
  %v38 = vld [vmem:[%s1 + $0x88] sm:$0xf]
  %v39 = vld [vmem:[%s1 + $0x8c] sm:$0xff]
  %v40 = vld [vmem:[%s1 + $0x94] sm:$0xff]
  %v41 = vld [vmem:[%s1 + $0x9c] sm:$0xff]
  %v42 = vld [vmem:[%s1 + $0xa4] sm:$0xf]
  %v43 = vld [vmem:[%s1 + $0xa8] sm:$0xff]
  %v44 = vld [vmem:[%s1 + $0xb0] sm:$0xff]
  %v45 = vld [vmem:[%s1 + $0xb8] sm:$0xff]
  %v46 = vld [vmem:[%s1 + $0xc0] sm:$0xf]
  %v47 = vld [vmem:[%s1 + $0xc4] sm:$0xff]
  %v48 = vld [vmem:[%s1 + $0xcc] sm:$0xff]
  %v49 = vld [vmem:[%s1 + $0xd4] sm:$0xff]
  %v50 = vld [vmem:[%s1 + $0xdc] sm:$0xf]
  %v51 = vld [vmem:[%s0] sm:$0xf]
  %v52 = vld [vmem:[%s0 + $0x4] sm:$0xf]
  %v53 = vld [vmem:[%s0 + $0x8] sm:$0xf]
  %v54 = vld [vmem:[%s0 + $0xc] sm:$0xf]
  %v55 = vld [vmem:[%s0 + $0x10] sm:$0xf]
  %v56 = vld [vmem:[%s0 + $0x14] sm:$0xf]
  %v57 = vld [vmem:[%s0 + $0x18] sm:$0xf]
  %v58 = vld [vmem:[%s0 + $0x1c] sm:$0xf]
  %v59 = vld [vmem:[%s0 + $0x20] sm:$0xf]
  %v60 = vld [vmem:[%s0 + $0x24] sm:$0xf]
  %v61 = vld [vmem:[%s0 + $0x28] sm:$0xf]
  %v62 = vld [vmem:[%s0 + $0x2c] sm:$0xf]
  %v63 = vld [vmem:[%s0 + $0x30] sm:$0xf]
  %v64 = vld [vmem:[%s0 + $0x34] sm:$0xf]
  %v65 = vld [vmem:[%s0 + $0x38] sm:$0xf]
  %v66 = vld [vmem:[%s0 + $0x3c] sm:$0xf]
  %v67 = vld [vmem:[%s0 + $0x40] sm:$0xf]
  %v68 = vld [vmem:[%s0 + $0x44] sm:$0xf]
  %v69 = vld [vmem:[%s0 + $0x48] sm:$0xf]
  %v70 = vld [vmem:[%s0 + $0x4c] sm:$0xf]
  %v71 = vld [vmem:[%s0 + $0x50] sm:$0xf]
  %v72 = vld [vmem:[%s0 + $0x54] sm:$0xf]
  %v73 = vld [vmem:[%s0 + $0x58] sm:$0xf]
  %v74 = vld [vmem:[%s0 + $0x5c] sm:$0xf]
  %v75 = vld [vmem:[%s0 + $0x60] sm:$0xf]
  %v76 = vld [vmem:[%s0 + $0x64] sm:$0xf]
  %v77 = vld [vmem:[%s0 + $0x68] sm:$0xf]
  %v78 = vld [vmem:[%s0 + $0x6c] sm:$0xf]
  %v79 = vld [vmem:[%s0 + $0x70] sm:$0xf]
  %v80 = vld [vmem:[%s0 + $0x74] sm:$0xf]
  %v81 = vld [vmem:[%s0 + $0x78] sm:$0xf]
  %v82 = vld [vmem:[%s0 + $0x7c] sm:$0xf]
  %v83 = vld [vmem:[%s0 + $0x80] sm:$0xf]
  %v84 = vld [vmem:[%s0 + $0x84] sm:$0xf]
  %v85 = vld [vmem:[%s0 + $0x88] sm:$0xf]
  %v86 = vld [vmem:[%s0 + $0x8c] sm:$0xf]
  %v87 = vld [vmem:[%s0 + $0x90] sm:$0xf]
  %v88 = vld [vmem:[%s0 + $0x94] sm:$0xf]
  %v89 = vld [vmem:[%s0 + $0x98] sm:$0xf]
  %v90 = vld [vmem:[%s0 + $0x9c] sm:$0xf]
  %v91 = vld [vmem:[%s0 + $0xa0] sm:$0xf]
  %v92 = vld [vmem:[%s0 + $0xa4] sm:$0xf]
  %v93 = vld [vmem:[%s0 + $0xa8] sm:$0xf]
  %v94 = vld [vmem:[%s0 + $0xac] sm:$0xf]
  %v95 = vld [vmem:[%s0 + $0xb0] sm:$0xf]
  %v96 = vld [vmem:[%s0 + $0xb4] sm:$0xf]
  %v97 = vld [vmem:[%s0 + $0xb8] sm:$0xf]
  %v98 = vld [vmem:[%s0 + $0xbc] sm:$0xf]
  %v99 = vld [vmem:[%s0 + $0xc0] sm:$0xf]
  %v100 = vld [vmem:[%s0 + $0xc4] sm:$0xf]
  %v101 = vld [vmem:[%s0 + $0xc8] sm:$0xf]
  %v102 = vld [vmem:[%s0 + $0xcc] sm:$0xf]
  %v103 = vld [vmem:[%s0 + $0xd0] sm:$0xf]
  %v104 = vld [vmem:[%s0 + $0xd4] sm:$0xf]
  %v105 = vld [vmem:[%s0 + $0xd8] sm:$0xf]
  %v106 = vld [vmem:[%s0 + $0xdc] sm:$0xf]
  %v107 = vld [vmem:[%s0 + $0xe0] sm:$0xf]
  %v108 = vld [vmem:[%s0 + $0xe4] sm:$0xf]
  %v109 = vld [vmem:[%s0 + $0xe8] sm:$0xf]
  %v110 = vld [vmem:[%s0 + $0xec] sm:$0xf]
  %v111 = vld [vmem:[%s0 + $0xf0] sm:$0xf]
  %v112 = vld [vmem:[%s0 + $0xf4] sm:$0xf]
  %v113 = vld [vmem:[%s0 + $0xf8] sm:$0xf]
  %v114 = vld [vmem:[%s0 + $0xfc] sm:$0xf]
  %v115 = vld [vmem:[%s0 + $0x100] sm:$0xf]
  %v116 = vld [vmem:[%s0 + $0x104] sm:$0xf]
  %v117 = vld [vmem:[%s0 + $0x108] sm:$0xf]
  %v118 = vld [vmem:[%s0 + $0x10c] sm:$0xf]
  %v119 = vld [vmem:[%s0 + $0x110] sm:$0xf]
  %v120 = vld [vmem:[%s0 + $0x114] sm:$0xf]
  %v121 = vld [vmem:[%s0 + $0x118] sm:$0xf]
  %v122 = vld [vmem:[%s0 + $0x11c] sm:$0xf]
  %v123 = vld [vmem:[%s0 + $0x120] sm:$0xf]
  %v124 = vld [vmem:[%s0 + $0x124] sm:$0xf]
  %v125 = vld [vmem:[%s0 + $0x128] sm:$0xf]
  %v126 = vld [vmem:[%s0 + $0x12c] sm:$0xf]
  %v127 = vld [vmem:[%s0 + $0x130] sm:$0xf]
  %v128 = vld [vmem:[%s0 + $0x134] sm:$0xf]
  %v129 = vld [vmem:[%s0 + $0x138] sm:$0xf]
  %v130 = vld [vmem:[%s0 + $0x13c] sm:$0xf]
  %v131 = vld [vmem:[%s0 + $0x140] sm:$0xf]
  %v132 = vld [vmem:[%s0 + $0x144] sm:$0xf]
  %v133 = vld [vmem:[%s0 + $0x148] sm:$0xf]
  %v134 = vld [vmem:[%s0 + $0x14c] sm:$0xf]
  %v135 = vld [vmem:[%s0 + $0x150] sm:$0xf]
  %v136 = vld [vmem:[%s0 + $0x154] sm:$0xf]
  %v137 = vld [vmem:[%s0 + $0x158] sm:$0xf]
  %v138 = vld [vmem:[%s0 + $0x15c] sm:$0xf]
  %v139 = vld [vmem:[%s0 + $0x160] sm:$0xf]
  %v140 = vld [vmem:[%s0 + $0x164] sm:$0xf]
  %v141 = vld [vmem:[%s0 + $0x168] sm:$0xf]
  %v142 = vld [vmem:[%s0 + $0x16c] sm:$0xf]
  %v143 = vld [vmem:[%s0 + $0x170] sm:$0xf]
  %v144 = vld [vmem:[%s0 + $0x174] sm:$0xf]
  %v145 = vld [vmem:[%s0 + $0x178] sm:$0xf]
  %v146 = vld [vmem:[%s0 + $0x17c] sm:$0xf]
  %v147 = vld [vmem:[%s0 + $0x180] sm:$0xf]
  %v148 = vld [vmem:[%s0 + $0x184] sm:$0xf]
  %v149 = vld [vmem:[%s0 + $0x188] sm:$0xf]
  %v150 = vld [vmem:[%s0 + $0x18c] sm:$0xf]
  %v151 = vld [vmem:[%s2] sm:$0xff]
  %v152 = vld [vmem:[%s2 + $0x8] sm:$0xff]
  %v153 = vld [vmem:[%s2 + $0x10] sm:$0xff]
  %v154 = vld [vmem:[%s2 + $0x18] sm:$0xff]
  %v155 = vld [vmem:[%s2 + $0x20] sm:$0xff]
  %v156 = vld [vmem:[%s2 + $0x28] sm:$0xff]
  %v157 = vld [vmem:[%s2 + $0x30] sm:$0xff]
  %v158 = vld [vmem:[%s2 + $0x38] sm:$0xff]
  %160 = vset.pattern.permute.xlu0 0
  %161 = vperm.xlu0 %160, %v151
  %v162 = vpop.permute.xlu0 %161
  %165 = vset.pattern.permute.xlu0 0
  %166 = vperm.xlu0 %165, %v152
  %v167 = vpop.permute.xlu0 %166
  %170 = vset.pattern.permute.xlu0 0
  %171 = vperm.xlu0 %170, %v153
  %v172 = vpop.permute.xlu0 %171
  %175 = vset.pattern.permute.xlu0 0
  %176 = vperm.xlu0 %175, %v154
  %v177 = vpop.permute.xlu0 %176
  %180 = vset.pattern.permute.xlu0 0
  %181 = vperm.xlu0 %180, %v155
  %v182 = vpop.permute.xlu0 %181
  %185 = vset.pattern.permute.xlu0 0
  %186 = vperm.xlu0 %185, %v156
  %v187 = vpop.permute.xlu0 %186
  %190 = vset.pattern.permute.xlu0 0
  %191 = vperm.xlu0 %190, %v157
  %v192 = vpop.permute.xlu0 %191
  %195 = vset.pattern.permute.xlu0 0
  %196 = vperm.xlu0 %195, %v158
  %v197 = vpop.permute.xlu0 %196
  %v231 = vunpack.c.l.b16 %v19
  %v232 = vunpack.c.h.b16 %v19
  %v233 = vunpack.c.l.b16 %v20
  %v234 = vunpack.c.h.b16 %v20
  %v235 = vunpack.c.l.b16 %v21
  %v236 = vunpack.c.h.b16 %v21
  %v237 = vunpack.c.l.b16 %v22
  %v238 = vunpack.c.l.b16 %v23
  %v239 = vunpack.c.h.b16 %v23
  %v240 = vunpack.c.l.b16 %v24
  %v241 = vunpack.c.h.b16 %v24
  %v242 = vunpack.c.l.b16 %v25
  %v243 = vunpack.c.h.b16 %v25
  %v244 = vunpack.c.l.b16 %v26
  %v245 = vunpack.c.l.b16 %v27
  %v246 = vunpack.c.h.b16 %v27
  %v247 = vunpack.c.l.b16 %v28
  %v248 = vunpack.c.h.b16 %v28
  %v249 = vunpack.c.l.b16 %v29
  %v250 = vunpack.c.h.b16 %v29
  %v251 = vunpack.c.l.b16 %v30
  %v252 = vunpack.c.l.b16 %v31
  %v253 = vunpack.c.h.b16 %v31
  %v254 = vunpack.c.l.b16 %v32
  %v255 = vunpack.c.h.b16 %v32
  %v256 = vunpack.c.l.b16 %v33
  %v257 = vunpack.c.h.b16 %v33
  %v258 = vunpack.c.l.b16 %v34
  %v259 = vunpack.c.l.b16 %v35
  %v260 = vunpack.c.h.b16 %v35
  %v261 = vunpack.c.l.b16 %v36
  %v262 = vunpack.c.h.b16 %v36
  %v263 = vunpack.c.l.b16 %v37
  %v264 = vunpack.c.h.b16 %v37
  %v265 = vunpack.c.l.b16 %v38
  %v266 = vunpack.c.l.b16 %v39
  %v267 = vunpack.c.h.b16 %v39
  %v268 = vunpack.c.l.b16 %v40
  %v269 = vunpack.c.h.b16 %v40
  %v270 = vunpack.c.l.b16 %v41
  %v271 = vunpack.c.h.b16 %v41
  %v272 = vunpack.c.l.b16 %v42
  %v273 = vunpack.c.l.b16 %v43
  %v274 = vunpack.c.h.b16 %v43
  %v275 = vunpack.c.l.b16 %v44
  %v276 = vunpack.c.h.b16 %v44
  %v277 = vunpack.c.l.b16 %v45
  %v278 = vunpack.c.h.b16 %v45
  %v279 = vunpack.c.l.b16 %v46
  %v280 = vunpack.c.l.b16 %v47
  %v281 = vunpack.c.h.b16 %v47
  %v282 = vunpack.c.l.b16 %v48
  %v283 = vunpack.c.h.b16 %v48
  %v284 = vunpack.c.l.b16 %v49
  %v285 = vunpack.c.h.b16 %v49
  %v286 = vunpack.c.l.b16 %v50
  %v287 = vpack.c.b16 %v238, %v231
  %v288 = vpack.c.b16 %v239, %v232
  %v289 = vpack.c.b16 %v240, %v233
  %v290 = vpack.c.b16 %v241, %v234
  %v291 = vpack.c.b16 %v242, %v235
  %v292 = vpack.c.b16 %v243, %v236
  %v293 = vpack.c.b16 %v244, %v237
  %v294 = vpack.c.b16 %v252, %v245
  %v295 = vpack.c.b16 %v253, %v246
  %v296 = vpack.c.b16 %v254, %v247
  %v297 = vpack.c.b16 %v255, %v248
  %v298 = vpack.c.b16 %v256, %v249
  %v299 = vpack.c.b16 %v257, %v250
  %v300 = vpack.c.b16 %v258, %v251
  %v301 = vpack.c.b16 %v266, %v259
  %v302 = vpack.c.b16 %v267, %v260
  %v303 = vpack.c.b16 %v268, %v261
  %v304 = vpack.c.b16 %v269, %v262
  %v305 = vpack.c.b16 %v270, %v263
  %v306 = vpack.c.b16 %v271, %v264
  %v307 = vpack.c.b16 %v272, %v265
  %v308 = vpack.c.b16 %v280, %v273
  %v309 = vpack.c.b16 %v281, %v274
  %v310 = vpack.c.b16 %v282, %v275
  %v311 = vpack.c.b16 %v283, %v276
  %v312 = vpack.c.b16 %v284, %v277
  %v313 = vpack.c.b16 %v285, %v278
  %v314 = vpack.c.b16 %v286, %v279
  %v439 = vunpack.c.l.b16 %v51
  %v440 = vunpack.c.l.b16 %v52
  %v441 = vunpack.c.l.b16 %v53
  %v442 = vunpack.c.l.b16 %v54
  %v443 = vunpack.c.l.b16 %v55
  %v444 = vunpack.c.l.b16 %v56
  %v445 = vunpack.c.l.b16 %v57
  %v446 = vunpack.c.l.b16 %v58
  %v447 = vunpack.c.l.b16 %v59
  %v448 = vunpack.c.l.b16 %v60
  %v449 = vunpack.c.l.b16 %v61
  %v450 = vunpack.c.l.b16 %v62
  %v451 = vunpack.c.l.b16 %v63
  %v452 = vunpack.c.l.b16 %v64
  %v453 = vunpack.c.l.b16 %v65
  %v454 = vunpack.c.l.b16 %v66
  %v455 = vunpack.c.l.b16 %v67
  %v456 = vunpack.c.l.b16 %v68
  %v457 = vunpack.c.l.b16 %v69
  %v458 = vunpack.c.l.b16 %v70
  %v459 = vunpack.c.l.b16 %v71
  %v460 = vunpack.c.l.b16 %v72
  %v461 = vunpack.c.l.b16 %v73
  %v462 = vunpack.c.l.b16 %v74
  %v463 = vunpack.c.l.b16 %v75
  %v464 = vunpack.c.l.b16 %v76
  %v465 = vunpack.c.l.b16 %v77
  %v466 = vunpack.c.l.b16 %v78
  %v467 = vunpack.c.l.b16 %v79
  %v468 = vunpack.c.l.b16 %v80
  %v469 = vunpack.c.l.b16 %v81
  %v470 = vunpack.c.l.b16 %v82
  %v471 = vunpack.c.l.b16 %v83
  %v472 = vunpack.c.l.b16 %v84
  %v473 = vunpack.c.l.b16 %v85
  %v474 = vunpack.c.l.b16 %v86
  %v475 = vunpack.c.l.b16 %v87
  %v476 = vunpack.c.l.b16 %v88
  %v477 = vunpack.c.l.b16 %v89
  %v478 = vunpack.c.l.b16 %v90
  %v479 = vunpack.c.l.b16 %v91
  %v480 = vunpack.c.l.b16 %v92
  %v481 = vunpack.c.l.b16 %v93
  %v482 = vunpack.c.l.b16 %v94
  %v483 = vunpack.c.l.b16 %v95
  %v484 = vunpack.c.l.b16 %v96
  %v485 = vunpack.c.l.b16 %v97
  %v486 = vunpack.c.l.b16 %v98
  %v487 = vunpack.c.l.b16 %v99
  %v488 = vunpack.c.l.b16 %v100
  %v489 = vunpack.c.l.b16 %v101
  %v490 = vunpack.c.l.b16 %v102
  %v491 = vunpack.c.l.b16 %v103
  %v492 = vunpack.c.l.b16 %v104
  %v493 = vunpack.c.l.b16 %v105
  %v494 = vunpack.c.l.b16 %v106
  %v495 = vunpack.c.l.b16 %v107
  %v496 = vunpack.c.l.b16 %v108
  %v497 = vunpack.c.l.b16 %v109
  %v498 = vunpack.c.l.b16 %v110
  %v499 = vunpack.c.l.b16 %v111
  %v500 = vunpack.c.l.b16 %v112
  %v501 = vunpack.c.l.b16 %v113
  %v502 = vunpack.c.l.b16 %v114
  %v503 = vunpack.c.l.b16 %v115
  %v504 = vunpack.c.l.b16 %v116
  %v505 = vunpack.c.l.b16 %v117
  %v506 = vunpack.c.l.b16 %v118
  %v507 = vunpack.c.l.b16 %v119
  %v508 = vunpack.c.l.b16 %v120
  %v509 = vunpack.c.l.b16 %v121
  %v510 = vunpack.c.l.b16 %v122
  %v511 = vunpack.c.l.b16 %v123
  %v512 = vunpack.c.l.b16 %v124
  %v513 = vunpack.c.l.b16 %v125
  %v514 = vunpack.c.l.b16 %v126
  %v515 = vunpack.c.l.b16 %v127
  %v516 = vunpack.c.l.b16 %v128
  %v517 = vunpack.c.l.b16 %v129
  %v518 = vunpack.c.l.b16 %v130
  %v519 = vunpack.c.l.b16 %v131
  %v520 = vunpack.c.l.b16 %v132
  %v521 = vunpack.c.l.b16 %v133
  %v522 = vunpack.c.l.b16 %v134
  %v523 = vunpack.c.l.b16 %v135
  %v524 = vunpack.c.l.b16 %v136
  %v525 = vunpack.c.l.b16 %v137
  %v526 = vunpack.c.l.b16 %v138
  %v527 = vunpack.c.l.b16 %v139
  %v528 = vunpack.c.l.b16 %v140
  %v529 = vunpack.c.l.b16 %v141
  %v530 = vunpack.c.l.b16 %v142
  %v531 = vunpack.c.l.b16 %v143
  %v532 = vunpack.c.l.b16 %v144
  %v533 = vunpack.c.l.b16 %v145
  %v534 = vunpack.c.l.b16 %v146
  %v535 = vunpack.c.l.b16 %v147
  %v536 = vunpack.c.l.b16 %v148
  %v537 = vunpack.c.l.b16 %v149
  %v538 = vunpack.c.l.b16 %v150
  %v539 = vpack.c.b16 %v440, %v439
  %v540 = vpack.c.b16 %v442, %v441
  %v541 = vpack.c.b16 %v444, %v443
  %v542 = vpack.c.b16 %v446, %v445
  %v543 = vpack.c.b16 %v448, %v447
  %v544 = vpack.c.b16 %v450, %v449
  %v545 = vpack.c.b16 %v452, %v451
  %v546 = vpack.c.b16 %v454, %v453
  %v547 = vpack.c.b16 %v456, %v455
  %v548 = vpack.c.b16 %v458, %v457
  %v549 = vpack.c.b16 %v460, %v459
  %v550 = vpack.c.b16 %v462, %v461
  %v551 = vpack.c.b16 %v464, %v463
  %v552 = vpack.c.b16 %v466, %v465
  %v553 = vpack.c.b16 %v468, %v467
  %v554 = vpack.c.b16 %v470, %v469
  %v555 = vpack.c.b16 %v472, %v471
  %v556 = vpack.c.b16 %v474, %v473
  %v557 = vpack.c.b16 %v476, %v475
  %v558 = vpack.c.b16 %v478, %v477
  %v559 = vpack.c.b16 %v480, %v479
  %v560 = vpack.c.b16 %v482, %v481
  %v561 = vpack.c.b16 %v484, %v483
  %v562 = vpack.c.b16 %v486, %v485
  %v563 = vpack.c.b16 %v488, %v487
  %v564 = vpack.c.b16 %v490, %v489
  %v565 = vpack.c.b16 %v492, %v491
  %v566 = vpack.c.b16 %v494, %v493
  %v567 = vpack.c.b16 %v496, %v495
  %v568 = vpack.c.b16 %v498, %v497
  %v569 = vpack.c.b16 %v500, %v499
  %v570 = vpack.c.b16 %v502, %v501
  %v571 = vpack.c.b16 %v504, %v503
  %v572 = vpack.c.b16 %v506, %v505
  %v573 = vpack.c.b16 %v508, %v507
  %v574 = vpack.c.b16 %v510, %v509
  %v575 = vpack.c.b16 %v512, %v511
  %v576 = vpack.c.b16 %v514, %v513
  %v577 = vpack.c.b16 %v516, %v515
  %v578 = vpack.c.b16 %v518, %v517
  %v579 = vpack.c.b16 %v520, %v519
  %v580 = vpack.c.b16 %v522, %v521
  %v581 = vpack.c.b16 %v524, %v523
  %v582 = vpack.c.b16 %v526, %v525
  %v583 = vpack.c.b16 %v528, %v527
  %v584 = vpack.c.b16 %v530, %v529
  %v585 = vpack.c.b16 %v532, %v531
  %v586 = vpack.c.b16 %v534, %v533
  %v587 = vpack.c.b16 %v536, %v535
  %v588 = vpack.c.b16 %v538, %v537
  %vm639 = vcmask 261120
  %v641 = vsel %vm639, %v293, 0
  %v644 = vsel %vm639, %v300, 0
  %v647 = vsel %vm639, %v307, 0
  %v650 = vsel %vm639, %v314, 0
  %652 = vmatprep.subr.bf16.mxu0 0
  %653 = vmatpush1.bf16.msra.mxu0 %v539
  %654 = vmatprep.subr.bf16.mxu0 0
  %655 = vmatpush1.bf16.msra.mxu0 %v540
  %656 = vmatprep.subr.bf16.mxu0 0
  %657 = vmatpush1.bf16.msra.mxu0 %v541
  %658 = vmatprep.subr.bf16.mxu0 0
  %659 = vmatpush1.bf16.msra.mxu0 %v542
  %660 = vmatprep.subr.bf16.mxu0 0
  %661 = vmatpush1.bf16.msra.mxu0 %v543
  %662 = vmatprep.subr.bf16.mxu0 0
  %663 = vmatpush1.bf16.msra.mxu0 %v544
  %664 = vmatprep.subr.bf16.mxu0 0
  %665 = vmatpush1.bf16.msra.mxu0 %v545
  %666 = vmatprep.subr.bf16.mxu0 0
  %667 = vmatpush1.bf16.msra.mxu0 %v546
  %668 = vmatprep.subr.bf16.mxu0 0
  %669 = vmatpush1.bf16.msra.mxu0 %v547
  %670 = vmatprep.subr.bf16.mxu0 0
  %671 = vmatpush1.bf16.msra.mxu0 %v548
  %672 = vmatprep.subr.bf16.mxu0 0
  %673 = vmatpush1.bf16.msra.mxu0 %v549
  %674 = vmatprep.subr.bf16.mxu0 0
  %675 = vmatpush1.bf16.msra.mxu0 %v550
  %676 = vmatprep.subr.bf16.mxu0 0
  %677 = vmatpush1.bf16.msra.mxu0 %v551
  %678 = vmatprep.subr.bf16.mxu0 0
  %679 = vmatpush1.bf16.msra.mxu0 %v552
  %680 = vmatprep.subr.bf16.mxu0 0
  %681 = vmatpush1.bf16.msra.mxu0 %v553
  %682 = vmatprep.subr.bf16.mxu0 0
  %683 = vmatpush1.bf16.msra.mxu0 %v554
  %684 = vmatprep.mubr.bf16.mxu0 %v288
  %685 = vmatmul.mubr.bf16.gmra.mrb[0].mxu0 %v287
  %v686 = vpop.f32.mrb[0].mxu0
  %v687 = vadd.f32 %v162, %v686
  %v688 = vpop.f32.mrb[0].mxu0
  %v689 = vpop.f32.mrb[0].mxu0
  %v690 = vadd.f32 %v167, %v689
  %v691 = vpop.f32.mrb[0].mxu0
  %692 = vmatprep.mubr.bf16.mxu0 %v295
  %693 = vmatmul.mubr.bf16.gmra.mrb[0].mxu0 %v294
  %v694 = vpop.f32.mrb[0].mxu0
  %v695 = vadd.f32 %v172, %v694
  %v696 = vpop.f32.mrb[0].mxu0
  %v697 = vpop.f32.mrb[0].mxu0
  %v698 = vadd.f32 %v177, %v697
  %v699 = vpop.f32.mrb[0].mxu0
  %700 = vmatprep.mubr.bf16.mxu0 %v302
  %701 = vmatmul.mubr.bf16.gmra.mrb[0].mxu0 %v301
  %v702 = vpop.f32.mrb[0].mxu0
  %v703 = vadd.f32 %v182, %v702
  %v704 = vpop.f32.mrb[0].mxu0
  %v705 = vpop.f32.mrb[0].mxu0
  %v706 = vadd.f32 %v187, %v705
  %v707 = vpop.f32.mrb[0].mxu0
  %708 = vmatprep.mubr.bf16.mxu0 %v309
  %709 = vmatmul.mubr.bf16.gmra.mrb[0].mxu0 %v308
  %v710 = vpop.f32.mrb[0].mxu0
  %v711 = vadd.f32 %v192, %v710
  %v712 = vpop.f32.mrb[0].mxu0
  %v713 = vpop.f32.mrb[0].mxu0
  %v714 = vadd.f32 %v197, %v713
  %v715 = vpop.f32.mrb[0].mxu0
  %716 = vdwg.mxu0
  %717 = vmatprep.subr.bf16.mxu0 0
  %718 = vmatpush1.bf16.msra.mxu0 %v555
  %719 = vmatprep.subr.bf16.mxu0 0
  %720 = vmatpush1.bf16.msra.mxu0 %v556
  %721 = vmatprep.subr.bf16.mxu0 0
  %722 = vmatpush1.bf16.msra.mxu0 %v557
  %723 = vmatprep.subr.bf16.mxu0 0
  %724 = vmatpush1.bf16.msra.mxu0 %v558
  %725 = vmatprep.subr.bf16.mxu0 0
  %726 = vmatpush1.bf16.msra.mxu0 %v559
  %727 = vmatprep.subr.bf16.mxu0 0
  %728 = vmatpush1.bf16.msra.mxu0 %v560
  %729 = vmatprep.subr.bf16.mxu0 0
  %730 = vmatpush1.bf16.msra.mxu0 %v561
  %731 = vmatprep.subr.bf16.mxu0 0
  %732 = vmatpush1.bf16.msra.mxu0 %v562
  %733 = vmatprep.subr.bf16.mxu0 0
  %734 = vmatpush1.bf16.msra.mxu0 %v563
  %735 = vmatprep.subr.bf16.mxu0 0
  %736 = vmatpush1.bf16.msra.mxu0 %v564
  %737 = vmatprep.subr.bf16.mxu0 0
  %738 = vmatpush1.bf16.msra.mxu0 %v565
  %739 = vmatprep.subr.bf16.mxu0 0
  %740 = vmatpush1.bf16.msra.mxu0 %v566
  %741 = vmatprep.subr.bf16.mxu0 0
  %742 = vmatpush1.bf16.msra.mxu0 %v567
  %743 = vmatprep.subr.bf16.mxu0 0
  %744 = vmatpush1.bf16.msra.mxu0 %v568
  %745 = vmatprep.subr.bf16.mxu0 0
  %746 = vmatpush1.bf16.msra.mxu0 %v569
  %747 = vmatprep.subr.bf16.mxu0 0
  %748 = vmatpush1.bf16.msra.mxu0 %v570
  %749 = vmatprep.mubr.bf16.mxu0 %v290
  %750 = vmatmul.mubr.bf16.gmra.mrb[0].mxu0 %v289
  %v751 = vpop.f32.mrb[0].mxu0
  %v752 = vadd.f32 %v687, %v751
  %v753 = vpop.f32.mrb[0].mxu0
  %v754 = vpop.f32.mrb[0].mxu0
  %v755 = vadd.f32 %v690, %v754
  %v756 = vpop.f32.mrb[0].mxu0
  %757 = vmatprep.mubr.bf16.mxu0 %v297
  %758 = vmatmul.mubr.bf16.gmra.mrb[0].mxu0 %v296
  %v759 = vpop.f32.mrb[0].mxu0
  %v760 = vadd.f32 %v695, %v759
  %v761 = vpop.f32.mrb[0].mxu0
  %v762 = vpop.f32.mrb[0].mxu0
  %v763 = vadd.f32 %v698, %v762
  %v764 = vpop.f32.mrb[0].mxu0
  %765 = vmatprep.mubr.bf16.mxu0 %v304
  %766 = vmatmul.mubr.bf16.gmra.mrb[0].mxu0 %v303
  %v767 = vpop.f32.mrb[0].mxu0
  %v768 = vadd.f32 %v703, %v767
  %v769 = vpop.f32.mrb[0].mxu0
  %v770 = vpop.f32.mrb[0].mxu0
  %v771 = vadd.f32 %v706, %v770
  %v772 = vpop.f32.mrb[0].mxu0
  %773 = vmatprep.mubr.bf16.mxu0 %v311
  %774 = vmatmul.mubr.bf16.gmra.mrb[0].mxu0 %v310
  %v775 = vpop.f32.mrb[0].mxu0
  %v776 = vadd.f32 %v711, %v775
  %v777 = vpop.f32.mrb[0].mxu0
  %v778 = vpop.f32.mrb[0].mxu0
  %v779 = vadd.f32 %v714, %v778
  %v780 = vpop.f32.mrb[0].mxu0
  %781 = vdwg.mxu0
  %782 = vmatprep.subr.bf16.mxu0 0
  %783 = vmatpush1.bf16.msra.mxu0 %v571
  %784 = vmatprep.subr.bf16.mxu0 0
  %785 = vmatpush1.bf16.msra.mxu0 %v572
  %786 = vmatprep.subr.bf16.mxu0 0
  %787 = vmatpush1.bf16.msra.mxu0 %v573
  %788 = vmatprep.subr.bf16.mxu0 0
  %789 = vmatpush1.bf16.msra.mxu0 %v574
  %790 = vmatprep.subr.bf16.mxu0 0
  %791 = vmatpush1.bf16.msra.mxu0 %v575
  %792 = vmatprep.subr.bf16.mxu0 0
  %793 = vmatpush1.bf16.msra.mxu0 %v576
  %794 = vmatprep.subr.bf16.mxu0 0
  %795 = vmatpush1.bf16.msra.mxu0 %v577
  %796 = vmatprep.subr.bf16.mxu0 0
  %797 = vmatpush1.bf16.msra.mxu0 %v578
  %798 = vmatprep.subr.bf16.mxu0 0
  %799 = vmatpush1.bf16.msra.mxu0 %v579
  %800 = vmatprep.subr.bf16.mxu0 0
  %801 = vmatpush1.bf16.msra.mxu0 %v580
  %802 = vmatprep.subr.bf16.mxu0 0
  %803 = vmatpush1.bf16.msra.mxu0 %v581
  %804 = vmatprep.subr.bf16.mxu0 0
  %805 = vmatpush1.bf16.msra.mxu0 %v582
  %806 = vmatprep.subr.bf16.mxu0 0
  %807 = vmatpush1.bf16.msra.mxu0 %v583
  %808 = vmatprep.subr.bf16.mxu0 0
  %809 = vmatpush1.bf16.msra.mxu0 %v584
  %810 = vmatprep.subr.bf16.mxu0 0
  %811 = vmatpush1.bf16.msra.mxu0 %v585
  %812 = vmatprep.subr.bf16.mxu0 0
  %813 = vmatpush1.bf16.msra.mxu0 %v586
  %814 = vmatprep.mubr.bf16.mxu0 %v292
  %815 = vmatmul.mubr.bf16.gmra.mrb[0].mxu0 %v291
  %v816 = vpop.f32.mrb[0].mxu0
  %v817 = vadd.f32 %v752, %v816
  %v818 = vpop.f32.mrb[0].mxu0
  %v819 = vpop.f32.mrb[0].mxu0
  %v820 = vadd.f32 %v755, %v819
  %v821 = vpop.f32.mrb[0].mxu0
  %822 = vmatprep.mubr.bf16.mxu0 %v299
  %823 = vmatmul.mubr.bf16.gmra.mrb[0].mxu0 %v298
  %v824 = vpop.f32.mrb[0].mxu0
  %v825 = vadd.f32 %v760, %v824
  %v826 = vpop.f32.mrb[0].mxu0
  %v827 = vpop.f32.mrb[0].mxu0
  %v828 = vadd.f32 %v763, %v827
  %v829 = vpop.f32.mrb[0].mxu0
  %830 = vmatprep.mubr.bf16.mxu0 %v306
  %831 = vmatmul.mubr.bf16.gmra.mrb[0].mxu0 %v305
  %v832 = vpop.f32.mrb[0].mxu0
  %v833 = vadd.f32 %v768, %v832
  %v834 = vpop.f32.mrb[0].mxu0
  %v835 = vpop.f32.mrb[0].mxu0
  %v836 = vadd.f32 %v771, %v835
  %v837 = vpop.f32.mrb[0].mxu0
  %838 = vmatprep.mubr.bf16.mxu0 %v313
  %839 = vmatmul.mubr.bf16.gmra.mrb[0].mxu0 %v312
  %v840 = vpop.f32.mrb[0].mxu0
  %v841 = vadd.f32 %v776, %v840
  %v842 = vpop.f32.mrb[0].mxu0
  %v843 = vpop.f32.mrb[0].mxu0
  %v844 = vadd.f32 %v779, %v843
  %v845 = vpop.f32.mrb[0].mxu0
  %846 = vdwg.mxu0
  %847 = vmatprep.subr.bf16.mxu0 0
  %848 = vmatpush1.bf16.msra.mxu0 %v587
  %849 = vmatprep.subr.bf16.mxu0 0
  %850 = vmatpush1.bf16.msra.mxu0 %v588
  %851 = vmatprep.subr.bf16.mxu0 0
  %852 = vmatpush1.bf16.msra.mxu0 0
  %853 = vmatprep.subr.bf16.mxu0 0
  %854 = vmatpush1.bf16.msra.mxu0 0
  %855 = vmatprep.subr.bf16.mxu0 0
  %856 = vmatpush1.bf16.msra.mxu0 0
  %857 = vmatprep.subr.bf16.mxu0 0
  %858 = vmatpush1.bf16.msra.mxu0 0
  %859 = vmatprep.subr.bf16.mxu0 0
  %860 = vmatpush1.bf16.msra.mxu0 0
  %861 = vmatprep.subr.bf16.mxu0 0
  %862 = vmatpush1.bf16.msra.mxu0 0
  %863 = vmatprep.subr.bf16.mxu0 0
  %864 = vmatpush1.bf16.msra.mxu0 0
  %865 = vmatprep.subr.bf16.mxu0 0
  %866 = vmatpush1.bf16.msra.mxu0 0
  %867 = vmatprep.subr.bf16.mxu0 0
  %868 = vmatpush1.bf16.msra.mxu0 0
  %869 = vmatprep.subr.bf16.mxu0 0
  %870 = vmatpush1.bf16.msra.mxu0 0
  %871 = vmatprep.subr.bf16.mxu0 0
  %872 = vmatpush1.bf16.msra.mxu0 0
  %873 = vmatprep.subr.bf16.mxu0 0
  %874 = vmatpush1.bf16.msra.mxu0 0
  %875 = vmatprep.subr.bf16.mxu0 0
  %876 = vmatpush1.bf16.msra.mxu0 0
  %877 = vmatprep.subr.bf16.mxu0 0
  %878 = vmatpush1.bf16.msra.mxu0 0
  %879 = vmatprep.mubr.bf16.mxu0 0
  %880 = vmatmul.mubr.bf16.gmra.mrb[0].mxu0 %v641
  %v881 = vpop.f32.mrb[0].mxu0
  %v882 = vadd.f32 %v817, %v881
  %v883 = vpop.f32.mrb[0].mxu0
  %v884 = vpop.f32.mrb[0].mxu0
  %v885 = vadd.f32 %v820, %v884
  %v886 = vpop.f32.mrb[0].mxu0
  %887 = vmatprep.mubr.bf16.mxu0 0
  %888 = vmatmul.mubr.bf16.gmra.mrb[0].mxu0 %v644
  %v889 = vpop.f32.mrb[0].mxu0
  %v890 = vadd.f32 %v825, %v889
  %v891 = vpop.f32.mrb[0].mxu0
  %v892 = vpop.f32.mrb[0].mxu0
  %v893 = vadd.f32 %v828, %v892
  %v894 = vpop.f32.mrb[0].mxu0
  %895 = vmatprep.mubr.bf16.mxu0 0
  %896 = vmatmul.mubr.bf16.gmra.mrb[0].mxu0 %v647
  %v897 = vpop.f32.mrb[0].mxu0
  %v898 = vadd.f32 %v833, %v897
  %v899 = vpop.f32.mrb[0].mxu0
  %v900 = vpop.f32.mrb[0].mxu0
  %v901 = vadd.f32 %v836, %v900
  %v902 = vpop.f32.mrb[0].mxu0
  %903 = vmatprep.mubr.bf16.mxu0 0
  %904 = vmatmul.mubr.bf16.gmra.mrb[0].mxu0 %v650
  %v905 = vpop.f32.mrb[0].mxu0
  %v906 = vadd.f32 %v841, %v905
  %v907 = vpop.f32.mrb[0].mxu0
  %v908 = vpop.f32.mrb[0].mxu0
  %v909 = vadd.f32 %v844, %v908
  %v910 = vpop.f32.mrb[0].mxu0
  %911 = vdwg.mxu0
  %s912 = sld [smem:[#allocation2]]
  %vm913 = vcmp.gt.f32.partialorder %v882, 0.0
  %vm914 = vcmp.gt.f32.partialorder %v885, 0.0
  %vm915 = vcmp.gt.f32.partialorder %v890, 0.0
  %vm916 = vcmp.gt.f32.partialorder %v893, 0.0
  %vm917 = vcmp.gt.f32.partialorder %v898, 0.0
  %vm918 = vcmp.gt.f32.partialorder %v901, 0.0
  %vm919 = vcmp.gt.f32.partialorder %v906, 0.0
  %vm920 = vcmp.gt.f32.partialorder %v909, 0.0
  %v921 = vstv %s912
  %v922 = vmul.f32 %v921, %v882
  %v923 = vmul.f32 %v921, %v885
  %v924 = vmul.f32 %v921, %v890
  %v925 = vmul.f32 %v921, %v893
  %v926 = vmul.f32 %v921, %v898
  %v927 = vmul.f32 %v921, %v901
  %v928 = vmul.f32 %v921, %v906
  %v929 = vmul.f32 %v921, %v909
  %v930 = vsel %vm913, %v882, %v922
  %v931 = vsel %vm914, %v885, %v923
  %v932 = vsel %vm915, %v890, %v924
  %v933 = vsel %vm916, %v893, %v925
  %v934 = vsel %vm917, %v898, %v926
  %v935 = vsel %vm918, %v901, %v927
  %v936 = vsel %vm919, %v906, %v928
  %v937 = vsel %vm920, %v909, %v929
  %v938 = vpack.c.bf16 %v931, %v930
  %v939 = vpack.c.bf16 %v933, %v932
  %v940 = vpack.c.bf16 %v935, %v934
  %v941 = vpack.c.bf16 %v937, %v936
  %v946 = vunpack.c.l.b16 %v938
  %v947 = vunpack.c.h.b16 %v938
  %v948 = vunpack.c.l.b16 %v939
  %v949 = vunpack.c.h.b16 %v939
  %v950 = vunpack.c.l.b16 %v940
  %v951 = vunpack.c.h.b16 %v940
  %v952 = vunpack.c.l.b16 %v941
  %v953 = vunpack.c.h.b16 %v941
  %v954 = vpack.c.b16 %v946, %v946
  %v955 = vpack.c.b16 %v947, %v947
  %v956 = vpack.c.b16 %v948, %v948
  %v957 = vpack.c.b16 %v949, %v949
  %v958 = vpack.c.b16 %v950, %v950
  %v959 = vpack.c.b16 %v951, %v951
  %v960 = vpack.c.b16 %v952, %v952
  %v961 = vpack.c.b16 %v953, %v953
  %970 = vst [vmem:[%s4] sm:$0xf] %v954
  %971 = vst [vmem:[%s4 + $0x4] sm:$0xf] %v955
  %972 = vst [vmem:[%s4 + $0x8] sm:$0xf] %v956
  %973 = vst [vmem:[%s4 + $0xc] sm:$0xf] %v957
  %974 = vst [vmem:[%s4 + $0x10] sm:$0xf] %v958
  %975 = vst [vmem:[%s4 + $0x14] sm:$0xf] %v959
  %976 = vst [vmem:[%s4 + $0x18] sm:$0xf] %v960
  %977 = vst [vmem:[%s4 + $0x1c] sm:$0xf] %v961
  // Predicated region
  $region18: #{_cnn_forward.19} parent=0 // pred_check
    _
  $region19: #{_cnn_forward.19} parent=0 // pred_check_branch
    %979 = sbr.rel (0) target = $region21
  $region20: #{_cnn_forward.19} parent=0 // pred_region
    _
  $region21: #{_cnn_forward.19} parent=0 // pred_fallthru
    _
  // Predicated region
  $region22: #{_cnn_forward.19} parent=0 // pred_check
    _
  $region23: #{_cnn_forward.19} parent=0 // pred_check_branch
    %981 = sbr.rel (0) target = $region25
  $region24: #{_cnn_forward.19} parent=0 // pred_region
    _
  $region25: #{_cnn_forward.19} parent=0 // pred_fallthru
    _

// kernel: _cnn_forward.21
$region0: #{_cnn_forward.21}
  #allocation0 [shape = 'u32[]', space=smem, size = 0x4, offset = 0x4, fixed_abs, tag = 'smem constant byte address 0x4 - core index']
  #allocation1 [shape = 'u32[144,128]{1,0:T(1,128)}', space=vmem, size = 0x12000, scoped, tag = 'internal scratch']
  %s0 = inlined_call_operand.vmem [shape: bf16[16,128], index: 0, kind: input, shape index: {}]
  %s1 = inlined_call_operand.vmem [shape: bf16[16,128], index: 1, kind: input, shape index: {}]
  %s2 = inlined_call_operand.vmem [shape: bf16[16,128], index: 2, kind: input, shape index: {}]
  %s3 = inlined_call_operand.vmem [shape: bf16[16,128], index: 3, kind: input, shape index: {}]
  %s4 = inlined_call_operand.vmem [shape: bf16[16,128], index: 4, kind: output, shape index: {}]
  %s5 = sld [smem:[#allocation0]]
  $region26: #{_cnn_forward.21} parent=0
    _
  %s7 = ssub.s32 1, %s5
  %s8 = scalar_select 0, %s7, %s5
  // Predicated region
  $region2: #{_cnn_forward.21} parent=0 // pred_check
    _
  $region3: #{_cnn_forward.21} parent=0 // pred_check_branch
    %10 = sbr.rel (0) target = $region5
  $region4: #{_cnn_forward.21} parent=0 // pred_region
    _
  $region5: #{_cnn_forward.21} parent=0 // pred_fallthru
    _
  // Predicated region
  $region6: #{_cnn_forward.21} parent=0 // pred_check
    _
  $region7: #{_cnn_forward.21} parent=0 // pred_check_branch
    %12 = sbr.rel (0) target = $region9
  $region8: #{_cnn_forward.21} parent=0 // pred_region
    _
  $region9: #{_cnn_forward.21} parent=0 // pred_fallthru
    _
  // Predicated region
  $region10: #{_cnn_forward.21} parent=0 // pred_check
    _
  $region11: #{_cnn_forward.21} parent=0 // pred_check_branch
    %14 = sbr.rel (0) target = $region13
  $region12: #{_cnn_forward.21} parent=0 // pred_region
    _
  $region13: #{_cnn_forward.21} parent=0 // pred_fallthru
    _
  // Predicated region
  $region14: #{_cnn_forward.21} parent=0 // pred_check
    _
  $region15: #{_cnn_forward.21} parent=0 // pred_check_branch
    %16 = sbr.rel (0) target = $region17
  $region16: #{_cnn_forward.21} parent=0 // pred_region
    _
  $region17: #{_cnn_forward.21} parent=0 // pred_fallthru
    _
  %v17 = vld [vmem:[%s0] sm:$0xf]
  %v18 = vld [vmem:[%s0 + $0x4] sm:$0xf]
  %v19 = vld [vmem:[%s1] sm:$0xf]
  %v20 = vld [vmem:[%s1 + $0x4] sm:$0xf]
  %v21 = vmax.bf16 %v17, %v19
  %v22 = vmax.bf16 %v18, %v20
  %v23 = vld [vmem:[%s2] sm:$0xf]
  %v24 = vld [vmem:[%s2 + $0x4] sm:$0xf]
  %v25 = vld [vmem:[%s3] sm:$0xf]
  %v26 = vld [vmem:[%s3 + $0x4] sm:$0xf]
  %v27 = vmax.bf16 %v23, %v25
  %v28 = vmax.bf16 %v24, %v26
  %v29 = vmax.bf16 %v21, %v27
  %v30 = vmax.bf16 %v22, %v28
  %31 = vst [vmem:[%s4] sm:$0xf] %v29
  %32 = vst [vmem:[%s4 + $0x4] sm:$0xf] %v30
  // Predicated region
  $region18: #{_cnn_forward.21} parent=0 // pred_check
    _
  $region19: #{_cnn_forward.21} parent=0 // pred_check_branch
    %34 = sbr.rel (0) target = $region21
  $region20: #{_cnn_forward.21} parent=0 // pred_region
    _
  $region21: #{_cnn_forward.21} parent=0 // pred_fallthru
    _
  // Predicated region
  $region22: #{_cnn_forward.21} parent=0 // pred_check
    _
  $region23: #{_cnn_forward.21} parent=0 // pred_check_branch
    %36 = sbr.rel (0) target = $region25
  $region24: #{_cnn_forward.21} parent=0 // pred_region
    _
  $region25: #{_cnn_forward.21} parent=0 // pred_fallthru
    _

// kernel: _cnn_forward.20
$region0: #{_cnn_forward.20}
  #allocation0 [shape = 'u32[]', space=smem, size = 0x4, offset = 0x4, fixed_abs, tag = 'smem constant byte address 0x4 - core index']
  #allocation1 [shape = 'u32[144,128]{1,0:T(1,128)}', space=vmem, size = 0x12000, scoped, tag = 'internal scratch']
  #allocation2 [shape = 'f32[1]{0:T(128)S(6)}', space=smem, size = 0x200, scoped, tag = 'scoped memory for _cnn_forward.20']
  %s0 = inlined_call_operand.vmem [shape: bf16[1600,128], index: 0, kind: input, shape index: {}]
  %s1 = inlined_call_operand.vmem [shape: bf16[64,1600], index: 1, kind: input, shape index: {}]
  %s2 = inlined_call_operand.vmem [shape: f32[64,1], index: 2, kind: input, shape index: {}]
  %s3 = inlined_call_operand.<no memory space> [shape: f32[1], index: 3, kind: input, shape index: {}]
  %s4 = inlined_call_operand.vmem [shape: bf16[64,128], index: 4, kind: output, shape index: {}]
  %s5 = sld [smem:[#allocation0]]
  $region26: #{_cnn_forward.20} parent=0
    _
  %s7 = ssub.s32 1, %s5
  %s8 = scalar_select 0, %s7, %s5
  %9 = sst [smem:[#allocation2]] %s3
  // Predicated region
  $region2: #{_cnn_forward.20} parent=0 // pred_check
    _
  $region3: #{_cnn_forward.20} parent=0 // pred_check_branch
    %11 = sbr.rel (0) target = $region5
  $region4: #{_cnn_forward.20} parent=0 // pred_region
    _
  $region5: #{_cnn_forward.20} parent=0 // pred_fallthru
    _
  // Predicated region
  $region6: #{_cnn_forward.20} parent=0 // pred_check
    _
  $region7: #{_cnn_forward.20} parent=0 // pred_check_branch
    %13 = sbr.rel (0) target = $region9
  $region8: #{_cnn_forward.20} parent=0 // pred_region
    _
  $region9: #{_cnn_forward.20} parent=0 // pred_fallthru
    _
  // Predicated region
  $region10: #{_cnn_forward.20} parent=0 // pred_check
    _
  $region11: #{_cnn_forward.20} parent=0 // pred_check_branch
    %15 = sbr.rel (0) target = $region13
  $region12: #{_cnn_forward.20} parent=0 // pred_region
    _
  $region13: #{_cnn_forward.20} parent=0 // pred_fallthru
    _
  // Predicated region
  $region14: #{_cnn_forward.20} parent=0 // pred_check
    _
  $region15: #{_cnn_forward.20} parent=0 // pred_check_branch
    %17 = sbr.rel (0) target = $region17
  $region16: #{_cnn_forward.20} parent=0 // pred_region
    _
  $region17: #{_cnn_forward.20} parent=0 // pred_fallthru
    _
  %v19 = vld [vmem:[%s1] sm:$0xff]
  %v20 = vld [vmem:[%s1 + $0x8] sm:$0xff]
  %v21 = vld [vmem:[%s1 + $0x10] sm:$0xff]
  %v22 = vld [vmem:[%s1 + $0x18] sm:$0xff]
  %v23 = vld [vmem:[%s1 + $0x20] sm:$0xff]
  %v24 = vld [vmem:[%s1 + $0x28] sm:$0xff]
  %v25 = vld [vmem:[%s1 + $0x30] sm:$0xf]
  %v26 = vld [vmem:[%s1 + $0x34] sm:$0xff]
  %v27 = vld [vmem:[%s1 + $0x3c] sm:$0xff]
  %v28 = vld [vmem:[%s1 + $0x44] sm:$0xff]
  %v29 = vld [vmem:[%s1 + $0x4c] sm:$0xff]
  %v30 = vld [vmem:[%s1 + $0x54] sm:$0xff]
  %v31 = vld [vmem:[%s1 + $0x5c] sm:$0xff]
  %v32 = vld [vmem:[%s1 + $0x64] sm:$0xf]
  %v33 = vld [vmem:[%s1 + $0x68] sm:$0xff]
  %v34 = vld [vmem:[%s1 + $0x70] sm:$0xff]
  %v35 = vld [vmem:[%s1 + $0x78] sm:$0xff]
  %v36 = vld [vmem:[%s1 + $0x80] sm:$0xff]
  %v37 = vld [vmem:[%s1 + $0x88] sm:$0xff]
  %v38 = vld [vmem:[%s1 + $0x90] sm:$0xff]
  %v39 = vld [vmem:[%s1 + $0x98] sm:$0xf]
  %v40 = vld [vmem:[%s1 + $0x9c] sm:$0xff]
  %v41 = vld [vmem:[%s1 + $0xa4] sm:$0xff]
  %v42 = vld [vmem:[%s1 + $0xac] sm:$0xff]
  %v43 = vld [vmem:[%s1 + $0xb4] sm:$0xff]
  %v44 = vld [vmem:[%s1 + $0xbc] sm:$0xff]
  %v45 = vld [vmem:[%s1 + $0xc4] sm:$0xff]
  %v46 = vld [vmem:[%s1 + $0xcc] sm:$0xf]
  %v47 = vld [vmem:[%s1 + $0xd0] sm:$0xff]
  %v48 = vld [vmem:[%s1 + $0xd8] sm:$0xff]
  %v49 = vld [vmem:[%s1 + $0xe0] sm:$0xff]
  %v50 = vld [vmem:[%s1 + $0xe8] sm:$0xff]
  %v51 = vld [vmem:[%s1 + $0xf0] sm:$0xff]
  %v52 = vld [vmem:[%s1 + $0xf8] sm:$0xff]
  %v53 = vld [vmem:[%s1 + $0x100] sm:$0xf]
  %v54 = vld [vmem:[%s1 + $0x104] sm:$0xff]
  %v55 = vld [vmem:[%s1 + $0x10c] sm:$0xff]
  %v56 = vld [vmem:[%s1 + $0x114] sm:$0xff]
  %v57 = vld [vmem:[%s1 + $0x11c] sm:$0xff]
  %v58 = vld [vmem:[%s1 + $0x124] sm:$0xff]
  %v59 = vld [vmem:[%s1 + $0x12c] sm:$0xff]
  %v60 = vld [vmem:[%s1 + $0x134] sm:$0xf]
  %v61 = vld [vmem:[%s1 + $0x138] sm:$0xff]
  %v62 = vld [vmem:[%s1 + $0x140] sm:$0xff]
  %v63 = vld [vmem:[%s1 + $0x148] sm:$0xff]
  %v64 = vld [vmem:[%s1 + $0x150] sm:$0xff]
  %v65 = vld [vmem:[%s1 + $0x158] sm:$0xff]
  %v66 = vld [vmem:[%s1 + $0x160] sm:$0xff]
  %v67 = vld [vmem:[%s1 + $0x168] sm:$0xf]
  %v68 = vld [vmem:[%s1 + $0x16c] sm:$0xff]
  %v69 = vld [vmem:[%s1 + $0x174] sm:$0xff]
  %v70 = vld [vmem:[%s1 + $0x17c] sm:$0xff]
  %v71 = vld [vmem:[%s1 + $0x184] sm:$0xff]
  %v72 = vld [vmem:[%s1 + $0x18c] sm:$0xff]
  %v73 = vld [vmem:[%s1 + $0x194] sm:$0xff]
  %v74 = vld [vmem:[%s1 + $0x19c] sm:$0xf]
  %v75 = vld [vmem:[%s0] sm:$0xf]
  %v76 = vld [vmem:[%s0 + $0x4] sm:$0xf]
  %v77 = vld [vmem:[%s0 + $0x8] sm:$0xf]
  %v78 = vld [vmem:[%s0 + $0xc] sm:$0xf]
  %v79 = vld [vmem:[%s0 + $0x10] sm:$0xf]
  %v80 = vld [vmem:[%s0 + $0x14] sm:$0xf]
  %v81 = vld [vmem:[%s0 + $0x18] sm:$0xf]
  %v82 = vld [vmem:[%s0 + $0x1c] sm:$0xf]
  %v83 = vld [vmem:[%s0 + $0x20] sm:$0xf]
  %v84 = vld [vmem:[%s0 + $0x24] sm:$0xf]
  %v85 = vld [vmem:[%s0 + $0x28] sm:$0xf]
  %v86 = vld [vmem:[%s0 + $0x2c] sm:$0xf]
  %v87 = vld [vmem:[%s0 + $0x30] sm:$0xf]
  %v88 = vld [vmem:[%s0 + $0x34] sm:$0xf]
  %v89 = vld [vmem:[%s0 + $0x38] sm:$0xf]
  %v90 = vld [vmem:[%s0 + $0x3c] sm:$0xf]
  %v91 = vld [vmem:[%s0 + $0x40] sm:$0xf]
  %v92 = vld [vmem:[%s0 + $0x44] sm:$0xf]
  %v93 = vld [vmem:[%s0 + $0x48] sm:$0xf]
  %v94 = vld [vmem:[%s0 + $0x4c] sm:$0xf]
  %v95 = vld [vmem:[%s0 + $0x50] sm:$0xf]
  %v96 = vld [vmem:[%s0 + $0x54] sm:$0xf]
  %v97 = vld [vmem:[%s0 + $0x58] sm:$0xf]
  %v98 = vld [vmem:[%s0 + $0x5c] sm:$0xf]
  %v99 = vld [vmem:[%s0 + $0x60] sm:$0xf]
  %v100 = vld [vmem:[%s0 + $0x64] sm:$0xf]
  %v101 = vld [vmem:[%s0 + $0x68] sm:$0xf]
  %v102 = vld [vmem:[%s0 + $0x6c] sm:$0xf]
  %v103 = vld [vmem:[%s0 + $0x70] sm:$0xf]
  %v104 = vld [vmem:[%s0 + $0x74] sm:$0xf]
  %v105 = vld [vmem:[%s0 + $0x78] sm:$0xf]
  %v106 = vld [vmem:[%s0 + $0x7c] sm:$0xf]
  %v107 = vld [vmem:[%s0 + $0x80] sm:$0xf]
  %v108 = vld [vmem:[%s0 + $0x84] sm:$0xf]
  %v109 = vld [vmem:[%s0 + $0x88] sm:$0xf]
  %v110 = vld [vmem:[%s0 + $0x8c] sm:$0xf]
  %v111 = vld [vmem:[%s0 + $0x90] sm:$0xf]
  %v112 = vld [vmem:[%s0 + $0x94] sm:$0xf]
  %v113 = vld [vmem:[%s0 + $0x98] sm:$0xf]
  %v114 = vld [vmem:[%s0 + $0x9c] sm:$0xf]
  %v115 = vld [vmem:[%s0 + $0xa0] sm:$0xf]
  %v116 = vld [vmem:[%s0 + $0xa4] sm:$0xf]
  %v117 = vld [vmem:[%s0 + $0xa8] sm:$0xf]
  %v118 = vld [vmem:[%s0 + $0xac] sm:$0xf]
  %v119 = vld [vmem:[%s0 + $0xb0] sm:$0xf]
  %v120 = vld [vmem:[%s0 + $0xb4] sm:$0xf]
  %v121 = vld [vmem:[%s0 + $0xb8] sm:$0xf]
  %v122 = vld [vmem:[%s0 + $0xbc] sm:$0xf]
  %v123 = vld [vmem:[%s0 + $0xc0] sm:$0xf]
  %v124 = vld [vmem:[%s0 + $0xc4] sm:$0xf]
  %v125 = vld [vmem:[%s0 + $0xc8] sm:$0xf]
  %v126 = vld [vmem:[%s0 + $0xcc] sm:$0xf]
  %v127 = vld [vmem:[%s0 + $0xd0] sm:$0xf]
  %v128 = vld [vmem:[%s0 + $0xd4] sm:$0xf]
  %v129 = vld [vmem:[%s0 + $0xd8] sm:$0xf]
  %v130 = vld [vmem:[%s0 + $0xdc] sm:$0xf]
  %v131 = vld [vmem:[%s0 + $0xe0] sm:$0xf]
  %v132 = vld [vmem:[%s0 + $0xe4] sm:$0xf]
  %v133 = vld [vmem:[%s0 + $0xe8] sm:$0xf]
  %v134 = vld [vmem:[%s0 + $0xec] sm:$0xf]
  %v135 = vld [vmem:[%s0 + $0xf0] sm:$0xf]
  %v136 = vld [vmem:[%s0 + $0xf4] sm:$0xf]
  %v137 = vld [vmem:[%s0 + $0xf8] sm:$0xf]
  %v138 = vld [vmem:[%s0 + $0xfc] sm:$0xf]
  %v139 = vld [vmem:[%s0 + $0x100] sm:$0xf]
  %v140 = vld [vmem:[%s0 + $0x104] sm:$0xf]
  %v141 = vld [vmem:[%s0 + $0x108] sm:$0xf]
  %v142 = vld [vmem:[%s0 + $0x10c] sm:$0xf]
  %v143 = vld [vmem:[%s0 + $0x110] sm:$0xf]
  %v144 = vld [vmem:[%s0 + $0x114] sm:$0xf]
  %v145 = vld [vmem:[%s0 + $0x118] sm:$0xf]
  %v146 = vld [vmem:[%s0 + $0x11c] sm:$0xf]
  %v147 = vld [vmem:[%s0 + $0x120] sm:$0xf]
  %v148 = vld [vmem:[%s0 + $0x124] sm:$0xf]
  %v149 = vld [vmem:[%s0 + $0x128] sm:$0xf]
  %v150 = vld [vmem:[%s0 + $0x12c] sm:$0xf]
  %v151 = vld [vmem:[%s0 + $0x130] sm:$0xf]
  %v152 = vld [vmem:[%s0 + $0x134] sm:$0xf]
  %v153 = vld [vmem:[%s0 + $0x138] sm:$0xf]
  %v154 = vld [vmem:[%s0 + $0x13c] sm:$0xf]
  %v155 = vld [vmem:[%s0 + $0x140] sm:$0xf]
  %v156 = vld [vmem:[%s0 + $0x144] sm:$0xf]
  %v157 = vld [vmem:[%s0 + $0x148] sm:$0xf]
  %v158 = vld [vmem:[%s0 + $0x14c] sm:$0xf]
  %v159 = vld [vmem:[%s0 + $0x150] sm:$0xf]
  %v160 = vld [vmem:[%s0 + $0x154] sm:$0xf]
  %v161 = vld [vmem:[%s0 + $0x158] sm:$0xf]
  %v162 = vld [vmem:[%s0 + $0x15c] sm:$0xf]
  %v163 = vld [vmem:[%s0 + $0x160] sm:$0xf]
  %v164 = vld [vmem:[%s0 + $0x164] sm:$0xf]
  %v165 = vld [vmem:[%s0 + $0x168] sm:$0xf]
  %v166 = vld [vmem:[%s0 + $0x16c] sm:$0xf]
  %v167 = vld [vmem:[%s0 + $0x170] sm:$0xf]
  %v168 = vld [vmem:[%s0 + $0x174] sm:$0xf]
  %v169 = vld [vmem:[%s0 + $0x178] sm:$0xf]
  %v170 = vld [vmem:[%s0 + $0x17c] sm:$0xf]
  %v171 = vld [vmem:[%s0 + $0x180] sm:$0xf]
  %v172 = vld [vmem:[%s0 + $0x184] sm:$0xf]
  %v173 = vld [vmem:[%s0 + $0x188] sm:$0xf]
  %v174 = vld [vmem:[%s0 + $0x18c] sm:$0xf]
  %v175 = vld [vmem:[%s0 + $0x190] sm:$0xf]
  %v176 = vld [vmem:[%s0 + $0x194] sm:$0xf]
  %v177 = vld [vmem:[%s0 + $0x198] sm:$0xf]
  %v178 = vld [vmem:[%s0 + $0x19c] sm:$0xf]
  %v179 = vld [vmem:[%s0 + $0x1a0] sm:$0xf]
  %v180 = vld [vmem:[%s0 + $0x1a4] sm:$0xf]
  %v181 = vld [vmem:[%s0 + $0x1a8] sm:$0xf]
  %v182 = vld [vmem:[%s0 + $0x1ac] sm:$0xf]
  %v183 = vld [vmem:[%s0 + $0x1b0] sm:$0xf]
  %v184 = vld [vmem:[%s0 + $0x1b4] sm:$0xf]
  %v185 = vld [vmem:[%s0 + $0x1b8] sm:$0xf]
  %v186 = vld [vmem:[%s0 + $0x1bc] sm:$0xf]
  %v187 = vld [vmem:[%s0 + $0x1c0] sm:$0xf]
  %v188 = vld [vmem:[%s0 + $0x1c4] sm:$0xf]
  %v189 = vld [vmem:[%s0 + $0x1c8] sm:$0xf]
  %v190 = vld [vmem:[%s0 + $0x1cc] sm:$0xf]
  %v191 = vld [vmem:[%s0 + $0x1d0] sm:$0xf]
  %v192 = vld [vmem:[%s0 + $0x1d4] sm:$0xf]
  %v193 = vld [vmem:[%s0 + $0x1d8] sm:$0xf]
  %v194 = vld [vmem:[%s0 + $0x1dc] sm:$0xf]
  %v195 = vld [vmem:[%s0 + $0x1e0] sm:$0xf]
  %v196 = vld [vmem:[%s0 + $0x1e4] sm:$0xf]
  %v197 = vld [vmem:[%s0 + $0x1e8] sm:$0xf]
  %v198 = vld [vmem:[%s0 + $0x1ec] sm:$0xf]
  %v199 = vld [vmem:[%s0 + $0x1f0] sm:$0xf]
  %v200 = vld [vmem:[%s0 + $0x1f4] sm:$0xf]
  %v201 = vld [vmem:[%s0 + $0x1f8] sm:$0xf]
  %v202 = vld [vmem:[%s0 + $0x1fc] sm:$0xf]
  %v203 = vld [vmem:[%s0 + $0x200] sm:$0xf]
  %v204 = vld [vmem:[%s0 + $0x204] sm:$0xf]
  %v205 = vld [vmem:[%s0 + $0x208] sm:$0xf]
  %v206 = vld [vmem:[%s0 + $0x20c] sm:$0xf]
  %v207 = vld [vmem:[%s0 + $0x210] sm:$0xf]
  %v208 = vld [vmem:[%s0 + $0x214] sm:$0xf]
  %v209 = vld [vmem:[%s0 + $0x218] sm:$0xf]
  %v210 = vld [vmem:[%s0 + $0x21c] sm:$0xf]
  %v211 = vld [vmem:[%s0 + $0x220] sm:$0xf]
  %v212 = vld [vmem:[%s0 + $0x224] sm:$0xf]
  %v213 = vld [vmem:[%s0 + $0x228] sm:$0xf]
  %v214 = vld [vmem:[%s0 + $0x22c] sm:$0xf]
  %v215 = vld [vmem:[%s0 + $0x230] sm:$0xf]
  %v216 = vld [vmem:[%s0 + $0x234] sm:$0xf]
  %v217 = vld [vmem:[%s0 + $0x238] sm:$0xf]
  %v218 = vld [vmem:[%s0 + $0x23c] sm:$0xf]
  %v219 = vld [vmem:[%s0 + $0x240] sm:$0xf]
  %v220 = vld [vmem:[%s0 + $0x244] sm:$0xf]
  %v221 = vld [vmem:[%s0 + $0x248] sm:$0xf]
  %v222 = vld [vmem:[%s0 + $0x24c] sm:$0xf]
  %v223 = vld [vmem:[%s0 + $0x250] sm:$0xf]
  %v224 = vld [vmem:[%s0 + $0x254] sm:$0xf]
  %v225 = vld [vmem:[%s0 + $0x258] sm:$0xf]
  %v226 = vld [vmem:[%s0 + $0x25c] sm:$0xf]
  %v227 = vld [vmem:[%s0 + $0x260] sm:$0xf]
  %v228 = vld [vmem:[%s0 + $0x264] sm:$0xf]
  %v229 = vld [vmem:[%s0 + $0x268] sm:$0xf]
  %v230 = vld [vmem:[%s0 + $0x26c] sm:$0xf]
  %v231 = vld [vmem:[%s0 + $0x270] sm:$0xf]
  %v232 = vld [vmem:[%s0 + $0x274] sm:$0xf]
  %v233 = vld [vmem:[%s0 + $0x278] sm:$0xf]
  %v234 = vld [vmem:[%s0 + $0x27c] sm:$0xf]
  %v235 = vld [vmem:[%s0 + $0x280] sm:$0xf]
  %v236 = vld [vmem:[%s0 + $0x284] sm:$0xf]
  %v237 = vld [vmem:[%s0 + $0x288] sm:$0xf]
  %v238 = vld [vmem:[%s0 + $0x28c] sm:$0xf]
  %v239 = vld [vmem:[%s0 + $0x290] sm:$0xf]
  %v240 = vld [vmem:[%s0 + $0x294] sm:$0xf]
  %v241 = vld [vmem:[%s0 + $0x298] sm:$0xf]
  %v242 = vld [vmem:[%s0 + $0x29c] sm:$0xf]
  %v243 = vld [vmem:[%s0 + $0x2a0] sm:$0xf]
  %v244 = vld [vmem:[%s0 + $0x2a4] sm:$0xf]
  %v245 = vld [vmem:[%s0 + $0x2a8] sm:$0xf]
  %v246 = vld [vmem:[%s0 + $0x2ac] sm:$0xf]
  %v247 = vld [vmem:[%s0 + $0x2b0] sm:$0xf]
  %v248 = vld [vmem:[%s0 + $0x2b4] sm:$0xf]
  %v249 = vld [vmem:[%s0 + $0x2b8] sm:$0xf]
  %v250 = vld [vmem:[%s0 + $0x2bc] sm:$0xf]
  %v251 = vld [vmem:[%s0 + $0x2c0] sm:$0xf]
  %v252 = vld [vmem:[%s0 + $0x2c4] sm:$0xf]
  %v253 = vld [vmem:[%s0 + $0x2c8] sm:$0xf]
  %v254 = vld [vmem:[%s0 + $0x2cc] sm:$0xf]
  %v255 = vld [vmem:[%s0 + $0x2d0] sm:$0xf]
  %v256 = vld [vmem:[%s0 + $0x2d4] sm:$0xf]
  %v257 = vld [vmem:[%s0 + $0x2d8] sm:$0xf]
  %v258 = vld [vmem:[%s0 + $0x2dc] sm:$0xf]
  %v259 = vld [vmem:[%s0 + $0x2e0] sm:$0xf]
  %v260 = vld [vmem:[%s0 + $0x2e4] sm:$0xf]
  %v261 = vld [vmem:[%s0 + $0x2e8] sm:$0xf]
  %v262 = vld [vmem:[%s0 + $0x2ec] sm:$0xf]
  %v263 = vld [vmem:[%s0 + $0x2f0] sm:$0xf]
  %v264 = vld [vmem:[%s0 + $0x2f4] sm:$0xf]
  %v265 = vld [vmem:[%s0 + $0x2f8] sm:$0xf]
  %v266 = vld [vmem:[%s0 + $0x2fc] sm:$0xf]
  %v267 = vld [vmem:[%s0 + $0x300] sm:$0xf]
  %v268 = vld [vmem:[%s0 + $0x304] sm:$0xf]
  %v269 = vld [vmem:[%s0 + $0x308] sm:$0xf]
  %v270 = vld [vmem:[%s0 + $0x30c] sm:$0xf]
  %v271 = vld [vmem:[%s0 + $0x310] sm:$0xf]
  %v272 = vld [vmem:[%s0 + $0x314] sm:$0xf]
  %v273 = vld [vmem:[%s0 + $0x318] sm:$0xf]
  %v274 = vld [vmem:[%s0 + $0x31c] sm:$0xf]
  %v275 = vld [vmem:[%s2] sm:$0xff]
  %v276 = vld [vmem:[%s2 + $0x8] sm:$0xff]
  %v277 = vld [vmem:[%s2 + $0x10] sm:$0xff]
  %v278 = vld [vmem:[%s2 + $0x18] sm:$0xff]
  %v279 = vld [vmem:[%s2 + $0x20] sm:$0xff]
  %v280 = vld [vmem:[%s2 + $0x28] sm:$0xff]
  %v281 = vld [vmem:[%s2 + $0x30] sm:$0xff]
  %v282 = vld [vmem:[%s2 + $0x38] sm:$0xff]
  %284 = vset.pattern.permute.xlu0 0
  %285 = vperm.xlu0 %284, %v275
  %v286 = vpop.permute.xlu0 %285
  %289 = vset.pattern.permute.xlu0 0
  %290 = vperm.xlu0 %289, %v276
  %v291 = vpop.permute.xlu0 %290
  %294 = vset.pattern.permute.xlu0 0
  %295 = vperm.xlu0 %294, %v277
  %v296 = vpop.permute.xlu0 %295
  %299 = vset.pattern.permute.xlu0 0
  %300 = vperm.xlu0 %299, %v278
  %v301 = vpop.permute.xlu0 %300
  %304 = vset.pattern.permute.xlu0 0
  %305 = vperm.xlu0 %304, %v279
  %v306 = vpop.permute.xlu0 %305
  %309 = vset.pattern.permute.xlu0 0
  %310 = vperm.xlu0 %309, %v280
  %v311 = vpop.permute.xlu0 %310
  %314 = vset.pattern.permute.xlu0 0
  %315 = vperm.xlu0 %314, %v281
  %v316 = vpop.permute.xlu0 %315
  %319 = vset.pattern.permute.xlu0 0
  %320 = vperm.xlu0 %319, %v282
  %v321 = vpop.permute.xlu0 %320
  %v379 = vunpack.c.l.b16 %v19
  %v380 = vunpack.c.h.b16 %v19
  %v381 = vunpack.c.l.b16 %v20
  %v382 = vunpack.c.h.b16 %v20
  %v383 = vunpack.c.l.b16 %v21
  %v384 = vunpack.c.h.b16 %v21
  %v385 = vunpack.c.l.b16 %v22
  %v386 = vunpack.c.h.b16 %v22
  %v387 = vunpack.c.l.b16 %v23
  %v388 = vunpack.c.h.b16 %v23
  %v389 = vunpack.c.l.b16 %v24
  %v390 = vunpack.c.h.b16 %v24
  %v391 = vunpack.c.l.b16 %v25
  %v392 = vunpack.c.l.b16 %v26
  %v393 = vunpack.c.h.b16 %v26
  %v394 = vunpack.c.l.b16 %v27
  %v395 = vunpack.c.h.b16 %v27
  %v396 = vunpack.c.l.b16 %v28
  %v397 = vunpack.c.h.b16 %v28
  %v398 = vunpack.c.l.b16 %v29
  %v399 = vunpack.c.h.b16 %v29
  %v400 = vunpack.c.l.b16 %v30
  %v401 = vunpack.c.h.b16 %v30
  %v402 = vunpack.c.l.b16 %v31
  %v403 = vunpack.c.h.b16 %v31
  %v404 = vunpack.c.l.b16 %v32
  %v405 = vunpack.c.l.b16 %v33
  %v406 = vunpack.c.h.b16 %v33
  %v407 = vunpack.c.l.b16 %v34
  %v408 = vunpack.c.h.b16 %v34
  %v409 = vunpack.c.l.b16 %v35
  %v410 = vunpack.c.h.b16 %v35
  %v411 = vunpack.c.l.b16 %v36
  %v412 = vunpack.c.h.b16 %v36
  %v413 = vunpack.c.l.b16 %v37
  %v414 = vunpack.c.h.b16 %v37
  %v415 = vunpack.c.l.b16 %v38
  %v416 = vunpack.c.h.b16 %v38
  %v417 = vunpack.c.l.b16 %v39
  %v418 = vunpack.c.l.b16 %v40
  %v419 = vunpack.c.h.b16 %v40
  %v420 = vunpack.c.l.b16 %v41
  %v421 = vunpack.c.h.b16 %v41
  %v422 = vunpack.c.l.b16 %v42
  %v423 = vunpack.c.h.b16 %v42
  %v424 = vunpack.c.l.b16 %v43
  %v425 = vunpack.c.h.b16 %v43
  %v426 = vunpack.c.l.b16 %v44
  %v427 = vunpack.c.h.b16 %v44
  %v428 = vunpack.c.l.b16 %v45
  %v429 = vunpack.c.h.b16 %v45
  %v430 = vunpack.c.l.b16 %v46
  %v431 = vunpack.c.l.b16 %v47
  %v432 = vunpack.c.h.b16 %v47
  %v433 = vunpack.c.l.b16 %v48
  %v434 = vunpack.c.h.b16 %v48
  %v435 = vunpack.c.l.b16 %v49
  %v436 = vunpack.c.h.b16 %v49
  %v437 = vunpack.c.l.b16 %v50
  %v438 = vunpack.c.h.b16 %v50
  %v439 = vunpack.c.l.b16 %v51
  %v440 = vunpack.c.h.b16 %v51
  %v441 = vunpack.c.l.b16 %v52
  %v442 = vunpack.c.h.b16 %v52
  %v443 = vunpack.c.l.b16 %v53
  %v444 = vunpack.c.l.b16 %v54
  %v445 = vunpack.c.h.b16 %v54
  %v446 = vunpack.c.l.b16 %v55
  %v447 = vunpack.c.h.b16 %v55
  %v448 = vunpack.c.l.b16 %v56
  %v449 = vunpack.c.h.b16 %v56
  %v450 = vunpack.c.l.b16 %v57
  %v451 = vunpack.c.h.b16 %v57
  %v452 = vunpack.c.l.b16 %v58
  %v453 = vunpack.c.h.b16 %v58
  %v454 = vunpack.c.l.b16 %v59
  %v455 = vunpack.c.h.b16 %v59
  %v456 = vunpack.c.l.b16 %v60
  %v457 = vunpack.c.l.b16 %v61
  %v458 = vunpack.c.h.b16 %v61
  %v459 = vunpack.c.l.b16 %v62
  %v460 = vunpack.c.h.b16 %v62
  %v461 = vunpack.c.l.b16 %v63
  %v462 = vunpack.c.h.b16 %v63
  %v463 = vunpack.c.l.b16 %v64
  %v464 = vunpack.c.h.b16 %v64
  %v465 = vunpack.c.l.b16 %v65
  %v466 = vunpack.c.h.b16 %v65
  %v467 = vunpack.c.l.b16 %v66
  %v468 = vunpack.c.h.b16 %v66
  %v469 = vunpack.c.l.b16 %v67
  %v470 = vunpack.c.l.b16 %v68
  %v471 = vunpack.c.h.b16 %v68
  %v472 = vunpack.c.l.b16 %v69
  %v473 = vunpack.c.h.b16 %v69
  %v474 = vunpack.c.l.b16 %v70
  %v475 = vunpack.c.h.b16 %v70
  %v476 = vunpack.c.l.b16 %v71
  %v477 = vunpack.c.h.b16 %v71
  %v478 = vunpack.c.l.b16 %v72
  %v479 = vunpack.c.h.b16 %v72
  %v480 = vunpack.c.l.b16 %v73
  %v481 = vunpack.c.h.b16 %v73
  %v482 = vunpack.c.l.b16 %v74
  %v483 = vpack.c.b16 %v392, %v379
  %v484 = vpack.c.b16 %v393, %v380
  %v485 = vpack.c.b16 %v394, %v381
  %v486 = vpack.c.b16 %v395, %v382
  %v487 = vpack.c.b16 %v396, %v383
  %v488 = vpack.c.b16 %v397, %v384
  %v489 = vpack.c.b16 %v398, %v385
  %v490 = vpack.c.b16 %v399, %v386
  %v491 = vpack.c.b16 %v400, %v387
  %v492 = vpack.c.b16 %v401, %v388
  %v493 = vpack.c.b16 %v402, %v389
  %v494 = vpack.c.b16 %v403, %v390
  %v495 = vpack.c.b16 %v404, %v391
  %v496 = vpack.c.b16 %v418, %v405
  %v497 = vpack.c.b16 %v419, %v406
  %v498 = vpack.c.b16 %v420, %v407
  %v499 = vpack.c.b16 %v421, %v408
  %v500 = vpack.c.b16 %v422, %v409
  %v501 = vpack.c.b16 %v423, %v410
  %v502 = vpack.c.b16 %v424, %v411
  %v503 = vpack.c.b16 %v425, %v412
  %v504 = vpack.c.b16 %v426, %v413
  %v505 = vpack.c.b16 %v427, %v414
  %v506 = vpack.c.b16 %v428, %v415
  %v507 = vpack.c.b16 %v429, %v416
  %v508 = vpack.c.b16 %v430, %v417
  %v509 = vpack.c.b16 %v444, %v431
  %v510 = vpack.c.b16 %v445, %v432
  %v511 = vpack.c.b16 %v446, %v433
  %v512 = vpack.c.b16 %v447, %v434
  %v513 = vpack.c.b16 %v448, %v435
  %v514 = vpack.c.b16 %v449, %v436
  %v515 = vpack.c.b16 %v450, %v437
  %v516 = vpack.c.b16 %v451, %v438
  %v517 = vpack.c.b16 %v452, %v439
  %v518 = vpack.c.b16 %v453, %v440
  %v519 = vpack.c.b16 %v454, %v441
  %v520 = vpack.c.b16 %v455, %v442
  %v521 = vpack.c.b16 %v456, %v443
  %v522 = vpack.c.b16 %v470, %v457
  %v523 = vpack.c.b16 %v471, %v458
  %v524 = vpack.c.b16 %v472, %v459
  %v525 = vpack.c.b16 %v473, %v460
  %v526 = vpack.c.b16 %v474, %v461
  %v527 = vpack.c.b16 %v475, %v462
  %v528 = vpack.c.b16 %v476, %v463
  %v529 = vpack.c.b16 %v477, %v464
  %v530 = vpack.c.b16 %v478, %v465
  %v531 = vpack.c.b16 %v479, %v466
  %v532 = vpack.c.b16 %v480, %v467
  %v533 = vpack.c.b16 %v481, %v468
  %v534 = vpack.c.b16 %v482, %v469
  %v783 = vunpack.c.l.b16 %v75
  %v784 = vunpack.c.l.b16 %v76
  %v785 = vunpack.c.l.b16 %v77
  %v786 = vunpack.c.l.b16 %v78
  %v787 = vunpack.c.l.b16 %v79
  %v788 = vunpack.c.l.b16 %v80
  %v789 = vunpack.c.l.b16 %v81
  %v790 = vunpack.c.l.b16 %v82
  %v791 = vunpack.c.l.b16 %v83
  %v792 = vunpack.c.l.b16 %v84
  %v793 = vunpack.c.l.b16 %v85
  %v794 = vunpack.c.l.b16 %v86
  %v795 = vunpack.c.l.b16 %v87
  %v796 = vunpack.c.l.b16 %v88
  %v797 = vunpack.c.l.b16 %v89
  %v798 = vunpack.c.l.b16 %v90
  %v799 = vunpack.c.l.b16 %v91
  %v800 = vunpack.c.l.b16 %v92
  %v801 = vunpack.c.l.b16 %v93
  %v802 = vunpack.c.l.b16 %v94
  %v803 = vunpack.c.l.b16 %v95
  %v804 = vunpack.c.l.b16 %v96
  %v805 = vunpack.c.l.b16 %v97
  %v806 = vunpack.c.l.b16 %v98
  %v807 = vunpack.c.l.b16 %v99
  %v808 = vunpack.c.l.b16 %v100
  %v809 = vunpack.c.l.b16 %v101
  %v810 = vunpack.c.l.b16 %v102
  %v811 = vunpack.c.l.b16 %v103
  %v812 = vunpack.c.l.b16 %v104
  %v813 = vunpack.c.l.b16 %v105
  %v814 = vunpack.c.l.b16 %v106
  %v815 = vunpack.c.l.b16 %v107
  %v816 = vunpack.c.l.b16 %v108
  %v817 = vunpack.c.l.b16 %v109
  %v818 = vunpack.c.l.b16 %v110
  %v819 = vunpack.c.l.b16 %v111
  %v820 = vunpack.c.l.b16 %v112
  %v821 = vunpack.c.l.b16 %v113
  %v822 = vunpack.c.l.b16 %v114
  %v823 = vunpack.c.l.b16 %v115
  %v824 = vunpack.c.l.b16 %v116
  %v825 = vunpack.c.l.b16 %v117
  %v826 = vunpack.c.l.b16 %v118
  %v827 = vunpack.c.l.b16 %v119
  %v828 = vunpack.c.l.b16 %v120
  %v829 = vunpack.c.l.b16 %v121
  %v830 = vunpack.c.l.b16 %v122
  %v831 = vunpack.c.l.b16 %v123
  %v832 = vunpack.c.l.b16 %v124
  %v833 = vunpack.c.l.b16 %v125
  %v834 = vunpack.c.l.b16 %v126
  %v835 = vunpack.c.l.b16 %v127
  %v836 = vunpack.c.l.b16 %v128
  %v837 = vunpack.c.l.b16 %v129
  %v838 = vunpack.c.l.b16 %v130
  %v839 = vunpack.c.l.b16 %v131
  %v840 = vunpack.c.l.b16 %v132
  %v841 = vunpack.c.l.b16 %v133
  %v842 = vunpack.c.l.b16 %v134
  %v843 = vunpack.c.l.b16 %v135
  %v844 = vunpack.c.l.b16 %v136
  %v845 = vunpack.c.l.b16 %v137
  %v846 = vunpack.c.l.b16 %v138
  %v847 = vunpack.c.l.b16 %v139
  %v848 = vunpack.c.l.b16 %v140
  %v849 = vunpack.c.l.b16 %v141
  %v850 = vunpack.c.l.b16 %v142
  %v851 = vunpack.c.l.b16 %v143
  %v852 = vunpack.c.l.b16 %v144
  %v853 = vunpack.c.l.b16 %v145
  %v854 = vunpack.c.l.b16 %v146
  %v855 = vunpack.c.l.b16 %v147
  %v856 = vunpack.c.l.b16 %v148
  %v857 = vunpack.c.l.b16 %v149
  %v858 = vunpack.c.l.b16 %v150
  %v859 = vunpack.c.l.b16 %v151
  %v860 = vunpack.c.l.b16 %v152
  %v861 = vunpack.c.l.b16 %v153
  %v862 = vunpack.c.l.b16 %v154
  %v863 = vunpack.c.l.b16 %v155
  %v864 = vunpack.c.l.b16 %v156
  %v865 = vunpack.c.l.b16 %v157
  %v866 = vunpack.c.l.b16 %v158
  %v867 = vunpack.c.l.b16 %v159
  %v868 = vunpack.c.l.b16 %v160
  %v869 = vunpack.c.l.b16 %v161
  %v870 = vunpack.c.l.b16 %v162
  %v871 = vunpack.c.l.b16 %v163
  %v872 = vunpack.c.l.b16 %v164
  %v873 = vunpack.c.l.b16 %v165
  %v874 = vunpack.c.l.b16 %v166
  %v875 = vunpack.c.l.b16 %v167
  %v876 = vunpack.c.l.b16 %v168
  %v877 = vunpack.c.l.b16 %v169
  %v878 = vunpack.c.l.b16 %v170
  %v879 = vunpack.c.l.b16 %v171
  %v880 = vunpack.c.l.b16 %v172
  %v881 = vunpack.c.l.b16 %v173
  %v882 = vunpack.c.l.b16 %v174
  %v883 = vunpack.c.l.b16 %v175
  %v884 = vunpack.c.l.b16 %v176
  %v885 = vunpack.c.l.b16 %v177
  %v886 = vunpack.c.l.b16 %v178
  %v887 = vunpack.c.l.b16 %v179
  %v888 = vunpack.c.l.b16 %v180
  %v889 = vunpack.c.l.b16 %v181
  %v890 = vunpack.c.l.b16 %v182
  %v891 = vunpack.c.l.b16 %v183
  %v892 = vunpack.c.l.b16 %v184
  %v893 = vunpack.c.l.b16 %v185
  %v894 = vunpack.c.l.b16 %v186
  %v895 = vunpack.c.l.b16 %v187
  %v896 = vunpack.c.l.b16 %v188
  %v897 = vunpack.c.l.b16 %v189
  %v898 = vunpack.c.l.b16 %v190
  %v899 = vunpack.c.l.b16 %v191
  %v900 = vunpack.c.l.b16 %v192
  %v901 = vunpack.c.l.b16 %v193
  %v902 = vunpack.c.l.b16 %v194
  %v903 = vunpack.c.l.b16 %v195
  %v904 = vunpack.c.l.b16 %v196
  %v905 = vunpack.c.l.b16 %v197
  %v906 = vunpack.c.l.b16 %v198
  %v907 = vunpack.c.l.b16 %v199
  %v908 = vunpack.c.l.b16 %v200
  %v909 = vunpack.c.l.b16 %v201
  %v910 = vunpack.c.l.b16 %v202
  %v911 = vunpack.c.l.b16 %v203
  %v912 = vunpack.c.l.b16 %v204
  %v913 = vunpack.c.l.b16 %v205
  %v914 = vunpack.c.l.b16 %v206
  %v915 = vunpack.c.l.b16 %v207
  %v916 = vunpack.c.l.b16 %v208
  %v917 = vunpack.c.l.b16 %v209
  %v918 = vunpack.c.l.b16 %v210
  %v919 = vunpack.c.l.b16 %v211
  %v920 = vunpack.c.l.b16 %v212
  %v921 = vunpack.c.l.b16 %v213
  %v922 = vunpack.c.l.b16 %v214
  %v923 = vunpack.c.l.b16 %v215
  %v924 = vunpack.c.l.b16 %v216
  %v925 = vunpack.c.l.b16 %v217
  %v926 = vunpack.c.l.b16 %v218
  %v927 = vunpack.c.l.b16 %v219
  %v928 = vunpack.c.l.b16 %v220
  %v929 = vunpack.c.l.b16 %v221
  %v930 = vunpack.c.l.b16 %v222
  %v931 = vunpack.c.l.b16 %v223
  %v932 = vunpack.c.l.b16 %v224
  %v933 = vunpack.c.l.b16 %v225
  %v934 = vunpack.c.l.b16 %v226
  %v935 = vunpack.c.l.b16 %v227
  %v936 = vunpack.c.l.b16 %v228
  %v937 = vunpack.c.l.b16 %v229
  %v938 = vunpack.c.l.b16 %v230
  %v939 = vunpack.c.l.b16 %v231
  %v940 = vunpack.c.l.b16 %v232
  %v941 = vunpack.c.l.b16 %v233
  %v942 = vunpack.c.l.b16 %v234
  %v943 = vunpack.c.l.b16 %v235
  %v944 = vunpack.c.l.b16 %v236
  %v945 = vunpack.c.l.b16 %v237
  %v946 = vunpack.c.l.b16 %v238
  %v947 = vunpack.c.l.b16 %v239
  %v948 = vunpack.c.l.b16 %v240
  %v949 = vunpack.c.l.b16 %v241
  %v950 = vunpack.c.l.b16 %v242
  %v951 = vunpack.c.l.b16 %v243
  %v952 = vunpack.c.l.b16 %v244
  %v953 = vunpack.c.l.b16 %v245
  %v954 = vunpack.c.l.b16 %v246
  %v955 = vunpack.c.l.b16 %v247
  %v956 = vunpack.c.l.b16 %v248
  %v957 = vunpack.c.l.b16 %v249
  %v958 = vunpack.c.l.b16 %v250
  %v959 = vunpack.c.l.b16 %v251
  %v960 = vunpack.c.l.b16 %v252
  %v961 = vunpack.c.l.b16 %v253
  %v962 = vunpack.c.l.b16 %v254
  %v963 = vunpack.c.l.b16 %v255
  %v964 = vunpack.c.l.b16 %v256
  %v965 = vunpack.c.l.b16 %v257
  %v966 = vunpack.c.l.b16 %v258
  %v967 = vunpack.c.l.b16 %v259
  %v968 = vunpack.c.l.b16 %v260
  %v969 = vunpack.c.l.b16 %v261
  %v970 = vunpack.c.l.b16 %v262
  %v971 = vunpack.c.l.b16 %v263
  %v972 = vunpack.c.l.b16 %v264
  %v973 = vunpack.c.l.b16 %v265
  %v974 = vunpack.c.l.b16 %v266
  %v975 = vunpack.c.l.b16 %v267
  %v976 = vunpack.c.l.b16 %v268
  %v977 = vunpack.c.l.b16 %v269
  %v978 = vunpack.c.l.b16 %v270
  %v979 = vunpack.c.l.b16 %v271
  %v980 = vunpack.c.l.b16 %v272
  %v981 = vunpack.c.l.b16 %v273
  %v982 = vunpack.c.l.b16 %v274
  %v983 = vpack.c.b16 %v784, %v783
  %v984 = vpack.c.b16 %v786, %v785
  %v985 = vpack.c.b16 %v788, %v787
  %v986 = vpack.c.b16 %v790, %v789
  %v987 = vpack.c.b16 %v792, %v791
  %v988 = vpack.c.b16 %v794, %v793
  %v989 = vpack.c.b16 %v796, %v795
  %v990 = vpack.c.b16 %v798, %v797
  %v991 = vpack.c.b16 %v800, %v799
  %v992 = vpack.c.b16 %v802, %v801
  %v993 = vpack.c.b16 %v804, %v803
  %v994 = vpack.c.b16 %v806, %v805
  %v995 = vpack.c.b16 %v808, %v807
  %v996 = vpack.c.b16 %v810, %v809
  %v997 = vpack.c.b16 %v812, %v811
  %v998 = vpack.c.b16 %v814, %v813
  %v999 = vpack.c.b16 %v816, %v815
  %v1000 = vpack.c.b16 %v818, %v817
  %v1001 = vpack.c.b16 %v820, %v819
  %v1002 = vpack.c.b16 %v822, %v821
  %v1003 = vpack.c.b16 %v824, %v823
  %v1004 = vpack.c.b16 %v826, %v825
  %v1005 = vpack.c.b16 %v828, %v827
  %v1006 = vpack.c.b16 %v830, %v829
  %v1007 = vpack.c.b16 %v832, %v831
  %v1008 = vpack.c.b16 %v834, %v833
  %v1009 = vpack.c.b16 %v836, %v835
  %v1010 = vpack.c.b16 %v838, %v837
  %v1011 = vpack.c.b16 %v840, %v839
  %v1012 = vpack.c.b16 %v842, %v841
  %v1013 = vpack.c.b16 %v844, %v843
  %v1014 = vpack.c.b16 %v846, %v845
  %v1015 = vpack.c.b16 %v848, %v847
  %v1016 = vpack.c.b16 %v850, %v849
  %v1017 = vpack.c.b16 %v852, %v851
  %v1018 = vpack.c.b16 %v854, %v853
  %v1019 = vpack.c.b16 %v856, %v855
  %v1020 = vpack.c.b16 %v858, %v857
  %v1021 = vpack.c.b16 %v860, %v859
  %v1022 = vpack.c.b16 %v862, %v861
  %v1023 = vpack.c.b16 %v864, %v863
  %v1024 = vpack.c.b16 %v866, %v865
  %v1025 = vpack.c.b16 %v868, %v867
  %v1026 = vpack.c.b16 %v870, %v869
  %v1027 = vpack.c.b16 %v872, %v871
  %v1028 = vpack.c.b16 %v874, %v873
  %v1029 = vpack.c.b16 %v876, %v875
  %v1030 = vpack.c.b16 %v878, %v877
  %v1031 = vpack.c.b16 %v880, %v879
  %v1032 = vpack.c.b16 %v882, %v881
  %v1033 = vpack.c.b16 %v884, %v883
  %v1034 = vpack.c.b16 %v886, %v885
  %v1035 = vpack.c.b16 %v888, %v887
  %v1036 = vpack.c.b16 %v890, %v889
  %v1037 = vpack.c.b16 %v892, %v891
  %v1038 = vpack.c.b16 %v894, %v893
  %v1039 = vpack.c.b16 %v896, %v895
  %v1040 = vpack.c.b16 %v898, %v897
  %v1041 = vpack.c.b16 %v900, %v899
  %v1042 = vpack.c.b16 %v902, %v901
  %v1043 = vpack.c.b16 %v904, %v903
  %v1044 = vpack.c.b16 %v906, %v905
  %v1045 = vpack.c.b16 %v908, %v907
  %v1046 = vpack.c.b16 %v910, %v909
  %v1047 = vpack.c.b16 %v912, %v911
  %v1048 = vpack.c.b16 %v914, %v913
  %v1049 = vpack.c.b16 %v916, %v915
  %v1050 = vpack.c.b16 %v918, %v917
  %v1051 = vpack.c.b16 %v920, %v919
  %v1052 = vpack.c.b16 %v922, %v921
  %v1053 = vpack.c.b16 %v924, %v923
  %v1054 = vpack.c.b16 %v926, %v925
  %v1055 = vpack.c.b16 %v928, %v927
  %v1056 = vpack.c.b16 %v930, %v929
  %v1057 = vpack.c.b16 %v932, %v931
  %v1058 = vpack.c.b16 %v934, %v933
  %v1059 = vpack.c.b16 %v936, %v935
  %v1060 = vpack.c.b16 %v938, %v937
  %v1061 = vpack.c.b16 %v940, %v939
  %v1062 = vpack.c.b16 %v942, %v941
  %v1063 = vpack.c.b16 %v944, %v943
  %v1064 = vpack.c.b16 %v946, %v945
  %v1065 = vpack.c.b16 %v948, %v947
  %v1066 = vpack.c.b16 %v950, %v949
  %v1067 = vpack.c.b16 %v952, %v951
  %v1068 = vpack.c.b16 %v954, %v953
  %v1069 = vpack.c.b16 %v956, %v955
  %v1070 = vpack.c.b16 %v958, %v957
  %v1071 = vpack.c.b16 %v960, %v959
  %v1072 = vpack.c.b16 %v962, %v961
  %v1073 = vpack.c.b16 %v964, %v963
  %v1074 = vpack.c.b16 %v966, %v965
  %v1075 = vpack.c.b16 %v968, %v967
  %v1076 = vpack.c.b16 %v970, %v969
  %v1077 = vpack.c.b16 %v972, %v971
  %v1078 = vpack.c.b16 %v974, %v973
  %v1079 = vpack.c.b16 %v976, %v975
  %v1080 = vpack.c.b16 %v978, %v977
  %v1081 = vpack.c.b16 %v980, %v979
  %v1082 = vpack.c.b16 %v982, %v981
  %vm1183 = vcmask 523264
  %v1185 = vsel %vm1183, %v495, 0
  %v1188 = vsel %vm1183, %v508, 0
  %v1191 = vsel %vm1183, %v521, 0
  %v1194 = vsel %vm1183, %v534, 0
  %1196 = vmatprep.subr.bf16.mxu0 0
  %1197 = vmatpush1.bf16.msra.mxu0 %v983
  %1198 = vmatprep.subr.bf16.mxu0 0
  %1199 = vmatpush1.bf16.msra.mxu0 %v984
  %1200 = vmatprep.subr.bf16.mxu0 0
  %1201 = vmatpush1.bf16.msra.mxu0 %v985
  %1202 = vmatprep.subr.bf16.mxu0 0
  %1203 = vmatpush1.bf16.msra.mxu0 %v986
  %1204 = vmatprep.subr.bf16.mxu0 0
  %1205 = vmatpush1.bf16.msra.mxu0 %v987
  %1206 = vmatprep.subr.bf16.mxu0 0
  %1207 = vmatpush1.bf16.msra.mxu0 %v988
  %1208 = vmatprep.subr.bf16.mxu0 0
  %1209 = vmatpush1.bf16.msra.mxu0 %v989
  %1210 = vmatprep.subr.bf16.mxu0 0
  %1211 = vmatpush1.bf16.msra.mxu0 %v990
  %1212 = vmatprep.subr.bf16.mxu0 0
  %1213 = vmatpush1.bf16.msra.mxu0 %v991
  %1214 = vmatprep.subr.bf16.mxu0 0
  %1215 = vmatpush1.bf16.msra.mxu0 %v992
  %1216 = vmatprep.subr.bf16.mxu0 0
  %1217 = vmatpush1.bf16.msra.mxu0 %v993
  %1218 = vmatprep.subr.bf16.mxu0 0
  %1219 = vmatpush1.bf16.msra.mxu0 %v994
  %1220 = vmatprep.subr.bf16.mxu0 0
  %1221 = vmatpush1.bf16.msra.mxu0 %v995
  %1222 = vmatprep.subr.bf16.mxu0 0
  %1223 = vmatpush1.bf16.msra.mxu0 %v996
  %1224 = vmatprep.subr.bf16.mxu0 0
  %1225 = vmatpush1.bf16.msra.mxu0 %v997
  %1226 = vmatprep.subr.bf16.mxu0 0
  %1227 = vmatpush1.bf16.msra.mxu0 %v998
  %1228 = vmatprep.mubr.bf16.mxu0 %v484
  %1229 = vmatmul.mubr.bf16.gmra.mrb[0].mxu0 %v483
  %v1230 = vpop.f32.mrb[0].mxu0
  %v1231 = vadd.f32 %v286, %v1230
  %v1232 = vpop.f32.mrb[0].mxu0
  %v1233 = vpop.f32.mrb[0].mxu0
  %v1234 = vadd.f32 %v291, %v1233
  %v1235 = vpop.f32.mrb[0].mxu0
  %1236 = vmatprep.mubr.bf16.mxu0 %v497
  %1237 = vmatmul.mubr.bf16.gmra.mrb[0].mxu0 %v496
  %v1238 = vpop.f32.mrb[0].mxu0
  %v1239 = vadd.f32 %v296, %v1238
  %v1240 = vpop.f32.mrb[0].mxu0
  %v1241 = vpop.f32.mrb[0].mxu0
  %v1242 = vadd.f32 %v301, %v1241
  %v1243 = vpop.f32.mrb[0].mxu0
  %1244 = vmatprep.mubr.bf16.mxu0 %v510
  %1245 = vmatmul.mubr.bf16.gmra.mrb[0].mxu0 %v509
  %v1246 = vpop.f32.mrb[0].mxu0
  %v1247 = vadd.f32 %v306, %v1246
  %v1248 = vpop.f32.mrb[0].mxu0
  %v1249 = vpop.f32.mrb[0].mxu0
  %v1250 = vadd.f32 %v311, %v1249
  %v1251 = vpop.f32.mrb[0].mxu0
  %1252 = vmatprep.mubr.bf16.mxu0 %v523
  %1253 = vmatmul.mubr.bf16.gmra.mrb[0].mxu0 %v522
  %v1254 = vpop.f32.mrb[0].mxu0
  %v1255 = vadd.f32 %v316, %v1254
  %v1256 = vpop.f32.mrb[0].mxu0
  %v1257 = vpop.f32.mrb[0].mxu0
  %v1258 = vadd.f32 %v321, %v1257
  %v1259 = vpop.f32.mrb[0].mxu0
  %1260 = vdwg.mxu0
  %1261 = vmatprep.subr.bf16.mxu0 0
  %1262 = vmatpush1.bf16.msra.mxu0 %v999
  %1263 = vmatprep.subr.bf16.mxu0 0
  %1264 = vmatpush1.bf16.msra.mxu0 %v1000
  %1265 = vmatprep.subr.bf16.mxu0 0
  %1266 = vmatpush1.bf16.msra.mxu0 %v1001
  %1267 = vmatprep.subr.bf16.mxu0 0
  %1268 = vmatpush1.bf16.msra.mxu0 %v1002
  %1269 = vmatprep.subr.bf16.mxu0 0
  %1270 = vmatpush1.bf16.msra.mxu0 %v1003
  %1271 = vmatprep.subr.bf16.mxu0 0
  %1272 = vmatpush1.bf16.msra.mxu0 %v1004
  %1273 = vmatprep.subr.bf16.mxu0 0
  %1274 = vmatpush1.bf16.msra.mxu0 %v1005
  %1275 = vmatprep.subr.bf16.mxu0 0
  %1276 = vmatpush1.bf16.msra.mxu0 %v1006
  %1277 = vmatprep.subr.bf16.mxu0 0
  %1278 = vmatpush1.bf16.msra.mxu0 %v1007
  %1279 = vmatprep.subr.bf16.mxu0 0
  %1280 = vmatpush1.bf16.msra.mxu0 %v1008
  %1281 = vmatprep.subr.bf16.mxu0 0
  %1282 = vmatpush1.bf16.msra.mxu0 %v1009
  %1283 = vmatprep.subr.bf16.mxu0 0
  %1284 = vmatpush1.bf16.msra.mxu0 %v1010
  %1285 = vmatprep.subr.bf16.mxu0 0
  %1286 = vmatpush1.bf16.msra.mxu0 %v1011
  %1287 = vmatprep.subr.bf16.mxu0 0
  %1288 = vmatpush1.bf16.msra.mxu0 %v1012
  %1289 = vmatprep.subr.bf16.mxu0 0
  %1290 = vmatpush1.bf16.msra.mxu0 %v1013
  %1291 = vmatprep.subr.bf16.mxu0 0
  %1292 = vmatpush1.bf16.msra.mxu0 %v1014
  %1293 = vmatprep.mubr.bf16.mxu0 %v486
  %1294 = vmatmul.mubr.bf16.gmra.mrb[0].mxu0 %v485
  %v1295 = vpop.f32.mrb[0].mxu0
  %v1296 = vadd.f32 %v1231, %v1295
  %v1297 = vpop.f32.mrb[0].mxu0
  %v1298 = vpop.f32.mrb[0].mxu0
  %v1299 = vadd.f32 %v1234, %v1298
  %v1300 = vpop.f32.mrb[0].mxu0
  %1301 = vmatprep.mubr.bf16.mxu0 %v499
  %1302 = vmatmul.mubr.bf16.gmra.mrb[0].mxu0 %v498
  %v1303 = vpop.f32.mrb[0].mxu0
  %v1304 = vadd.f32 %v1239, %v1303
  %v1305 = vpop.f32.mrb[0].mxu0
  %v1306 = vpop.f32.mrb[0].mxu0
  %v1307 = vadd.f32 %v1242, %v1306
  %v1308 = vpop.f32.mrb[0].mxu0
  %1309 = vmatprep.mubr.bf16.mxu0 %v512
  %1310 = vmatmul.mubr.bf16.gmra.mrb[0].mxu0 %v511
  %v1311 = vpop.f32.mrb[0].mxu0
  %v1312 = vadd.f32 %v1247, %v1311
  %v1313 = vpop.f32.mrb[0].mxu0
  %v1314 = vpop.f32.mrb[0].mxu0
  %v1315 = vadd.f32 %v1250, %v1314
  %v1316 = vpop.f32.mrb[0].mxu0
  %1317 = vmatprep.mubr.bf16.mxu0 %v525
  %1318 = vmatmul.mubr.bf16.gmra.mrb[0].mxu0 %v524
  %v1319 = vpop.f32.mrb[0].mxu0
  %v1320 = vadd.f32 %v1255, %v1319
  %v1321 = vpop.f32.mrb[0].mxu0
  %v1322 = vpop.f32.mrb[0].mxu0
  %v1323 = vadd.f32 %v1258, %v1322
  %v1324 = vpop.f32.mrb[0].mxu0
  %1325 = vdwg.mxu0
  %1326 = vmatprep.subr.bf16.mxu0 0
  %1327 = vmatpush1.bf16.msra.mxu0 %v1015
  %1328 = vmatprep.subr.bf16.mxu0 0
  %1329 = vmatpush1.bf16.msra.mxu0 %v1016
  %1330 = vmatprep.subr.bf16.mxu0 0
  %1331 = vmatpush1.bf16.msra.mxu0 %v1017
  %1332 = vmatprep.subr.bf16.mxu0 0
  %1333 = vmatpush1.bf16.msra.mxu0 %v1018
  %1334 = vmatprep.subr.bf16.mxu0 0
  %1335 = vmatpush1.bf16.msra.mxu0 %v1019
  %1336 = vmatprep.subr.bf16.mxu0 0
  %1337 = vmatpush1.bf16.msra.mxu0 %v1020
  %1338 = vmatprep.subr.bf16.mxu0 0
  %1339 = vmatpush1.bf16.msra.mxu0 %v1021
  %1340 = vmatprep.subr.bf16.mxu0 0
  %1341 = vmatpush1.bf16.msra.mxu0 %v1022
  %1342 = vmatprep.subr.bf16.mxu0 0
  %1343 = vmatpush1.bf16.msra.mxu0 %v1023
  %1344 = vmatprep.subr.bf16.mxu0 0
  %1345 = vmatpush1.bf16.msra.mxu0 %v1024
  %1346 = vmatprep.subr.bf16.mxu0 0
  %1347 = vmatpush1.bf16.msra.mxu0 %v1025
  %1348 = vmatprep.subr.bf16.mxu0 0
  %1349 = vmatpush1.bf16.msra.mxu0 %v1026
  %1350 = vmatprep.subr.bf16.mxu0 0
  %1351 = vmatpush1.bf16.msra.mxu0 %v1027
  %1352 = vmatprep.subr.bf16.mxu0 0
  %1353 = vmatpush1.bf16.msra.mxu0 %v1028
  %1354 = vmatprep.subr.bf16.mxu0 0
  %1355 = vmatpush1.bf16.msra.mxu0 %v1029
  %1356 = vmatprep.subr.bf16.mxu0 0
  %1357 = vmatpush1.bf16.msra.mxu0 %v1030
  %1358 = vmatprep.mubr.bf16.mxu0 %v488
  %1359 = vmatmul.mubr.bf16.gmra.mrb[0].mxu0 %v487
  %v1360 = vpop.f32.mrb[0].mxu0
  %v1361 = vadd.f32 %v1296, %v1360
  %v1362 = vpop.f32.mrb[0].mxu0
  %v1363 = vpop.f32.mrb[0].mxu0
  %v1364 = vadd.f32 %v1299, %v1363
  %v1365 = vpop.f32.mrb[0].mxu0
  %1366 = vmatprep.mubr.bf16.mxu0 %v501
  %1367 = vmatmul.mubr.bf16.gmra.mrb[0].mxu0 %v500
  %v1368 = vpop.f32.mrb[0].mxu0
  %v1369 = vadd.f32 %v1304, %v1368
  %v1370 = vpop.f32.mrb[0].mxu0
  %v1371 = vpop.f32.mrb[0].mxu0
  %v1372 = vadd.f32 %v1307, %v1371
  %v1373 = vpop.f32.mrb[0].mxu0
  %1374 = vmatprep.mubr.bf16.mxu0 %v514
  %1375 = vmatmul.mubr.bf16.gmra.mrb[0].mxu0 %v513
  %v1376 = vpop.f32.mrb[0].mxu0
  %v1377 = vadd.f32 %v1312, %v1376
  %v1378 = vpop.f32.mrb[0].mxu0
  %v1379 = vpop.f32.mrb[0].mxu0
  %v1380 = vadd.f32 %v1315, %v1379
  %v1381 = vpop.f32.mrb[0].mxu0
  %1382 = vmatprep.mubr.bf16.mxu0 %v527
  %1383 = vmatmul.mubr.bf16.gmra.mrb[0].mxu0 %v526
  %v1384 = vpop.f32.mrb[0].mxu0
  %v1385 = vadd.f32 %v1320, %v1384
  %v1386 = vpop.f32.mrb[0].mxu0
  %v1387 = vpop.f32.mrb[0].mxu0
  %v1388 = vadd.f32 %v1323, %v1387
  %v1389 = vpop.f32.mrb[0].mxu0
  %1390 = vdwg.mxu0
  %1391 = vmatprep.subr.bf16.mxu0 0
  %1392 = vmatpush1.bf16.msra.mxu0 %v1031
  %1393 = vmatprep.subr.bf16.mxu0 0
  %1394 = vmatpush1.bf16.msra.mxu0 %v1032
  %1395 = vmatprep.subr.bf16.mxu0 0
  %1396 = vmatpush1.bf16.msra.mxu0 %v1033
  %1397 = vmatprep.subr.bf16.mxu0 0
  %1398 = vmatpush1.bf16.msra.mxu0 %v1034
  %1399 = vmatprep.subr.bf16.mxu0 0
  %1400 = vmatpush1.bf16.msra.mxu0 %v1035
  %1401 = vmatprep.subr.bf16.mxu0 0
  %1402 = vmatpush1.bf16.msra.mxu0 %v1036
  %1403 = vmatprep.subr.bf16.mxu0 0
  %1404 = vmatpush1.bf16.msra.mxu0 %v1037
  %1405 = vmatprep.subr.bf16.mxu0 0
  %1406 = vmatpush1.bf16.msra.mxu0 %v1038
  %1407 = vmatprep.subr.bf16.mxu0 0
  %1408 = vmatpush1.bf16.msra.mxu0 %v1039
  %1409 = vmatprep.subr.bf16.mxu0 0
  %1410 = vmatpush1.bf16.msra.mxu0 %v1040
  %1411 = vmatprep.subr.bf16.mxu0 0
  %1412 = vmatpush1.bf16.msra.mxu0 %v1041
  %1413 = vmatprep.subr.bf16.mxu0 0
  %1414 = vmatpush1.bf16.msra.mxu0 %v1042
  %1415 = vmatprep.subr.bf16.mxu0 0
  %1416 = vmatpush1.bf16.msra.mxu0 %v1043
  %1417 = vmatprep.subr.bf16.mxu0 0
  %1418 = vmatpush1.bf16.msra.mxu0 %v1044
  %1419 = vmatprep.subr.bf16.mxu0 0
  %1420 = vmatpush1.bf16.msra.mxu0 %v1045
  %1421 = vmatprep.subr.bf16.mxu0 0
  %1422 = vmatpush1.bf16.msra.mxu0 %v1046
  %1423 = vmatprep.mubr.bf16.mxu0 %v490
  %1424 = vmatmul.mubr.bf16.gmra.mrb[0].mxu0 %v489
  %v1425 = vpop.f32.mrb[0].mxu0
  %v1426 = vadd.f32 %v1361, %v1425
  %v1427 = vpop.f32.mrb[0].mxu0
  %v1428 = vpop.f32.mrb[0].mxu0
  %v1429 = vadd.f32 %v1364, %v1428
  %v1430 = vpop.f32.mrb[0].mxu0
  %1431 = vmatprep.mubr.bf16.mxu0 %v503
  %1432 = vmatmul.mubr.bf16.gmra.mrb[0].mxu0 %v502
  %v1433 = vpop.f32.mrb[0].mxu0
  %v1434 = vadd.f32 %v1369, %v1433
  %v1435 = vpop.f32.mrb[0].mxu0
  %v1436 = vpop.f32.mrb[0].mxu0
  %v1437 = vadd.f32 %v1372, %v1436
  %v1438 = vpop.f32.mrb[0].mxu0
  %1439 = vmatprep.mubr.bf16.mxu0 %v516
  %1440 = vmatmul.mubr.bf16.gmra.mrb[0].mxu0 %v515
  %v1441 = vpop.f32.mrb[0].mxu0
  %v1442 = vadd.f32 %v1377, %v1441
  %v1443 = vpop.f32.mrb[0].mxu0
  %v1444 = vpop.f32.mrb[0].mxu0
  %v1445 = vadd.f32 %v1380, %v1444
  %v1446 = vpop.f32.mrb[0].mxu0
  %1447 = vmatprep.mubr.bf16.mxu0 %v529
  %1448 = vmatmul.mubr.bf16.gmra.mrb[0].mxu0 %v528
  %v1449 = vpop.f32.mrb[0].mxu0
  %v1450 = vadd.f32 %v1385, %v1449
  %v1451 = vpop.f32.mrb[0].mxu0
  %v1452 = vpop.f32.mrb[0].mxu0
  %v1453 = vadd.f32 %v1388, %v1452
  %v1454 = vpop.f32.mrb[0].mxu0
  %1455 = vdwg.mxu0
  %1456 = vmatprep.subr.bf16.mxu0 0
  %1457 = vmatpush1.bf16.msra.mxu0 %v1047
  %1458 = vmatprep.subr.bf16.mxu0 0
  %1459 = vmatpush1.bf16.msra.mxu0 %v1048
  %1460 = vmatprep.subr.bf16.mxu0 0
  %1461 = vmatpush1.bf16.msra.mxu0 %v1049
  %1462 = vmatprep.subr.bf16.mxu0 0
  %1463 = vmatpush1.bf16.msra.mxu0 %v1050
  %1464 = vmatprep.subr.bf16.mxu0 0
  %1465 = vmatpush1.bf16.msra.mxu0 %v1051
  %1466 = vmatprep.subr.bf16.mxu0 0
  %1467 = vmatpush1.bf16.msra.mxu0 %v1052
  %1468 = vmatprep.subr.bf16.mxu0 0
  %1469 = vmatpush1.bf16.msra.mxu0 %v1053
  %1470 = vmatprep.subr.bf16.mxu0 0
  %1471 = vmatpush1.bf16.msra.mxu0 %v1054
  %1472 = vmatprep.subr.bf16.mxu0 0
  %1473 = vmatpush1.bf16.msra.mxu0 %v1055
  %1474 = vmatprep.subr.bf16.mxu0 0
  %1475 = vmatpush1.bf16.msra.mxu0 %v1056
  %1476 = vmatprep.subr.bf16.mxu0 0
  %1477 = vmatpush1.bf16.msra.mxu0 %v1057
  %1478 = vmatprep.subr.bf16.mxu0 0
  %1479 = vmatpush1.bf16.msra.mxu0 %v1058
  %1480 = vmatprep.subr.bf16.mxu0 0
  %1481 = vmatpush1.bf16.msra.mxu0 %v1059
  %1482 = vmatprep.subr.bf16.mxu0 0
  %1483 = vmatpush1.bf16.msra.mxu0 %v1060
  %1484 = vmatprep.subr.bf16.mxu0 0
  %1485 = vmatpush1.bf16.msra.mxu0 %v1061
  %1486 = vmatprep.subr.bf16.mxu0 0
  %1487 = vmatpush1.bf16.msra.mxu0 %v1062
  %1488 = vmatprep.mubr.bf16.mxu0 %v492
  %1489 = vmatmul.mubr.bf16.gmra.mrb[0].mxu0 %v491
  %v1490 = vpop.f32.mrb[0].mxu0
  %v1491 = vadd.f32 %v1426, %v1490
  %v1492 = vpop.f32.mrb[0].mxu0
  %v1493 = vpop.f32.mrb[0].mxu0
  %v1494 = vadd.f32 %v1429, %v1493
  %v1495 = vpop.f32.mrb[0].mxu0
  %1496 = vmatprep.mubr.bf16.mxu0 %v505
  %1497 = vmatmul.mubr.bf16.gmra.mrb[0].mxu0 %v504
  %v1498 = vpop.f32.mrb[0].mxu0
  %v1499 = vadd.f32 %v1434, %v1498
  %v1500 = vpop.f32.mrb[0].mxu0
  %v1501 = vpop.f32.mrb[0].mxu0
  %v1502 = vadd.f32 %v1437, %v1501
  %v1503 = vpop.f32.mrb[0].mxu0
  %1504 = vmatprep.mubr.bf16.mxu0 %v518
  %1505 = vmatmul.mubr.bf16.gmra.mrb[0].mxu0 %v517
  %v1506 = vpop.f32.mrb[0].mxu0
  %v1507 = vadd.f32 %v1442, %v1506
  %v1508 = vpop.f32.mrb[0].mxu0
  %v1509 = vpop.f32.mrb[0].mxu0
  %v1510 = vadd.f32 %v1445, %v1509
  %v1511 = vpop.f32.mrb[0].mxu0
  %1512 = vmatprep.mubr.bf16.mxu0 %v531
  %1513 = vmatmul.mubr.bf16.gmra.mrb[0].mxu0 %v530
  %v1514 = vpop.f32.mrb[0].mxu0
  %v1515 = vadd.f32 %v1450, %v1514
  %v1516 = vpop.f32.mrb[0].mxu0
  %v1517 = vpop.f32.mrb[0].mxu0
  %v1518 = vadd.f32 %v1453, %v1517
  %v1519 = vpop.f32.mrb[0].mxu0
  %1520 = vdwg.mxu0
  %1521 = vmatprep.subr.bf16.mxu0 0
  %1522 = vmatpush1.bf16.msra.mxu0 %v1063
  %1523 = vmatprep.subr.bf16.mxu0 0
  %1524 = vmatpush1.bf16.msra.mxu0 %v1064
  %1525 = vmatprep.subr.bf16.mxu0 0
  %1526 = vmatpush1.bf16.msra.mxu0 %v1065
  %1527 = vmatprep.subr.bf16.mxu0 0
  %1528 = vmatpush1.bf16.msra.mxu0 %v1066
  %1529 = vmatprep.subr.bf16.mxu0 0
  %1530 = vmatpush1.bf16.msra.mxu0 %v1067
  %1531 = vmatprep.subr.bf16.mxu0 0
  %1532 = vmatpush1.bf16.msra.mxu0 %v1068
  %1533 = vmatprep.subr.bf16.mxu0 0
  %1534 = vmatpush1.bf16.msra.mxu0 %v1069
  %1535 = vmatprep.subr.bf16.mxu0 0
  %1536 = vmatpush1.bf16.msra.mxu0 %v1070
  %1537 = vmatprep.subr.bf16.mxu0 0
  %1538 = vmatpush1.bf16.msra.mxu0 %v1071
  %1539 = vmatprep.subr.bf16.mxu0 0
  %1540 = vmatpush1.bf16.msra.mxu0 %v1072
  %1541 = vmatprep.subr.bf16.mxu0 0
  %1542 = vmatpush1.bf16.msra.mxu0 %v1073
  %1543 = vmatprep.subr.bf16.mxu0 0
  %1544 = vmatpush1.bf16.msra.mxu0 %v1074
  %1545 = vmatprep.subr.bf16.mxu0 0
  %1546 = vmatpush1.bf16.msra.mxu0 %v1075
  %1547 = vmatprep.subr.bf16.mxu0 0
  %1548 = vmatpush1.bf16.msra.mxu0 %v1076
  %1549 = vmatprep.subr.bf16.mxu0 0
  %1550 = vmatpush1.bf16.msra.mxu0 %v1077
  %1551 = vmatprep.subr.bf16.mxu0 0
  %1552 = vmatpush1.bf16.msra.mxu0 %v1078
  %1553 = vmatprep.mubr.bf16.mxu0 %v494
  %1554 = vmatmul.mubr.bf16.gmra.mrb[0].mxu0 %v493
  %v1555 = vpop.f32.mrb[0].mxu0
  %v1556 = vadd.f32 %v1491, %v1555
  %v1557 = vpop.f32.mrb[0].mxu0
  %v1558 = vpop.f32.mrb[0].mxu0
  %v1559 = vadd.f32 %v1494, %v1558
  %v1560 = vpop.f32.mrb[0].mxu0
  %1561 = vmatprep.mubr.bf16.mxu0 %v507
  %1562 = vmatmul.mubr.bf16.gmra.mrb[0].mxu0 %v506
  %v1563 = vpop.f32.mrb[0].mxu0
  %v1564 = vadd.f32 %v1499, %v1563
  %v1565 = vpop.f32.mrb[0].mxu0
  %v1566 = vpop.f32.mrb[0].mxu0
  %v1567 = vadd.f32 %v1502, %v1566
  %v1568 = vpop.f32.mrb[0].mxu0
  %1569 = vmatprep.mubr.bf16.mxu0 %v520
  %1570 = vmatmul.mubr.bf16.gmra.mrb[0].mxu0 %v519
  %v1571 = vpop.f32.mrb[0].mxu0
  %v1572 = vadd.f32 %v1507, %v1571
  %v1573 = vpop.f32.mrb[0].mxu0
  %v1574 = vpop.f32.mrb[0].mxu0
  %v1575 = vadd.f32 %v1510, %v1574
  %v1576 = vpop.f32.mrb[0].mxu0
  %1577 = vmatprep.mubr.bf16.mxu0 %v533
  %1578 = vmatmul.mubr.bf16.gmra.mrb[0].mxu0 %v532
  %v1579 = vpop.f32.mrb[0].mxu0
  %v1580 = vadd.f32 %v1515, %v1579
  %v1581 = vpop.f32.mrb[0].mxu0
  %v1582 = vpop.f32.mrb[0].mxu0
  %v1583 = vadd.f32 %v1518, %v1582
  %v1584 = vpop.f32.mrb[0].mxu0
  %1585 = vdwg.mxu0
  %1586 = vmatprep.subr.bf16.mxu0 0
  %1587 = vmatpush1.bf16.msra.mxu0 %v1079
  %1588 = vmatprep.subr.bf16.mxu0 0
  %1589 = vmatpush1.bf16.msra.mxu0 %v1080
  %1590 = vmatprep.subr.bf16.mxu0 0
  %1591 = vmatpush1.bf16.msra.mxu0 %v1081
  %1592 = vmatprep.subr.bf16.mxu0 0
  %1593 = vmatpush1.bf16.msra.mxu0 %v1082
  %1594 = vmatprep.subr.bf16.mxu0 0
  %1595 = vmatpush1.bf16.msra.mxu0 0
  %1596 = vmatprep.subr.bf16.mxu0 0
  %1597 = vmatpush1.bf16.msra.mxu0 0
  %1598 = vmatprep.subr.bf16.mxu0 0
  %1599 = vmatpush1.bf16.msra.mxu0 0
  %1600 = vmatprep.subr.bf16.mxu0 0
  %1601 = vmatpush1.bf16.msra.mxu0 0
  %1602 = vmatprep.subr.bf16.mxu0 0
  %1603 = vmatpush1.bf16.msra.mxu0 0
  %1604 = vmatprep.subr.bf16.mxu0 0
  %1605 = vmatpush1.bf16.msra.mxu0 0
  %1606 = vmatprep.subr.bf16.mxu0 0
  %1607 = vmatpush1.bf16.msra.mxu0 0
  %1608 = vmatprep.subr.bf16.mxu0 0
  %1609 = vmatpush1.bf16.msra.mxu0 0
  %1610 = vmatprep.subr.bf16.mxu0 0
  %1611 = vmatpush1.bf16.msra.mxu0 0
  %1612 = vmatprep.subr.bf16.mxu0 0
  %1613 = vmatpush1.bf16.msra.mxu0 0
  %1614 = vmatprep.subr.bf16.mxu0 0
  %1615 = vmatpush1.bf16.msra.mxu0 0
  %1616 = vmatprep.subr.bf16.mxu0 0
  %1617 = vmatpush1.bf16.msra.mxu0 0
  %1618 = vmatprep.mubr.bf16.mxu0 0
  %1619 = vmatmul.mubr.bf16.gmra.mrb[0].mxu0 %v1185
  %v1620 = vpop.f32.mrb[0].mxu0
  %v1621 = vadd.f32 %v1556, %v1620
  %v1622 = vpop.f32.mrb[0].mxu0
  %v1623 = vpop.f32.mrb[0].mxu0
  %v1624 = vadd.f32 %v1559, %v1623
  %v1625 = vpop.f32.mrb[0].mxu0
  %1626 = vmatprep.mubr.bf16.mxu0 0
  %1627 = vmatmul.mubr.bf16.gmra.mrb[0].mxu0 %v1188
  %v1628 = vpop.f32.mrb[0].mxu0
  %v1629 = vadd.f32 %v1564, %v1628
  %v1630 = vpop.f32.mrb[0].mxu0
  %v1631 = vpop.f32.mrb[0].mxu0
  %v1632 = vadd.f32 %v1567, %v1631
  %v1633 = vpop.f32.mrb[0].mxu0
  %1634 = vmatprep.mubr.bf16.mxu0 0
  %1635 = vmatmul.mubr.bf16.gmra.mrb[0].mxu0 %v1191
  %v1636 = vpop.f32.mrb[0].mxu0
  %v1637 = vadd.f32 %v1572, %v1636
  %v1638 = vpop.f32.mrb[0].mxu0
  %v1639 = vpop.f32.mrb[0].mxu0
  %v1640 = vadd.f32 %v1575, %v1639
  %v1641 = vpop.f32.mrb[0].mxu0
  %1642 = vmatprep.mubr.bf16.mxu0 0
  %1643 = vmatmul.mubr.bf16.gmra.mrb[0].mxu0 %v1194
  %v1644 = vpop.f32.mrb[0].mxu0
  %v1645 = vadd.f32 %v1580, %v1644
  %v1646 = vpop.f32.mrb[0].mxu0
  %v1647 = vpop.f32.mrb[0].mxu0
  %v1648 = vadd.f32 %v1583, %v1647
  %v1649 = vpop.f32.mrb[0].mxu0
  %1650 = vdwg.mxu0
  %s1651 = sld [smem:[#allocation2]]
  %vm1652 = vcmp.gt.f32.partialorder %v1621, 0.0
  %vm1653 = vcmp.gt.f32.partialorder %v1624, 0.0
  %vm1654 = vcmp.gt.f32.partialorder %v1629, 0.0
  %vm1655 = vcmp.gt.f32.partialorder %v1632, 0.0
  %vm1656 = vcmp.gt.f32.partialorder %v1637, 0.0
  %vm1657 = vcmp.gt.f32.partialorder %v1640, 0.0
  %vm1658 = vcmp.gt.f32.partialorder %v1645, 0.0
  %vm1659 = vcmp.gt.f32.partialorder %v1648, 0.0
  %v1660 = vstv %s1651
  %v1661 = vmul.f32 %v1660, %v1621
  %v1662 = vmul.f32 %v1660, %v1624
  %v1663 = vmul.f32 %v1660, %v1629
  %v1664 = vmul.f32 %v1660, %v1632
  %v1665 = vmul.f32 %v1660, %v1637
  %v1666 = vmul.f32 %v1660, %v1640
  %v1667 = vmul.f32 %v1660, %v1645
  %v1668 = vmul.f32 %v1660, %v1648
  %v1669 = vsel %vm1652, %v1621, %v1661
  %v1670 = vsel %vm1653, %v1624, %v1662
  %v1671 = vsel %vm1654, %v1629, %v1663
  %v1672 = vsel %vm1655, %v1632, %v1664
  %v1673 = vsel %vm1656, %v1637, %v1665
  %v1674 = vsel %vm1657, %v1640, %v1666
  %v1675 = vsel %vm1658, %v1645, %v1667
  %v1676 = vsel %vm1659, %v1648, %v1668
  %v1677 = vpack.c.bf16 %v1670, %v1669
  %v1678 = vpack.c.bf16 %v1672, %v1671
  %v1679 = vpack.c.bf16 %v1674, %v1673
  %v1680 = vpack.c.bf16 %v1676, %v1675
  %v1685 = vunpack.c.l.b16 %v1677
  %v1686 = vunpack.c.h.b16 %v1677
  %v1687 = vunpack.c.l.b16 %v1678
  %v1688 = vunpack.c.h.b16 %v1678
  %v1689 = vunpack.c.l.b16 %v1679
  %v1690 = vunpack.c.h.b16 %v1679
  %v1691 = vunpack.c.l.b16 %v1680
  %v1692 = vunpack.c.h.b16 %v1680
  %v1693 = vpack.c.b16 %v1685, %v1685
  %v1694 = vpack.c.b16 %v1686, %v1686
  %v1695 = vpack.c.b16 %v1687, %v1687
  %v1696 = vpack.c.b16 %v1688, %v1688
  %v1697 = vpack.c.b16 %v1689, %v1689
  %v1698 = vpack.c.b16 %v1690, %v1690
  %v1699 = vpack.c.b16 %v1691, %v1691
  %v1700 = vpack.c.b16 %v1692, %v1692
  %1709 = vst [vmem:[%s4] sm:$0xf] %v1693
  %1710 = vst [vmem:[%s4 + $0x4] sm:$0xf] %v1694
  %1711 = vst [vmem:[%s4 + $0x8] sm:$0xf] %v1695
  %1712 = vst [vmem:[%s4 + $0xc] sm:$0xf] %v1696
  %1713 = vst [vmem:[%s4 + $0x10] sm:$0xf] %v1697
  %1714 = vst [vmem:[%s4 + $0x14] sm:$0xf] %v1698
  %1715 = vst [vmem:[%s4 + $0x18] sm:$0xf] %v1699
  %1716 = vst [vmem:[%s4 + $0x1c] sm:$0xf] %v1700
  // Predicated region
  $region18: #{_cnn_forward.20} parent=0 // pred_check
    _
  $region19: #{_cnn_forward.20} parent=0 // pred_check_branch
    %1718 = sbr.rel (0) target = $region21
  $region20: #{_cnn_forward.20} parent=0 // pred_region
    _
  $region21: #{_cnn_forward.20} parent=0 // pred_fallthru
    _
  // Predicated region
  $region22: #{_cnn_forward.20} parent=0 // pred_check
    _
  $region23: #{_cnn_forward.20} parent=0 // pred_check_branch
    %1720 = sbr.rel (0) target = $region25
  $region24: #{_cnn_forward.20} parent=0 // pred_region
    _
  $region25: #{_cnn_forward.20} parent=0 // pred_fallthru
    _

// kernel: _cnn_forward.22
$region0: #{_cnn_forward.22}
  #allocation0 [shape = 'u32[]', space=smem, size = 0x4, offset = 0x4, fixed_abs, tag = 'smem constant byte address 0x4 - core index']
  #allocation1 [shape = 'u32[144,128]{1,0:T(1,128)}', space=vmem, size = 0x12000, scoped, tag = 'internal scratch']
  #allocation2 [shape = 'f32[1]{0:T(128)S(6)}', space=smem, size = 0x200, scoped, tag = 'scoped memory for _cnn_forward.22']
  %s0 = inlined_call_operand.vmem [shape: bf16[576,128], index: 0, kind: input, shape index: {}]
  %s1 = inlined_call_operand.vmem [shape: bf16[128,576], index: 1, kind: input, shape index: {}]
  %s2 = inlined_call_operand.vmem [shape: f32[128,1], index: 2, kind: input, shape index: {}]
  %s3 = inlined_call_operand.<no memory space> [shape: f32[1], index: 3, kind: input, shape index: {}]
  %s4 = inlined_call_operand.vmem [shape: bf16[128,128], index: 4, kind: output, shape index: {}]
  %s5 = sld [smem:[#allocation0]]
  $region26: #{_cnn_forward.22} parent=0
    _
  %s7 = ssub.s32 1, %s5
  %s8 = scalar_select 0, %s7, %s5
  %9 = sst [smem:[#allocation2]] %s3
  // Predicated region
  $region2: #{_cnn_forward.22} parent=0 // pred_check
    _
  $region3: #{_cnn_forward.22} parent=0 // pred_check_branch
    %11 = sbr.rel (0) target = $region5
  $region4: #{_cnn_forward.22} parent=0 // pred_region
    _
  $region5: #{_cnn_forward.22} parent=0 // pred_fallthru
    _
  // Predicated region
  $region6: #{_cnn_forward.22} parent=0 // pred_check
    _
  $region7: #{_cnn_forward.22} parent=0 // pred_check_branch
    %13 = sbr.rel (0) target = $region9
  $region8: #{_cnn_forward.22} parent=0 // pred_region
    _
  $region9: #{_cnn_forward.22} parent=0 // pred_fallthru
    _
  // Predicated region
  $region10: #{_cnn_forward.22} parent=0 // pred_check
    _
  $region11: #{_cnn_forward.22} parent=0 // pred_check_branch
    %15 = sbr.rel (0) target = $region13
  $region12: #{_cnn_forward.22} parent=0 // pred_region
    _
  $region13: #{_cnn_forward.22} parent=0 // pred_fallthru
    _
  // Predicated region
  $region14: #{_cnn_forward.22} parent=0 // pred_check
    _
  $region15: #{_cnn_forward.22} parent=0 // pred_check_branch
    %17 = sbr.rel (0) target = $region17
  $region16: #{_cnn_forward.22} parent=0 // pred_region
    _
  $region17: #{_cnn_forward.22} parent=0 // pred_fallthru
    _
  %v19 = vld [vmem:[%s1] sm:$0xff]
  %v20 = vld [vmem:[%s1 + $0x8] sm:$0xff]
  %v21 = vld [vmem:[%s1 + $0x10] sm:$0xf]
  %v22 = vld [vmem:[%s1 + $0x14] sm:$0xff]
  %v23 = vld [vmem:[%s1 + $0x1c] sm:$0xff]
  %v24 = vld [vmem:[%s1 + $0x24] sm:$0xf]
  %v25 = vld [vmem:[%s1 + $0x28] sm:$0xff]
  %v26 = vld [vmem:[%s1 + $0x30] sm:$0xff]
  %v27 = vld [vmem:[%s1 + $0x38] sm:$0xf]
  %v28 = vld [vmem:[%s1 + $0x3c] sm:$0xff]
  %v29 = vld [vmem:[%s1 + $0x44] sm:$0xff]
  %v30 = vld [vmem:[%s1 + $0x4c] sm:$0xf]
  %v31 = vld [vmem:[%s1 + $0x50] sm:$0xff]
  %v32 = vld [vmem:[%s1 + $0x58] sm:$0xff]
  %v33 = vld [vmem:[%s1 + $0x60] sm:$0xf]
  %v34 = vld [vmem:[%s1 + $0x64] sm:$0xff]
  %v35 = vld [vmem:[%s1 + $0x6c] sm:$0xff]
  %v36 = vld [vmem:[%s1 + $0x74] sm:$0xf]
  %v37 = vld [vmem:[%s1 + $0x78] sm:$0xff]
  %v38 = vld [vmem:[%s1 + $0x80] sm:$0xff]
  %v39 = vld [vmem:[%s1 + $0x88] sm:$0xf]
  %v40 = vld [vmem:[%s1 + $0x8c] sm:$0xff]
  %v41 = vld [vmem:[%s1 + $0x94] sm:$0xff]
  %v42 = vld [vmem:[%s1 + $0x9c] sm:$0xf]
  %v43 = vld [vmem:[%s1 + $0xa0] sm:$0xff]
  %v44 = vld [vmem:[%s1 + $0xa8] sm:$0xff]
  %v45 = vld [vmem:[%s1 + $0xb0] sm:$0xf]
  %v46 = vld [vmem:[%s1 + $0xb4] sm:$0xff]
  %v47 = vld [vmem:[%s1 + $0xbc] sm:$0xff]
  %v48 = vld [vmem:[%s1 + $0xc4] sm:$0xf]
  %v49 = vld [vmem:[%s1 + $0xc8] sm:$0xff]
  %v50 = vld [vmem:[%s1 + $0xd0] sm:$0xff]
  %v51 = vld [vmem:[%s1 + $0xd8] sm:$0xf]
  %v52 = vld [vmem:[%s1 + $0xdc] sm:$0xff]
  %v53 = vld [vmem:[%s1 + $0xe4] sm:$0xff]
  %v54 = vld [vmem:[%s1 + $0xec] sm:$0xf]
  %v55 = vld [vmem:[%s1 + $0xf0] sm:$0xff]
  %v56 = vld [vmem:[%s1 + $0xf8] sm:$0xff]
  %v57 = vld [vmem:[%s1 + $0x100] sm:$0xf]
  %v58 = vld [vmem:[%s1 + $0x104] sm:$0xff]
  %v59 = vld [vmem:[%s1 + $0x10c] sm:$0xff]
  %v60 = vld [vmem:[%s1 + $0x114] sm:$0xf]
  %v61 = vld [vmem:[%s1 + $0x118] sm:$0xff]
  %v62 = vld [vmem:[%s1 + $0x120] sm:$0xff]
  %v63 = vld [vmem:[%s1 + $0x128] sm:$0xf]
  %v64 = vld [vmem:[%s1 + $0x12c] sm:$0xff]
  %v65 = vld [vmem:[%s1 + $0x134] sm:$0xff]
  %v66 = vld [vmem:[%s1 + $0x13c] sm:$0xf]
  %v67 = vld [vmem:[%s0] sm:$0xf]
  %v68 = vld [vmem:[%s0 + $0x4] sm:$0xf]
  %v69 = vld [vmem:[%s0 + $0x8] sm:$0xf]
  %v70 = vld [vmem:[%s0 + $0xc] sm:$0xf]
  %v71 = vld [vmem:[%s0 + $0x10] sm:$0xf]
  %v72 = vld [vmem:[%s0 + $0x14] sm:$0xf]
  %v73 = vld [vmem:[%s0 + $0x18] sm:$0xf]
  %v74 = vld [vmem:[%s0 + $0x1c] sm:$0xf]
  %v75 = vld [vmem:[%s0 + $0x20] sm:$0xf]
  %v76 = vld [vmem:[%s0 + $0x24] sm:$0xf]
  %v77 = vld [vmem:[%s0 + $0x28] sm:$0xf]
  %v78 = vld [vmem:[%s0 + $0x2c] sm:$0xf]
  %v79 = vld [vmem:[%s0 + $0x30] sm:$0xf]
  %v80 = vld [vmem:[%s0 + $0x34] sm:$0xf]
  %v81 = vld [vmem:[%s0 + $0x38] sm:$0xf]
  %v82 = vld [vmem:[%s0 + $0x3c] sm:$0xf]
  %v83 = vld [vmem:[%s0 + $0x40] sm:$0xf]
  %v84 = vld [vmem:[%s0 + $0x44] sm:$0xf]
  %v85 = vld [vmem:[%s0 + $0x48] sm:$0xf]
  %v86 = vld [vmem:[%s0 + $0x4c] sm:$0xf]
  %v87 = vld [vmem:[%s0 + $0x50] sm:$0xf]
  %v88 = vld [vmem:[%s0 + $0x54] sm:$0xf]
  %v89 = vld [vmem:[%s0 + $0x58] sm:$0xf]
  %v90 = vld [vmem:[%s0 + $0x5c] sm:$0xf]
  %v91 = vld [vmem:[%s0 + $0x60] sm:$0xf]
  %v92 = vld [vmem:[%s0 + $0x64] sm:$0xf]
  %v93 = vld [vmem:[%s0 + $0x68] sm:$0xf]
  %v94 = vld [vmem:[%s0 + $0x6c] sm:$0xf]
  %v95 = vld [vmem:[%s0 + $0x70] sm:$0xf]
  %v96 = vld [vmem:[%s0 + $0x74] sm:$0xf]
  %v97 = vld [vmem:[%s0 + $0x78] sm:$0xf]
  %v98 = vld [vmem:[%s0 + $0x7c] sm:$0xf]
  %v99 = vld [vmem:[%s0 + $0x80] sm:$0xf]
  %v100 = vld [vmem:[%s0 + $0x84] sm:$0xf]
  %v101 = vld [vmem:[%s0 + $0x88] sm:$0xf]
  %v102 = vld [vmem:[%s0 + $0x8c] sm:$0xf]
  %v103 = vld [vmem:[%s0 + $0x90] sm:$0xf]
  %v104 = vld [vmem:[%s0 + $0x94] sm:$0xf]
  %v105 = vld [vmem:[%s0 + $0x98] sm:$0xf]
  %v106 = vld [vmem:[%s0 + $0x9c] sm:$0xf]
  %v107 = vld [vmem:[%s0 + $0xa0] sm:$0xf]
  %v108 = vld [vmem:[%s0 + $0xa4] sm:$0xf]
  %v109 = vld [vmem:[%s0 + $0xa8] sm:$0xf]
  %v110 = vld [vmem:[%s0 + $0xac] sm:$0xf]
  %v111 = vld [vmem:[%s0 + $0xb0] sm:$0xf]
  %v112 = vld [vmem:[%s0 + $0xb4] sm:$0xf]
  %v113 = vld [vmem:[%s0 + $0xb8] sm:$0xf]
  %v114 = vld [vmem:[%s0 + $0xbc] sm:$0xf]
  %v115 = vld [vmem:[%s0 + $0xc0] sm:$0xf]
  %v116 = vld [vmem:[%s0 + $0xc4] sm:$0xf]
  %v117 = vld [vmem:[%s0 + $0xc8] sm:$0xf]
  %v118 = vld [vmem:[%s0 + $0xcc] sm:$0xf]
  %v119 = vld [vmem:[%s0 + $0xd0] sm:$0xf]
  %v120 = vld [vmem:[%s0 + $0xd4] sm:$0xf]
  %v121 = vld [vmem:[%s0 + $0xd8] sm:$0xf]
  %v122 = vld [vmem:[%s0 + $0xdc] sm:$0xf]
  %v123 = vld [vmem:[%s0 + $0xe0] sm:$0xf]
  %v124 = vld [vmem:[%s0 + $0xe4] sm:$0xf]
  %v125 = vld [vmem:[%s0 + $0xe8] sm:$0xf]
  %v126 = vld [vmem:[%s0 + $0xec] sm:$0xf]
  %v127 = vld [vmem:[%s0 + $0xf0] sm:$0xf]
  %v128 = vld [vmem:[%s0 + $0xf4] sm:$0xf]
  %v129 = vld [vmem:[%s0 + $0xf8] sm:$0xf]
  %v130 = vld [vmem:[%s0 + $0xfc] sm:$0xf]
  %v131 = vld [vmem:[%s0 + $0x100] sm:$0xf]
  %v132 = vld [vmem:[%s0 + $0x104] sm:$0xf]
  %v133 = vld [vmem:[%s0 + $0x108] sm:$0xf]
  %v134 = vld [vmem:[%s0 + $0x10c] sm:$0xf]
  %v135 = vld [vmem:[%s0 + $0x110] sm:$0xf]
  %v136 = vld [vmem:[%s0 + $0x114] sm:$0xf]
  %v137 = vld [vmem:[%s0 + $0x118] sm:$0xf]
  %v138 = vld [vmem:[%s0 + $0x11c] sm:$0xf]
  %v139 = vld [vmem:[%s2] sm:$0xff]
  %v140 = vld [vmem:[%s2 + $0x8] sm:$0xff]
  %v141 = vld [vmem:[%s2 + $0x10] sm:$0xff]
  %v142 = vld [vmem:[%s2 + $0x18] sm:$0xff]
  %v143 = vld [vmem:[%s2 + $0x20] sm:$0xff]
  %v144 = vld [vmem:[%s2 + $0x28] sm:$0xff]
  %v145 = vld [vmem:[%s2 + $0x30] sm:$0xff]
  %v146 = vld [vmem:[%s2 + $0x38] sm:$0xff]
  %v147 = vld [vmem:[%s2 + $0x40] sm:$0xff]
  %v148 = vld [vmem:[%s2 + $0x48] sm:$0xff]
  %v149 = vld [vmem:[%s2 + $0x50] sm:$0xff]
  %v150 = vld [vmem:[%s2 + $0x58] sm:$0xff]
  %v151 = vld [vmem:[%s2 + $0x60] sm:$0xff]
  %v152 = vld [vmem:[%s2 + $0x68] sm:$0xff]
  %v153 = vld [vmem:[%s2 + $0x70] sm:$0xff]
  %v154 = vld [vmem:[%s2 + $0x78] sm:$0xff]
  %156 = vset.pattern.permute.xlu0 0
  %157 = vperm.xlu0 %156, %v139
  %v158 = vpop.permute.xlu0 %157
  %161 = vset.pattern.permute.xlu0 0
  %162 = vperm.xlu0 %161, %v140
  %v163 = vpop.permute.xlu0 %162
  %166 = vset.pattern.permute.xlu0 0
  %167 = vperm.xlu0 %166, %v141
  %v168 = vpop.permute.xlu0 %167
  %171 = vset.pattern.permute.xlu0 0
  %172 = vperm.xlu0 %171, %v142
  %v173 = vpop.permute.xlu0 %172
  %176 = vset.pattern.permute.xlu0 0
  %177 = vperm.xlu0 %176, %v143
  %v178 = vpop.permute.xlu0 %177
  %181 = vset.pattern.permute.xlu0 0
  %182 = vperm.xlu0 %181, %v144
  %v183 = vpop.permute.xlu0 %182
  %186 = vset.pattern.permute.xlu0 0
  %187 = vperm.xlu0 %186, %v145
  %v188 = vpop.permute.xlu0 %187
  %191 = vset.pattern.permute.xlu0 0
  %192 = vperm.xlu0 %191, %v146
  %v193 = vpop.permute.xlu0 %192
  %196 = vset.pattern.permute.xlu0 0
  %197 = vperm.xlu0 %196, %v147
  %v198 = vpop.permute.xlu0 %197
  %201 = vset.pattern.permute.xlu0 0
  %202 = vperm.xlu0 %201, %v148
  %v203 = vpop.permute.xlu0 %202
  %206 = vset.pattern.permute.xlu0 0
  %207 = vperm.xlu0 %206, %v149
  %v208 = vpop.permute.xlu0 %207
  %211 = vset.pattern.permute.xlu0 0
  %212 = vperm.xlu0 %211, %v150
  %v213 = vpop.permute.xlu0 %212
  %216 = vset.pattern.permute.xlu0 0
  %217 = vperm.xlu0 %216, %v151
  %v218 = vpop.permute.xlu0 %217
  %221 = vset.pattern.permute.xlu0 0
  %222 = vperm.xlu0 %221, %v152
  %v223 = vpop.permute.xlu0 %222
  %226 = vset.pattern.permute.xlu0 0
  %227 = vperm.xlu0 %226, %v153
  %v228 = vpop.permute.xlu0 %227
  %231 = vset.pattern.permute.xlu0 0
  %232 = vperm.xlu0 %231, %v154
  %v233 = vpop.permute.xlu0 %232
  %v283 = vunpack.c.l.b16 %v19
  %v284 = vunpack.c.h.b16 %v19
  %v285 = vunpack.c.l.b16 %v20
  %v286 = vunpack.c.h.b16 %v20
  %v287 = vunpack.c.l.b16 %v21
  %v288 = vunpack.c.l.b16 %v22
  %v289 = vunpack.c.h.b16 %v22
  %v290 = vunpack.c.l.b16 %v23
  %v291 = vunpack.c.h.b16 %v23
  %v292 = vunpack.c.l.b16 %v24
  %v293 = vunpack.c.l.b16 %v25
  %v294 = vunpack.c.h.b16 %v25
  %v295 = vunpack.c.l.b16 %v26
  %v296 = vunpack.c.h.b16 %v26
  %v297 = vunpack.c.l.b16 %v27
  %v298 = vunpack.c.l.b16 %v28
  %v299 = vunpack.c.h.b16 %v28
  %v300 = vunpack.c.l.b16 %v29
  %v301 = vunpack.c.h.b16 %v29
  %v302 = vunpack.c.l.b16 %v30
  %v303 = vunpack.c.l.b16 %v31
  %v304 = vunpack.c.h.b16 %v31
  %v305 = vunpack.c.l.b16 %v32
  %v306 = vunpack.c.h.b16 %v32
  %v307 = vunpack.c.l.b16 %v33
  %v308 = vunpack.c.l.b16 %v34
  %v309 = vunpack.c.h.b16 %v34
  %v310 = vunpack.c.l.b16 %v35
  %v311 = vunpack.c.h.b16 %v35
  %v312 = vunpack.c.l.b16 %v36
  %v313 = vunpack.c.l.b16 %v37
  %v314 = vunpack.c.h.b16 %v37
  %v315 = vunpack.c.l.b16 %v38
  %v316 = vunpack.c.h.b16 %v38
  %v317 = vunpack.c.l.b16 %v39
  %v318 = vunpack.c.l.b16 %v40
  %v319 = vunpack.c.h.b16 %v40
  %v320 = vunpack.c.l.b16 %v41
  %v321 = vunpack.c.h.b16 %v41
  %v322 = vunpack.c.l.b16 %v42
  %v323 = vunpack.c.l.b16 %v43
  %v324 = vunpack.c.h.b16 %v43
  %v325 = vunpack.c.l.b16 %v44
  %v326 = vunpack.c.h.b16 %v44
  %v327 = vunpack.c.l.b16 %v45
  %v328 = vunpack.c.l.b16 %v46
  %v329 = vunpack.c.h.b16 %v46
  %v330 = vunpack.c.l.b16 %v47
  %v331 = vunpack.c.h.b16 %v47
  %v332 = vunpack.c.l.b16 %v48
  %v333 = vunpack.c.l.b16 %v49
  %v334 = vunpack.c.h.b16 %v49
  %v335 = vunpack.c.l.b16 %v50
  %v336 = vunpack.c.h.b16 %v50
  %v337 = vunpack.c.l.b16 %v51
  %v338 = vunpack.c.l.b16 %v52
  %v339 = vunpack.c.h.b16 %v52
  %v340 = vunpack.c.l.b16 %v53
  %v341 = vunpack.c.h.b16 %v53
  %v342 = vunpack.c.l.b16 %v54
  %v343 = vunpack.c.l.b16 %v55
  %v344 = vunpack.c.h.b16 %v55
  %v345 = vunpack.c.l.b16 %v56
  %v346 = vunpack.c.h.b16 %v56
  %v347 = vunpack.c.l.b16 %v57
  %v348 = vunpack.c.l.b16 %v58
  %v349 = vunpack.c.h.b16 %v58
  %v350 = vunpack.c.l.b16 %v59
  %v351 = vunpack.c.h.b16 %v59
  %v352 = vunpack.c.l.b16 %v60
  %v353 = vunpack.c.l.b16 %v61
  %v354 = vunpack.c.h.b16 %v61
  %v355 = vunpack.c.l.b16 %v62
  %v356 = vunpack.c.h.b16 %v62
  %v357 = vunpack.c.l.b16 %v63
  %v358 = vunpack.c.l.b16 %v64
  %v359 = vunpack.c.h.b16 %v64
  %v360 = vunpack.c.l.b16 %v65
  %v361 = vunpack.c.h.b16 %v65
  %v362 = vunpack.c.l.b16 %v66
  %v363 = vpack.c.b16 %v288, %v283
  %v364 = vpack.c.b16 %v289, %v284
  %v365 = vpack.c.b16 %v290, %v285
  %v366 = vpack.c.b16 %v291, %v286
  %v367 = vpack.c.b16 %v292, %v287
  %v368 = vpack.c.b16 %v298, %v293
  %v369 = vpack.c.b16 %v299, %v294
  %v370 = vpack.c.b16 %v300, %v295
  %v371 = vpack.c.b16 %v301, %v296
  %v372 = vpack.c.b16 %v302, %v297
  %v373 = vpack.c.b16 %v308, %v303
  %v374 = vpack.c.b16 %v309, %v304
  %v375 = vpack.c.b16 %v310, %v305
  %v376 = vpack.c.b16 %v311, %v306
  %v377 = vpack.c.b16 %v312, %v307
  %v378 = vpack.c.b16 %v318, %v313
  %v379 = vpack.c.b16 %v319, %v314
  %v380 = vpack.c.b16 %v320, %v315
  %v381 = vpack.c.b16 %v321, %v316
  %v382 = vpack.c.b16 %v322, %v317
  %v383 = vpack.c.b16 %v328, %v323
  %v384 = vpack.c.b16 %v329, %v324
  %v385 = vpack.c.b16 %v330, %v325
  %v386 = vpack.c.b16 %v331, %v326
  %v387 = vpack.c.b16 %v332, %v327
  %v388 = vpack.c.b16 %v338, %v333
  %v389 = vpack.c.b16 %v339, %v334
  %v390 = vpack.c.b16 %v340, %v335
  %v391 = vpack.c.b16 %v341, %v336
  %v392 = vpack.c.b16 %v342, %v337
  %v393 = vpack.c.b16 %v348, %v343
  %v394 = vpack.c.b16 %v349, %v344
  %v395 = vpack.c.b16 %v350, %v345
  %v396 = vpack.c.b16 %v351, %v346
  %v397 = vpack.c.b16 %v352, %v347
  %v398 = vpack.c.b16 %v358, %v353
  %v399 = vpack.c.b16 %v359, %v354
  %v400 = vpack.c.b16 %v360, %v355
  %v401 = vpack.c.b16 %v361, %v356
  %v402 = vpack.c.b16 %v362, %v357
  %v507 = vunpack.c.l.b16 %v67
  %v508 = vunpack.c.l.b16 %v68
  %v509 = vunpack.c.l.b16 %v69
  %v510 = vunpack.c.l.b16 %v70
  %v511 = vunpack.c.l.b16 %v71
  %v512 = vunpack.c.l.b16 %v72
  %v513 = vunpack.c.l.b16 %v73
  %v514 = vunpack.c.l.b16 %v74
  %v515 = vunpack.c.l.b16 %v75
  %v516 = vunpack.c.l.b16 %v76
  %v517 = vunpack.c.l.b16 %v77
  %v518 = vunpack.c.l.b16 %v78
  %v519 = vunpack.c.l.b16 %v79
  %v520 = vunpack.c.l.b16 %v80
  %v521 = vunpack.c.l.b16 %v81
  %v522 = vunpack.c.l.b16 %v82
  %v523 = vunpack.c.l.b16 %v83
  %v524 = vunpack.c.l.b16 %v84
  %v525 = vunpack.c.l.b16 %v85
  %v526 = vunpack.c.l.b16 %v86
  %v527 = vunpack.c.l.b16 %v87
  %v528 = vunpack.c.l.b16 %v88
  %v529 = vunpack.c.l.b16 %v89
  %v530 = vunpack.c.l.b16 %v90
  %v531 = vunpack.c.l.b16 %v91
  %v532 = vunpack.c.l.b16 %v92
  %v533 = vunpack.c.l.b16 %v93
  %v534 = vunpack.c.l.b16 %v94
  %v535 = vunpack.c.l.b16 %v95
  %v536 = vunpack.c.l.b16 %v96
  %v537 = vunpack.c.l.b16 %v97
  %v538 = vunpack.c.l.b16 %v98
  %v539 = vunpack.c.l.b16 %v99
  %v540 = vunpack.c.l.b16 %v100
  %v541 = vunpack.c.l.b16 %v101
  %v542 = vunpack.c.l.b16 %v102
  %v543 = vunpack.c.l.b16 %v103
  %v544 = vunpack.c.l.b16 %v104
  %v545 = vunpack.c.l.b16 %v105
  %v546 = vunpack.c.l.b16 %v106
  %v547 = vunpack.c.l.b16 %v107
  %v548 = vunpack.c.l.b16 %v108
  %v549 = vunpack.c.l.b16 %v109
  %v550 = vunpack.c.l.b16 %v110
  %v551 = vunpack.c.l.b16 %v111
  %v552 = vunpack.c.l.b16 %v112
  %v553 = vunpack.c.l.b16 %v113
  %v554 = vunpack.c.l.b16 %v114
  %v555 = vunpack.c.l.b16 %v115
  %v556 = vunpack.c.l.b16 %v116
  %v557 = vunpack.c.l.b16 %v117
  %v558 = vunpack.c.l.b16 %v118
  %v559 = vunpack.c.l.b16 %v119
  %v560 = vunpack.c.l.b16 %v120
  %v561 = vunpack.c.l.b16 %v121
  %v562 = vunpack.c.l.b16 %v122
  %v563 = vunpack.c.l.b16 %v123
  %v564 = vunpack.c.l.b16 %v124
  %v565 = vunpack.c.l.b16 %v125
  %v566 = vunpack.c.l.b16 %v126
  %v567 = vunpack.c.l.b16 %v127
  %v568 = vunpack.c.l.b16 %v128
  %v569 = vunpack.c.l.b16 %v129
  %v570 = vunpack.c.l.b16 %v130
  %v571 = vunpack.c.l.b16 %v131
  %v572 = vunpack.c.l.b16 %v132
  %v573 = vunpack.c.l.b16 %v133
  %v574 = vunpack.c.l.b16 %v134
  %v575 = vunpack.c.l.b16 %v135
  %v576 = vunpack.c.l.b16 %v136
  %v577 = vunpack.c.l.b16 %v137
  %v578 = vunpack.c.l.b16 %v138
  %v579 = vpack.c.b16 %v508, %v507
  %v580 = vpack.c.b16 %v510, %v509
  %v581 = vpack.c.b16 %v512, %v511
  %v582 = vpack.c.b16 %v514, %v513
  %v583 = vpack.c.b16 %v516, %v515
  %v584 = vpack.c.b16 %v518, %v517
  %v585 = vpack.c.b16 %v520, %v519
  %v586 = vpack.c.b16 %v522, %v521
  %v587 = vpack.c.b16 %v524, %v523
  %v588 = vpack.c.b16 %v526, %v525
  %v589 = vpack.c.b16 %v528, %v527
  %v590 = vpack.c.b16 %v530, %v529
  %v591 = vpack.c.b16 %v532, %v531
  %v592 = vpack.c.b16 %v534, %v533
  %v593 = vpack.c.b16 %v536, %v535
  %v594 = vpack.c.b16 %v538, %v537
  %v595 = vpack.c.b16 %v540, %v539
  %v596 = vpack.c.b16 %v542, %v541
  %v597 = vpack.c.b16 %v544, %v543
  %v598 = vpack.c.b16 %v546, %v545
  %v599 = vpack.c.b16 %v548, %v547
  %v600 = vpack.c.b16 %v550, %v549
  %v601 = vpack.c.b16 %v552, %v551
  %v602 = vpack.c.b16 %v554, %v553
  %v603 = vpack.c.b16 %v556, %v555
  %v604 = vpack.c.b16 %v558, %v557
  %v605 = vpack.c.b16 %v560, %v559
  %v606 = vpack.c.b16 %v562, %v561
  %v607 = vpack.c.b16 %v564, %v563
  %v608 = vpack.c.b16 %v566, %v565
  %v609 = vpack.c.b16 %v568, %v567
  %v610 = vpack.c.b16 %v570, %v569
  %v611 = vpack.c.b16 %v572, %v571
  %v612 = vpack.c.b16 %v574, %v573
  %v613 = vpack.c.b16 %v576, %v575
  %v614 = vpack.c.b16 %v578, %v577
  %vm651 = vcmask 523264
  %v653 = vsel %vm651, %v367, 0
  %v656 = vsel %vm651, %v372, 0
  %v659 = vsel %vm651, %v377, 0
  %v662 = vsel %vm651, %v382, 0
  %v665 = vsel %vm651, %v387, 0
  %v668 = vsel %vm651, %v392, 0
  %v671 = vsel %vm651, %v397, 0
  %v674 = vsel %vm651, %v402, 0
  %676 = vmatprep.subr.bf16.mxu0 0
  %677 = vmatpush1.bf16.msra.mxu0 %v579
  %678 = vmatprep.subr.bf16.mxu0 0
  %679 = vmatpush1.bf16.msra.mxu0 %v580
  %680 = vmatprep.subr.bf16.mxu0 0
  %681 = vmatpush1.bf16.msra.mxu0 %v581
  %682 = vmatprep.subr.bf16.mxu0 0
  %683 = vmatpush1.bf16.msra.mxu0 %v582
  %684 = vmatprep.subr.bf16.mxu0 0
  %685 = vmatpush1.bf16.msra.mxu0 %v583
  %686 = vmatprep.subr.bf16.mxu0 0
  %687 = vmatpush1.bf16.msra.mxu0 %v584
  %688 = vmatprep.subr.bf16.mxu0 0
  %689 = vmatpush1.bf16.msra.mxu0 %v585
  %690 = vmatprep.subr.bf16.mxu0 0
  %691 = vmatpush1.bf16.msra.mxu0 %v586
  %692 = vmatprep.subr.bf16.mxu0 0
  %693 = vmatpush1.bf16.msra.mxu0 %v587
  %694 = vmatprep.subr.bf16.mxu0 0
  %695 = vmatpush1.bf16.msra.mxu0 %v588
  %696 = vmatprep.subr.bf16.mxu0 0
  %697 = vmatpush1.bf16.msra.mxu0 %v589
  %698 = vmatprep.subr.bf16.mxu0 0
  %699 = vmatpush1.bf16.msra.mxu0 %v590
  %700 = vmatprep.subr.bf16.mxu0 0
  %701 = vmatpush1.bf16.msra.mxu0 %v591
  %702 = vmatprep.subr.bf16.mxu0 0
  %703 = vmatpush1.bf16.msra.mxu0 %v592
  %704 = vmatprep.subr.bf16.mxu0 0
  %705 = vmatpush1.bf16.msra.mxu0 %v593
  %706 = vmatprep.subr.bf16.mxu0 0
  %707 = vmatpush1.bf16.msra.mxu0 %v594
  %708 = vmatprep.mubr.bf16.mxu0 %v364
  %709 = vmatmul.mubr.bf16.gmra.mrb[0].mxu0 %v363
  %v710 = vpop.f32.mrb[0].mxu0
  %v711 = vadd.f32 %v158, %v710
  %v712 = vpop.f32.mrb[0].mxu0
  %v713 = vpop.f32.mrb[0].mxu0
  %v714 = vadd.f32 %v163, %v713
  %v715 = vpop.f32.mrb[0].mxu0
  %716 = vmatprep.mubr.bf16.mxu0 %v369
  %717 = vmatmul.mubr.bf16.gmra.mrb[0].mxu0 %v368
  %v718 = vpop.f32.mrb[0].mxu0
  %v719 = vadd.f32 %v168, %v718
  %v720 = vpop.f32.mrb[0].mxu0
  %v721 = vpop.f32.mrb[0].mxu0
  %v722 = vadd.f32 %v173, %v721
  %v723 = vpop.f32.mrb[0].mxu0
  %724 = vmatprep.mubr.bf16.mxu0 %v374
  %725 = vmatmul.mubr.bf16.gmra.mrb[0].mxu0 %v373
  %v726 = vpop.f32.mrb[0].mxu0
  %v727 = vadd.f32 %v178, %v726
  %v728 = vpop.f32.mrb[0].mxu0
  %v729 = vpop.f32.mrb[0].mxu0
  %v730 = vadd.f32 %v183, %v729
  %v731 = vpop.f32.mrb[0].mxu0
  %732 = vmatprep.mubr.bf16.mxu0 %v379
  %733 = vmatmul.mubr.bf16.gmra.mrb[0].mxu0 %v378
  %v734 = vpop.f32.mrb[0].mxu0
  %v735 = vadd.f32 %v188, %v734
  %v736 = vpop.f32.mrb[0].mxu0
  %v737 = vpop.f32.mrb[0].mxu0
  %v738 = vadd.f32 %v193, %v737
  %v739 = vpop.f32.mrb[0].mxu0
  %740 = vmatprep.mubr.bf16.mxu0 %v384
  %741 = vmatmul.mubr.bf16.gmra.mrb[0].mxu0 %v383
  %v742 = vpop.f32.mrb[0].mxu0
  %v743 = vadd.f32 %v198, %v742
  %v744 = vpop.f32.mrb[0].mxu0
  %v745 = vpop.f32.mrb[0].mxu0
  %v746 = vadd.f32 %v203, %v745
  %v747 = vpop.f32.mrb[0].mxu0
  %748 = vmatprep.mubr.bf16.mxu0 %v389
  %749 = vmatmul.mubr.bf16.gmra.mrb[0].mxu0 %v388
  %v750 = vpop.f32.mrb[0].mxu0
  %v751 = vadd.f32 %v208, %v750
  %v752 = vpop.f32.mrb[0].mxu0
  %v753 = vpop.f32.mrb[0].mxu0
  %v754 = vadd.f32 %v213, %v753
  %v755 = vpop.f32.mrb[0].mxu0
  %756 = vmatprep.mubr.bf16.mxu0 %v394
  %757 = vmatmul.mubr.bf16.gmra.mrb[0].mxu0 %v393
  %v758 = vpop.f32.mrb[0].mxu0
  %v759 = vadd.f32 %v218, %v758
  %v760 = vpop.f32.mrb[0].mxu0
  %v761 = vpop.f32.mrb[0].mxu0
  %v762 = vadd.f32 %v223, %v761
  %v763 = vpop.f32.mrb[0].mxu0
  %764 = vmatprep.mubr.bf16.mxu0 %v399
  %765 = vmatmul.mubr.bf16.gmra.mrb[0].mxu0 %v398
  %v766 = vpop.f32.mrb[0].mxu0
  %v767 = vadd.f32 %v228, %v766
  %v768 = vpop.f32.mrb[0].mxu0
  %v769 = vpop.f32.mrb[0].mxu0
  %v770 = vadd.f32 %v233, %v769
  %v771 = vpop.f32.mrb[0].mxu0
  %772 = vdwg.mxu0
  %773 = vmatprep.subr.bf16.mxu0 0
  %774 = vmatpush1.bf16.msra.mxu0 %v595
  %775 = vmatprep.subr.bf16.mxu0 0
  %776 = vmatpush1.bf16.msra.mxu0 %v596
  %777 = vmatprep.subr.bf16.mxu0 0
  %778 = vmatpush1.bf16.msra.mxu0 %v597
  %779 = vmatprep.subr.bf16.mxu0 0
  %780 = vmatpush1.bf16.msra.mxu0 %v598
  %781 = vmatprep.subr.bf16.mxu0 0
  %782 = vmatpush1.bf16.msra.mxu0 %v599
  %783 = vmatprep.subr.bf16.mxu0 0
  %784 = vmatpush1.bf16.msra.mxu0 %v600
  %785 = vmatprep.subr.bf16.mxu0 0
  %786 = vmatpush1.bf16.msra.mxu0 %v601
  %787 = vmatprep.subr.bf16.mxu0 0
  %788 = vmatpush1.bf16.msra.mxu0 %v602
  %789 = vmatprep.subr.bf16.mxu0 0
  %790 = vmatpush1.bf16.msra.mxu0 %v603
  %791 = vmatprep.subr.bf16.mxu0 0
  %792 = vmatpush1.bf16.msra.mxu0 %v604
  %793 = vmatprep.subr.bf16.mxu0 0
  %794 = vmatpush1.bf16.msra.mxu0 %v605
  %795 = vmatprep.subr.bf16.mxu0 0
  %796 = vmatpush1.bf16.msra.mxu0 %v606
  %797 = vmatprep.subr.bf16.mxu0 0
  %798 = vmatpush1.bf16.msra.mxu0 %v607
  %799 = vmatprep.subr.bf16.mxu0 0
  %800 = vmatpush1.bf16.msra.mxu0 %v608
  %801 = vmatprep.subr.bf16.mxu0 0
  %802 = vmatpush1.bf16.msra.mxu0 %v609
  %803 = vmatprep.subr.bf16.mxu0 0
  %804 = vmatpush1.bf16.msra.mxu0 %v610
  %805 = vmatprep.mubr.bf16.mxu0 %v366
  %806 = vmatmul.mubr.bf16.gmra.mrb[0].mxu0 %v365
  %v807 = vpop.f32.mrb[0].mxu0
  %v808 = vadd.f32 %v711, %v807
  %v809 = vpop.f32.mrb[0].mxu0
  %v810 = vpop.f32.mrb[0].mxu0
  %v811 = vadd.f32 %v714, %v810
  %v812 = vpop.f32.mrb[0].mxu0
  %813 = vmatprep.mubr.bf16.mxu0 %v371
  %814 = vmatmul.mubr.bf16.gmra.mrb[0].mxu0 %v370
  %v815 = vpop.f32.mrb[0].mxu0
  %v816 = vadd.f32 %v719, %v815
  %v817 = vpop.f32.mrb[0].mxu0
  %v818 = vpop.f32.mrb[0].mxu0
  %v819 = vadd.f32 %v722, %v818
  %v820 = vpop.f32.mrb[0].mxu0
  %821 = vmatprep.mubr.bf16.mxu0 %v376
  %822 = vmatmul.mubr.bf16.gmra.mrb[0].mxu0 %v375
  %v823 = vpop.f32.mrb[0].mxu0
  %v824 = vadd.f32 %v727, %v823
  %v825 = vpop.f32.mrb[0].mxu0
  %v826 = vpop.f32.mrb[0].mxu0
  %v827 = vadd.f32 %v730, %v826
  %v828 = vpop.f32.mrb[0].mxu0
  %829 = vmatprep.mubr.bf16.mxu0 %v381
  %830 = vmatmul.mubr.bf16.gmra.mrb[0].mxu0 %v380
  %v831 = vpop.f32.mrb[0].mxu0
  %v832 = vadd.f32 %v735, %v831
  %v833 = vpop.f32.mrb[0].mxu0
  %v834 = vpop.f32.mrb[0].mxu0
  %v835 = vadd.f32 %v738, %v834
  %v836 = vpop.f32.mrb[0].mxu0
  %837 = vmatprep.mubr.bf16.mxu0 %v386
  %838 = vmatmul.mubr.bf16.gmra.mrb[0].mxu0 %v385
  %v839 = vpop.f32.mrb[0].mxu0
  %v840 = vadd.f32 %v743, %v839
  %v841 = vpop.f32.mrb[0].mxu0
  %v842 = vpop.f32.mrb[0].mxu0
  %v843 = vadd.f32 %v746, %v842
  %v844 = vpop.f32.mrb[0].mxu0
  %845 = vmatprep.mubr.bf16.mxu0 %v391
  %846 = vmatmul.mubr.bf16.gmra.mrb[0].mxu0 %v390
  %v847 = vpop.f32.mrb[0].mxu0
  %v848 = vadd.f32 %v751, %v847
  %v849 = vpop.f32.mrb[0].mxu0
  %v850 = vpop.f32.mrb[0].mxu0
  %v851 = vadd.f32 %v754, %v850
  %v852 = vpop.f32.mrb[0].mxu0
  %853 = vmatprep.mubr.bf16.mxu0 %v396
  %854 = vmatmul.mubr.bf16.gmra.mrb[0].mxu0 %v395
  %v855 = vpop.f32.mrb[0].mxu0
  %v856 = vadd.f32 %v759, %v855
  %v857 = vpop.f32.mrb[0].mxu0
  %v858 = vpop.f32.mrb[0].mxu0
  %v859 = vadd.f32 %v762, %v858
  %v860 = vpop.f32.mrb[0].mxu0
  %861 = vmatprep.mubr.bf16.mxu0 %v401
  %862 = vmatmul.mubr.bf16.gmra.mrb[0].mxu0 %v400
  %v863 = vpop.f32.mrb[0].mxu0
  %v864 = vadd.f32 %v767, %v863
  %v865 = vpop.f32.mrb[0].mxu0
  %v866 = vpop.f32.mrb[0].mxu0
  %v867 = vadd.f32 %v770, %v866
  %v868 = vpop.f32.mrb[0].mxu0
  %869 = vdwg.mxu0
  %870 = vmatprep.subr.bf16.mxu0 0
  %871 = vmatpush1.bf16.msra.mxu0 %v611
  %872 = vmatprep.subr.bf16.mxu0 0
  %873 = vmatpush1.bf16.msra.mxu0 %v612
  %874 = vmatprep.subr.bf16.mxu0 0
  %875 = vmatpush1.bf16.msra.mxu0 %v613
  %876 = vmatprep.subr.bf16.mxu0 0
  %877 = vmatpush1.bf16.msra.mxu0 %v614
  %878 = vmatprep.subr.bf16.mxu0 0
  %879 = vmatpush1.bf16.msra.mxu0 0
  %880 = vmatprep.subr.bf16.mxu0 0
  %881 = vmatpush1.bf16.msra.mxu0 0
  %882 = vmatprep.subr.bf16.mxu0 0
  %883 = vmatpush1.bf16.msra.mxu0 0
  %884 = vmatprep.subr.bf16.mxu0 0
  %885 = vmatpush1.bf16.msra.mxu0 0
  %886 = vmatprep.subr.bf16.mxu0 0
  %887 = vmatpush1.bf16.msra.mxu0 0
  %888 = vmatprep.subr.bf16.mxu0 0
  %889 = vmatpush1.bf16.msra.mxu0 0
  %890 = vmatprep.subr.bf16.mxu0 0
  %891 = vmatpush1.bf16.msra.mxu0 0
  %892 = vmatprep.subr.bf16.mxu0 0
  %893 = vmatpush1.bf16.msra.mxu0 0
  %894 = vmatprep.subr.bf16.mxu0 0
  %895 = vmatpush1.bf16.msra.mxu0 0
  %896 = vmatprep.subr.bf16.mxu0 0
  %897 = vmatpush1.bf16.msra.mxu0 0
  %898 = vmatprep.subr.bf16.mxu0 0
  %899 = vmatpush1.bf16.msra.mxu0 0
  %900 = vmatprep.subr.bf16.mxu0 0
  %901 = vmatpush1.bf16.msra.mxu0 0
  %902 = vmatprep.mubr.bf16.mxu0 0
  %903 = vmatmul.mubr.bf16.gmra.mrb[0].mxu0 %v653
  %v904 = vpop.f32.mrb[0].mxu0
  %v905 = vadd.f32 %v808, %v904
  %v906 = vpop.f32.mrb[0].mxu0
  %v907 = vpop.f32.mrb[0].mxu0
  %v908 = vadd.f32 %v811, %v907
  %v909 = vpop.f32.mrb[0].mxu0
  %910 = vmatprep.mubr.bf16.mxu0 0
  %911 = vmatmul.mubr.bf16.gmra.mrb[0].mxu0 %v656
  %v912 = vpop.f32.mrb[0].mxu0
  %v913 = vadd.f32 %v816, %v912
  %v914 = vpop.f32.mrb[0].mxu0
  %v915 = vpop.f32.mrb[0].mxu0
  %v916 = vadd.f32 %v819, %v915
  %v917 = vpop.f32.mrb[0].mxu0
  %918 = vmatprep.mubr.bf16.mxu0 0
  %919 = vmatmul.mubr.bf16.gmra.mrb[0].mxu0 %v659
  %v920 = vpop.f32.mrb[0].mxu0
  %v921 = vadd.f32 %v824, %v920
  %v922 = vpop.f32.mrb[0].mxu0
  %v923 = vpop.f32.mrb[0].mxu0
  %v924 = vadd.f32 %v827, %v923
  %v925 = vpop.f32.mrb[0].mxu0
  %926 = vmatprep.mubr.bf16.mxu0 0
  %927 = vmatmul.mubr.bf16.gmra.mrb[0].mxu0 %v662
  %v928 = vpop.f32.mrb[0].mxu0
  %v929 = vadd.f32 %v832, %v928
  %v930 = vpop.f32.mrb[0].mxu0
  %v931 = vpop.f32.mrb[0].mxu0
  %v932 = vadd.f32 %v835, %v931
  %v933 = vpop.f32.mrb[0].mxu0
  %934 = vmatprep.mubr.bf16.mxu0 0
  %935 = vmatmul.mubr.bf16.gmra.mrb[0].mxu0 %v665
  %v936 = vpop.f32.mrb[0].mxu0
  %v937 = vadd.f32 %v840, %v936
  %v938 = vpop.f32.mrb[0].mxu0
  %v939 = vpop.f32.mrb[0].mxu0
  %v940 = vadd.f32 %v843, %v939
  %v941 = vpop.f32.mrb[0].mxu0
  %942 = vmatprep.mubr.bf16.mxu0 0
  %943 = vmatmul.mubr.bf16.gmra.mrb[0].mxu0 %v668
  %v944 = vpop.f32.mrb[0].mxu0
  %v945 = vadd.f32 %v848, %v944
  %v946 = vpop.f32.mrb[0].mxu0
  %v947 = vpop.f32.mrb[0].mxu0
  %v948 = vadd.f32 %v851, %v947
  %v949 = vpop.f32.mrb[0].mxu0
  %950 = vmatprep.mubr.bf16.mxu0 0
  %951 = vmatmul.mubr.bf16.gmra.mrb[0].mxu0 %v671
  %v952 = vpop.f32.mrb[0].mxu0
  %v953 = vadd.f32 %v856, %v952
  %v954 = vpop.f32.mrb[0].mxu0
  %v955 = vpop.f32.mrb[0].mxu0
  %v956 = vadd.f32 %v859, %v955
  %v957 = vpop.f32.mrb[0].mxu0
  %958 = vmatprep.mubr.bf16.mxu0 0
  %959 = vmatmul.mubr.bf16.gmra.mrb[0].mxu0 %v674
  %v960 = vpop.f32.mrb[0].mxu0
  %v961 = vadd.f32 %v864, %v960
  %v962 = vpop.f32.mrb[0].mxu0
  %v963 = vpop.f32.mrb[0].mxu0
  %v964 = vadd.f32 %v867, %v963
  %v965 = vpop.f32.mrb[0].mxu0
  %966 = vdwg.mxu0
  %s967 = sld [smem:[#allocation2]]
  %vm968 = vcmp.gt.f32.partialorder %v905, 0.0
  %vm969 = vcmp.gt.f32.partialorder %v908, 0.0
  %vm970 = vcmp.gt.f32.partialorder %v913, 0.0
  %vm971 = vcmp.gt.f32.partialorder %v916, 0.0
  %vm972 = vcmp.gt.f32.partialorder %v921, 0.0
  %vm973 = vcmp.gt.f32.partialorder %v924, 0.0
  %vm974 = vcmp.gt.f32.partialorder %v929, 0.0
  %vm975 = vcmp.gt.f32.partialorder %v932, 0.0
  %vm976 = vcmp.gt.f32.partialorder %v937, 0.0
  %vm977 = vcmp.gt.f32.partialorder %v940, 0.0
  %vm978 = vcmp.gt.f32.partialorder %v945, 0.0
  %vm979 = vcmp.gt.f32.partialorder %v948, 0.0
  %vm980 = vcmp.gt.f32.partialorder %v953, 0.0
  %vm981 = vcmp.gt.f32.partialorder %v956, 0.0
  %vm982 = vcmp.gt.f32.partialorder %v961, 0.0
  %vm983 = vcmp.gt.f32.partialorder %v964, 0.0
  %v984 = vstv %s967
  %v985 = vmul.f32 %v984, %v905
  %v986 = vmul.f32 %v984, %v908
  %v987 = vmul.f32 %v984, %v913
  %v988 = vmul.f32 %v984, %v916
  %v989 = vmul.f32 %v984, %v921
  %v990 = vmul.f32 %v984, %v924
  %v991 = vmul.f32 %v984, %v929
  %v992 = vmul.f32 %v984, %v932
  %v993 = vmul.f32 %v984, %v937
  %v994 = vmul.f32 %v984, %v940
  %v995 = vmul.f32 %v984, %v945
  %v996 = vmul.f32 %v984, %v948
  %v997 = vmul.f32 %v984, %v953
  %v998 = vmul.f32 %v984, %v956
  %v999 = vmul.f32 %v984, %v961
  %v1000 = vmul.f32 %v984, %v964
  %v1001 = vsel %vm968, %v905, %v985
  %v1002 = vsel %vm969, %v908, %v986
  %v1003 = vsel %vm970, %v913, %v987
  %v1004 = vsel %vm971, %v916, %v988
  %v1005 = vsel %vm972, %v921, %v989
  %v1006 = vsel %vm973, %v924, %v990
  %v1007 = vsel %vm974, %v929, %v991
  %v1008 = vsel %vm975, %v932, %v992
  %v1009 = vsel %vm976, %v937, %v993
  %v1010 = vsel %vm977, %v940, %v994
  %v1011 = vsel %vm978, %v945, %v995
  %v1012 = vsel %vm979, %v948, %v996
  %v1013 = vsel %vm980, %v953, %v997
  %v1014 = vsel %vm981, %v956, %v998
  %v1015 = vsel %vm982, %v961, %v999
  %v1016 = vsel %vm983, %v964, %v1000
  %v1017 = vpack.c.bf16 %v1002, %v1001
  %v1018 = vpack.c.bf16 %v1004, %v1003
  %v1019 = vpack.c.bf16 %v1006, %v1005
  %v1020 = vpack.c.bf16 %v1008, %v1007
  %v1021 = vpack.c.bf16 %v1010, %v1009
  %v1022 = vpack.c.bf16 %v1012, %v1011
  %v1023 = vpack.c.bf16 %v1014, %v1013
  %v1024 = vpack.c.bf16 %v1016, %v1015
  %v1033 = vunpack.c.l.b16 %v1017
  %v1034 = vunpack.c.h.b16 %v1017
  %v1035 = vunpack.c.l.b16 %v1018
  %v1036 = vunpack.c.h.b16 %v1018
  %v1037 = vunpack.c.l.b16 %v1019
  %v1038 = vunpack.c.h.b16 %v1019
  %v1039 = vunpack.c.l.b16 %v1020
  %v1040 = vunpack.c.h.b16 %v1020
  %v1041 = vunpack.c.l.b16 %v1021
  %v1042 = vunpack.c.h.b16 %v1021
  %v1043 = vunpack.c.l.b16 %v1022
  %v1044 = vunpack.c.h.b16 %v1022
  %v1045 = vunpack.c.l.b16 %v1023
  %v1046 = vunpack.c.h.b16 %v1023
  %v1047 = vunpack.c.l.b16 %v1024
  %v1048 = vunpack.c.h.b16 %v1024
  %v1049 = vpack.c.b16 %v1033, %v1033
  %v1050 = vpack.c.b16 %v1034, %v1034
  %v1051 = vpack.c.b16 %v1035, %v1035
  %v1052 = vpack.c.b16 %v1036, %v1036
  %v1053 = vpack.c.b16 %v1037, %v1037
  %v1054 = vpack.c.b16 %v1038, %v1038
  %v1055 = vpack.c.b16 %v1039, %v1039
  %v1056 = vpack.c.b16 %v1040, %v1040
  %v1057 = vpack.c.b16 %v1041, %v1041
  %v1058 = vpack.c.b16 %v1042, %v1042
  %v1059 = vpack.c.b16 %v1043, %v1043
  %v1060 = vpack.c.b16 %v1044, %v1044
  %v1061 = vpack.c.b16 %v1045, %v1045
  %v1062 = vpack.c.b16 %v1046, %v1046
  %v1063 = vpack.c.b16 %v1047, %v1047
  %v1064 = vpack.c.b16 %v1048, %v1048
  %1081 = vst [vmem:[%s4] sm:$0xf] %v1049
  %1082 = vst [vmem:[%s4 + $0x4] sm:$0xf] %v1050
  %1083 = vst [vmem:[%s4 + $0x8] sm:$0xf] %v1051
  %1084 = vst [vmem:[%s4 + $0xc] sm:$0xf] %v1052
  %1085 = vst [vmem:[%s4 + $0x10] sm:$0xf] %v1053
  %1086 = vst [vmem:[%s4 + $0x14] sm:$0xf] %v1054
  %1087 = vst [vmem:[%s4 + $0x18] sm:$0xf] %v1055
  %1088 = vst [vmem:[%s4 + $0x1c] sm:$0xf] %v1056
  %1089 = vst [vmem:[%s4 + $0x20] sm:$0xf] %v1057
  %1090 = vst [vmem:[%s4 + $0x24] sm:$0xf] %v1058
  %1091 = vst [vmem:[%s4 + $0x28] sm:$0xf] %v1059
  %1092 = vst [vmem:[%s4 + $0x2c] sm:$0xf] %v1060
  %1093 = vst [vmem:[%s4 + $0x30] sm:$0xf] %v1061
  %1094 = vst [vmem:[%s4 + $0x34] sm:$0xf] %v1062
  %1095 = vst [vmem:[%s4 + $0x38] sm:$0xf] %v1063
  %1096 = vst [vmem:[%s4 + $0x3c] sm:$0xf] %v1064
  // Predicated region
  $region18: #{_cnn_forward.22} parent=0 // pred_check
    _
  $region19: #{_cnn_forward.22} parent=0 // pred_check_branch
    %1098 = sbr.rel (0) target = $region21
  $region20: #{_cnn_forward.22} parent=0 // pred_region
    _
  $region21: #{_cnn_forward.22} parent=0 // pred_fallthru
    _
  // Predicated region
  $region22: #{_cnn_forward.22} parent=0 // pred_check
    _
  $region23: #{_cnn_forward.22} parent=0 // pred_check_branch
    %1100 = sbr.rel (0) target = $region25
  $region24: #{_cnn_forward.22} parent=0 // pred_region
    _
  $region25: #{_cnn_forward.22} parent=0 // pred_fallthru
    _

// kernel: _cnn_forward.23
$region0: #{_cnn_forward.23}
  #allocation0 [shape = 'u32[]', space=smem, size = 0x4, offset = 0x4, fixed_abs, tag = 'smem constant byte address 0x4 - core index']
  #allocation1 [shape = 'u32[144,128]{1,0:T(1,128)}', space=vmem, size = 0x12000, scoped, tag = 'internal scratch']
  #allocation2 [shape = 'f32[1]{0:T(128)S(6)}', space=smem, size = 0x200, scoped, tag = 'scoped memory for _cnn_forward.23']
  %s0 = inlined_call_operand.vmem [shape: bf16[1152,128], index: 0, kind: input, shape index: {}]
  %s1 = inlined_call_operand.vmem [shape: bf16[128,1152], index: 1, kind: input, shape index: {}]
  %s2 = inlined_call_operand.vmem [shape: f32[128,1], index: 2, kind: input, shape index: {}]
  %s3 = inlined_call_operand.<no memory space> [shape: f32[1], index: 3, kind: input, shape index: {}]
  %s4 = inlined_call_operand.vmem [shape: bf16[128,128], index: 4, kind: output, shape index: {}]
  %s5 = sld [smem:[#allocation0]]
  $region26: #{_cnn_forward.23} parent=0
    _
  %s7 = ssub.s32 1, %s5
  %s8 = scalar_select 0, %s7, %s5
  %9 = sst [smem:[#allocation2]] %s3
  // Predicated region
  $region2: #{_cnn_forward.23} parent=0 // pred_check
    _
  $region3: #{_cnn_forward.23} parent=0 // pred_check_branch
    %11 = sbr.rel (0) target = $region5
  $region4: #{_cnn_forward.23} parent=0 // pred_region
    _
  $region5: #{_cnn_forward.23} parent=0 // pred_fallthru
    _
  // Predicated region
  $region6: #{_cnn_forward.23} parent=0 // pred_check
    _
  $region7: #{_cnn_forward.23} parent=0 // pred_check_branch
    %13 = sbr.rel (0) target = $region9
  $region8: #{_cnn_forward.23} parent=0 // pred_region
    _
  $region9: #{_cnn_forward.23} parent=0 // pred_fallthru
    _
  // Predicated region
  $region10: #{_cnn_forward.23} parent=0 // pred_check
    _
  $region11: #{_cnn_forward.23} parent=0 // pred_check_branch
    %15 = sbr.rel (0) target = $region13
  $region12: #{_cnn_forward.23} parent=0 // pred_region
    _
  $region13: #{_cnn_forward.23} parent=0 // pred_fallthru
    _
  // Predicated region
  $region14: #{_cnn_forward.23} parent=0 // pred_check
    _
  $region15: #{_cnn_forward.23} parent=0 // pred_check_branch
    %17 = sbr.rel (0) target = $region17
  $region16: #{_cnn_forward.23} parent=0 // pred_region
    _
  $region17: #{_cnn_forward.23} parent=0 // pred_fallthru
    _
  %v19 = vld [vmem:[%s1] sm:$0xff]
  %v20 = vld [vmem:[%s1 + $0x8] sm:$0xff]
  %v21 = vld [vmem:[%s1 + $0x10] sm:$0xff]
  %v22 = vld [vmem:[%s1 + $0x18] sm:$0xff]
  %v23 = vld [vmem:[%s1 + $0x20] sm:$0xf]
  %v24 = vld [vmem:[%s1 + $0x24] sm:$0xff]
  %v25 = vld [vmem:[%s1 + $0x2c] sm:$0xff]
  %v26 = vld [vmem:[%s1 + $0x34] sm:$0xff]
  %v27 = vld [vmem:[%s1 + $0x3c] sm:$0xff]
  %v28 = vld [vmem:[%s1 + $0x44] sm:$0xf]
  %v29 = vld [vmem:[%s1 + $0x48] sm:$0xff]
  %v30 = vld [vmem:[%s1 + $0x50] sm:$0xff]
  %v31 = vld [vmem:[%s1 + $0x58] sm:$0xff]
  %v32 = vld [vmem:[%s1 + $0x60] sm:$0xff]
  %v33 = vld [vmem:[%s1 + $0x68] sm:$0xf]
  %v34 = vld [vmem:[%s1 + $0x6c] sm:$0xff]
  %v35 = vld [vmem:[%s1 + $0x74] sm:$0xff]
  %v36 = vld [vmem:[%s1 + $0x7c] sm:$0xff]
  %v37 = vld [vmem:[%s1 + $0x84] sm:$0xff]
  %v38 = vld [vmem:[%s1 + $0x8c] sm:$0xf]
  %v39 = vld [vmem:[%s1 + $0x90] sm:$0xff]
  %v40 = vld [vmem:[%s1 + $0x98] sm:$0xff]
  %v41 = vld [vmem:[%s1 + $0xa0] sm:$0xff]
  %v42 = vld [vmem:[%s1 + $0xa8] sm:$0xff]
  %v43 = vld [vmem:[%s1 + $0xb0] sm:$0xf]
  %v44 = vld [vmem:[%s1 + $0xb4] sm:$0xff]
  %v45 = vld [vmem:[%s1 + $0xbc] sm:$0xff]
  %v46 = vld [vmem:[%s1 + $0xc4] sm:$0xff]
  %v47 = vld [vmem:[%s1 + $0xcc] sm:$0xff]
  %v48 = vld [vmem:[%s1 + $0xd4] sm:$0xf]
  %v49 = vld [vmem:[%s1 + $0xd8] sm:$0xff]
  %v50 = vld [vmem:[%s1 + $0xe0] sm:$0xff]
  %v51 = vld [vmem:[%s1 + $0xe8] sm:$0xff]
  %v52 = vld [vmem:[%s1 + $0xf0] sm:$0xff]
  %v53 = vld [vmem:[%s1 + $0xf8] sm:$0xf]
  %v54 = vld [vmem:[%s1 + $0xfc] sm:$0xff]
  %v55 = vld [vmem:[%s1 + $0x104] sm:$0xff]
  %v56 = vld [vmem:[%s1 + $0x10c] sm:$0xff]
  %v57 = vld [vmem:[%s1 + $0x114] sm:$0xff]
  %v58 = vld [vmem:[%s1 + $0x11c] sm:$0xf]
  %v59 = vld [vmem:[%s1 + $0x120] sm:$0xff]
  %v60 = vld [vmem:[%s1 + $0x128] sm:$0xff]
  %v61 = vld [vmem:[%s1 + $0x130] sm:$0xff]
  %v62 = vld [vmem:[%s1 + $0x138] sm:$0xff]
  %v63 = vld [vmem:[%s1 + $0x140] sm:$0xf]
  %v64 = vld [vmem:[%s1 + $0x144] sm:$0xff]
  %v65 = vld [vmem:[%s1 + $0x14c] sm:$0xff]
  %v66 = vld [vmem:[%s1 + $0x154] sm:$0xff]
  %v67 = vld [vmem:[%s1 + $0x15c] sm:$0xff]
  %v68 = vld [vmem:[%s1 + $0x164] sm:$0xf]
  %v69 = vld [vmem:[%s1 + $0x168] sm:$0xff]
  %v70 = vld [vmem:[%s1 + $0x170] sm:$0xff]
  %v71 = vld [vmem:[%s1 + $0x178] sm:$0xff]
  %v72 = vld [vmem:[%s1 + $0x180] sm:$0xff]
  %v73 = vld [vmem:[%s1 + $0x188] sm:$0xf]
  %v74 = vld [vmem:[%s1 + $0x18c] sm:$0xff]
  %v75 = vld [vmem:[%s1 + $0x194] sm:$0xff]
  %v76 = vld [vmem:[%s1 + $0x19c] sm:$0xff]
  %v77 = vld [vmem:[%s1 + $0x1a4] sm:$0xff]
  %v78 = vld [vmem:[%s1 + $0x1ac] sm:$0xf]
  %v79 = vld [vmem:[%s1 + $0x1b0] sm:$0xff]
  %v80 = vld [vmem:[%s1 + $0x1b8] sm:$0xff]
  %v81 = vld [vmem:[%s1 + $0x1c0] sm:$0xff]
  %v82 = vld [vmem:[%s1 + $0x1c8] sm:$0xff]
  %v83 = vld [vmem:[%s1 + $0x1d0] sm:$0xf]
  %v84 = vld [vmem:[%s1 + $0x1d4] sm:$0xff]
  %v85 = vld [vmem:[%s1 + $0x1dc] sm:$0xff]
  %v86 = vld [vmem:[%s1 + $0x1e4] sm:$0xff]
  %v87 = vld [vmem:[%s1 + $0x1ec] sm:$0xff]
  %v88 = vld [vmem:[%s1 + $0x1f4] sm:$0xf]
  %v89 = vld [vmem:[%s1 + $0x1f8] sm:$0xff]
  %v90 = vld [vmem:[%s1 + $0x200] sm:$0xff]
  %v91 = vld [vmem:[%s1 + $0x208] sm:$0xff]
  %v92 = vld [vmem:[%s1 + $0x210] sm:$0xff]
  %v93 = vld [vmem:[%s1 + $0x218] sm:$0xf]
  %v94 = vld [vmem:[%s1 + $0x21c] sm:$0xff]
  %v95 = vld [vmem:[%s1 + $0x224] sm:$0xff]
  %v96 = vld [vmem:[%s1 + $0x22c] sm:$0xff]
  %v97 = vld [vmem:[%s1 + $0x234] sm:$0xff]
  %v98 = vld [vmem:[%s1 + $0x23c] sm:$0xf]
  %v99 = vld [vmem:[%s0] sm:$0xf]
  %v100 = vld [vmem:[%s0 + $0x4] sm:$0xf]
  %v101 = vld [vmem:[%s0 + $0x8] sm:$0xf]
  %v102 = vld [vmem:[%s0 + $0xc] sm:$0xf]
  %v103 = vld [vmem:[%s0 + $0x10] sm:$0xf]
  %v104 = vld [vmem:[%s0 + $0x14] sm:$0xf]
  %v105 = vld [vmem:[%s0 + $0x18] sm:$0xf]
  %v106 = vld [vmem:[%s0 + $0x1c] sm:$0xf]
  %v107 = vld [vmem:[%s0 + $0x20] sm:$0xf]
  %v108 = vld [vmem:[%s0 + $0x24] sm:$0xf]
  %v109 = vld [vmem:[%s0 + $0x28] sm:$0xf]
  %v110 = vld [vmem:[%s0 + $0x2c] sm:$0xf]
  %v111 = vld [vmem:[%s0 + $0x30] sm:$0xf]
  %v112 = vld [vmem:[%s0 + $0x34] sm:$0xf]
  %v113 = vld [vmem:[%s0 + $0x38] sm:$0xf]
  %v114 = vld [vmem:[%s0 + $0x3c] sm:$0xf]
  %v115 = vld [vmem:[%s0 + $0x40] sm:$0xf]
  %v116 = vld [vmem:[%s0 + $0x44] sm:$0xf]
  %v117 = vld [vmem:[%s0 + $0x48] sm:$0xf]
  %v118 = vld [vmem:[%s0 + $0x4c] sm:$0xf]
  %v119 = vld [vmem:[%s0 + $0x50] sm:$0xf]
  %v120 = vld [vmem:[%s0 + $0x54] sm:$0xf]
  %v121 = vld [vmem:[%s0 + $0x58] sm:$0xf]
  %v122 = vld [vmem:[%s0 + $0x5c] sm:$0xf]
  %v123 = vld [vmem:[%s0 + $0x60] sm:$0xf]
  %v124 = vld [vmem:[%s0 + $0x64] sm:$0xf]
  %v125 = vld [vmem:[%s0 + $0x68] sm:$0xf]
  %v126 = vld [vmem:[%s0 + $0x6c] sm:$0xf]
  %v127 = vld [vmem:[%s0 + $0x70] sm:$0xf]
  %v128 = vld [vmem:[%s0 + $0x74] sm:$0xf]
  %v129 = vld [vmem:[%s0 + $0x78] sm:$0xf]
  %v130 = vld [vmem:[%s0 + $0x7c] sm:$0xf]
  %v131 = vld [vmem:[%s0 + $0x80] sm:$0xf]
  %v132 = vld [vmem:[%s0 + $0x84] sm:$0xf]
  %v133 = vld [vmem:[%s0 + $0x88] sm:$0xf]
  %v134 = vld [vmem:[%s0 + $0x8c] sm:$0xf]
  %v135 = vld [vmem:[%s0 + $0x90] sm:$0xf]
  %v136 = vld [vmem:[%s0 + $0x94] sm:$0xf]
  %v137 = vld [vmem:[%s0 + $0x98] sm:$0xf]
  %v138 = vld [vmem:[%s0 + $0x9c] sm:$0xf]
  %v139 = vld [vmem:[%s0 + $0xa0] sm:$0xf]
  %v140 = vld [vmem:[%s0 + $0xa4] sm:$0xf]
  %v141 = vld [vmem:[%s0 + $0xa8] sm:$0xf]
  %v142 = vld [vmem:[%s0 + $0xac] sm:$0xf]
  %v143 = vld [vmem:[%s0 + $0xb0] sm:$0xf]
  %v144 = vld [vmem:[%s0 + $0xb4] sm:$0xf]
  %v145 = vld [vmem:[%s0 + $0xb8] sm:$0xf]
  %v146 = vld [vmem:[%s0 + $0xbc] sm:$0xf]
  %v147 = vld [vmem:[%s0 + $0xc0] sm:$0xf]
  %v148 = vld [vmem:[%s0 + $0xc4] sm:$0xf]
  %v149 = vld [vmem:[%s0 + $0xc8] sm:$0xf]
  %v150 = vld [vmem:[%s0 + $0xcc] sm:$0xf]
  %v151 = vld [vmem:[%s0 + $0xd0] sm:$0xf]
  %v152 = vld [vmem:[%s0 + $0xd4] sm:$0xf]
  %v153 = vld [vmem:[%s0 + $0xd8] sm:$0xf]
  %v154 = vld [vmem:[%s0 + $0xdc] sm:$0xf]
  %v155 = vld [vmem:[%s0 + $0xe0] sm:$0xf]
  %v156 = vld [vmem:[%s0 + $0xe4] sm:$0xf]
  %v157 = vld [vmem:[%s0 + $0xe8] sm:$0xf]
  %v158 = vld [vmem:[%s0 + $0xec] sm:$0xf]
  %v159 = vld [vmem:[%s0 + $0xf0] sm:$0xf]
  %v160 = vld [vmem:[%s0 + $0xf4] sm:$0xf]
  %v161 = vld [vmem:[%s0 + $0xf8] sm:$0xf]
  %v162 = vld [vmem:[%s0 + $0xfc] sm:$0xf]
  %v163 = vld [vmem:[%s0 + $0x100] sm:$0xf]
  %v164 = vld [vmem:[%s0 + $0x104] sm:$0xf]
  %v165 = vld [vmem:[%s0 + $0x108] sm:$0xf]
  %v166 = vld [vmem:[%s0 + $0x10c] sm:$0xf]
  %v167 = vld [vmem:[%s0 + $0x110] sm:$0xf]
  %v168 = vld [vmem:[%s0 + $0x114] sm:$0xf]
  %v169 = vld [vmem:[%s0 + $0x118] sm:$0xf]
  %v170 = vld [vmem:[%s0 + $0x11c] sm:$0xf]
  %v171 = vld [vmem:[%s0 + $0x120] sm:$0xf]
  %v172 = vld [vmem:[%s0 + $0x124] sm:$0xf]
  %v173 = vld [vmem:[%s0 + $0x128] sm:$0xf]
  %v174 = vld [vmem:[%s0 + $0x12c] sm:$0xf]
  %v175 = vld [vmem:[%s0 + $0x130] sm:$0xf]
  %v176 = vld [vmem:[%s0 + $0x134] sm:$0xf]
  %v177 = vld [vmem:[%s0 + $0x138] sm:$0xf]
  %v178 = vld [vmem:[%s0 + $0x13c] sm:$0xf]
  %v179 = vld [vmem:[%s0 + $0x140] sm:$0xf]
  %v180 = vld [vmem:[%s0 + $0x144] sm:$0xf]
  %v181 = vld [vmem:[%s0 + $0x148] sm:$0xf]
  %v182 = vld [vmem:[%s0 + $0x14c] sm:$0xf]
  %v183 = vld [vmem:[%s0 + $0x150] sm:$0xf]
  %v184 = vld [vmem:[%s0 + $0x154] sm:$0xf]
  %v185 = vld [vmem:[%s0 + $0x158] sm:$0xf]
  %v186 = vld [vmem:[%s0 + $0x15c] sm:$0xf]
  %v187 = vld [vmem:[%s0 + $0x160] sm:$0xf]
  %v188 = vld [vmem:[%s0 + $0x164] sm:$0xf]
  %v189 = vld [vmem:[%s0 + $0x168] sm:$0xf]
  %v190 = vld [vmem:[%s0 + $0x16c] sm:$0xf]
  %v191 = vld [vmem:[%s0 + $0x170] sm:$0xf]
  %v192 = vld [vmem:[%s0 + $0x174] sm:$0xf]
  %v193 = vld [vmem:[%s0 + $0x178] sm:$0xf]
  %v194 = vld [vmem:[%s0 + $0x17c] sm:$0xf]
  %v195 = vld [vmem:[%s0 + $0x180] sm:$0xf]
  %v196 = vld [vmem:[%s0 + $0x184] sm:$0xf]
  %v197 = vld [vmem:[%s0 + $0x188] sm:$0xf]
  %v198 = vld [vmem:[%s0 + $0x18c] sm:$0xf]
  %v199 = vld [vmem:[%s0 + $0x190] sm:$0xf]
  %v200 = vld [vmem:[%s0 + $0x194] sm:$0xf]
  %v201 = vld [vmem:[%s0 + $0x198] sm:$0xf]
  %v202 = vld [vmem:[%s0 + $0x19c] sm:$0xf]
  %v203 = vld [vmem:[%s0 + $0x1a0] sm:$0xf]
  %v204 = vld [vmem:[%s0 + $0x1a4] sm:$0xf]
  %v205 = vld [vmem:[%s0 + $0x1a8] sm:$0xf]
  %v206 = vld [vmem:[%s0 + $0x1ac] sm:$0xf]
  %v207 = vld [vmem:[%s0 + $0x1b0] sm:$0xf]
  %v208 = vld [vmem:[%s0 + $0x1b4] sm:$0xf]
  %v209 = vld [vmem:[%s0 + $0x1b8] sm:$0xf]
  %v210 = vld [vmem:[%s0 + $0x1bc] sm:$0xf]
  %v211 = vld [vmem:[%s0 + $0x1c0] sm:$0xf]
  %v212 = vld [vmem:[%s0 + $0x1c4] sm:$0xf]
  %v213 = vld [vmem:[%s0 + $0x1c8] sm:$0xf]
  %v214 = vld [vmem:[%s0 + $0x1cc] sm:$0xf]
  %v215 = vld [vmem:[%s0 + $0x1d0] sm:$0xf]
  %v216 = vld [vmem:[%s0 + $0x1d4] sm:$0xf]
  %v217 = vld [vmem:[%s0 + $0x1d8] sm:$0xf]
  %v218 = vld [vmem:[%s0 + $0x1dc] sm:$0xf]
  %v219 = vld [vmem:[%s0 + $0x1e0] sm:$0xf]
  %v220 = vld [vmem:[%s0 + $0x1e4] sm:$0xf]
  %v221 = vld [vmem:[%s0 + $0x1e8] sm:$0xf]
  %v222 = vld [vmem:[%s0 + $0x1ec] sm:$0xf]
  %v223 = vld [vmem:[%s0 + $0x1f0] sm:$0xf]
  %v224 = vld [vmem:[%s0 + $0x1f4] sm:$0xf]
  %v225 = vld [vmem:[%s0 + $0x1f8] sm:$0xf]
  %v226 = vld [vmem:[%s0 + $0x1fc] sm:$0xf]
  %v227 = vld [vmem:[%s0 + $0x200] sm:$0xf]
  %v228 = vld [vmem:[%s0 + $0x204] sm:$0xf]
  %v229 = vld [vmem:[%s0 + $0x208] sm:$0xf]
  %v230 = vld [vmem:[%s0 + $0x20c] sm:$0xf]
  %v231 = vld [vmem:[%s0 + $0x210] sm:$0xf]
  %v232 = vld [vmem:[%s0 + $0x214] sm:$0xf]
  %v233 = vld [vmem:[%s0 + $0x218] sm:$0xf]
  %v234 = vld [vmem:[%s0 + $0x21c] sm:$0xf]
  %v235 = vld [vmem:[%s0 + $0x220] sm:$0xf]
  %v236 = vld [vmem:[%s0 + $0x224] sm:$0xf]
  %v237 = vld [vmem:[%s0 + $0x228] sm:$0xf]
  %v238 = vld [vmem:[%s0 + $0x22c] sm:$0xf]
  %v239 = vld [vmem:[%s0 + $0x230] sm:$0xf]
  %v240 = vld [vmem:[%s0 + $0x234] sm:$0xf]
  %v241 = vld [vmem:[%s0 + $0x238] sm:$0xf]
  %v242 = vld [vmem:[%s0 + $0x23c] sm:$0xf]
  %v243 = vld [vmem:[%s2] sm:$0xff]
  %v244 = vld [vmem:[%s2 + $0x8] sm:$0xff]
  %v245 = vld [vmem:[%s2 + $0x10] sm:$0xff]
  %v246 = vld [vmem:[%s2 + $0x18] sm:$0xff]
  %v247 = vld [vmem:[%s2 + $0x20] sm:$0xff]
  %v248 = vld [vmem:[%s2 + $0x28] sm:$0xff]
  %v249 = vld [vmem:[%s2 + $0x30] sm:$0xff]
  %v250 = vld [vmem:[%s2 + $0x38] sm:$0xff]
  %v251 = vld [vmem:[%s2 + $0x40] sm:$0xff]
  %v252 = vld [vmem:[%s2 + $0x48] sm:$0xff]
  %v253 = vld [vmem:[%s2 + $0x50] sm:$0xff]
  %v254 = vld [vmem:[%s2 + $0x58] sm:$0xff]
  %v255 = vld [vmem:[%s2 + $0x60] sm:$0xff]
  %v256 = vld [vmem:[%s2 + $0x68] sm:$0xff]
  %v257 = vld [vmem:[%s2 + $0x70] sm:$0xff]
  %v258 = vld [vmem:[%s2 + $0x78] sm:$0xff]
  %260 = vset.pattern.permute.xlu0 0
  %261 = vperm.xlu0 %260, %v243
  %v262 = vpop.permute.xlu0 %261
  %265 = vset.pattern.permute.xlu0 0
  %266 = vperm.xlu0 %265, %v244
  %v267 = vpop.permute.xlu0 %266
  %270 = vset.pattern.permute.xlu0 0
  %271 = vperm.xlu0 %270, %v245
  %v272 = vpop.permute.xlu0 %271
  %275 = vset.pattern.permute.xlu0 0
  %276 = vperm.xlu0 %275, %v246
  %v277 = vpop.permute.xlu0 %276
  %280 = vset.pattern.permute.xlu0 0
  %281 = vperm.xlu0 %280, %v247
  %v282 = vpop.permute.xlu0 %281
  %285 = vset.pattern.permute.xlu0 0
  %286 = vperm.xlu0 %285, %v248
  %v287 = vpop.permute.xlu0 %286
  %290 = vset.pattern.permute.xlu0 0
  %291 = vperm.xlu0 %290, %v249
  %v292 = vpop.permute.xlu0 %291
  %295 = vset.pattern.permute.xlu0 0
  %296 = vperm.xlu0 %295, %v250
  %v297 = vpop.permute.xlu0 %296
  %300 = vset.pattern.permute.xlu0 0
  %301 = vperm.xlu0 %300, %v251
  %v302 = vpop.permute.xlu0 %301
  %305 = vset.pattern.permute.xlu0 0
  %306 = vperm.xlu0 %305, %v252
  %v307 = vpop.permute.xlu0 %306
  %310 = vset.pattern.permute.xlu0 0
  %311 = vperm.xlu0 %310, %v253
  %v312 = vpop.permute.xlu0 %311
  %315 = vset.pattern.permute.xlu0 0
  %316 = vperm.xlu0 %315, %v254
  %v317 = vpop.permute.xlu0 %316
  %320 = vset.pattern.permute.xlu0 0
  %321 = vperm.xlu0 %320, %v255
  %v322 = vpop.permute.xlu0 %321
  %325 = vset.pattern.permute.xlu0 0
  %326 = vperm.xlu0 %325, %v256
  %v327 = vpop.permute.xlu0 %326
  %330 = vset.pattern.permute.xlu0 0
  %331 = vperm.xlu0 %330, %v257
  %v332 = vpop.permute.xlu0 %331
  %335 = vset.pattern.permute.xlu0 0
  %336 = vperm.xlu0 %335, %v258
  %v337 = vpop.permute.xlu0 %336
  %v419 = vunpack.c.l.b16 %v19
  %v420 = vunpack.c.h.b16 %v19
  %v421 = vunpack.c.l.b16 %v20
  %v422 = vunpack.c.h.b16 %v20
  %v423 = vunpack.c.l.b16 %v21
  %v424 = vunpack.c.h.b16 %v21
  %v425 = vunpack.c.l.b16 %v22
  %v426 = vunpack.c.h.b16 %v22
  %v427 = vunpack.c.l.b16 %v23
  %v428 = vunpack.c.l.b16 %v24
  %v429 = vunpack.c.h.b16 %v24
  %v430 = vunpack.c.l.b16 %v25
  %v431 = vunpack.c.h.b16 %v25
  %v432 = vunpack.c.l.b16 %v26
  %v433 = vunpack.c.h.b16 %v26
  %v434 = vunpack.c.l.b16 %v27
  %v435 = vunpack.c.h.b16 %v27
  %v436 = vunpack.c.l.b16 %v28
  %v437 = vunpack.c.l.b16 %v29
  %v438 = vunpack.c.h.b16 %v29
  %v439 = vunpack.c.l.b16 %v30
  %v440 = vunpack.c.h.b16 %v30
  %v441 = vunpack.c.l.b16 %v31
  %v442 = vunpack.c.h.b16 %v31
  %v443 = vunpack.c.l.b16 %v32
  %v444 = vunpack.c.h.b16 %v32
  %v445 = vunpack.c.l.b16 %v33
  %v446 = vunpack.c.l.b16 %v34
  %v447 = vunpack.c.h.b16 %v34
  %v448 = vunpack.c.l.b16 %v35
  %v449 = vunpack.c.h.b16 %v35
  %v450 = vunpack.c.l.b16 %v36
  %v451 = vunpack.c.h.b16 %v36
  %v452 = vunpack.c.l.b16 %v37
  %v453 = vunpack.c.h.b16 %v37
  %v454 = vunpack.c.l.b16 %v38
  %v455 = vunpack.c.l.b16 %v39
  %v456 = vunpack.c.h.b16 %v39
  %v457 = vunpack.c.l.b16 %v40
  %v458 = vunpack.c.h.b16 %v40
  %v459 = vunpack.c.l.b16 %v41
  %v460 = vunpack.c.h.b16 %v41
  %v461 = vunpack.c.l.b16 %v42
  %v462 = vunpack.c.h.b16 %v42
  %v463 = vunpack.c.l.b16 %v43
  %v464 = vunpack.c.l.b16 %v44
  %v465 = vunpack.c.h.b16 %v44
  %v466 = vunpack.c.l.b16 %v45
  %v467 = vunpack.c.h.b16 %v45
  %v468 = vunpack.c.l.b16 %v46
  %v469 = vunpack.c.h.b16 %v46
  %v470 = vunpack.c.l.b16 %v47
  %v471 = vunpack.c.h.b16 %v47
  %v472 = vunpack.c.l.b16 %v48
  %v473 = vunpack.c.l.b16 %v49
  %v474 = vunpack.c.h.b16 %v49
  %v475 = vunpack.c.l.b16 %v50
  %v476 = vunpack.c.h.b16 %v50
  %v477 = vunpack.c.l.b16 %v51
  %v478 = vunpack.c.h.b16 %v51
  %v479 = vunpack.c.l.b16 %v52
  %v480 = vunpack.c.h.b16 %v52
  %v481 = vunpack.c.l.b16 %v53
  %v482 = vunpack.c.l.b16 %v54
  %v483 = vunpack.c.h.b16 %v54
  %v484 = vunpack.c.l.b16 %v55
  %v485 = vunpack.c.h.b16 %v55
  %v486 = vunpack.c.l.b16 %v56
  %v487 = vunpack.c.h.b16 %v56
  %v488 = vunpack.c.l.b16 %v57
  %v489 = vunpack.c.h.b16 %v57
  %v490 = vunpack.c.l.b16 %v58
  %v491 = vunpack.c.l.b16 %v59
  %v492 = vunpack.c.h.b16 %v59
  %v493 = vunpack.c.l.b16 %v60
  %v494 = vunpack.c.h.b16 %v60
  %v495 = vunpack.c.l.b16 %v61
  %v496 = vunpack.c.h.b16 %v61
  %v497 = vunpack.c.l.b16 %v62
  %v498 = vunpack.c.h.b16 %v62
  %v499 = vunpack.c.l.b16 %v63
  %v500 = vunpack.c.l.b16 %v64
  %v501 = vunpack.c.h.b16 %v64
  %v502 = vunpack.c.l.b16 %v65
  %v503 = vunpack.c.h.b16 %v65
  %v504 = vunpack.c.l.b16 %v66
  %v505 = vunpack.c.h.b16 %v66
  %v506 = vunpack.c.l.b16 %v67
  %v507 = vunpack.c.h.b16 %v67
  %v508 = vunpack.c.l.b16 %v68
  %v509 = vunpack.c.l.b16 %v69
  %v510 = vunpack.c.h.b16 %v69
  %v511 = vunpack.c.l.b16 %v70
  %v512 = vunpack.c.h.b16 %v70
  %v513 = vunpack.c.l.b16 %v71
  %v514 = vunpack.c.h.b16 %v71
  %v515 = vunpack.c.l.b16 %v72
  %v516 = vunpack.c.h.b16 %v72
  %v517 = vunpack.c.l.b16 %v73
  %v518 = vunpack.c.l.b16 %v74
  %v519 = vunpack.c.h.b16 %v74
  %v520 = vunpack.c.l.b16 %v75
  %v521 = vunpack.c.h.b16 %v75
  %v522 = vunpack.c.l.b16 %v76
  %v523 = vunpack.c.h.b16 %v76
  %v524 = vunpack.c.l.b16 %v77
  %v525 = vunpack.c.h.b16 %v77
  %v526 = vunpack.c.l.b16 %v78
  %v527 = vunpack.c.l.b16 %v79
  %v528 = vunpack.c.h.b16 %v79
  %v529 = vunpack.c.l.b16 %v80
  %v530 = vunpack.c.h.b16 %v80
  %v531 = vunpack.c.l.b16 %v81
  %v532 = vunpack.c.h.b16 %v81
  %v533 = vunpack.c.l.b16 %v82
  %v534 = vunpack.c.h.b16 %v82
  %v535 = vunpack.c.l.b16 %v83
  %v536 = vunpack.c.l.b16 %v84
  %v537 = vunpack.c.h.b16 %v84
  %v538 = vunpack.c.l.b16 %v85
  %v539 = vunpack.c.h.b16 %v85
  %v540 = vunpack.c.l.b16 %v86
  %v541 = vunpack.c.h.b16 %v86
  %v542 = vunpack.c.l.b16 %v87
  %v543 = vunpack.c.h.b16 %v87
  %v544 = vunpack.c.l.b16 %v88
  %v545 = vunpack.c.l.b16 %v89
  %v546 = vunpack.c.h.b16 %v89
  %v547 = vunpack.c.l.b16 %v90
  %v548 = vunpack.c.h.b16 %v90
  %v549 = vunpack.c.l.b16 %v91
  %v550 = vunpack.c.h.b16 %v91
  %v551 = vunpack.c.l.b16 %v92
  %v552 = vunpack.c.h.b16 %v92
  %v553 = vunpack.c.l.b16 %v93
  %v554 = vunpack.c.l.b16 %v94
  %v555 = vunpack.c.h.b16 %v94
  %v556 = vunpack.c.l.b16 %v95
  %v557 = vunpack.c.h.b16 %v95
  %v558 = vunpack.c.l.b16 %v96
  %v559 = vunpack.c.h.b16 %v96
  %v560 = vunpack.c.l.b16 %v97
  %v561 = vunpack.c.h.b16 %v97
  %v562 = vunpack.c.l.b16 %v98
  %v563 = vpack.c.b16 %v428, %v419
  %v564 = vpack.c.b16 %v429, %v420
  %v565 = vpack.c.b16 %v430, %v421
  %v566 = vpack.c.b16 %v431, %v422
  %v567 = vpack.c.b16 %v432, %v423
  %v568 = vpack.c.b16 %v433, %v424
  %v569 = vpack.c.b16 %v434, %v425
  %v570 = vpack.c.b16 %v435, %v426
  %v571 = vpack.c.b16 %v436, %v427
  %v572 = vpack.c.b16 %v446, %v437
  %v573 = vpack.c.b16 %v447, %v438
  %v574 = vpack.c.b16 %v448, %v439
  %v575 = vpack.c.b16 %v449, %v440
  %v576 = vpack.c.b16 %v450, %v441
  %v577 = vpack.c.b16 %v451, %v442
  %v578 = vpack.c.b16 %v452, %v443
  %v579 = vpack.c.b16 %v453, %v444
  %v580 = vpack.c.b16 %v454, %v445
  %v581 = vpack.c.b16 %v464, %v455
  %v582 = vpack.c.b16 %v465, %v456
  %v583 = vpack.c.b16 %v466, %v457
  %v584 = vpack.c.b16 %v467, %v458
  %v585 = vpack.c.b16 %v468, %v459
  %v586 = vpack.c.b16 %v469, %v460
  %v587 = vpack.c.b16 %v470, %v461
  %v588 = vpack.c.b16 %v471, %v462
  %v589 = vpack.c.b16 %v472, %v463
  %v590 = vpack.c.b16 %v482, %v473
  %v591 = vpack.c.b16 %v483, %v474
  %v592 = vpack.c.b16 %v484, %v475
  %v593 = vpack.c.b16 %v485, %v476
  %v594 = vpack.c.b16 %v486, %v477
  %v595 = vpack.c.b16 %v487, %v478
  %v596 = vpack.c.b16 %v488, %v479
  %v597 = vpack.c.b16 %v489, %v480
  %v598 = vpack.c.b16 %v490, %v481
  %v599 = vpack.c.b16 %v500, %v491
  %v600 = vpack.c.b16 %v501, %v492
  %v601 = vpack.c.b16 %v502, %v493
  %v602 = vpack.c.b16 %v503, %v494
  %v603 = vpack.c.b16 %v504, %v495
  %v604 = vpack.c.b16 %v505, %v496
  %v605 = vpack.c.b16 %v506, %v497
  %v606 = vpack.c.b16 %v507, %v498
  %v607 = vpack.c.b16 %v508, %v499
  %v608 = vpack.c.b16 %v518, %v509
  %v609 = vpack.c.b16 %v519, %v510
  %v610 = vpack.c.b16 %v520, %v511
  %v611 = vpack.c.b16 %v521, %v512
  %v612 = vpack.c.b16 %v522, %v513
  %v613 = vpack.c.b16 %v523, %v514
  %v614 = vpack.c.b16 %v524, %v515
  %v615 = vpack.c.b16 %v525, %v516
  %v616 = vpack.c.b16 %v526, %v517
  %v617 = vpack.c.b16 %v536, %v527
  %v618 = vpack.c.b16 %v537, %v528
  %v619 = vpack.c.b16 %v538, %v529
  %v620 = vpack.c.b16 %v539, %v530
  %v621 = vpack.c.b16 %v540, %v531
  %v622 = vpack.c.b16 %v541, %v532
  %v623 = vpack.c.b16 %v542, %v533
  %v624 = vpack.c.b16 %v543, %v534
  %v625 = vpack.c.b16 %v544, %v535
  %v626 = vpack.c.b16 %v554, %v545
  %v627 = vpack.c.b16 %v555, %v546
  %v628 = vpack.c.b16 %v556, %v547
  %v629 = vpack.c.b16 %v557, %v548
  %v630 = vpack.c.b16 %v558, %v549
  %v631 = vpack.c.b16 %v559, %v550
  %v632 = vpack.c.b16 %v560, %v551
  %v633 = vpack.c.b16 %v561, %v552
  %v634 = vpack.c.b16 %v562, %v553
  %v851 = vunpack.c.l.b16 %v99
  %v852 = vunpack.c.l.b16 %v100
  %v853 = vunpack.c.l.b16 %v101
  %v854 = vunpack.c.l.b16 %v102
  %v855 = vunpack.c.l.b16 %v103
  %v856 = vunpack.c.l.b16 %v104
  %v857 = vunpack.c.l.b16 %v105
  %v858 = vunpack.c.l.b16 %v106
  %v859 = vunpack.c.l.b16 %v107
  %v860 = vunpack.c.l.b16 %v108
  %v861 = vunpack.c.l.b16 %v109
  %v862 = vunpack.c.l.b16 %v110
  %v863 = vunpack.c.l.b16 %v111
  %v864 = vunpack.c.l.b16 %v112
  %v865 = vunpack.c.l.b16 %v113
  %v866 = vunpack.c.l.b16 %v114
  %v867 = vunpack.c.l.b16 %v115
  %v868 = vunpack.c.l.b16 %v116
  %v869 = vunpack.c.l.b16 %v117
  %v870 = vunpack.c.l.b16 %v118
  %v871 = vunpack.c.l.b16 %v119
  %v872 = vunpack.c.l.b16 %v120
  %v873 = vunpack.c.l.b16 %v121
  %v874 = vunpack.c.l.b16 %v122
  %v875 = vunpack.c.l.b16 %v123
  %v876 = vunpack.c.l.b16 %v124
  %v877 = vunpack.c.l.b16 %v125
  %v878 = vunpack.c.l.b16 %v126
  %v879 = vunpack.c.l.b16 %v127
  %v880 = vunpack.c.l.b16 %v128
  %v881 = vunpack.c.l.b16 %v129
  %v882 = vunpack.c.l.b16 %v130
  %v883 = vunpack.c.l.b16 %v131
  %v884 = vunpack.c.l.b16 %v132
  %v885 = vunpack.c.l.b16 %v133
  %v886 = vunpack.c.l.b16 %v134
  %v887 = vunpack.c.l.b16 %v135
  %v888 = vunpack.c.l.b16 %v136
  %v889 = vunpack.c.l.b16 %v137
  %v890 = vunpack.c.l.b16 %v138
  %v891 = vunpack.c.l.b16 %v139
  %v892 = vunpack.c.l.b16 %v140
  %v893 = vunpack.c.l.b16 %v141
  %v894 = vunpack.c.l.b16 %v142
  %v895 = vunpack.c.l.b16 %v143
  %v896 = vunpack.c.l.b16 %v144
  %v897 = vunpack.c.l.b16 %v145
  %v898 = vunpack.c.l.b16 %v146
  %v899 = vunpack.c.l.b16 %v147
  %v900 = vunpack.c.l.b16 %v148
  %v901 = vunpack.c.l.b16 %v149
  %v902 = vunpack.c.l.b16 %v150
  %v903 = vunpack.c.l.b16 %v151
  %v904 = vunpack.c.l.b16 %v152
  %v905 = vunpack.c.l.b16 %v153
  %v906 = vunpack.c.l.b16 %v154
  %v907 = vunpack.c.l.b16 %v155
  %v908 = vunpack.c.l.b16 %v156
  %v909 = vunpack.c.l.b16 %v157
  %v910 = vunpack.c.l.b16 %v158
  %v911 = vunpack.c.l.b16 %v159
  %v912 = vunpack.c.l.b16 %v160
  %v913 = vunpack.c.l.b16 %v161
  %v914 = vunpack.c.l.b16 %v162
  %v915 = vunpack.c.l.b16 %v163
  %v916 = vunpack.c.l.b16 %v164
  %v917 = vunpack.c.l.b16 %v165
  %v918 = vunpack.c.l.b16 %v166
  %v919 = vunpack.c.l.b16 %v167
  %v920 = vunpack.c.l.b16 %v168
  %v921 = vunpack.c.l.b16 %v169
  %v922 = vunpack.c.l.b16 %v170
  %v923 = vunpack.c.l.b16 %v171
  %v924 = vunpack.c.l.b16 %v172
  %v925 = vunpack.c.l.b16 %v173
  %v926 = vunpack.c.l.b16 %v174
  %v927 = vunpack.c.l.b16 %v175
  %v928 = vunpack.c.l.b16 %v176
  %v929 = vunpack.c.l.b16 %v177
  %v930 = vunpack.c.l.b16 %v178
  %v931 = vunpack.c.l.b16 %v179
  %v932 = vunpack.c.l.b16 %v180
  %v933 = vunpack.c.l.b16 %v181
  %v934 = vunpack.c.l.b16 %v182
  %v935 = vunpack.c.l.b16 %v183
  %v936 = vunpack.c.l.b16 %v184
  %v937 = vunpack.c.l.b16 %v185
  %v938 = vunpack.c.l.b16 %v186
  %v939 = vunpack.c.l.b16 %v187
  %v940 = vunpack.c.l.b16 %v188
  %v941 = vunpack.c.l.b16 %v189
  %v942 = vunpack.c.l.b16 %v190
  %v943 = vunpack.c.l.b16 %v191
  %v944 = vunpack.c.l.b16 %v192
  %v945 = vunpack.c.l.b16 %v193
  %v946 = vunpack.c.l.b16 %v194
  %v947 = vunpack.c.l.b16 %v195
  %v948 = vunpack.c.l.b16 %v196
  %v949 = vunpack.c.l.b16 %v197
  %v950 = vunpack.c.l.b16 %v198
  %v951 = vunpack.c.l.b16 %v199
  %v952 = vunpack.c.l.b16 %v200
  %v953 = vunpack.c.l.b16 %v201
  %v954 = vunpack.c.l.b16 %v202
  %v955 = vunpack.c.l.b16 %v203
  %v956 = vunpack.c.l.b16 %v204
  %v957 = vunpack.c.l.b16 %v205
  %v958 = vunpack.c.l.b16 %v206
  %v959 = vunpack.c.l.b16 %v207
  %v960 = vunpack.c.l.b16 %v208
  %v961 = vunpack.c.l.b16 %v209
  %v962 = vunpack.c.l.b16 %v210
  %v963 = vunpack.c.l.b16 %v211
  %v964 = vunpack.c.l.b16 %v212
  %v965 = vunpack.c.l.b16 %v213
  %v966 = vunpack.c.l.b16 %v214
  %v967 = vunpack.c.l.b16 %v215
  %v968 = vunpack.c.l.b16 %v216
  %v969 = vunpack.c.l.b16 %v217
  %v970 = vunpack.c.l.b16 %v218
  %v971 = vunpack.c.l.b16 %v219
  %v972 = vunpack.c.l.b16 %v220
  %v973 = vunpack.c.l.b16 %v221
  %v974 = vunpack.c.l.b16 %v222
  %v975 = vunpack.c.l.b16 %v223
  %v976 = vunpack.c.l.b16 %v224
  %v977 = vunpack.c.l.b16 %v225
  %v978 = vunpack.c.l.b16 %v226
  %v979 = vunpack.c.l.b16 %v227
  %v980 = vunpack.c.l.b16 %v228
  %v981 = vunpack.c.l.b16 %v229
  %v982 = vunpack.c.l.b16 %v230
  %v983 = vunpack.c.l.b16 %v231
  %v984 = vunpack.c.l.b16 %v232
  %v985 = vunpack.c.l.b16 %v233
  %v986 = vunpack.c.l.b16 %v234
  %v987 = vunpack.c.l.b16 %v235
  %v988 = vunpack.c.l.b16 %v236
  %v989 = vunpack.c.l.b16 %v237
  %v990 = vunpack.c.l.b16 %v238
  %v991 = vunpack.c.l.b16 %v239
  %v992 = vunpack.c.l.b16 %v240
  %v993 = vunpack.c.l.b16 %v241
  %v994 = vunpack.c.l.b16 %v242
  %v995 = vpack.c.b16 %v852, %v851
  %v996 = vpack.c.b16 %v854, %v853
  %v997 = vpack.c.b16 %v856, %v855
  %v998 = vpack.c.b16 %v858, %v857
  %v999 = vpack.c.b16 %v860, %v859
  %v1000 = vpack.c.b16 %v862, %v861
  %v1001 = vpack.c.b16 %v864, %v863
  %v1002 = vpack.c.b16 %v866, %v865
  %v1003 = vpack.c.b16 %v868, %v867
  %v1004 = vpack.c.b16 %v870, %v869
  %v1005 = vpack.c.b16 %v872, %v871
  %v1006 = vpack.c.b16 %v874, %v873
  %v1007 = vpack.c.b16 %v876, %v875
  %v1008 = vpack.c.b16 %v878, %v877
  %v1009 = vpack.c.b16 %v880, %v879
  %v1010 = vpack.c.b16 %v882, %v881
  %v1011 = vpack.c.b16 %v884, %v883
  %v1012 = vpack.c.b16 %v886, %v885
  %v1013 = vpack.c.b16 %v888, %v887
  %v1014 = vpack.c.b16 %v890, %v889
  %v1015 = vpack.c.b16 %v892, %v891
  %v1016 = vpack.c.b16 %v894, %v893
  %v1017 = vpack.c.b16 %v896, %v895
  %v1018 = vpack.c.b16 %v898, %v897
  %v1019 = vpack.c.b16 %v900, %v899
  %v1020 = vpack.c.b16 %v902, %v901
  %v1021 = vpack.c.b16 %v904, %v903
  %v1022 = vpack.c.b16 %v906, %v905
  %v1023 = vpack.c.b16 %v908, %v907
  %v1024 = vpack.c.b16 %v910, %v909
  %v1025 = vpack.c.b16 %v912, %v911
  %v1026 = vpack.c.b16 %v914, %v913
  %v1027 = vpack.c.b16 %v916, %v915
  %v1028 = vpack.c.b16 %v918, %v917
  %v1029 = vpack.c.b16 %v920, %v919
  %v1030 = vpack.c.b16 %v922, %v921
  %v1031 = vpack.c.b16 %v924, %v923
  %v1032 = vpack.c.b16 %v926, %v925
  %v1033 = vpack.c.b16 %v928, %v927
  %v1034 = vpack.c.b16 %v930, %v929
  %v1035 = vpack.c.b16 %v932, %v931
  %v1036 = vpack.c.b16 %v934, %v933
  %v1037 = vpack.c.b16 %v936, %v935
  %v1038 = vpack.c.b16 %v938, %v937
  %v1039 = vpack.c.b16 %v940, %v939
  %v1040 = vpack.c.b16 %v942, %v941
  %v1041 = vpack.c.b16 %v944, %v943
  %v1042 = vpack.c.b16 %v946, %v945
  %v1043 = vpack.c.b16 %v948, %v947
  %v1044 = vpack.c.b16 %v950, %v949
  %v1045 = vpack.c.b16 %v952, %v951
  %v1046 = vpack.c.b16 %v954, %v953
  %v1047 = vpack.c.b16 %v956, %v955
  %v1048 = vpack.c.b16 %v958, %v957
  %v1049 = vpack.c.b16 %v960, %v959
  %v1050 = vpack.c.b16 %v962, %v961
  %v1051 = vpack.c.b16 %v964, %v963
  %v1052 = vpack.c.b16 %v966, %v965
  %v1053 = vpack.c.b16 %v968, %v967
  %v1054 = vpack.c.b16 %v970, %v969
  %v1055 = vpack.c.b16 %v972, %v971
  %v1056 = vpack.c.b16 %v974, %v973
  %v1057 = vpack.c.b16 %v976, %v975
  %v1058 = vpack.c.b16 %v978, %v977
  %v1059 = vpack.c.b16 %v980, %v979
  %v1060 = vpack.c.b16 %v982, %v981
  %v1061 = vpack.c.b16 %v984, %v983
  %v1062 = vpack.c.b16 %v986, %v985
  %v1063 = vpack.c.b16 %v988, %v987
  %v1064 = vpack.c.b16 %v990, %v989
  %v1065 = vpack.c.b16 %v992, %v991
  %v1066 = vpack.c.b16 %v994, %v993
  %1139 = vmatprep.subr.bf16.mxu0 0
  %1140 = vmatpush1.bf16.msra.mxu0 %v995
  %1141 = vmatprep.subr.bf16.mxu0 0
  %1142 = vmatpush1.bf16.msra.mxu0 %v996
  %1143 = vmatprep.subr.bf16.mxu0 0
  %1144 = vmatpush1.bf16.msra.mxu0 %v997
  %1145 = vmatprep.subr.bf16.mxu0 0
  %1146 = vmatpush1.bf16.msra.mxu0 %v998
  %1147 = vmatprep.subr.bf16.mxu0 0
  %1148 = vmatpush1.bf16.msra.mxu0 %v999
  %1149 = vmatprep.subr.bf16.mxu0 0
  %1150 = vmatpush1.bf16.msra.mxu0 %v1000
  %1151 = vmatprep.subr.bf16.mxu0 0
  %1152 = vmatpush1.bf16.msra.mxu0 %v1001
  %1153 = vmatprep.subr.bf16.mxu0 0
  %1154 = vmatpush1.bf16.msra.mxu0 %v1002
  %1155 = vmatprep.subr.bf16.mxu0 0
  %1156 = vmatpush1.bf16.msra.mxu0 %v1003
  %1157 = vmatprep.subr.bf16.mxu0 0
  %1158 = vmatpush1.bf16.msra.mxu0 %v1004
  %1159 = vmatprep.subr.bf16.mxu0 0
  %1160 = vmatpush1.bf16.msra.mxu0 %v1005
  %1161 = vmatprep.subr.bf16.mxu0 0
  %1162 = vmatpush1.bf16.msra.mxu0 %v1006
  %1163 = vmatprep.subr.bf16.mxu0 0
  %1164 = vmatpush1.bf16.msra.mxu0 %v1007
  %1165 = vmatprep.subr.bf16.mxu0 0
  %1166 = vmatpush1.bf16.msra.mxu0 %v1008
  %1167 = vmatprep.subr.bf16.mxu0 0
  %1168 = vmatpush1.bf16.msra.mxu0 %v1009
  %1169 = vmatprep.subr.bf16.mxu0 0
  %1170 = vmatpush1.bf16.msra.mxu0 %v1010
  %1171 = vmatprep.mubr.bf16.mxu0 %v564
  %1172 = vmatmul.mubr.bf16.gmra.mrb[0].mxu0 %v563
  %v1173 = vpop.f32.mrb[0].mxu0
  %v1174 = vadd.f32 %v262, %v1173
  %v1175 = vpop.f32.mrb[0].mxu0
  %v1176 = vpop.f32.mrb[0].mxu0
  %v1177 = vadd.f32 %v267, %v1176
  %v1178 = vpop.f32.mrb[0].mxu0
  %1179 = vmatprep.mubr.bf16.mxu0 %v573
  %1180 = vmatmul.mubr.bf16.gmra.mrb[0].mxu0 %v572
  %v1181 = vpop.f32.mrb[0].mxu0
  %v1182 = vadd.f32 %v272, %v1181
  %v1183 = vpop.f32.mrb[0].mxu0
  %v1184 = vpop.f32.mrb[0].mxu0
  %v1185 = vadd.f32 %v277, %v1184
  %v1186 = vpop.f32.mrb[0].mxu0
  %1187 = vmatprep.mubr.bf16.mxu0 %v582
  %1188 = vmatmul.mubr.bf16.gmra.mrb[0].mxu0 %v581
  %v1189 = vpop.f32.mrb[0].mxu0
  %v1190 = vadd.f32 %v282, %v1189
  %v1191 = vpop.f32.mrb[0].mxu0
  %v1192 = vpop.f32.mrb[0].mxu0
  %v1193 = vadd.f32 %v287, %v1192
  %v1194 = vpop.f32.mrb[0].mxu0
  %1195 = vmatprep.mubr.bf16.mxu0 %v591
  %1196 = vmatmul.mubr.bf16.gmra.mrb[0].mxu0 %v590
  %v1197 = vpop.f32.mrb[0].mxu0
  %v1198 = vadd.f32 %v292, %v1197
  %v1199 = vpop.f32.mrb[0].mxu0
  %v1200 = vpop.f32.mrb[0].mxu0
  %v1201 = vadd.f32 %v297, %v1200
  %v1202 = vpop.f32.mrb[0].mxu0
  %1203 = vmatprep.mubr.bf16.mxu0 %v600
  %1204 = vmatmul.mubr.bf16.gmra.mrb[0].mxu0 %v599
  %v1205 = vpop.f32.mrb[0].mxu0
  %v1206 = vadd.f32 %v302, %v1205
  %v1207 = vpop.f32.mrb[0].mxu0
  %v1208 = vpop.f32.mrb[0].mxu0
  %v1209 = vadd.f32 %v307, %v1208
  %v1210 = vpop.f32.mrb[0].mxu0
  %1211 = vmatprep.mubr.bf16.mxu0 %v609
  %1212 = vmatmul.mubr.bf16.gmra.mrb[0].mxu0 %v608
  %v1213 = vpop.f32.mrb[0].mxu0
  %v1214 = vadd.f32 %v312, %v1213
  %v1215 = vpop.f32.mrb[0].mxu0
  %v1216 = vpop.f32.mrb[0].mxu0
  %v1217 = vadd.f32 %v317, %v1216
  %v1218 = vpop.f32.mrb[0].mxu0
  %1219 = vmatprep.mubr.bf16.mxu0 %v618
  %1220 = vmatmul.mubr.bf16.gmra.mrb[0].mxu0 %v617
  %v1221 = vpop.f32.mrb[0].mxu0
  %v1222 = vadd.f32 %v322, %v1221
  %v1223 = vpop.f32.mrb[0].mxu0
  %v1224 = vpop.f32.mrb[0].mxu0
  %v1225 = vadd.f32 %v327, %v1224
  %v1226 = vpop.f32.mrb[0].mxu0
  %1227 = vmatprep.mubr.bf16.mxu0 %v627
  %1228 = vmatmul.mubr.bf16.gmra.mrb[0].mxu0 %v626
  %v1229 = vpop.f32.mrb[0].mxu0
  %v1230 = vadd.f32 %v332, %v1229
  %v1231 = vpop.f32.mrb[0].mxu0
  %v1232 = vpop.f32.mrb[0].mxu0
  %v1233 = vadd.f32 %v337, %v1232
  %v1234 = vpop.f32.mrb[0].mxu0
  %1235 = vdwg.mxu0
  %1236 = vmatprep.subr.bf16.mxu0 0
  %1237 = vmatpush1.bf16.msra.mxu0 %v1011
  %1238 = vmatprep.subr.bf16.mxu0 0
  %1239 = vmatpush1.bf16.msra.mxu0 %v1012
  %1240 = vmatprep.subr.bf16.mxu0 0
  %1241 = vmatpush1.bf16.msra.mxu0 %v1013
  %1242 = vmatprep.subr.bf16.mxu0 0
  %1243 = vmatpush1.bf16.msra.mxu0 %v1014
  %1244 = vmatprep.subr.bf16.mxu0 0
  %1245 = vmatpush1.bf16.msra.mxu0 %v1015
  %1246 = vmatprep.subr.bf16.mxu0 0
  %1247 = vmatpush1.bf16.msra.mxu0 %v1016
  %1248 = vmatprep.subr.bf16.mxu0 0
  %1249 = vmatpush1.bf16.msra.mxu0 %v1017
  %1250 = vmatprep.subr.bf16.mxu0 0
  %1251 = vmatpush1.bf16.msra.mxu0 %v1018
  %1252 = vmatprep.subr.bf16.mxu0 0
  %1253 = vmatpush1.bf16.msra.mxu0 %v1019
  %1254 = vmatprep.subr.bf16.mxu0 0
  %1255 = vmatpush1.bf16.msra.mxu0 %v1020
  %1256 = vmatprep.subr.bf16.mxu0 0
  %1257 = vmatpush1.bf16.msra.mxu0 %v1021
  %1258 = vmatprep.subr.bf16.mxu0 0
  %1259 = vmatpush1.bf16.msra.mxu0 %v1022
  %1260 = vmatprep.subr.bf16.mxu0 0
  %1261 = vmatpush1.bf16.msra.mxu0 %v1023
  %1262 = vmatprep.subr.bf16.mxu0 0
  %1263 = vmatpush1.bf16.msra.mxu0 %v1024
  %1264 = vmatprep.subr.bf16.mxu0 0
  %1265 = vmatpush1.bf16.msra.mxu0 %v1025
  %1266 = vmatprep.subr.bf16.mxu0 0
  %1267 = vmatpush1.bf16.msra.mxu0 %v1026
  %1268 = vmatprep.mubr.bf16.mxu0 %v566
  %1269 = vmatmul.mubr.bf16.gmra.mrb[0].mxu0 %v565
  %v1270 = vpop.f32.mrb[0].mxu0
  %v1271 = vadd.f32 %v1174, %v1270
  %v1272 = vpop.f32.mrb[0].mxu0
  %v1273 = vpop.f32.mrb[0].mxu0
  %v1274 = vadd.f32 %v1177, %v1273
  %v1275 = vpop.f32.mrb[0].mxu0
  %1276 = vmatprep.mubr.bf16.mxu0 %v575
  %1277 = vmatmul.mubr.bf16.gmra.mrb[0].mxu0 %v574
  %v1278 = vpop.f32.mrb[0].mxu0
  %v1279 = vadd.f32 %v1182, %v1278
  %v1280 = vpop.f32.mrb[0].mxu0
  %v1281 = vpop.f32.mrb[0].mxu0
  %v1282 = vadd.f32 %v1185, %v1281
  %v1283 = vpop.f32.mrb[0].mxu0
  %1284 = vmatprep.mubr.bf16.mxu0 %v584
  %1285 = vmatmul.mubr.bf16.gmra.mrb[0].mxu0 %v583
  %v1286 = vpop.f32.mrb[0].mxu0
  %v1287 = vadd.f32 %v1190, %v1286
  %v1288 = vpop.f32.mrb[0].mxu0
  %v1289 = vpop.f32.mrb[0].mxu0
  %v1290 = vadd.f32 %v1193, %v1289
  %v1291 = vpop.f32.mrb[0].mxu0
  %1292 = vmatprep.mubr.bf16.mxu0 %v593
  %1293 = vmatmul.mubr.bf16.gmra.mrb[0].mxu0 %v592
  %v1294 = vpop.f32.mrb[0].mxu0
  %v1295 = vadd.f32 %v1198, %v1294
  %v1296 = vpop.f32.mrb[0].mxu0
  %v1297 = vpop.f32.mrb[0].mxu0
  %v1298 = vadd.f32 %v1201, %v1297
  %v1299 = vpop.f32.mrb[0].mxu0
  %1300 = vmatprep.mubr.bf16.mxu0 %v602
  %1301 = vmatmul.mubr.bf16.gmra.mrb[0].mxu0 %v601
  %v1302 = vpop.f32.mrb[0].mxu0
  %v1303 = vadd.f32 %v1206, %v1302
  %v1304 = vpop.f32.mrb[0].mxu0
  %v1305 = vpop.f32.mrb[0].mxu0
  %v1306 = vadd.f32 %v1209, %v1305
  %v1307 = vpop.f32.mrb[0].mxu0
  %1308 = vmatprep.mubr.bf16.mxu0 %v611
  %1309 = vmatmul.mubr.bf16.gmra.mrb[0].mxu0 %v610
  %v1310 = vpop.f32.mrb[0].mxu0
  %v1311 = vadd.f32 %v1214, %v1310
  %v1312 = vpop.f32.mrb[0].mxu0
  %v1313 = vpop.f32.mrb[0].mxu0
  %v1314 = vadd.f32 %v1217, %v1313
  %v1315 = vpop.f32.mrb[0].mxu0
  %1316 = vmatprep.mubr.bf16.mxu0 %v620
  %1317 = vmatmul.mubr.bf16.gmra.mrb[0].mxu0 %v619
  %v1318 = vpop.f32.mrb[0].mxu0
  %v1319 = vadd.f32 %v1222, %v1318
  %v1320 = vpop.f32.mrb[0].mxu0
  %v1321 = vpop.f32.mrb[0].mxu0
  %v1322 = vadd.f32 %v1225, %v1321
  %v1323 = vpop.f32.mrb[0].mxu0
  %1324 = vmatprep.mubr.bf16.mxu0 %v629
  %1325 = vmatmul.mubr.bf16.gmra.mrb[0].mxu0 %v628
  %v1326 = vpop.f32.mrb[0].mxu0
  %v1327 = vadd.f32 %v1230, %v1326
  %v1328 = vpop.f32.mrb[0].mxu0
  %v1329 = vpop.f32.mrb[0].mxu0
  %v1330 = vadd.f32 %v1233, %v1329
  %v1331 = vpop.f32.mrb[0].mxu0
  %1332 = vdwg.mxu0
  %1333 = vmatprep.subr.bf16.mxu0 0
  %1334 = vmatpush1.bf16.msra.mxu0 %v1027
  %1335 = vmatprep.subr.bf16.mxu0 0
  %1336 = vmatpush1.bf16.msra.mxu0 %v1028
  %1337 = vmatprep.subr.bf16.mxu0 0
  %1338 = vmatpush1.bf16.msra.mxu0 %v1029
  %1339 = vmatprep.subr.bf16.mxu0 0
  %1340 = vmatpush1.bf16.msra.mxu0 %v1030
  %1341 = vmatprep.subr.bf16.mxu0 0
  %1342 = vmatpush1.bf16.msra.mxu0 %v1031
  %1343 = vmatprep.subr.bf16.mxu0 0
  %1344 = vmatpush1.bf16.msra.mxu0 %v1032
  %1345 = vmatprep.subr.bf16.mxu0 0
  %1346 = vmatpush1.bf16.msra.mxu0 %v1033
  %1347 = vmatprep.subr.bf16.mxu0 0
  %1348 = vmatpush1.bf16.msra.mxu0 %v1034
  %1349 = vmatprep.subr.bf16.mxu0 0
  %1350 = vmatpush1.bf16.msra.mxu0 %v1035
  %1351 = vmatprep.subr.bf16.mxu0 0
  %1352 = vmatpush1.bf16.msra.mxu0 %v1036
  %1353 = vmatprep.subr.bf16.mxu0 0
  %1354 = vmatpush1.bf16.msra.mxu0 %v1037
  %1355 = vmatprep.subr.bf16.mxu0 0
  %1356 = vmatpush1.bf16.msra.mxu0 %v1038
  %1357 = vmatprep.subr.bf16.mxu0 0
  %1358 = vmatpush1.bf16.msra.mxu0 %v1039
  %1359 = vmatprep.subr.bf16.mxu0 0
  %1360 = vmatpush1.bf16.msra.mxu0 %v1040
  %1361 = vmatprep.subr.bf16.mxu0 0
  %1362 = vmatpush1.bf16.msra.mxu0 %v1041
  %1363 = vmatprep.subr.bf16.mxu0 0
  %1364 = vmatpush1.bf16.msra.mxu0 %v1042
  %1365 = vmatprep.mubr.bf16.mxu0 %v568
  %1366 = vmatmul.mubr.bf16.gmra.mrb[0].mxu0 %v567
  %v1367 = vpop.f32.mrb[0].mxu0
  %v1368 = vadd.f32 %v1271, %v1367
  %v1369 = vpop.f32.mrb[0].mxu0
  %v1370 = vpop.f32.mrb[0].mxu0
  %v1371 = vadd.f32 %v1274, %v1370
  %v1372 = vpop.f32.mrb[0].mxu0
  %1373 = vmatprep.mubr.bf16.mxu0 %v577
  %1374 = vmatmul.mubr.bf16.gmra.mrb[0].mxu0 %v576
  %v1375 = vpop.f32.mrb[0].mxu0
  %v1376 = vadd.f32 %v1279, %v1375
  %v1377 = vpop.f32.mrb[0].mxu0
  %v1378 = vpop.f32.mrb[0].mxu0
  %v1379 = vadd.f32 %v1282, %v1378
  %v1380 = vpop.f32.mrb[0].mxu0
  %1381 = vmatprep.mubr.bf16.mxu0 %v586
  %1382 = vmatmul.mubr.bf16.gmra.mrb[0].mxu0 %v585
  %v1383 = vpop.f32.mrb[0].mxu0
  %v1384 = vadd.f32 %v1287, %v1383
  %v1385 = vpop.f32.mrb[0].mxu0
  %v1386 = vpop.f32.mrb[0].mxu0
  %v1387 = vadd.f32 %v1290, %v1386
  %v1388 = vpop.f32.mrb[0].mxu0
  %1389 = vmatprep.mubr.bf16.mxu0 %v595
  %1390 = vmatmul.mubr.bf16.gmra.mrb[0].mxu0 %v594
  %v1391 = vpop.f32.mrb[0].mxu0
  %v1392 = vadd.f32 %v1295, %v1391
  %v1393 = vpop.f32.mrb[0].mxu0
  %v1394 = vpop.f32.mrb[0].mxu0
  %v1395 = vadd.f32 %v1298, %v1394
  %v1396 = vpop.f32.mrb[0].mxu0
  %1397 = vmatprep.mubr.bf16.mxu0 %v604
  %1398 = vmatmul.mubr.bf16.gmra.mrb[0].mxu0 %v603
  %v1399 = vpop.f32.mrb[0].mxu0
  %v1400 = vadd.f32 %v1303, %v1399
  %v1401 = vpop.f32.mrb[0].mxu0
  %v1402 = vpop.f32.mrb[0].mxu0
  %v1403 = vadd.f32 %v1306, %v1402
  %v1404 = vpop.f32.mrb[0].mxu0
  %1405 = vmatprep.mubr.bf16.mxu0 %v613
  %1406 = vmatmul.mubr.bf16.gmra.mrb[0].mxu0 %v612
  %v1407 = vpop.f32.mrb[0].mxu0
  %v1408 = vadd.f32 %v1311, %v1407
  %v1409 = vpop.f32.mrb[0].mxu0
  %v1410 = vpop.f32.mrb[0].mxu0
  %v1411 = vadd.f32 %v1314, %v1410
  %v1412 = vpop.f32.mrb[0].mxu0
  %1413 = vmatprep.mubr.bf16.mxu0 %v622
  %1414 = vmatmul.mubr.bf16.gmra.mrb[0].mxu0 %v621
  %v1415 = vpop.f32.mrb[0].mxu0
  %v1416 = vadd.f32 %v1319, %v1415
  %v1417 = vpop.f32.mrb[0].mxu0
  %v1418 = vpop.f32.mrb[0].mxu0
  %v1419 = vadd.f32 %v1322, %v1418
  %v1420 = vpop.f32.mrb[0].mxu0
  %1421 = vmatprep.mubr.bf16.mxu0 %v631
  %1422 = vmatmul.mubr.bf16.gmra.mrb[0].mxu0 %v630
  %v1423 = vpop.f32.mrb[0].mxu0
  %v1424 = vadd.f32 %v1327, %v1423
  %v1425 = vpop.f32.mrb[0].mxu0
  %v1426 = vpop.f32.mrb[0].mxu0
  %v1427 = vadd.f32 %v1330, %v1426
  %v1428 = vpop.f32.mrb[0].mxu0
  %1429 = vdwg.mxu0
  %1430 = vmatprep.subr.bf16.mxu0 0
  %1431 = vmatpush1.bf16.msra.mxu0 %v1043
  %1432 = vmatprep.subr.bf16.mxu0 0
  %1433 = vmatpush1.bf16.msra.mxu0 %v1044
  %1434 = vmatprep.subr.bf16.mxu0 0
  %1435 = vmatpush1.bf16.msra.mxu0 %v1045
  %1436 = vmatprep.subr.bf16.mxu0 0
  %1437 = vmatpush1.bf16.msra.mxu0 %v1046
  %1438 = vmatprep.subr.bf16.mxu0 0
  %1439 = vmatpush1.bf16.msra.mxu0 %v1047
  %1440 = vmatprep.subr.bf16.mxu0 0
  %1441 = vmatpush1.bf16.msra.mxu0 %v1048
  %1442 = vmatprep.subr.bf16.mxu0 0
  %1443 = vmatpush1.bf16.msra.mxu0 %v1049
  %1444 = vmatprep.subr.bf16.mxu0 0
  %1445 = vmatpush1.bf16.msra.mxu0 %v1050
  %1446 = vmatprep.subr.bf16.mxu0 0
  %1447 = vmatpush1.bf16.msra.mxu0 %v1051
  %1448 = vmatprep.subr.bf16.mxu0 0
  %1449 = vmatpush1.bf16.msra.mxu0 %v1052
  %1450 = vmatprep.subr.bf16.mxu0 0
  %1451 = vmatpush1.bf16.msra.mxu0 %v1053
  %1452 = vmatprep.subr.bf16.mxu0 0
  %1453 = vmatpush1.bf16.msra.mxu0 %v1054
  %1454 = vmatprep.subr.bf16.mxu0 0
  %1455 = vmatpush1.bf16.msra.mxu0 %v1055
  %1456 = vmatprep.subr.bf16.mxu0 0
  %1457 = vmatpush1.bf16.msra.mxu0 %v1056
  %1458 = vmatprep.subr.bf16.mxu0 0
  %1459 = vmatpush1.bf16.msra.mxu0 %v1057
  %1460 = vmatprep.subr.bf16.mxu0 0
  %1461 = vmatpush1.bf16.msra.mxu0 %v1058
  %1462 = vmatprep.mubr.bf16.mxu0 %v570
  %1463 = vmatmul.mubr.bf16.gmra.mrb[0].mxu0 %v569
  %v1464 = vpop.f32.mrb[0].mxu0
  %v1465 = vadd.f32 %v1368, %v1464
  %v1466 = vpop.f32.mrb[0].mxu0
  %v1467 = vpop.f32.mrb[0].mxu0
  %v1468 = vadd.f32 %v1371, %v1467
  %v1469 = vpop.f32.mrb[0].mxu0
  %1470 = vmatprep.mubr.bf16.mxu0 %v579
  %1471 = vmatmul.mubr.bf16.gmra.mrb[0].mxu0 %v578
  %v1472 = vpop.f32.mrb[0].mxu0
  %v1473 = vadd.f32 %v1376, %v1472
  %v1474 = vpop.f32.mrb[0].mxu0
  %v1475 = vpop.f32.mrb[0].mxu0
  %v1476 = vadd.f32 %v1379, %v1475
  %v1477 = vpop.f32.mrb[0].mxu0
  %1478 = vmatprep.mubr.bf16.mxu0 %v588
  %1479 = vmatmul.mubr.bf16.gmra.mrb[0].mxu0 %v587
  %v1480 = vpop.f32.mrb[0].mxu0
  %v1481 = vadd.f32 %v1384, %v1480
  %v1482 = vpop.f32.mrb[0].mxu0
  %v1483 = vpop.f32.mrb[0].mxu0
  %v1484 = vadd.f32 %v1387, %v1483
  %v1485 = vpop.f32.mrb[0].mxu0
  %1486 = vmatprep.mubr.bf16.mxu0 %v597
  %1487 = vmatmul.mubr.bf16.gmra.mrb[0].mxu0 %v596
  %v1488 = vpop.f32.mrb[0].mxu0
  %v1489 = vadd.f32 %v1392, %v1488
  %v1490 = vpop.f32.mrb[0].mxu0
  %v1491 = vpop.f32.mrb[0].mxu0
  %v1492 = vadd.f32 %v1395, %v1491
  %v1493 = vpop.f32.mrb[0].mxu0
  %1494 = vmatprep.mubr.bf16.mxu0 %v606
  %1495 = vmatmul.mubr.bf16.gmra.mrb[0].mxu0 %v605
  %v1496 = vpop.f32.mrb[0].mxu0
  %v1497 = vadd.f32 %v1400, %v1496
  %v1498 = vpop.f32.mrb[0].mxu0
  %v1499 = vpop.f32.mrb[0].mxu0
  %v1500 = vadd.f32 %v1403, %v1499
  %v1501 = vpop.f32.mrb[0].mxu0
  %1502 = vmatprep.mubr.bf16.mxu0 %v615
  %1503 = vmatmul.mubr.bf16.gmra.mrb[0].mxu0 %v614
  %v1504 = vpop.f32.mrb[0].mxu0
  %v1505 = vadd.f32 %v1408, %v1504
  %v1506 = vpop.f32.mrb[0].mxu0
  %v1507 = vpop.f32.mrb[0].mxu0
  %v1508 = vadd.f32 %v1411, %v1507
  %v1509 = vpop.f32.mrb[0].mxu0
  %1510 = vmatprep.mubr.bf16.mxu0 %v624
  %1511 = vmatmul.mubr.bf16.gmra.mrb[0].mxu0 %v623
  %v1512 = vpop.f32.mrb[0].mxu0
  %v1513 = vadd.f32 %v1416, %v1512
  %v1514 = vpop.f32.mrb[0].mxu0
  %v1515 = vpop.f32.mrb[0].mxu0
  %v1516 = vadd.f32 %v1419, %v1515
  %v1517 = vpop.f32.mrb[0].mxu0
  %1518 = vmatprep.mubr.bf16.mxu0 %v633
  %1519 = vmatmul.mubr.bf16.gmra.mrb[0].mxu0 %v632
  %v1520 = vpop.f32.mrb[0].mxu0
  %v1521 = vadd.f32 %v1424, %v1520
  %v1522 = vpop.f32.mrb[0].mxu0
  %v1523 = vpop.f32.mrb[0].mxu0
  %v1524 = vadd.f32 %v1427, %v1523
  %v1525 = vpop.f32.mrb[0].mxu0
  %1526 = vdwg.mxu0
  %1527 = vmatprep.subr.bf16.mxu0 0
  %1528 = vmatpush1.bf16.msra.mxu0 %v1059
  %1529 = vmatprep.subr.bf16.mxu0 0
  %1530 = vmatpush1.bf16.msra.mxu0 %v1060
  %1531 = vmatprep.subr.bf16.mxu0 0
  %1532 = vmatpush1.bf16.msra.mxu0 %v1061
  %1533 = vmatprep.subr.bf16.mxu0 0
  %1534 = vmatpush1.bf16.msra.mxu0 %v1062
  %1535 = vmatprep.subr.bf16.mxu0 0
  %1536 = vmatpush1.bf16.msra.mxu0 %v1063
  %1537 = vmatprep.subr.bf16.mxu0 0
  %1538 = vmatpush1.bf16.msra.mxu0 %v1064
  %1539 = vmatprep.subr.bf16.mxu0 0
  %1540 = vmatpush1.bf16.msra.mxu0 %v1065
  %1541 = vmatprep.subr.bf16.mxu0 0
  %1542 = vmatpush1.bf16.msra.mxu0 %v1066
  %1543 = vmatprep.subr.bf16.mxu0 0
  %1544 = vmatpush1.bf16.msra.mxu0 0
  %1545 = vmatprep.subr.bf16.mxu0 0
  %1546 = vmatpush1.bf16.msra.mxu0 0
  %1547 = vmatprep.subr.bf16.mxu0 0
  %1548 = vmatpush1.bf16.msra.mxu0 0
  %1549 = vmatprep.subr.bf16.mxu0 0
  %1550 = vmatpush1.bf16.msra.mxu0 0
  %1551 = vmatprep.subr.bf16.mxu0 0
  %1552 = vmatpush1.bf16.msra.mxu0 0
  %1553 = vmatprep.subr.bf16.mxu0 0
  %1554 = vmatpush1.bf16.msra.mxu0 0
  %1555 = vmatprep.subr.bf16.mxu0 0
  %1556 = vmatpush1.bf16.msra.mxu0 0
  %1557 = vmatprep.subr.bf16.mxu0 0
  %1558 = vmatpush1.bf16.msra.mxu0 0
  %1559 = vmatprep.mubr.bf16.mxu0 0
  %1560 = vmatmul.mubr.bf16.gmra.mrb[0].mxu0 %v571
  %v1561 = vpop.f32.mrb[0].mxu0
  %v1562 = vadd.f32 %v1465, %v1561
  %v1563 = vpop.f32.mrb[0].mxu0
  %v1564 = vpop.f32.mrb[0].mxu0
  %v1565 = vadd.f32 %v1468, %v1564
  %v1566 = vpop.f32.mrb[0].mxu0
  %1567 = vmatprep.mubr.bf16.mxu0 0
  %1568 = vmatmul.mubr.bf16.gmra.mrb[0].mxu0 %v580
  %v1569 = vpop.f32.mrb[0].mxu0
  %v1570 = vadd.f32 %v1473, %v1569
  %v1571 = vpop.f32.mrb[0].mxu0
  %v1572 = vpop.f32.mrb[0].mxu0
  %v1573 = vadd.f32 %v1476, %v1572
  %v1574 = vpop.f32.mrb[0].mxu0
  %1575 = vmatprep.mubr.bf16.mxu0 0
  %1576 = vmatmul.mubr.bf16.gmra.mrb[0].mxu0 %v589
  %v1577 = vpop.f32.mrb[0].mxu0
  %v1578 = vadd.f32 %v1481, %v1577
  %v1579 = vpop.f32.mrb[0].mxu0
  %v1580 = vpop.f32.mrb[0].mxu0
  %v1581 = vadd.f32 %v1484, %v1580
  %v1582 = vpop.f32.mrb[0].mxu0
  %1583 = vmatprep.mubr.bf16.mxu0 0
  %1584 = vmatmul.mubr.bf16.gmra.mrb[0].mxu0 %v598
  %v1585 = vpop.f32.mrb[0].mxu0
  %v1586 = vadd.f32 %v1489, %v1585
  %v1587 = vpop.f32.mrb[0].mxu0
  %v1588 = vpop.f32.mrb[0].mxu0
  %v1589 = vadd.f32 %v1492, %v1588
  %v1590 = vpop.f32.mrb[0].mxu0
  %1591 = vmatprep.mubr.bf16.mxu0 0
  %1592 = vmatmul.mubr.bf16.gmra.mrb[0].mxu0 %v607
  %v1593 = vpop.f32.mrb[0].mxu0
  %v1594 = vadd.f32 %v1497, %v1593
  %v1595 = vpop.f32.mrb[0].mxu0
  %v1596 = vpop.f32.mrb[0].mxu0
  %v1597 = vadd.f32 %v1500, %v1596
  %v1598 = vpop.f32.mrb[0].mxu0
  %1599 = vmatprep.mubr.bf16.mxu0 0
  %1600 = vmatmul.mubr.bf16.gmra.mrb[0].mxu0 %v616
  %v1601 = vpop.f32.mrb[0].mxu0
  %v1602 = vadd.f32 %v1505, %v1601
  %v1603 = vpop.f32.mrb[0].mxu0
  %v1604 = vpop.f32.mrb[0].mxu0
  %v1605 = vadd.f32 %v1508, %v1604
  %v1606 = vpop.f32.mrb[0].mxu0
  %1607 = vmatprep.mubr.bf16.mxu0 0
  %1608 = vmatmul.mubr.bf16.gmra.mrb[0].mxu0 %v625
  %v1609 = vpop.f32.mrb[0].mxu0
  %v1610 = vadd.f32 %v1513, %v1609
  %v1611 = vpop.f32.mrb[0].mxu0
  %v1612 = vpop.f32.mrb[0].mxu0
  %v1613 = vadd.f32 %v1516, %v1612
  %v1614 = vpop.f32.mrb[0].mxu0
  %1615 = vmatprep.mubr.bf16.mxu0 0
  %1616 = vmatmul.mubr.bf16.gmra.mrb[0].mxu0 %v634
  %v1617 = vpop.f32.mrb[0].mxu0
  %v1618 = vadd.f32 %v1521, %v1617
  %v1619 = vpop.f32.mrb[0].mxu0
  %v1620 = vpop.f32.mrb[0].mxu0
  %v1621 = vadd.f32 %v1524, %v1620
  %v1622 = vpop.f32.mrb[0].mxu0
  %1623 = vdwg.mxu0
  %s1624 = sld [smem:[#allocation2]]
  %vm1625 = vcmp.gt.f32.partialorder %v1562, 0.0
  %vm1626 = vcmp.gt.f32.partialorder %v1565, 0.0
  %vm1627 = vcmp.gt.f32.partialorder %v1570, 0.0
  %vm1628 = vcmp.gt.f32.partialorder %v1573, 0.0
  %vm1629 = vcmp.gt.f32.partialorder %v1578, 0.0
  %vm1630 = vcmp.gt.f32.partialorder %v1581, 0.0
  %vm1631 = vcmp.gt.f32.partialorder %v1586, 0.0
  %vm1632 = vcmp.gt.f32.partialorder %v1589, 0.0
  %vm1633 = vcmp.gt.f32.partialorder %v1594, 0.0
  %vm1634 = vcmp.gt.f32.partialorder %v1597, 0.0
  %vm1635 = vcmp.gt.f32.partialorder %v1602, 0.0
  %vm1636 = vcmp.gt.f32.partialorder %v1605, 0.0
  %vm1637 = vcmp.gt.f32.partialorder %v1610, 0.0
  %vm1638 = vcmp.gt.f32.partialorder %v1613, 0.0
  %vm1639 = vcmp.gt.f32.partialorder %v1618, 0.0
  %vm1640 = vcmp.gt.f32.partialorder %v1621, 0.0
  %v1641 = vstv %s1624
  %v1642 = vmul.f32 %v1641, %v1562
  %v1643 = vmul.f32 %v1641, %v1565
  %v1644 = vmul.f32 %v1641, %v1570
  %v1645 = vmul.f32 %v1641, %v1573
  %v1646 = vmul.f32 %v1641, %v1578
  %v1647 = vmul.f32 %v1641, %v1581
  %v1648 = vmul.f32 %v1641, %v1586
  %v1649 = vmul.f32 %v1641, %v1589
  %v1650 = vmul.f32 %v1641, %v1594
  %v1651 = vmul.f32 %v1641, %v1597
  %v1652 = vmul.f32 %v1641, %v1602
  %v1653 = vmul.f32 %v1641, %v1605
  %v1654 = vmul.f32 %v1641, %v1610
  %v1655 = vmul.f32 %v1641, %v1613
  %v1656 = vmul.f32 %v1641, %v1618
  %v1657 = vmul.f32 %v1641, %v1621
  %v1658 = vsel %vm1625, %v1562, %v1642
  %v1659 = vsel %vm1626, %v1565, %v1643
  %v1660 = vsel %vm1627, %v1570, %v1644
  %v1661 = vsel %vm1628, %v1573, %v1645
  %v1662 = vsel %vm1629, %v1578, %v1646
  %v1663 = vsel %vm1630, %v1581, %v1647
  %v1664 = vsel %vm1631, %v1586, %v1648
  %v1665 = vsel %vm1632, %v1589, %v1649
  %v1666 = vsel %vm1633, %v1594, %v1650
  %v1667 = vsel %vm1634, %v1597, %v1651
  %v1668 = vsel %vm1635, %v1602, %v1652
  %v1669 = vsel %vm1636, %v1605, %v1653
  %v1670 = vsel %vm1637, %v1610, %v1654
  %v1671 = vsel %vm1638, %v1613, %v1655
  %v1672 = vsel %vm1639, %v1618, %v1656
  %v1673 = vsel %vm1640, %v1621, %v1657
  %v1674 = vpack.c.bf16 %v1659, %v1658
  %v1675 = vpack.c.bf16 %v1661, %v1660
  %v1676 = vpack.c.bf16 %v1663, %v1662
  %v1677 = vpack.c.bf16 %v1665, %v1664
  %v1678 = vpack.c.bf16 %v1667, %v1666
  %v1679 = vpack.c.bf16 %v1669, %v1668
  %v1680 = vpack.c.bf16 %v1671, %v1670
  %v1681 = vpack.c.bf16 %v1673, %v1672
  %v1690 = vunpack.c.l.b16 %v1674
  %v1691 = vunpack.c.h.b16 %v1674
  %v1692 = vunpack.c.l.b16 %v1675
  %v1693 = vunpack.c.h.b16 %v1675
  %v1694 = vunpack.c.l.b16 %v1676
  %v1695 = vunpack.c.h.b16 %v1676
  %v1696 = vunpack.c.l.b16 %v1677
  %v1697 = vunpack.c.h.b16 %v1677
  %v1698 = vunpack.c.l.b16 %v1678
  %v1699 = vunpack.c.h.b16 %v1678
  %v1700 = vunpack.c.l.b16 %v1679
  %v1701 = vunpack.c.h.b16 %v1679
  %v1702 = vunpack.c.l.b16 %v1680
  %v1703 = vunpack.c.h.b16 %v1680
  %v1704 = vunpack.c.l.b16 %v1681
  %v1705 = vunpack.c.h.b16 %v1681
  %v1706 = vpack.c.b16 %v1690, %v1690
  %v1707 = vpack.c.b16 %v1691, %v1691
  %v1708 = vpack.c.b16 %v1692, %v1692
  %v1709 = vpack.c.b16 %v1693, %v1693
  %v1710 = vpack.c.b16 %v1694, %v1694
  %v1711 = vpack.c.b16 %v1695, %v1695
  %v1712 = vpack.c.b16 %v1696, %v1696
  %v1713 = vpack.c.b16 %v1697, %v1697
  %v1714 = vpack.c.b16 %v1698, %v1698
  %v1715 = vpack.c.b16 %v1699, %v1699
  %v1716 = vpack.c.b16 %v1700, %v1700
  %v1717 = vpack.c.b16 %v1701, %v1701
  %v1718 = vpack.c.b16 %v1702, %v1702
  %v1719 = vpack.c.b16 %v1703, %v1703
  %v1720 = vpack.c.b16 %v1704, %v1704
  %v1721 = vpack.c.b16 %v1705, %v1705
  %1738 = vst [vmem:[%s4] sm:$0xf] %v1706
  %1739 = vst [vmem:[%s4 + $0x4] sm:$0xf] %v1707
  %1740 = vst [vmem:[%s4 + $0x8] sm:$0xf] %v1708
  %1741 = vst [vmem:[%s4 + $0xc] sm:$0xf] %v1709
  %1742 = vst [vmem:[%s4 + $0x10] sm:$0xf] %v1710
  %1743 = vst [vmem:[%s4 + $0x14] sm:$0xf] %v1711
  %1744 = vst [vmem:[%s4 + $0x18] sm:$0xf] %v1712
  %1745 = vst [vmem:[%s4 + $0x1c] sm:$0xf] %v1713
  %1746 = vst [vmem:[%s4 + $0x20] sm:$0xf] %v1714
  %1747 = vst [vmem:[%s4 + $0x24] sm:$0xf] %v1715
  %1748 = vst [vmem:[%s4 + $0x28] sm:$0xf] %v1716
  %1749 = vst [vmem:[%s4 + $0x2c] sm:$0xf] %v1717
  %1750 = vst [vmem:[%s4 + $0x30] sm:$0xf] %v1718
  %1751 = vst [vmem:[%s4 + $0x34] sm:$0xf] %v1719
  %1752 = vst [vmem:[%s4 + $0x38] sm:$0xf] %v1720
  %1753 = vst [vmem:[%s4 + $0x3c] sm:$0xf] %v1721
  // Predicated region
  $region18: #{_cnn_forward.23} parent=0 // pred_check
    _
  $region19: #{_cnn_forward.23} parent=0 // pred_check_branch
    %1755 = sbr.rel (0) target = $region21
  $region20: #{_cnn_forward.23} parent=0 // pred_region
    _
  $region21: #{_cnn_forward.23} parent=0 // pred_fallthru
    _
  // Predicated region
  $region22: #{_cnn_forward.23} parent=0 // pred_check
    _
  $region23: #{_cnn_forward.23} parent=0 // pred_check_branch
    %1757 = sbr.rel (0) target = $region25
  $region24: #{_cnn_forward.23} parent=0 // pred_region
    _
  $region25: #{_cnn_forward.23} parent=0 // pred_fallthru
    _

// kernel: _cnn_forward.24
$region0: #{_cnn_forward.24}
  #allocation0 [shape = 'u32[]', space=smem, size = 0x4, offset = 0x4, fixed_abs, tag = 'smem constant byte address 0x4 - core index']
  #allocation1 [shape = 'u32[144,128]{1,0:T(1,128)}', space=vmem, size = 0x12000, scoped, tag = 'internal scratch']
  %s0 = inlined_call_operand.vmem [shape: bf16[8,128], index: 0, kind: input, shape index: {}]
  %s1 = inlined_call_operand.vmem [shape: bf16[8,128], index: 1, kind: input, shape index: {}]
  %s2 = inlined_call_operand.vmem [shape: bf16[8,128], index: 2, kind: input, shape index: {}]
  %s3 = inlined_call_operand.vmem [shape: bf16[8,128], index: 3, kind: input, shape index: {}]
  %s4 = inlined_call_operand.vmem [shape: bf16[8,128], index: 4, kind: output, shape index: {}]
  %s5 = sld [smem:[#allocation0]]
  $region26: #{_cnn_forward.24} parent=0
    _
  %s7 = ssub.s32 1, %s5
  %s8 = scalar_select 0, %s7, %s5
  // Predicated region
  $region2: #{_cnn_forward.24} parent=0 // pred_check
    _
  $region3: #{_cnn_forward.24} parent=0 // pred_check_branch
    %10 = sbr.rel (0) target = $region5
  $region4: #{_cnn_forward.24} parent=0 // pred_region
    _
  $region5: #{_cnn_forward.24} parent=0 // pred_fallthru
    _
  // Predicated region
  $region6: #{_cnn_forward.24} parent=0 // pred_check
    _
  $region7: #{_cnn_forward.24} parent=0 // pred_check_branch
    %12 = sbr.rel (0) target = $region9
  $region8: #{_cnn_forward.24} parent=0 // pred_region
    _
  $region9: #{_cnn_forward.24} parent=0 // pred_fallthru
    _
  // Predicated region
  $region10: #{_cnn_forward.24} parent=0 // pred_check
    _
  $region11: #{_cnn_forward.24} parent=0 // pred_check_branch
    %14 = sbr.rel (0) target = $region13
  $region12: #{_cnn_forward.24} parent=0 // pred_region
    _
  $region13: #{_cnn_forward.24} parent=0 // pred_fallthru
    _
  // Predicated region
  $region14: #{_cnn_forward.24} parent=0 // pred_check
    _
  $region15: #{_cnn_forward.24} parent=0 // pred_check_branch
    %16 = sbr.rel (0) target = $region17
  $region16: #{_cnn_forward.24} parent=0 // pred_region
    _
  $region17: #{_cnn_forward.24} parent=0 // pred_fallthru
    _
  %v17 = vld [vmem:[%s0] sm:$0xf]
  %v18 = vld [vmem:[%s1] sm:$0xf]
  %v19 = vmax.bf16 %v17, %v18
  %v20 = vld [vmem:[%s2] sm:$0xf]
  %v21 = vld [vmem:[%s3] sm:$0xf]
  %v22 = vmax.bf16 %v20, %v21
  %v23 = vmax.bf16 %v19, %v22
  %24 = vst [vmem:[%s4] sm:$0xf] %v23
  // Predicated region
  $region18: #{_cnn_forward.24} parent=0 // pred_check
    _
  $region19: #{_cnn_forward.24} parent=0 // pred_check_branch
    %26 = sbr.rel (0) target = $region21
  $region20: #{_cnn_forward.24} parent=0 // pred_region
    _
  $region21: #{_cnn_forward.24} parent=0 // pred_fallthru
    _
  // Predicated region
  $region22: #{_cnn_forward.24} parent=0 // pred_check
    _
  $region23: #{_cnn_forward.24} parent=0 // pred_check_branch
    %28 = sbr.rel (0) target = $region25
  $region24: #{_cnn_forward.24} parent=0 // pred_region
    _
  $region25: #{_cnn_forward.24} parent=0 // pred_fallthru
    _

// kernel: _cnn_forward.25
$region0: #{_cnn_forward.25}
  #allocation0 [shape = 'u32[]', space=smem, size = 0x4, offset = 0x4, fixed_abs, tag = 'smem constant byte address 0x4 - core index']
  #allocation1 [shape = 'u32[144,128]{1,0:T(1,128)}', space=vmem, size = 0x12000, scoped, tag = 'internal scratch']
  #allocation2 [shape = 'f32[1]{0:T(128)S(6)}', space=smem, size = 0x200, scoped, tag = 'scoped memory for _cnn_forward.25']
  %s0 = inlined_call_operand.vmem [shape: bf16[8,512], index: 0, kind: input, shape index: {}]
  %s1 = inlined_call_operand.vmem [shape: bf16[512,128], index: 1, kind: input, shape index: {}]
  %s2 = inlined_call_operand.vmem [shape: f32[1,128], index: 2, kind: input, shape index: {}]
  %s3 = inlined_call_operand.vmem [shape: bf16[128,64], index: 3, kind: input, shape index: {}]
  %s4 = inlined_call_operand.vmem [shape: f32[1,64], index: 4, kind: input, shape index: {}]
  %s5 = inlined_call_operand.vmem [shape: bf16[64,16], index: 5, kind: input, shape index: {}]
  %s6 = inlined_call_operand.vmem [shape: f32[1,16], index: 6, kind: input, shape index: {}]
  %s7 = inlined_call_operand.vmem [shape: bf16[16,10], index: 7, kind: input, shape index: {}]
  %s8 = inlined_call_operand.vmem [shape: f32[1,10], index: 8, kind: input, shape index: {}]
  %s9 = inlined_call_operand.<no memory space> [shape: f32[1], index: 9, kind: input, shape index: {}]
  %s10 = inlined_call_operand.vmem [shape: f32[8,10], index: 10, kind: output, shape index: {}]
  %s11 = sld [smem:[#allocation0]]
  $region50: #{_cnn_forward.25} parent=0
    _
  %s13 = ssub.s32 1, %s11
  %s14 = scalar_select 0, %s13, %s11
  %15 = sst [smem:[#allocation2]] %s9
  // Predicated region
  $region2: #{_cnn_forward.25} parent=0 // pred_check
    _
  $region3: #{_cnn_forward.25} parent=0 // pred_check_branch
    %17 = sbr.rel (0) target = $region5
  $region4: #{_cnn_forward.25} parent=0 // pred_region
    _
  $region5: #{_cnn_forward.25} parent=0 // pred_fallthru
    _
  // Predicated region
  $region6: #{_cnn_forward.25} parent=0 // pred_check
    _
  $region7: #{_cnn_forward.25} parent=0 // pred_check_branch
    %19 = sbr.rel (0) target = $region9
  $region8: #{_cnn_forward.25} parent=0 // pred_region
    _
  $region9: #{_cnn_forward.25} parent=0 // pred_fallthru
    _
  // Predicated region
  $region10: #{_cnn_forward.25} parent=0 // pred_check
    _
  $region11: #{_cnn_forward.25} parent=0 // pred_check_branch
    %21 = sbr.rel (0) target = $region13
  $region12: #{_cnn_forward.25} parent=0 // pred_region
    _
  $region13: #{_cnn_forward.25} parent=0 // pred_fallthru
    _
  // Predicated region
  $region14: #{_cnn_forward.25} parent=0 // pred_check
    _
  $region15: #{_cnn_forward.25} parent=0 // pred_check_branch
    %23 = sbr.rel (0) target = $region17
  $region16: #{_cnn_forward.25} parent=0 // pred_region
    _
  $region17: #{_cnn_forward.25} parent=0 // pred_fallthru
    _
  // Predicated region
  $region18: #{_cnn_forward.25} parent=0 // pred_check
    _
  $region19: #{_cnn_forward.25} parent=0 // pred_check_branch
    %25 = sbr.rel (0) target = $region21
  $region20: #{_cnn_forward.25} parent=0 // pred_region
    _
  $region21: #{_cnn_forward.25} parent=0 // pred_fallthru
    _
  // Predicated region
  $region22: #{_cnn_forward.25} parent=0 // pred_check
    _
  $region23: #{_cnn_forward.25} parent=0 // pred_check_branch
    %27 = sbr.rel (0) target = $region25
  $region24: #{_cnn_forward.25} parent=0 // pred_region
    _
  $region25: #{_cnn_forward.25} parent=0 // pred_fallthru
    _
  // Predicated region
  $region26: #{_cnn_forward.25} parent=0 // pred_check
    _
  $region27: #{_cnn_forward.25} parent=0 // pred_check_branch
    %29 = sbr.rel (0) target = $region29
  $region28: #{_cnn_forward.25} parent=0 // pred_region
    _
  $region29: #{_cnn_forward.25} parent=0 // pred_fallthru
    _
  // Predicated region
  $region30: #{_cnn_forward.25} parent=0 // pred_check
    _
  $region31: #{_cnn_forward.25} parent=0 // pred_check_branch
    %31 = sbr.rel (0) target = $region33
  $region32: #{_cnn_forward.25} parent=0 // pred_region
    _
  $region33: #{_cnn_forward.25} parent=0 // pred_fallthru
    _
  // Predicated region
  $region34: #{_cnn_forward.25} parent=0 // pred_check
    _
  $region35: #{_cnn_forward.25} parent=0 // pred_check_branch
    %33 = sbr.rel (0) target = $region37
  $region36: #{_cnn_forward.25} parent=0 // pred_region
    _
  $region37: #{_cnn_forward.25} parent=0 // pred_fallthru
    _
  // Predicated region
  $region38: #{_cnn_forward.25} parent=0 // pred_check
    _
  $region39: #{_cnn_forward.25} parent=0 // pred_check_branch
    %35 = sbr.rel (0) target = $region41
  $region40: #{_cnn_forward.25} parent=0 // pred_region
    _
  $region41: #{_cnn_forward.25} parent=0 // pred_fallthru
    _
  %s37 = sld [smem:[#allocation2]]
  %v38 = vld [vmem:[%s0] sm:$0xff]
  %v39 = vld [vmem:[%s0 + $0x8] sm:$0xff]
  %v40 = vld [vmem:[%s1] sm:$0xf]
  %v41 = vld [vmem:[%s1 + $0x4] sm:$0xf]
  %v42 = vld [vmem:[%s1 + $0x8] sm:$0xf]
  %v43 = vld [vmem:[%s1 + $0xc] sm:$0xf]
  %v44 = vld [vmem:[%s1 + $0x10] sm:$0xf]
  %v45 = vld [vmem:[%s1 + $0x14] sm:$0xf]
  %v46 = vld [vmem:[%s1 + $0x18] sm:$0xf]
  %v47 = vld [vmem:[%s1 + $0x1c] sm:$0xf]
  %v48 = vld [vmem:[%s1 + $0x20] sm:$0xf]
  %v49 = vld [vmem:[%s1 + $0x24] sm:$0xf]
  %v50 = vld [vmem:[%s1 + $0x28] sm:$0xf]
  %v51 = vld [vmem:[%s1 + $0x2c] sm:$0xf]
  %v52 = vld [vmem:[%s1 + $0x30] sm:$0xf]
  %v53 = vld [vmem:[%s1 + $0x34] sm:$0xf]
  %v54 = vld [vmem:[%s1 + $0x38] sm:$0xf]
  %v55 = vld [vmem:[%s1 + $0x3c] sm:$0xf]
  %v56 = vld [vmem:[%s1 + $0x40] sm:$0xf]
  %v57 = vld [vmem:[%s1 + $0x44] sm:$0xf]
  %v58 = vld [vmem:[%s1 + $0x48] sm:$0xf]
  %v59 = vld [vmem:[%s1 + $0x4c] sm:$0xf]
  %v60 = vld [vmem:[%s1 + $0x50] sm:$0xf]
  %v61 = vld [vmem:[%s1 + $0x54] sm:$0xf]
  %v62 = vld [vmem:[%s1 + $0x58] sm:$0xf]
  %v63 = vld [vmem:[%s1 + $0x5c] sm:$0xf]
  %v64 = vld [vmem:[%s1 + $0x60] sm:$0xf]
  %v65 = vld [vmem:[%s1 + $0x64] sm:$0xf]
  %v66 = vld [vmem:[%s1 + $0x68] sm:$0xf]
  %v67 = vld [vmem:[%s1 + $0x6c] sm:$0xf]
  %v68 = vld [vmem:[%s1 + $0x70] sm:$0xf]
  %v69 = vld [vmem:[%s1 + $0x74] sm:$0xf]
  %v70 = vld [vmem:[%s1 + $0x78] sm:$0xf]
  %v71 = vld [vmem:[%s1 + $0x7c] sm:$0xf]
  %v72 = vld [vmem:[%s1 + $0x80] sm:$0xf]
  %v73 = vld [vmem:[%s1 + $0x84] sm:$0xf]
  %v74 = vld [vmem:[%s1 + $0x88] sm:$0xf]
  %v75 = vld [vmem:[%s1 + $0x8c] sm:$0xf]
  %v76 = vld [vmem:[%s1 + $0x90] sm:$0xf]
  %v77 = vld [vmem:[%s1 + $0x94] sm:$0xf]
  %v78 = vld [vmem:[%s1 + $0x98] sm:$0xf]
  %v79 = vld [vmem:[%s1 + $0x9c] sm:$0xf]
  %v80 = vld [vmem:[%s1 + $0xa0] sm:$0xf]
  %v81 = vld [vmem:[%s1 + $0xa4] sm:$0xf]
  %v82 = vld [vmem:[%s1 + $0xa8] sm:$0xf]
  %v83 = vld [vmem:[%s1 + $0xac] sm:$0xf]
  %v84 = vld [vmem:[%s1 + $0xb0] sm:$0xf]
  %v85 = vld [vmem:[%s1 + $0xb4] sm:$0xf]
  %v86 = vld [vmem:[%s1 + $0xb8] sm:$0xf]
  %v87 = vld [vmem:[%s1 + $0xbc] sm:$0xf]
  %v88 = vld [vmem:[%s1 + $0xc0] sm:$0xf]
  %v89 = vld [vmem:[%s1 + $0xc4] sm:$0xf]
  %v90 = vld [vmem:[%s1 + $0xc8] sm:$0xf]
  %v91 = vld [vmem:[%s1 + $0xcc] sm:$0xf]
  %v92 = vld [vmem:[%s1 + $0xd0] sm:$0xf]
  %v93 = vld [vmem:[%s1 + $0xd4] sm:$0xf]
  %v94 = vld [vmem:[%s1 + $0xd8] sm:$0xf]
  %v95 = vld [vmem:[%s1 + $0xdc] sm:$0xf]
  %v96 = vld [vmem:[%s1 + $0xe0] sm:$0xf]
  %v97 = vld [vmem:[%s1 + $0xe4] sm:$0xf]
  %v98 = vld [vmem:[%s1 + $0xe8] sm:$0xf]
  %v99 = vld [vmem:[%s1 + $0xec] sm:$0xf]
  %v100 = vld [vmem:[%s1 + $0xf0] sm:$0xf]
  %v101 = vld [vmem:[%s1 + $0xf4] sm:$0xf]
  %v102 = vld [vmem:[%s1 + $0xf8] sm:$0xf]
  %v103 = vld [vmem:[%s1 + $0xfc] sm:$0xf]
  %v104 = vld [vmem:[%s2] sm:$0x1]
  %v106 = vlaneseq
  %v107 = vshrl.u32 %v106, 7
  %v108 = vsub.s32 0, %v107
  %v109 = vrot.slane %v104, %v108
  %v113 = vunpack.c.l.b16 %v38
  %v114 = vunpack.c.h.b16 %v38
  %v115 = vunpack.c.l.b16 %v39
  %v116 = vunpack.c.h.b16 %v39
  %v117 = vpack.c.b16 %v113, %v113
  %v118 = vpack.c.b16 %v114, %v114
  %v119 = vpack.c.b16 %v115, %v115
  %v120 = vpack.c.b16 %v116, %v116
  %v189 = vunpack.c.l.b16 %v40
  %v190 = vunpack.c.l.b16 %v41
  %v191 = vunpack.c.l.b16 %v42
  %v192 = vunpack.c.l.b16 %v43
  %v193 = vunpack.c.l.b16 %v44
  %v194 = vunpack.c.l.b16 %v45
  %v195 = vunpack.c.l.b16 %v46
  %v196 = vunpack.c.l.b16 %v47
  %v197 = vunpack.c.l.b16 %v48
  %v198 = vunpack.c.l.b16 %v49
  %v199 = vunpack.c.l.b16 %v50
  %v200 = vunpack.c.l.b16 %v51
  %v201 = vunpack.c.l.b16 %v52
  %v202 = vunpack.c.l.b16 %v53
  %v203 = vunpack.c.l.b16 %v54
  %v204 = vunpack.c.l.b16 %v55
  %v205 = vunpack.c.l.b16 %v56
  %v206 = vunpack.c.l.b16 %v57
  %v207 = vunpack.c.l.b16 %v58
  %v208 = vunpack.c.l.b16 %v59
  %v209 = vunpack.c.l.b16 %v60
  %v210 = vunpack.c.l.b16 %v61
  %v211 = vunpack.c.l.b16 %v62
  %v212 = vunpack.c.l.b16 %v63
  %v213 = vunpack.c.l.b16 %v64
  %v214 = vunpack.c.l.b16 %v65
  %v215 = vunpack.c.l.b16 %v66
  %v216 = vunpack.c.l.b16 %v67
  %v217 = vunpack.c.l.b16 %v68
  %v218 = vunpack.c.l.b16 %v69
  %v219 = vunpack.c.l.b16 %v70
  %v220 = vunpack.c.l.b16 %v71
  %v221 = vunpack.c.l.b16 %v72
  %v222 = vunpack.c.l.b16 %v73
  %v223 = vunpack.c.l.b16 %v74
  %v224 = vunpack.c.l.b16 %v75
  %v225 = vunpack.c.l.b16 %v76
  %v226 = vunpack.c.l.b16 %v77
  %v227 = vunpack.c.l.b16 %v78
  %v228 = vunpack.c.l.b16 %v79
  %v229 = vunpack.c.l.b16 %v80
  %v230 = vunpack.c.l.b16 %v81
  %v231 = vunpack.c.l.b16 %v82
  %v232 = vunpack.c.l.b16 %v83
  %v233 = vunpack.c.l.b16 %v84
  %v234 = vunpack.c.l.b16 %v85
  %v235 = vunpack.c.l.b16 %v86
  %v236 = vunpack.c.l.b16 %v87
  %v237 = vunpack.c.l.b16 %v88
  %v238 = vunpack.c.l.b16 %v89
  %v239 = vunpack.c.l.b16 %v90
  %v240 = vunpack.c.l.b16 %v91
  %v241 = vunpack.c.l.b16 %v92
  %v242 = vunpack.c.l.b16 %v93
  %v243 = vunpack.c.l.b16 %v94
  %v244 = vunpack.c.l.b16 %v95
  %v245 = vunpack.c.l.b16 %v96
  %v246 = vunpack.c.l.b16 %v97
  %v247 = vunpack.c.l.b16 %v98
  %v248 = vunpack.c.l.b16 %v99
  %v249 = vunpack.c.l.b16 %v100
  %v250 = vunpack.c.l.b16 %v101
  %v251 = vunpack.c.l.b16 %v102
  %v252 = vunpack.c.l.b16 %v103
  %v253 = vpack.c.b16 %v190, %v189
  %v254 = vpack.c.b16 %v192, %v191
  %v255 = vpack.c.b16 %v194, %v193
  %v256 = vpack.c.b16 %v196, %v195
  %v257 = vpack.c.b16 %v198, %v197
  %v258 = vpack.c.b16 %v200, %v199
  %v259 = vpack.c.b16 %v202, %v201
  %v260 = vpack.c.b16 %v204, %v203
  %v261 = vpack.c.b16 %v206, %v205
  %v262 = vpack.c.b16 %v208, %v207
  %v263 = vpack.c.b16 %v210, %v209
  %v264 = vpack.c.b16 %v212, %v211
  %v265 = vpack.c.b16 %v214, %v213
  %v266 = vpack.c.b16 %v216, %v215
  %v267 = vpack.c.b16 %v218, %v217
  %v268 = vpack.c.b16 %v220, %v219
  %v269 = vpack.c.b16 %v222, %v221
  %v270 = vpack.c.b16 %v224, %v223
  %v271 = vpack.c.b16 %v226, %v225
  %v272 = vpack.c.b16 %v228, %v227
  %v273 = vpack.c.b16 %v230, %v229
  %v274 = vpack.c.b16 %v232, %v231
  %v275 = vpack.c.b16 %v234, %v233
  %v276 = vpack.c.b16 %v236, %v235
  %v277 = vpack.c.b16 %v238, %v237
  %v278 = vpack.c.b16 %v240, %v239
  %v279 = vpack.c.b16 %v242, %v241
  %v280 = vpack.c.b16 %v244, %v243
  %v281 = vpack.c.b16 %v246, %v245
  %v282 = vpack.c.b16 %v248, %v247
  %v283 = vpack.c.b16 %v250, %v249
  %v284 = vpack.c.b16 %v252, %v251
  %317 = vmatprep.subr.bf16.mxu0 0
  %318 = vmatpush1.bf16.msra.mxu0 %v253
  %319 = vmatprep.subr.bf16.mxu0 0
  %320 = vmatpush1.bf16.msra.mxu0 %v254
  %321 = vmatprep.subr.bf16.mxu0 0
  %322 = vmatpush1.bf16.msra.mxu0 %v255
  %323 = vmatprep.subr.bf16.mxu0 0
  %324 = vmatpush1.bf16.msra.mxu0 %v256
  %325 = vmatprep.subr.bf16.mxu0 0
  %326 = vmatpush1.bf16.msra.mxu0 %v257
  %327 = vmatprep.subr.bf16.mxu0 0
  %328 = vmatpush1.bf16.msra.mxu0 %v258
  %329 = vmatprep.subr.bf16.mxu0 0
  %330 = vmatpush1.bf16.msra.mxu0 %v259
  %331 = vmatprep.subr.bf16.mxu0 0
  %332 = vmatpush1.bf16.msra.mxu0 %v260
  %333 = vmatprep.subr.bf16.mxu0 0
  %334 = vmatpush1.bf16.msra.mxu0 %v261
  %335 = vmatprep.subr.bf16.mxu0 0
  %336 = vmatpush1.bf16.msra.mxu0 %v262
  %337 = vmatprep.subr.bf16.mxu0 0
  %338 = vmatpush1.bf16.msra.mxu0 %v263
  %339 = vmatprep.subr.bf16.mxu0 0
  %340 = vmatpush1.bf16.msra.mxu0 %v264
  %341 = vmatprep.subr.bf16.mxu0 0
  %342 = vmatpush1.bf16.msra.mxu0 %v265
  %343 = vmatprep.subr.bf16.mxu0 0
  %344 = vmatpush1.bf16.msra.mxu0 %v266
  %345 = vmatprep.subr.bf16.mxu0 0
  %346 = vmatpush1.bf16.msra.mxu0 %v267
  %347 = vmatprep.subr.bf16.mxu0 0
  %348 = vmatpush1.bf16.msra.mxu0 %v268
  %349 = vmatprep.mubr.bf16.mxu0 %v118
  %350 = vmatmul.mubr.bf16.gmra.mrb[0].mxu0 %v117
  %v351 = vpop.f32.mrb[0].mxu0
  %v352 = vadd.f32 %v109, %v351
  %v353 = vpop.f32.mrb[0].mxu0
  %v354 = vpop.f32.mrb[0].mxu0
  %v355 = vpop.f32.mrb[0].mxu0
  %356 = vdwg.mxu0
  %357 = vmatprep.subr.bf16.mxu0 0
  %358 = vmatpush1.bf16.msra.mxu0 %v269
  %359 = vmatprep.subr.bf16.mxu0 0
  %360 = vmatpush1.bf16.msra.mxu0 %v270
  %361 = vmatprep.subr.bf16.mxu0 0
  %362 = vmatpush1.bf16.msra.mxu0 %v271
  %363 = vmatprep.subr.bf16.mxu0 0
  %364 = vmatpush1.bf16.msra.mxu0 %v272
  %365 = vmatprep.subr.bf16.mxu0 0
  %366 = vmatpush1.bf16.msra.mxu0 %v273
  %367 = vmatprep.subr.bf16.mxu0 0
  %368 = vmatpush1.bf16.msra.mxu0 %v274
  %369 = vmatprep.subr.bf16.mxu0 0
  %370 = vmatpush1.bf16.msra.mxu0 %v275
  %371 = vmatprep.subr.bf16.mxu0 0
  %372 = vmatpush1.bf16.msra.mxu0 %v276
  %373 = vmatprep.subr.bf16.mxu0 0
  %374 = vmatpush1.bf16.msra.mxu0 %v277
  %375 = vmatprep.subr.bf16.mxu0 0
  %376 = vmatpush1.bf16.msra.mxu0 %v278
  %377 = vmatprep.subr.bf16.mxu0 0
  %378 = vmatpush1.bf16.msra.mxu0 %v279
  %379 = vmatprep.subr.bf16.mxu0 0
  %380 = vmatpush1.bf16.msra.mxu0 %v280
  %381 = vmatprep.subr.bf16.mxu0 0
  %382 = vmatpush1.bf16.msra.mxu0 %v281
  %383 = vmatprep.subr.bf16.mxu0 0
  %384 = vmatpush1.bf16.msra.mxu0 %v282
  %385 = vmatprep.subr.bf16.mxu0 0
  %386 = vmatpush1.bf16.msra.mxu0 %v283
  %387 = vmatprep.subr.bf16.mxu0 0
  %388 = vmatpush1.bf16.msra.mxu0 %v284
  %389 = vmatprep.mubr.bf16.mxu0 %v120
  %390 = vmatmul.mubr.bf16.gmra.mrb[0].mxu0 %v119
  %v391 = vpop.f32.mrb[0].mxu0
  %v392 = vadd.f32 %v352, %v391
  %v393 = vpop.f32.mrb[0].mxu0
  %v394 = vpop.f32.mrb[0].mxu0
  %v395 = vpop.f32.mrb[0].mxu0
  %396 = vdwg.mxu0
  %vm397 = vcmp.gt.f32.partialorder %v392, 0.0
  %v398 = vstv %s37
  %v399 = vmul.f32 %v398, %v392
  %v400 = vsel %vm397, %v392, %v399
  %v401 = vpack.c.bf16 %v400, %v400
  %v402 = vld [vmem:[%s3] sm:$0xf]
  %v403 = vld [vmem:[%s3 + $0x4] sm:$0xf]
  %v404 = vld [vmem:[%s3 + $0x8] sm:$0xf]
  %v405 = vld [vmem:[%s3 + $0xc] sm:$0xf]
  %v406 = vld [vmem:[%s3 + $0x10] sm:$0xf]
  %v407 = vld [vmem:[%s3 + $0x14] sm:$0xf]
  %v408 = vld [vmem:[%s3 + $0x18] sm:$0xf]
  %v409 = vld [vmem:[%s3 + $0x1c] sm:$0xf]
  %v410 = vld [vmem:[%s3 + $0x20] sm:$0xf]
  %v411 = vld [vmem:[%s3 + $0x24] sm:$0xf]
  %v412 = vld [vmem:[%s3 + $0x28] sm:$0xf]
  %v413 = vld [vmem:[%s3 + $0x2c] sm:$0xf]
  %v414 = vld [vmem:[%s3 + $0x30] sm:$0xf]
  %v415 = vld [vmem:[%s3 + $0x34] sm:$0xf]
  %v416 = vld [vmem:[%s3 + $0x38] sm:$0xf]
  %v417 = vld [vmem:[%s3 + $0x3c] sm:$0xf]
  %v418 = vld [vmem:[%s4] sm:$0x1]
  %v420 = vlaneseq
  %v421 = vshrl.u32 %v420, 7
  %v422 = vsub.s32 0, %v421
  %v423 = vrot.slane %v418, %v422
  %v441 = vunpack.c.l.b16 %v402
  %v442 = vunpack.c.l.b16 %v403
  %v443 = vunpack.c.l.b16 %v404
  %v444 = vunpack.c.l.b16 %v405
  %v445 = vunpack.c.l.b16 %v406
  %v446 = vunpack.c.l.b16 %v407
  %v447 = vunpack.c.l.b16 %v408
  %v448 = vunpack.c.l.b16 %v409
  %v449 = vunpack.c.l.b16 %v410
  %v450 = vunpack.c.l.b16 %v411
  %v451 = vunpack.c.l.b16 %v412
  %v452 = vunpack.c.l.b16 %v413
  %v453 = vunpack.c.l.b16 %v414
  %v454 = vunpack.c.l.b16 %v415
  %v455 = vunpack.c.l.b16 %v416
  %v456 = vunpack.c.l.b16 %v417
  %v457 = vpack.c.b16 %v442, %v441
  %v458 = vpack.c.b16 %v444, %v443
  %v459 = vpack.c.b16 %v446, %v445
  %v460 = vpack.c.b16 %v448, %v447
  %v461 = vpack.c.b16 %v450, %v449
  %v462 = vpack.c.b16 %v452, %v451
  %v463 = vpack.c.b16 %v454, %v453
  %v464 = vpack.c.b16 %v456, %v455
  %473 = vmatprep.subr.bf16.mxu0 0
  %474 = vmatpush1.bf16.msra.mxu0 %v457
  %475 = vmatprep.subr.bf16.mxu0 0
  %476 = vmatpush1.bf16.msra.mxu0 %v458
  %477 = vmatprep.subr.bf16.mxu0 0
  %478 = vmatpush1.bf16.msra.mxu0 %v459
  %479 = vmatprep.subr.bf16.mxu0 0
  %480 = vmatpush1.bf16.msra.mxu0 %v460
  %481 = vmatprep.subr.bf16.mxu0 0
  %482 = vmatpush1.bf16.msra.mxu0 %v461
  %483 = vmatprep.subr.bf16.mxu0 0
  %484 = vmatpush1.bf16.msra.mxu0 %v462
  %485 = vmatprep.subr.bf16.mxu0 0
  %486 = vmatpush1.bf16.msra.mxu0 %v463
  %487 = vmatprep.subr.bf16.mxu0 0
  %488 = vmatpush1.bf16.msra.mxu0 %v464
  %489 = vmatprep.subr.bf16.mxu0 0
  %490 = vmatpush1.bf16.msra.mxu0 0
  %491 = vmatprep.subr.bf16.mxu0 0
  %492 = vmatpush1.bf16.msra.mxu0 0
  %493 = vmatprep.subr.bf16.mxu0 0
  %494 = vmatpush1.bf16.msra.mxu0 0
  %495 = vmatprep.subr.bf16.mxu0 0
  %496 = vmatpush1.bf16.msra.mxu0 0
  %497 = vmatprep.subr.bf16.mxu0 0
  %498 = vmatpush1.bf16.msra.mxu0 0
  %499 = vmatprep.subr.bf16.mxu0 0
  %500 = vmatpush1.bf16.msra.mxu0 0
  %501 = vmatprep.subr.bf16.mxu0 0
  %502 = vmatpush1.bf16.msra.mxu0 0
  %503 = vmatprep.subr.bf16.mxu0 0
  %504 = vmatpush1.bf16.msra.mxu0 0
  %505 = vmatprep.mubr.bf16.mxu0 0
  %506 = vmatmul.mubr.bf16.gmra.mrb[0].mxu0 %v401
  %v507 = vpop.f32.mrb[0].mxu0
  %v508 = vadd.f32 %v423, %v507
  %v509 = vpop.f32.mrb[0].mxu0
  %v510 = vpop.f32.mrb[0].mxu0
  %v511 = vpop.f32.mrb[0].mxu0
  %512 = vdwg.mxu0
  %vm513 = vcmp.gt.f32.partialorder %v508, 0.0
  %v514 = vmul.f32 %v398, %v508
  %v515 = vsel %vm513, %v508, %v514
  %v516 = vpack.c.bf16 %v515, %v515
  %v517 = vld [vmem:[%s5] sm:$0xf]
  %v518 = vld [vmem:[%s5 + $0x4] sm:$0xf]
  %v519 = vld [vmem:[%s5 + $0x8] sm:$0xf]
  %v520 = vld [vmem:[%s5 + $0xc] sm:$0xf]
  %v521 = vld [vmem:[%s5 + $0x10] sm:$0xf]
  %v522 = vld [vmem:[%s5 + $0x14] sm:$0xf]
  %v523 = vld [vmem:[%s5 + $0x18] sm:$0xf]
  %v524 = vld [vmem:[%s5 + $0x1c] sm:$0xf]
  %v525 = vld [vmem:[%s6] sm:$0x1]
  %v527 = vlaneseq
  %v528 = vshrl.u32 %v527, 7
  %v529 = vsub.s32 0, %v528
  %v530 = vrot.slane %v525, %v529
  %v540 = vunpack.c.l.b16 %v517
  %v541 = vunpack.c.l.b16 %v518
  %v542 = vunpack.c.l.b16 %v519
  %v543 = vunpack.c.l.b16 %v520
  %v544 = vunpack.c.l.b16 %v521
  %v545 = vunpack.c.l.b16 %v522
  %v546 = vunpack.c.l.b16 %v523
  %v547 = vunpack.c.l.b16 %v524
  %v548 = vpack.c.b16 %v541, %v540
  %v549 = vpack.c.b16 %v543, %v542
  %v550 = vpack.c.b16 %v545, %v544
  %v551 = vpack.c.b16 %v547, %v546
  %vm556 = vcmask 523264
  %v558 = vsel %vm556, %v516, 0
  %560 = vmatprep.subr.bf16.mxu0 0
  %561 = vmatpush1.bf16.msra.mxu0 %v548
  %562 = vmatprep.subr.bf16.mxu0 0
  %563 = vmatpush1.bf16.msra.mxu0 %v549
  %564 = vmatprep.subr.bf16.mxu0 0
  %565 = vmatpush1.bf16.msra.mxu0 %v550
  %566 = vmatprep.subr.bf16.mxu0 0
  %567 = vmatpush1.bf16.msra.mxu0 %v551
  %568 = vmatprep.subr.bf16.mxu0 0
  %569 = vmatpush1.bf16.msra.mxu0 0
  %570 = vmatprep.subr.bf16.mxu0 0
  %571 = vmatpush1.bf16.msra.mxu0 0
  %572 = vmatprep.subr.bf16.mxu0 0
  %573 = vmatpush1.bf16.msra.mxu0 0
  %574 = vmatprep.subr.bf16.mxu0 0
  %575 = vmatpush1.bf16.msra.mxu0 0
  %576 = vmatprep.subr.bf16.mxu0 0
  %577 = vmatpush1.bf16.msra.mxu0 0
  %578 = vmatprep.subr.bf16.mxu0 0
  %579 = vmatpush1.bf16.msra.mxu0 0
  %580 = vmatprep.subr.bf16.mxu0 0
  %581 = vmatpush1.bf16.msra.mxu0 0
  %582 = vmatprep.subr.bf16.mxu0 0
  %583 = vmatpush1.bf16.msra.mxu0 0
  %584 = vmatprep.subr.bf16.mxu0 0
  %585 = vmatpush1.bf16.msra.mxu0 0
  %586 = vmatprep.subr.bf16.mxu0 0
  %587 = vmatpush1.bf16.msra.mxu0 0
  %588 = vmatprep.subr.bf16.mxu0 0
  %589 = vmatpush1.bf16.msra.mxu0 0
  %590 = vmatprep.subr.bf16.mxu0 0
  %591 = vmatpush1.bf16.msra.mxu0 0
  %592 = vmatprep.mubr.bf16.mxu0 0
  %593 = vmatmul.mubr.bf16.gmra.mrb[0].mxu0 %v558
  %v594 = vpop.f32.mrb[0].mxu0
  %v595 = vadd.f32 %v530, %v594
  %v596 = vpop.f32.mrb[0].mxu0
  %v597 = vpop.f32.mrb[0].mxu0
  %v598 = vpop.f32.mrb[0].mxu0
  %599 = vdwg.mxu0
  %vm600 = vcmp.gt.f32.partialorder %v595, 0.0
  %v601 = vmul.f32 %v398, %v595
  %v602 = vsel %vm600, %v595, %v601
  %v603 = vpack.c.bf16 %v602, %v602
  %v604 = vld [vmem:[%s7] sm:$0xf]
  %v605 = vld [vmem:[%s7 + $0x4] sm:$0xf]
  %v606 = vld [vmem:[%s8] sm:$0x1]
  %v608 = vlaneseq
  %v609 = vshrl.u32 %v608, 7
  %v610 = vsub.s32 0, %v609
  %v611 = vrot.slane %v606, %v610
  %v615 = vunpack.c.l.b16 %v604
  %v616 = vunpack.c.l.b16 %v605
  %v617 = vpack.c.b16 %v616, %v615
  %vm619 = vcmask 130048
  %v621 = vsel %vm619, %v603, 0
  %623 = vmatprep.subr.bf16.mxu0 0
  %624 = vmatpush1.bf16.msra.mxu0 %v617
  %625 = vmatprep.subr.bf16.mxu0 0
  %626 = vmatpush1.bf16.msra.mxu0 0
  %627 = vmatprep.subr.bf16.mxu0 0
  %628 = vmatpush1.bf16.msra.mxu0 0
  %629 = vmatprep.subr.bf16.mxu0 0
  %630 = vmatpush1.bf16.msra.mxu0 0
  %631 = vmatprep.subr.bf16.mxu0 0
  %632 = vmatpush1.bf16.msra.mxu0 0
  %633 = vmatprep.subr.bf16.mxu0 0
  %634 = vmatpush1.bf16.msra.mxu0 0
  %635 = vmatprep.subr.bf16.mxu0 0
  %636 = vmatpush1.bf16.msra.mxu0 0
  %637 = vmatprep.subr.bf16.mxu0 0
  %638 = vmatpush1.bf16.msra.mxu0 0
  %639 = vmatprep.subr.bf16.mxu0 0
  %640 = vmatpush1.bf16.msra.mxu0 0
  %641 = vmatprep.subr.bf16.mxu0 0
  %642 = vmatpush1.bf16.msra.mxu0 0
  %643 = vmatprep.subr.bf16.mxu0 0
  %644 = vmatpush1.bf16.msra.mxu0 0
  %645 = vmatprep.subr.bf16.mxu0 0
  %646 = vmatpush1.bf16.msra.mxu0 0
  %647 = vmatprep.subr.bf16.mxu0 0
  %648 = vmatpush1.bf16.msra.mxu0 0
  %649 = vmatprep.subr.bf16.mxu0 0
  %650 = vmatpush1.bf16.msra.mxu0 0
  %651 = vmatprep.subr.bf16.mxu0 0
  %652 = vmatpush1.bf16.msra.mxu0 0
  %653 = vmatprep.subr.bf16.mxu0 0
  %654 = vmatpush1.bf16.msra.mxu0 0
  %655 = vmatprep.mubr.bf16.mxu0 0
  %656 = vmatmul.mubr.bf16.gmra.mrb[0].mxu0 %v621
  %v657 = vpop.f32.mrb[0].mxu0
  %v658 = vadd.f32 %v611, %v657
  %v659 = vpop.f32.mrb[0].mxu0
  %v660 = vpop.f32.mrb[0].mxu0
  %v661 = vpop.f32.mrb[0].mxu0
  %662 = vdwg.mxu0
  %vm663 = vcmask 80896
  %664 = vst.msk [vmem:[%s10] sm:$0xff] %vm663, %v658
  // Predicated region
  $region42: #{_cnn_forward.25} parent=0 // pred_check
    _
  $region43: #{_cnn_forward.25} parent=0 // pred_check_branch
    %666 = sbr.rel (0) target = $region45
  $region44: #{_cnn_forward.25} parent=0 // pred_region
    _
  $region45: #{_cnn_forward.25} parent=0 // pred_fallthru
    _
  // Predicated region
  $region46: #{_cnn_forward.25} parent=0 // pred_check
    _
  $region47: #{_cnn_forward.25} parent=0 // pred_check_branch
    %668 = sbr.rel (0) target = $region49
  $region48: #{_cnn_forward.25} parent=0 // pred_region
    _
  $region49: #{_cnn_forward.25} parent=0 // pred_fallthru
    _

</llo_original>
